<compile_context>
chip_gen: v7x
topology: tpu7x:2x2x1
jax: 0.10.0
libtpu: 0.0.40
codegen_flags: <defaults>
</compile_context>

<pallas_src>
import functools

import jax
import jax.numpy as jnp
import numpy as np
from jax import lax
from jax.experimental import pallas as pl
from jax.experimental.pallas import tpu as pltpu

EPS = 1e-5
KMAX = 7                      # largest depthwise kernel
PMAX = (KMAX - 1) // 2        # shared halo


def get_same_padding(k):
    return (k - 1) // 2


def bn_fold(gamma, beta, mean, var):
    s = gamma / jnp.sqrt(var + EPS)
    t = beta - mean * s
    return s, t


def _round_up(v, m):
    return ((v + m - 1) // m) * m


def _tree_sum(terms):
    # Balanced-tree reduction: breaks the serial dependent-add chain.
    terms = list(terms)
    while len(terms) > 1:
        nxt = [terms[i] + terms[i + 1] for i in range(0, len(terms) - 1, 2)]
        if len(terms) % 2:
            nxt.append(terms[-1])
        terms = nxt
    return terms[0]


def _device_kind():
    try:
        return jax.devices()[0].device_kind.lower()
    except Exception:
        return ""


def _make_cfg(N, H, W, C):
    kind = _device_kind()
    multi_tc = "v7" in kind                      # 2 TensorCores / chip
    use_bf16 = ("v6" in kind) or ("v7" in kind)  # bf16-native MXU/VPU
    # W tile for the affine-tail matmul: keep K per tile fixed (w_tile*C = 128
    # when possible) so the kron weight does NOT scale with the full W.
    if C <= 128 and 128 % C == 0 and W % (128 // C) == 0:
        w_tile = min(W, 128 // C)
    else:
        w_tile = W
    cout = C // 2
    cout_pad = cout
    while (w_tile * cout_pad) % 128:             # lane-dense output store
        cout_pad += 1
    # images per grid step: 1 on v7x (feed both TCs), N on single-TC chips.
    nb = 1 if (multi_tc and N > 1) else N
    # halo scratch: image placed at (8,128)-aligned offsets so the in-kernel
    # store of the unpadded block is an aligned full-lane store.
    r0 = _round_up(PMAX, 8)
    l0 = _round_up(PMAX * C, 128)
    pad_rows = _round_up(r0 + H + PMAX, 8)
    pad_lanes = _round_up(l0 + W * C + PMAX * C, 128)
    return dict(multi_tc=multi_tc, use_bf16=use_bf16, w_tile=w_tile,
                cout=cout, cout_pad=cout_pad, nb=nb,
                r0=r0, l0=l0, pad_rows=pad_rows, pad_lanes=pad_lanes)


# -----------------------------------------------------------------------------
# Fused kernel: in-VMEM halo pad -> 4x(depthwise + BN + ReLU6) ->
#               branch-stacked folded-tail matmul -> ReLU -> lane-dense store.
# -----------------------------------------------------------------------------
def _fused_kernel(x_ref, dww_ref, dwb_ref, wstack_ref, bout_ref, o_ref, xpad_ref,
                  *, scales, H, W, C, cfg):
    WC = W * C
    Hh = H + 2 * PMAX
    r0, l0 = cfg["r0"], cfg["l0"]
    w_tile, cout_pad = cfg["w_tile"], cfg["cout_pad"]
    md = jnp.bfloat16 if cfg["use_bf16"] else jnp.float32

    wstack = wstack_ref[...]                              # (4*w_tile*C, w_tile*cout_pad)
    bout = bout_ref[0].astype(jnp.float32)                # (w_tile*cout_pad,)

    # Zero the halo scratch once per grid step (replaces the HBM-side jnp.pad).
    xpad_ref[...] = jnp.zeros((cfg["pad_rows"], cfg["pad_lanes"]), jnp.float32)

    for n in range(cfg["nb"]):                            # static unroll over images
        # Aligned (8,128) store of the unpadded image into the zeroed scratch.
        xpad_ref[r0:r0 + H, l0:l0 + WC] = x_ref[n].astype(jnp.float32)
        xp = xpad_ref[...]

        # Hoisted lane shifts: one (Hh, W*C) view per horizontal offset, shared
        # by every branch / tap.
        shifted = [xp[r0 - PMAX:r0 - PMAX + Hh,
                      l0 + (s - PMAX) * C: l0 + (s - PMAX) * C + WC]
                   for s in range(2 * PMAX + 1)]

        hs = []
        for i, k in enumerate(scales):
            o = PMAX - get_same_padding(k)                # center offset in halo
            w_i = dww_ref[i].astype(jnp.float32)          # (KMAX, KMAX, W*C)
            b_i = dwb_ref[i].astype(jnp.float32)          # (W*C,)
            dy_parts = []
            for dy in range(k):
                # Sum over dx at full halo height first -> a single sublane
                # slice per (branch, dy): 16 slices total instead of 84.
                row = _tree_sum(shifted[o + dx] * w_i[o + dy, o + dx]
                                for dx in range(k))       # (Hh, W*C)
                dy_parts.append(row[o + dy:o + dy + H, :])
            acc = _tree_sum(dy_parts)                     # (H, W*C)
            # depthwise bias + BN folded into one offset, then ReLU6
            hs.append(jnp.clip(acc + b_i, 0.0, 6.0))

        # Folded affine tail: ONE branch-stacked MXU matmul per W tile
        # (K = 4*w_tile*C = 512 here; weight size independent of full W).
        cols = []
        for wt in range(W // w_tile):
            lo = wt * w_tile * C
            hcat = jnp.concatenate([h[:, lo:lo + w_tile * C] for h in hs],
                                   axis=-1).astype(md)    # (H, 4*w_tile*C)
            y = jnp.dot(hcat, wstack, preferred_element_type=jnp.float32)
            cols.append(y + bout)
        y = cols[0] if len(cols) == 1 else jnp.concatenate(cols, axis=-1)

        # BasicConv ReLU; store is lane-dense (W*cout_pad is a multiple of 128).
        o_ref[n] = jnp.maximum(y, 0.0).astype(o_ref.dtype)


def fused_forward(x_ld, packed, scales, H, W, C, cfg):
    # x_ld: (N, H, W*C) unpadded, lane-dense. Returns (N, H, W*cout_pad).
    N = x_ld.shape[0]
    nb = cfg["nb"]
    cout_pad = cfg["cout_pad"]
    kern = functools.partial(_fused_kernel, scales=scales, H=H, W=W, C=C, cfg=cfg)
    return pl.pallas_call(
        kern,
        out_shape=jax.ShapeDtypeStruct((N, H, W * cout_pad), x_ld.dtype),
        grid=(N // nb,),
        in_specs=[
            pl.BlockSpec((nb, H, W * C), lambda n: (n, 0, 0)),
            pl.BlockSpec(packed["dw_w"].shape, lambda n: (0, 0, 0, 0)),
            pl.BlockSpec(packed["dw_b"].shape, lambda n: (0, 0)),
            pl.BlockSpec(packed["w_stack"].shape, lambda n: (0, 0)),
            pl.BlockSpec(packed["b_out"].shape, lambda n: (0, 0)),
        ],
        out_specs=pl.BlockSpec((nb, H, W * cout_pad), lambda n: (n, 0, 0)),
        scratch_shapes=[pltpu.VMEM((cfg["pad_rows"], cfg["pad_lanes"]), jnp.float32)],
        compiler_params=pltpu.CompilerParams(dimension_semantics=("parallel",)),
    )(x_ld, packed["dw_w"], packed["dw_b"], packed["w_stack"], packed["b_out"])


# -----------------------------------------------------------------------------
# Parameter prep: fold BN into weights/offsets and fold the whole 1x1 tail.
# Runs ONCE at build time (not re-traced inside every forward).
# -----------------------------------------------------------------------------
def pack_params(params, scales, W, cfg):
    C = params["scale"][0]["dw_w"].shape[-1]      # in_c
    Cb = params["scale"][0]["pw_w"].shape[-1]     # in_c // 8
    cout = 4 * Cb                                  # = in_c // 2
    cout_pad, w_tile = cfg["cout_pad"], cfg["w_tile"]

    # Depthwise: BN scale folded into taps, bias+BN offset into one vector.
    # NOTE: dw_w/dw_b are tiled across W (W-times redundant constants; fine at
    # this size — see module TODO for the production-W variant).
    dww = jnp.zeros((4, KMAX, KMAX, C), jnp.float32)
    dwb = []
    for i, k in enumerate(scales):
        p = params["scale"][i]
        o = PMAX - get_same_padding(k)
        dww = dww.at[i, o:o + k, o:o + k, :].set(p["dw_w"] * p["dw_s"])
        dwb.append(jnp.tile(p["dw_b"] * p["dw_s"] + p["dw_t"], W))
    dw_w = jnp.tile(dww[:, :, :, None, :], (1, 1, 1, W, 1)).reshape(4, KMAX, KMAX, W * C)
    dw_b = jnp.stack(dwb)                                        # (4, W*C)

    # Tail: per-branch (pw conv + BN) -> concat -> (fuse 1x1 + BN) is affine
    # with no nonlinearity in between -> fold exactly (in f32).
    pf = params["fuse"]
    fw = pf["w"] * pf["s"][None, :]                              # (cout, cout)
    b_acc = pf["b"] * pf["s"] + pf["t"]                          # (cout,)
    eye_wt = jnp.eye(w_tile, dtype=jnp.float32)
    blocks = []
    for i in range(4):
        p = params["scale"][i]
        fwi = fw[i * Cb:(i + 1) * Cb, :]                         # (Cb, cout)
        w_comb = (p["pw_w"] * p["pw_s"][None, :]) @ fwi          # (C, cout)
        b_acc = b_acc + (p["pw_b"] * p["pw_s"] + p["pw_t"]) @ fwi
        w_comb = jnp.pad(w_comb, ((0, 0), (0, cout_pad - cout)))  # lane-dense pad
        # kron(eye(w_tile), w_comb): consumes the lane-dense (H, w_tile*C)
        # activations directly; sized per W-tile, independent of the full W.
        blocks.append(jnp.kron(eye_wt, w_comb))
    w_stack = jnp.concatenate(blocks, axis=0)        # (4*w_tile*C, w_tile*cout_pad)
    b_out = jnp.tile(jnp.pad(b_acc, (0, cout_pad - cout)), w_tile).reshape(1, -1)

    if cfg["use_bf16"]:
        # bf16 MXU operands on v6e/v7x; accumulation stays f32 in the kernel.
        w_stack = w_stack.astype(jnp.bfloat16)
    return dict(dw_w=dw_w, dw_b=dw_b, w_stack=w_stack, b_out=b_out)


# -----------------------------------------------------------------------------
# Parameters (deterministic, synthetic)
# -----------------------------------------------------------------------------
def init_params(key, in_c, scales):
    keys = iter(jax.random.split(key, 64))

    def nrm(shape, scale):
        return jax.random.normal(next(keys), shape, jnp.float32) * scale

    def bn(c):
        gamma = 1.0 + 0.1 * jax.random.normal(next(keys), (c,), jnp.float32)
        beta = 0.1 * jax.random.normal(next(keys), (c,), jnp.float32)
        mean = 0.1 * jax.random.normal(next(keys), (c,), jnp.float32)
        var = jax.random.uniform(next(keys), (c,), jnp.float32, 0.5, 1.5)
        return bn_fold(gamma, beta, mean, var)

    branches = []
    for k in scales[:4]:
        use_bias = get_same_padding(k) > 0  # DSConv gets padding in the use_bias slot
        out_c = in_c // 8
        dw_w = nrm((k, k, in_c), 0.2)
        dw_b = nrm((in_c,), 0.1) if use_bias else jnp.zeros((in_c,), jnp.float32)
        dw_s, dw_t = bn(in_c)
        pw_w = nrm((in_c, out_c), 0.2)
        pw_b = nrm((out_c,), 0.1) if use_bias else jnp.zeros((out_c,), jnp.float32)
        pw_s, pw_t = bn(out_c)
        branches.append(dict(dw_w=dw_w, dw_b=dw_b, dw_s=dw_s, dw_t=dw_t,
                             pw_w=pw_w, pw_b=pw_b, pw_s=pw_s, pw_t=pw_t))
    half = in_c // 2
    fw = nrm((half, half), 0.2)
    fb = nrm((half,), 0.1)     # BasicConv's Conv2d has bias=True by default
    fs, ft = bn(half)
    return dict(scale=branches, fuse=dict(w=fw, b=fb, s=fs, t=ft),
                scales=tuple(scales[:4]))


# -----------------------------------------------------------------------------
# Forward builder: pack once, return a jitted forward (boundary glue only).
# -----------------------------------------------------------------------------
def build_forward(params, N, H, W):
    scales = params["scales"]
    C = params["scale"][0]["dw_w"].shape[-1]
    cfg = _make_cfg(N, H, W, C)
    packed = pack_params(params, scales, W, cfg)           # computed once

    @jax.jit
    def fwd(rgb, t):
        rgbt = jnp.concatenate([rgb, t], axis=1)           # (N, in_c, H, W)
        x = jnp.transpose(rgbt, (0, 2, 3, 1))              # NHWC (layout glue)
        x_ld = x.reshape(N, H, W * C)                      # lane-dense, UNPADDED
        y = fused_forward(x_ld, packed, scales, H, W, C, cfg)
        y = y.reshape(N, H, W, cfg["cout_pad"])[..., :cfg["cout"]]
        return jnp.transpose(y, (0, 3, 1, 2))              # back to NCHW
    return fwd


# Pure-JAX reference (numerical sanity check)
def reference_forward(params, rgb, t):
    rgbt = jnp.concatenate([rgb, t], axis=1)
    x = jnp.transpose(rgbt, (0, 2, 3, 1)).astype(jnp.float32)
    C = x.shape[-1]
    feats = []
    for i, k in enumerate(params["scales"]):
        p = params["scale"][i]
        pad = get_same_padding(k)
        w = p["dw_w"].reshape(k, k, 1, C)
        y = lax.conv_general_dilated(
            x, w, window_strides=(1, 1), padding=((pad, pad), (pad, pad)),
            dimension_numbers=("NHWC", "HWIO", "NHWC"), feature_group_count=C)
        y = (y + p["dw_b"]) * p["dw_s"] + p["dw_t"]
        y = jnp.clip(y, 0.0, 6.0)
        y = jnp.einsum("nhwc,cd->nhwd", y, p["pw_w"]) + p["pw_b"]
        y = y * p["pw_s"] + p["pw_t"]
        feats.append(y)
    cat = jnp.concatenate(feats, axis=-1)
    pf = params["fuse"]
    y = jnp.einsum("nhwc,cd->nhwd", cat, pf["w"]) + pf["b"]
    y = jnp.maximum(y * pf["s"] + pf["t"], 0.0)
    return jnp.transpose(y, (0, 3, 1, 2))


if __name__ == "__main__":
    key = jax.random.PRNGKey(0)
    k_rgb, k_t, k_p = jax.random.split(key, 3)

    N, Cmod, H, W = 2, 4, 16, 16          # rgb/t each (2, 4, 16, 16) NCHW
    in_c = 2 * Cmod                       # channels of cat((rgb, t), dim=1)
    scales = (1, 3, 5, 7)

    rgb = jax.random.normal(k_rgb, (N, Cmod, H, W), jnp.float32)
    t = jax.random.normal(k_t, (N, Cmod, H, W), jnp.float32)
    params = init_params(k_p, in_c, scales)

    fwd = build_forward(params, N, H, W)
    out = jax.block_until_ready(fwd(rgb, t))
    assert out.shape == (N, in_c // 2, H, W)

    ref = reference_forward(params, rgb, t)
    kind = _device_kind()
    tol = 5e-3 if (("v6" in kind) or ("v7" in kind)) else 2e-3  # bf16 MXU headroom
    np.testing.assert_allclose(np.asarray(out), np.asarray(ref), atol=tol, rtol=tol)

    print("KERNEL_OK")
</pallas_src>

<mosaic_0001>
module attributes {stable_mosaic.version = 11 : i64} {
  func.func @_fused_kernel(%arg0: i32, %arg1: memref<2x16x128xf32, #tpu.memory_space<vmem>>, %arg2: memref<4x7x7x128xf32, #tpu.memory_space<vmem>>, %arg3: memref<4x128xf32, #tpu.memory_space<vmem>>, %arg4: memref<512x128xf32, #tpu.memory_space<vmem>>, %arg5: memref<1x128xf32, #tpu.memory_space<vmem>>, %arg6: memref<2x16x128xf32, #tpu.memory_space<vmem>>, %arg7: memref<32x384xf32, #tpu.memory_space<vmem>>) attributes {dimension_semantics = [#tpu.dimension_semantics<parallel>], iteration_bounds = array<i64: 1>, scalar_prefetch = 0 : i64, scratch_operands = 1 : i64, tpu.core_type = #tpu.core_type<tc>, window_params = [{transform_indices = @transform_0, window_bounds = array<i64: 2, 16, 128>}, {pipeline_mode = #tpu.pipeline_mode<synchronous>, transform_indices = @transform_1, window_bounds = array<i64: 4, 7, 7, 128>}, {pipeline_mode = #tpu.pipeline_mode<synchronous>, transform_indices = @transform_2, window_bounds = array<i64: 4, 128>}, {pipeline_mode = #tpu.pipeline_mode<synchronous>, transform_indices = @transform_3, window_bounds = array<i64: 512, 128>}, {pipeline_mode = #tpu.pipeline_mode<synchronous>, transform_indices = @transform_4, window_bounds = array<i64: 1, 128>}, {transform_indices = @transform_5, window_bounds = array<i64: 2, 16, 128>}]} {
    %c0 = arith.constant 0 : index
    %c0_0 = arith.constant 0 : index
    %0 = vector.load %arg4[%c0, %c0_0] : memref<512x128xf32, #tpu.memory_space<vmem>>, vector<512x128xf32>
    %c0_1 = arith.constant 0 : index
    %c0_2 = arith.constant 0 : index
    %1 = vector.load %arg5[%c0_1, %c0_2] : memref<1x128xf32, #tpu.memory_space<vmem>>, vector<1x128xf32>
    %2 = vector.shape_cast %1 : vector<1x128xf32> to vector<128xf32>
    %cst = arith.constant 0.000000e+00 : f32
    %3 = vector.broadcast %cst : f32 to vector<32x384xf32>
    %c0_3 = arith.constant 0 : index
    %c0_4 = arith.constant 0 : index
    %4 = vector.load %arg7[%c0_3, %c0_4] : memref<32x384xf32, #tpu.memory_space<vmem>>, vector<32x384xf32>
    tpu.vector_store %arg7[%c0_3, %c0_4], %3 {strides = array<i32>} : memref<32x384xf32, #tpu.memory_space<vmem>>, vector<32x384xf32>,
    %c0_5 = arith.constant 0 : index
    %c0_6 = arith.constant 0 : index
    %c0_7 = arith.constant 0 : index
    %5 = vector.load %arg1[%c0_5, %c0_6, %c0_7] : memref<2x16x128xf32, #tpu.memory_space<vmem>>, vector<1x16x128xf32>
    %6 = vector.shape_cast %5 : vector<1x16x128xf32> to vector<16x128xf32>
    %c8 = arith.constant 8 : index
    %c128 = arith.constant 128 : index
    %7 = vector.load %arg7[%c8, %c128] : memref<32x384xf32, #tpu.memory_space<vmem>>, vector<16x128xf32>
    tpu.vector_store %arg7[%c8, %c128], %6 {strides = array<i32>} : memref<32x384xf32, #tpu.memory_space<vmem>>, vector<16x128xf32>,
    %c0_8 = arith.constant 0 : index
    %c0_9 = arith.constant 0 : index
    %8 = vector.load %arg7[%c0_8, %c0_9] : memref<32x384xf32, #tpu.memory_space<vmem>>, vector<32x384xf32>
    %9 = vector.extract_strided_slice %8 {offsets = [5, 104], sizes = [22, 128], strides = [1, 1]} : vector<32x384xf32> to vector<22x128xf32>
    %10 = vector.extract_strided_slice %8 {offsets = [5, 112], sizes = [22, 128], strides = [1, 1]} : vector<32x384xf32> to vector<22x128xf32>
    %11 = vector.extract_strided_slice %8 {offsets = [5, 120], sizes = [22, 128], strides = [1, 1]} : vector<32x384xf32> to vector<22x128xf32>
    %12 = vector.extract_strided_slice %8 {offsets = [5, 128], sizes = [22, 128], strides = [1, 1]} : vector<32x384xf32> to vector<22x128xf32>
    %13 = vector.extract_strided_slice %8 {offsets = [5, 136], sizes = [22, 128], strides = [1, 1]} : vector<32x384xf32> to vector<22x128xf32>
    %14 = vector.extract_strided_slice %8 {offsets = [5, 144], sizes = [22, 128], strides = [1, 1]} : vector<32x384xf32> to vector<22x128xf32>
    %15 = vector.extract_strided_slice %8 {offsets = [5, 152], sizes = [22, 128], strides = [1, 1]} : vector<32x384xf32> to vector<22x128xf32>
    %c0_10 = arith.constant 0 : index
    %c0_11 = arith.constant 0 : index
    %c0_12 = arith.constant 0 : index
    %c0_13 = arith.constant 0 : index
    %16 = vector.load %arg2[%c0_10, %c0_11, %c0_12, %c0_13] : memref<4x7x7x128xf32, #tpu.memory_space<vmem>>, vector<1x7x7x128xf32>
    %17 = vector.shape_cast %16 : vector<1x7x7x128xf32> to vector<7x7x128xf32>
    %c0_14 = arith.constant 0 : index
    %c0_15 = arith.constant 0 : index
    %18 = vector.load %arg3[%c0_14, %c0_15] : memref<4x128xf32, #tpu.memory_space<vmem>>, vector<1x128xf32>
    %19 = vector.shape_cast %18 : vector<1x128xf32> to vector<128xf32>
    %20 = vector.extract_strided_slice %17 {offsets = [3, 3, 0], sizes = [1, 1, 128], strides = [1, 1, 1]} : vector<7x7x128xf32> to vector<1x1x128xf32>
    %21 = vector.shape_cast %20 : vector<1x1x128xf32> to vector<128xf32>
    %22 = vector.shape_cast %21 : vector<128xf32> to vector<1x128xf32>
    %23 = vector.broadcast %22 : vector<1x128xf32> to vector<22x128xf32>
    %24 = arith.mulf %12, %23 : vector<22x128xf32>
    %25 = vector.extract_strided_slice %24 {offsets = [3, 0], sizes = [16, 128], strides = [1, 1]} : vector<22x128xf32> to vector<16x128xf32>
    %26 = vector.shape_cast %19 : vector<128xf32> to vector<1x128xf32>
    %27 = vector.broadcast %26 : vector<1x128xf32> to vector<16x128xf32>
    %28 = arith.addf %25, %27 : vector<16x128xf32>
    %cst_16 = arith.constant 0.000000e+00 : f32
    %cst_17 = arith.constant 6.000000e+00 : f32
    %29 = vector.broadcast %cst_16 : f32 to vector<16x128xf32>
    %30 = arith.maximumf %29, %28 : vector<16x128xf32>
    %31 = vector.broadcast %cst_17 : f32 to vector<16x128xf32>
    %32 = arith.minimumf %31, %30 : vector<16x128xf32>
    %c1 = arith.constant 1 : index
    %c0_18 = arith.constant 0 : index
    %c0_19 = arith.constant 0 : index
    %c0_20 = arith.constant 0 : index
    %33 = vector.load %arg2[%c1, %c0_18, %c0_19, %c0_20] : memref<4x7x7x128xf32, #tpu.memory_space<vmem>>, vector<1x7x7x128xf32>
    %34 = vector.shape_cast %33 : vector<1x7x7x128xf32> to vector<7x7x128xf32>
    %c1_21 = arith.constant 1 : index
    %c0_22 = arith.constant 0 : index
    %35 = vector.load %arg3[%c1_21, %c0_22] : memref<4x128xf32, #tpu.memory_space<vmem>>, vector<1x128xf32>
    %36 = vector.shape_cast %35 : vector<1x128xf32> to vector<128xf32>
    %37 = vector.extract_strided_slice %34 {offsets = [2, 2, 0], sizes = [1, 1, 128], strides = [1, 1, 1]} : vector<7x7x128xf32> to vector<1x1x128xf32>
    %38 = vector.shape_cast %37 : vector<1x1x128xf32> to vector<128xf32>
    %39 = vector.shape_cast %38 : vector<128xf32> to vector<1x128xf32>
    %40 = vector.broadcast %39 : vector<1x128xf32> to vector<22x128xf32>
    %41 = arith.mulf %11, %40 : vector<22x128xf32>
    %42 = vector.extract_strided_slice %34 {offsets = [2, 3, 0], sizes = [1, 1, 128], strides = [1, 1, 1]} : vector<7x7x128xf32> to vector<1x1x128xf32>
    %43 = vector.shape_cast %42 : vector<1x1x128xf32> to vector<128xf32>
    %44 = vector.shape_cast %43 : vector<128xf32> to vector<1x128xf32>
    %45 = vector.broadcast %44 : vector<1x128xf32> to vector<22x128xf32>
    %46 = arith.mulf %12, %45 : vector<22x128xf32>
    %47 = vector.extract_strided_slice %34 {offsets = [2, 4, 0], sizes = [1, 1, 128], strides = [1, 1, 1]} : vector<7x7x128xf32> to vector<1x1x128xf32>
    %48 = vector.shape_cast %47 : vector<1x1x128xf32> to vector<128xf32>
    %49 = vector.shape_cast %48 : vector<128xf32> to vector<1x128xf32>
    %50 = vector.broadcast %49 : vector<1x128xf32> to vector<22x128xf32>
    %51 = arith.mulf %13, %50 : vector<22x128xf32>
    %52 = arith.addf %41, %46 : vector<22x128xf32>
    %53 = arith.addf %52, %51 : vector<22x128xf32>
    %54 = vector.extract_strided_slice %53 {offsets = [2, 0], sizes = [16, 128], strides = [1, 1]} : vector<22x128xf32> to vector<16x128xf32>
    %55 = vector.extract_strided_slice %34 {offsets = [3, 2, 0], sizes = [1, 1, 128], strides = [1, 1, 1]} : vector<7x7x128xf32> to vector<1x1x128xf32>
    %56 = vector.shape_cast %55 : vector<1x1x128xf32> to vector<128xf32>
    %57 = vector.shape_cast %56 : vector<128xf32> to vector<1x128xf32>
    %58 = vector.broadcast %57 : vector<1x128xf32> to vector<22x128xf32>
    %59 = arith.mulf %11, %58 : vector<22x128xf32>
    %60 = vector.extract_strided_slice %34 {offsets = [3, 3, 0], sizes = [1, 1, 128], strides = [1, 1, 1]} : vector<7x7x128xf32> to vector<1x1x128xf32>
    %61 = vector.shape_cast %60 : vector<1x1x128xf32> to vector<128xf32>
    %62 = vector.shape_cast %61 : vector<128xf32> to vector<1x128xf32>
    %63 = vector.broadcast %62 : vector<1x128xf32> to vector<22x128xf32>
    %64 = arith.mulf %12, %63 : vector<22x128xf32>
    %65 = vector.extract_strided_slice %34 {offsets = [3, 4, 0], sizes = [1, 1, 128], strides = [1, 1, 1]} : vector<7x7x128xf32> to vector<1x1x128xf32>
    %66 = vector.shape_cast %65 : vector<1x1x128xf32> to vector<128xf32>
    %67 = vector.shape_cast %66 : vector<128xf32> to vector<1x128xf32>
    %68 = vector.broadcast %67 : vector<1x128xf32> to vector<22x128xf32>
    %69 = arith.mulf %13, %68 : vector<22x128xf32>
    %70 = arith.addf %59, %64 : vector<22x128xf32>
    %71 = arith.addf %70, %69 : vector<22x128xf32>
    %72 = vector.extract_strided_slice %71 {offsets = [3, 0], sizes = [16, 128], strides = [1, 1]} : vector<22x128xf32> to vector<16x128xf32>
    %73 = vector.extract_strided_slice %34 {offsets = [4, 2, 0], sizes = [1, 1, 128], strides = [1, 1, 1]} : vector<7x7x128xf32> to vector<1x1x128xf32>
    %74 = vector.shape_cast %73 : vector<1x1x128xf32> to vector<128xf32>
    %75 = vector.shape_cast %74 : vector<128xf32> to vector<1x128xf32>
    %76 = vector.broadcast %75 : vector<1x128xf32> to vector<22x128xf32>
    %77 = arith.mulf %11, %76 : vector<22x128xf32>
    %78 = vector.extract_strided_slice %34 {offsets = [4, 3, 0], sizes = [1, 1, 128], strides = [1, 1, 1]} : vector<7x7x128xf32> to vector<1x1x128xf32>
    %79 = vector.shape_cast %78 : vector<1x1x128xf32> to vector<128xf32>
    %80 = vector.shape_cast %79 : vector<128xf32> to vector<1x128xf32>
    %81 = vector.broadcast %80 : vector<1x128xf32> to vector<22x128xf32>
    %82 = arith.mulf %12, %81 : vector<22x128xf32>
    %83 = vector.extract_strided_slice %34 {offsets = [4, 4, 0], sizes = [1, 1, 128], strides = [1, 1, 1]} : vector<7x7x128xf32> to vector<1x1x128xf32>
    %84 = vector.shape_cast %83 : vector<1x1x128xf32> to vector<128xf32>
    %85 = vector.shape_cast %84 : vector<128xf32> to vector<1x128xf32>
    %86 = vector.broadcast %85 : vector<1x128xf32> to vector<22x128xf32>
    %87 = arith.mulf %13, %86 : vector<22x128xf32>
    %88 = arith.addf %77, %82 : vector<22x128xf32>
    %89 = arith.addf %88, %87 : vector<22x128xf32>
    %90 = vector.extract_strided_slice %89 {offsets = [4, 0], sizes = [16, 128], strides = [1, 1]} : vector<22x128xf32> to vector<16x128xf32>
    %91 = arith.addf %54, %72 : vector<16x128xf32>
    %92 = arith.addf %91, %90 : vector<16x128xf32>
    %93 = vector.shape_cast %36 : vector<128xf32> to vector<1x128xf32>
    %94 = vector.broadcast %93 : vector<1x128xf32> to vector<16x128xf32>
    %95 = arith.addf %92, %94 : vector<16x128xf32>
    %cst_23 = arith.constant 0.000000e+00 : f32
    %cst_24 = arith.constant 6.000000e+00 : f32
    %96 = vector.broadcast %cst_23 : f32 to vector<16x128xf32>
    %97 = arith.maximumf %96, %95 : vector<16x128xf32>
    %98 = vector.broadcast %cst_24 : f32 to vector<16x128xf32>
    %99 = arith.minimumf %98, %97 : vector<16x128xf32>
    %c2 = arith.constant 2 : index
    %c0_25 = arith.constant 0 : index
    %c0_26 = arith.constant 0 : index
    %c0_27 = arith.constant 0 : index
    %100 = vector.load %arg2[%c2, %c0_25, %c0_26, %c0_27] : memref<4x7x7x128xf32, #tpu.memory_space<vmem>>, vector<1x7x7x128xf32>
    %101 = vector.shape_cast %100 : vector<1x7x7x128xf32> to vector<7x7x128xf32>
    %c2_28 = arith.constant 2 : index
    %c0_29 = arith.constant 0 : index
    %102 = vector.load %arg3[%c2_28, %c0_29] : memref<4x128xf32, #tpu.memory_space<vmem>>, vector<1x128xf32>
    %103 = vector.shape_cast %102 : vector<1x128xf32> to vector<128xf32>
    %104 = vector.extract_strided_slice %101 {offsets = [1, 1, 0], sizes = [1, 1, 128], strides = [1, 1, 1]} : vector<7x7x128xf32> to vector<1x1x128xf32>
    %105 = vector.shape_cast %104 : vector<1x1x128xf32> to vector<128xf32>
    %106 = vector.shape_cast %105 : vector<128xf32> to vector<1x128xf32>
    %107 = vector.broadcast %106 : vector<1x128xf32> to vector<22x128xf32>
    %108 = arith.mulf %10, %107 : vector<22x128xf32>
    %109 = vector.extract_strided_slice %101 {offsets = [1, 2, 0], sizes = [1, 1, 128], strides = [1, 1, 1]} : vector<7x7x128xf32> to vector<1x1x128xf32>
    %110 = vector.shape_cast %109 : vector<1x1x128xf32> to vector<128xf32>
    %111 = vector.shape_cast %110 : vector<128xf32> to vector<1x128xf32>
    %112 = vector.broadcast %111 : vector<1x128xf32> to vector<22x128xf32>
    %113 = arith.mulf %11, %112 : vector<22x128xf32>
    %114 = vector.extract_strided_slice %101 {offsets = [1, 3, 0], sizes = [1, 1, 128], strides = [1, 1, 1]} : vector<7x7x128xf32> to vector<1x1x128xf32>
    %115 = vector.shape_cast %114 : vector<1x1x128xf32> to vector<128xf32>
    %116 = vector.shape_cast %115 : vector<128xf32> to vector<1x128xf32>
    %117 = vector.broadcast %116 : vector<1x128xf32> to vector<22x128xf32>
    %118 = arith.mulf %12, %117 : vector<22x128xf32>
    %119 = vector.extract_strided_slice %101 {offsets = [1, 4, 0], sizes = [1, 1, 128], strides = [1, 1, 1]} : vector<7x7x128xf32> to vector<1x1x128xf32>
    %120 = vector.shape_cast %119 : vector<1x1x128xf32> to vector<128xf32>
    %121 = vector.shape_cast %120 : vector<128xf32> to vector<1x128xf32>
    %122 = vector.broadcast %121 : vector<1x128xf32> to vector<22x128xf32>
    %123 = arith.mulf %13, %122 : vector<22x128xf32>
    %124 = vector.extract_strided_slice %101 {offsets = [1, 5, 0], sizes = [1, 1, 128], strides = [1, 1, 1]} : vector<7x7x128xf32> to vector<1x1x128xf32>
    %125 = vector.shape_cast %124 : vector<1x1x128xf32> to vector<128xf32>
    %126 = vector.shape_cast %125 : vector<128xf32> to vector<1x128xf32>
    %127 = vector.broadcast %126 : vector<1x128xf32> to vector<22x128xf32>
    %128 = arith.mulf %14, %127 : vector<22x128xf32>
    %129 = arith.addf %108, %113 : vector<22x128xf32>
    %130 = arith.addf %118, %123 : vector<22x128xf32>
    %131 = arith.addf %129, %130 : vector<22x128xf32>
    %132 = arith.addf %131, %128 : vector<22x128xf32>
    %133 = vector.extract_strided_slice %132 {offsets = [1, 0], sizes = [16, 128], strides = [1, 1]} : vector<22x128xf32> to vector<16x128xf32>
    %134 = vector.extract_strided_slice %101 {offsets = [2, 1, 0], sizes = [1, 1, 128], strides = [1, 1, 1]} : vector<7x7x128xf32> to vector<1x1x128xf32>
    %135 = vector.shape_cast %134 : vector<1x1x128xf32> to vector<128xf32>
    %136 = vector.shape_cast %135 : vector<128xf32> to vector<1x128xf32>
    %137 = vector.broadcast %136 : vector<1x128xf32> to vector<22x128xf32>
    %138 = arith.mulf %10, %137 : vector<22x128xf32>
    %139 = vector.extract_strided_slice %101 {offsets = [2, 2, 0], sizes = [1, 1, 128], strides = [1, 1, 1]} : vector<7x7x128xf32> to vector<1x1x128xf32>
    %140 = vector.shape_cast %139 : vector<1x1x128xf32> to vector<128xf32>
    %141 = vector.shape_cast %140 : vector<128xf32> to vector<1x128xf32>
    %142 = vector.broadcast %141 : vector<1x128xf32> to vector<22x128xf32>
    %143 = arith.mulf %11, %142 : vector<22x128xf32>
    %144 = vector.extract_strided_slice %101 {offsets = [2, 3, 0], sizes = [1, 1, 128], strides = [1, 1, 1]} : vector<7x7x128xf32> to vector<1x1x128xf32>
    %145 = vector.shape_cast %144 : vector<1x1x128xf32> to vector<128xf32>
    %146 = vector.shape_cast %145 : vector<128xf32> to vector<1x128xf32>
    %147 = vector.broadcast %146 : vector<1x128xf32> to vector<22x128xf32>
    %148 = arith.mulf %12, %147 : vector<22x128xf32>
    %149 = vector.extract_strided_slice %101 {offsets = [2, 4, 0], sizes = [1, 1, 128], strides = [1, 1, 1]} : vector<7x7x128xf32> to vector<1x1x128xf32>
    %150 = vector.shape_cast %149 : vector<1x1x128xf32> to vector<128xf32>
    %151 = vector.shape_cast %150 : vector<128xf32> to vector<1x128xf32>
    %152 = vector.broadcast %151 : vector<1x128xf32> to vector<22x128xf32>
    %153 = arith.mulf %13, %152 : vector<22x128xf32>
    %154 = vector.extract_strided_slice %101 {offsets = [2, 5, 0], sizes = [1, 1, 128], strides = [1, 1, 1]} : vector<7x7x128xf32> to vector<1x1x128xf32>
    %155 = vector.shape_cast %154 : vector<1x1x128xf32> to vector<128xf32>
    %156 = vector.shape_cast %155 : vector<128xf32> to vector<1x128xf32>
    %157 = vector.broadcast %156 : vector<1x128xf32> to vector<22x128xf32>
    %158 = arith.mulf %14, %157 : vector<22x128xf32>
    %159 = arith.addf %138, %143 : vector<22x128xf32>
    %160 = arith.addf %148, %153 : vector<22x128xf32>
    %161 = arith.addf %159, %160 : vector<22x128xf32>
    %162 = arith.addf %161, %158 : vector<22x128xf32>
    %163 = vector.extract_strided_slice %162 {offsets = [2, 0], sizes = [16, 128], strides = [1, 1]} : vector<22x128xf32> to vector<16x128xf32>
    %164 = vector.extract_strided_slice %101 {offsets = [3, 1, 0], sizes = [1, 1, 128], strides = [1, 1, 1]} : vector<7x7x128xf32> to vector<1x1x128xf32>
    %165 = vector.shape_cast %164 : vector<1x1x128xf32> to vector<128xf32>
    %166 = vector.shape_cast %165 : vector<128xf32> to vector<1x128xf32>
    %167 = vector.broadcast %166 : vector<1x128xf32> to vector<22x128xf32>
    %168 = arith.mulf %10, %167 : vector<22x128xf32>
    %169 = vector.extract_strided_slice %101 {offsets = [3, 2, 0], sizes = [1, 1, 128], strides = [1, 1, 1]} : vector<7x7x128xf32> to vector<1x1x128xf32>
    %170 = vector.shape_cast %169 : vector<1x1x128xf32> to vector<128xf32>
    %171 = vector.shape_cast %170 : vector<128xf32> to vector<1x128xf32>
    %172 = vector.broadcast %171 : vector<1x128xf32> to vector<22x128xf32>
    %173 = arith.mulf %11, %172 : vector<22x128xf32>
    %174 = vector.extract_strided_slice %101 {offsets = [3, 3, 0], sizes = [1, 1, 128], strides = [1, 1, 1]} : vector<7x7x128xf32> to vector<1x1x128xf32>
    %175 = vector.shape_cast %174 : vector<1x1x128xf32> to vector<128xf32>
    %176 = vector.shape_cast %175 : vector<128xf32> to vector<1x128xf32>
    %177 = vector.broadcast %176 : vector<1x128xf32> to vector<22x128xf32>
    %178 = arith.mulf %12, %177 : vector<22x128xf32>
    %179 = vector.extract_strided_slice %101 {offsets = [3, 4, 0], sizes = [1, 1, 128], strides = [1, 1, 1]} : vector<7x7x128xf32> to vector<1x1x128xf32>
    %180 = vector.shape_cast %179 : vector<1x1x128xf32> to vector<128xf32>
    %181 = vector.shape_cast %180 : vector<128xf32> to vector<1x128xf32>
    %182 = vector.broadcast %181 : vector<1x128xf32> to vector<22x128xf32>
    %183 = arith.mulf %13, %182 : vector<22x128xf32>
    %184 = vector.extract_strided_slice %101 {offsets = [3, 5, 0], sizes = [1, 1, 128], strides = [1, 1, 1]} : vector<7x7x128xf32> to vector<1x1x128xf32>
    %185 = vector.shape_cast %184 : vector<1x1x128xf32> to vector<128xf32>
    %186 = vector.shape_cast %185 : vector<128xf32> to vector<1x128xf32>
    %187 = vector.broadcast %186 : vector<1x128xf32> to vector<22x128xf32>
    %188 = arith.mulf %14, %187 : vector<22x128xf32>
    %189 = arith.addf %168, %173 : vector<22x128xf32>
    %190 = arith.addf %178, %183 : vector<22x128xf32>
    %191 = arith.addf %189, %190 : vector<22x128xf32>
    %192 = arith.addf %191, %188 : vector<22x128xf32>
    %193 = vector.extract_strided_slice %192 {offsets = [3, 0], sizes = [16, 128], strides = [1, 1]} : vector<22x128xf32> to vector<16x128xf32>
    %194 = vector.extract_strided_slice %101 {offsets = [4, 1, 0], sizes = [1, 1, 128], strides = [1, 1, 1]} : vector<7x7x128xf32> to vector<1x1x128xf32>
    %195 = vector.shape_cast %194 : vector<1x1x128xf32> to vector<128xf32>
    %196 = vector.shape_cast %195 : vector<128xf32> to vector<1x128xf32>
    %197 = vector.broadcast %196 : vector<1x128xf32> to vector<22x128xf32>
    %198 = arith.mulf %10, %197 : vector<22x128xf32>
    %199 = vector.extract_strided_slice %101 {offsets = [4, 2, 0], sizes = [1, 1, 128], strides = [1, 1, 1]} : vector<7x7x128xf32> to vector<1x1x128xf32>
    %200 = vector.shape_cast %199 : vector<1x1x128xf32> to vector<128xf32>
    %201 = vector.shape_cast %200 : vector<128xf32> to vector<1x128xf32>
    %202 = vector.broadcast %201 : vector<1x128xf32> to vector<22x128xf32>
    %203 = arith.mulf %11, %202 : vector<22x128xf32>
    %204 = vector.extract_strided_slice %101 {offsets = [4, 3, 0], sizes = [1, 1, 128], strides = [1, 1, 1]} : vector<7x7x128xf32> to vector<1x1x128xf32>
    %205 = vector.shape_cast %204 : vector<1x1x128xf32> to vector<128xf32>
    %206 = vector.shape_cast %205 : vector<128xf32> to vector<1x128xf32>
    %207 = vector.broadcast %206 : vector<1x128xf32> to vector<22x128xf32>
    %208 = arith.mulf %12, %207 : vector<22x128xf32>
    %209 = vector.extract_strided_slice %101 {offsets = [4, 4, 0], sizes = [1, 1, 128], strides = [1, 1, 1]} : vector<7x7x128xf32> to vector<1x1x128xf32>
    %210 = vector.shape_cast %209 : vector<1x1x128xf32> to vector<128xf32>
    %211 = vector.shape_cast %210 : vector<128xf32> to vector<1x128xf32>
    %212 = vector.broadcast %211 : vector<1x128xf32> to vector<22x128xf32>
    %213 = arith.mulf %13, %212 : vector<22x128xf32>
    %214 = vector.extract_strided_slice %101 {offsets = [4, 5, 0], sizes = [1, 1, 128], strides = [1, 1, 1]} : vector<7x7x128xf32> to vector<1x1x128xf32>
    %215 = vector.shape_cast %214 : vector<1x1x128xf32> to vector<128xf32>
    %216 = vector.shape_cast %215 : vector<128xf32> to vector<1x128xf32>
    %217 = vector.broadcast %216 : vector<1x128xf32> to vector<22x128xf32>
    %218 = arith.mulf %14, %217 : vector<22x128xf32>
    %219 = arith.addf %198, %203 : vector<22x128xf32>
    %220 = arith.addf %208, %213 : vector<22x128xf32>
    %221 = arith.addf %219, %220 : vector<22x128xf32>
    %222 = arith.addf %221, %218 : vector<22x128xf32>
    %223 = vector.extract_strided_slice %222 {offsets = [4, 0], sizes = [16, 128], strides = [1, 1]} : vector<22x128xf32> to vector<16x128xf32>
    %224 = vector.extract_strided_slice %101 {offsets = [5, 1, 0], sizes = [1, 1, 128], strides = [1, 1, 1]} : vector<7x7x128xf32> to vector<1x1x128xf32>
    %225 = vector.shape_cast %224 : vector<1x1x128xf32> to vector<128xf32>
    %226 = vector.shape_cast %225 : vector<128xf32> to vector<1x128xf32>
    %227 = vector.broadcast %226 : vector<1x128xf32> to vector<22x128xf32>
    %228 = arith.mulf %10, %227 : vector<22x128xf32>
    %229 = vector.extract_strided_slice %101 {offsets = [5, 2, 0], sizes = [1, 1, 128], strides = [1, 1, 1]} : vector<7x7x128xf32> to vector<1x1x128xf32>
    %230 = vector.shape_cast %229 : vector<1x1x128xf32> to vector<128xf32>
    %231 = vector.shape_cast %230 : vector<128xf32> to vector<1x128xf32>
    %232 = vector.broadcast %231 : vector<1x128xf32> to vector<22x128xf32>
    %233 = arith.mulf %11, %232 : vector<22x128xf32>
    %234 = vector.extract_strided_slice %101 {offsets = [5, 3, 0], sizes = [1, 1, 128], strides = [1, 1, 1]} : vector<7x7x128xf32> to vector<1x1x128xf32>
    %235 = vector.shape_cast %234 : vector<1x1x128xf32> to vector<128xf32>
    %236 = vector.shape_cast %235 : vector<128xf32> to vector<1x128xf32>
    %237 = vector.broadcast %236 : vector<1x128xf32> to vector<22x128xf32>
    %238 = arith.mulf %12, %237 : vector<22x128xf32>
    %239 = vector.extract_strided_slice %101 {offsets = [5, 4, 0], sizes = [1, 1, 128], strides = [1, 1, 1]} : vector<7x7x128xf32> to vector<1x1x128xf32>
    %240 = vector.shape_cast %239 : vector<1x1x128xf32> to vector<128xf32>
    %241 = vector.shape_cast %240 : vector<128xf32> to vector<1x128xf32>
    %242 = vector.broadcast %241 : vector<1x128xf32> to vector<22x128xf32>
    %243 = arith.mulf %13, %242 : vector<22x128xf32>
    %244 = vector.extract_strided_slice %101 {offsets = [5, 5, 0], sizes = [1, 1, 128], strides = [1, 1, 1]} : vector<7x7x128xf32> to vector<1x1x128xf32>
    %245 = vector.shape_cast %244 : vector<1x1x128xf32> to vector<128xf32>
    %246 = vector.shape_cast %245 : vector<128xf32> to vector<1x128xf32>
    %247 = vector.broadcast %246 : vector<1x128xf32> to vector<22x128xf32>
    %248 = arith.mulf %14, %247 : vector<22x128xf32>
    %249 = arith.addf %228, %233 : vector<22x128xf32>
    %250 = arith.addf %238, %243 : vector<22x128xf32>
    %251 = arith.addf %249, %250 : vector<22x128xf32>
    %252 = arith.addf %251, %248 : vector<22x128xf32>
    %253 = vector.extract_strided_slice %252 {offsets = [5, 0], sizes = [16, 128], strides = [1, 1]} : vector<22x128xf32> to vector<16x128xf32>
    %254 = arith.addf %133, %163 : vector<16x128xf32>
    %255 = arith.addf %193, %223 : vector<16x128xf32>
    %256 = arith.addf %254, %255 : vector<16x128xf32>
    %257 = arith.addf %256, %253 : vector<16x128xf32>
    %258 = vector.shape_cast %103 : vector<128xf32> to vector<1x128xf32>
    %259 = vector.broadcast %258 : vector<1x128xf32> to vector<16x128xf32>
    %260 = arith.addf %257, %259 : vector<16x128xf32>
    %cst_30 = arith.constant 0.000000e+00 : f32
    %cst_31 = arith.constant 6.000000e+00 : f32
    %261 = vector.broadcast %cst_30 : f32 to vector<16x128xf32>
    %262 = arith.maximumf %261, %260 : vector<16x128xf32>
    %263 = vector.broadcast %cst_31 : f32 to vector<16x128xf32>
    %264 = arith.minimumf %263, %262 : vector<16x128xf32>
    %c3 = arith.constant 3 : index
    %c0_32 = arith.constant 0 : index
    %c0_33 = arith.constant 0 : index
    %c0_34 = arith.constant 0 : index
    %265 = vector.load %arg2[%c3, %c0_32, %c0_33, %c0_34] : memref<4x7x7x128xf32, #tpu.memory_space<vmem>>, vector<1x7x7x128xf32>
    %266 = vector.shape_cast %265 : vector<1x7x7x128xf32> to vector<7x7x128xf32>
    %c3_35 = arith.constant 3 : index
    %c0_36 = arith.constant 0 : index
    %267 = vector.load %arg3[%c3_35, %c0_36] : memref<4x128xf32, #tpu.memory_space<vmem>>, vector<1x128xf32>
    %268 = vector.shape_cast %267 : vector<1x128xf32> to vector<128xf32>
    %269 = vector.extract_strided_slice %266 {offsets = [0, 0, 0], sizes = [1, 1, 128], strides = [1, 1, 1]} : vector<7x7x128xf32> to vector<1x1x128xf32>
    %270 = vector.shape_cast %269 : vector<1x1x128xf32> to vector<128xf32>
    %271 = vector.shape_cast %270 : vector<128xf32> to vector<1x128xf32>
    %272 = vector.broadcast %271 : vector<1x128xf32> to vector<22x128xf32>
    %273 = arith.mulf %9, %272 : vector<22x128xf32>
    %274 = vector.extract_strided_slice %266 {offsets = [0, 1, 0], sizes = [1, 1, 128], strides = [1, 1, 1]} : vector<7x7x128xf32> to vector<1x1x128xf32>
    %275 = vector.shape_cast %274 : vector<1x1x128xf32> to vector<128xf32>
    %276 = vector.shape_cast %275 : vector<128xf32> to vector<1x128xf32>
    %277 = vector.broadcast %276 : vector<1x128xf32> to vector<22x128xf32>
    %278 = arith.mulf %10, %277 : vector<22x128xf32>
    %279 = vector.extract_strided_slice %266 {offsets = [0, 2, 0], sizes = [1, 1, 128], strides = [1, 1, 1]} : vector<7x7x128xf32> to vector<1x1x128xf32>
    %280 = vector.shape_cast %279 : vector<1x1x128xf32> to vector<128xf32>
    %281 = vector.shape_cast %280 : vector<128xf32> to vector<1x128xf32>
    %282 = vector.broadcast %281 : vector<1x128xf32> to vector<22x128xf32>
    %283 = arith.mulf %11, %282 : vector<22x128xf32>
    %284 = vector.extract_strided_slice %266 {offsets = [0, 3, 0], sizes = [1, 1, 128], strides = [1, 1, 1]} : vector<7x7x128xf32> to vector<1x1x128xf32>
    %285 = vector.shape_cast %284 : vector<1x1x128xf32> to vector<128xf32>
    %286 = vector.shape_cast %285 : vector<128xf32> to vector<1x128xf32>
    %287 = vector.broadcast %286 : vector<1x128xf32> to vector<22x128xf32>
    %288 = arith.mulf %12, %287 : vector<22x128xf32>
    %289 = vector.extract_strided_slice %266 {offsets = [0, 4, 0], sizes = [1, 1, 128], strides = [1, 1, 1]} : vector<7x7x128xf32> to vector<1x1x128xf32>
    %290 = vector.shape_cast %289 : vector<1x1x128xf32> to vector<128xf32>
    %291 = vector.shape_cast %290 : vector<128xf32> to vector<1x128xf32>
    %292 = vector.broadcast %291 : vector<1x128xf32> to vector<22x128xf32>
    %293 = arith.mulf %13, %292 : vector<22x128xf32>
    %294 = vector.extract_strided_slice %266 {offsets = [0, 5, 0], sizes = [1, 1, 128], strides = [1, 1, 1]} : vector<7x7x128xf32> to vector<1x1x128xf32>
    %295 = vector.shape_cast %294 : vector<1x1x128xf32> to vector<128xf32>
    %296 = vector.shape_cast %295 : vector<128xf32> to vector<1x128xf32>
    %297 = vector.broadcast %296 : vector<1x128xf32> to vector<22x128xf32>
    %298 = arith.mulf %14, %297 : vector<22x128xf32>
    %299 = vector.extract_strided_slice %266 {offsets = [0, 6, 0], sizes = [1, 1, 128], strides = [1, 1, 1]} : vector<7x7x128xf32> to vector<1x1x128xf32>
    %300 = vector.shape_cast %299 : vector<1x1x128xf32> to vector<128xf32>
    %301 = vector.shape_cast %300 : vector<128xf32> to vector<1x128xf32>
    %302 = vector.broadcast %301 : vector<1x128xf32> to vector<22x128xf32>
    %303 = arith.mulf %15, %302 : vector<22x128xf32>
    %304 = arith.addf %273, %278 : vector<22x128xf32>
    %305 = arith.addf %283, %288 : vector<22x128xf32>
    %306 = arith.addf %293, %298 : vector<22x128xf32>
    %307 = arith.addf %304, %305 : vector<22x128xf32>
    %308 = arith.addf %306, %303 : vector<22x128xf32>
    %309 = arith.addf %307, %308 : vector<22x128xf32>
    %310 = vector.extract_strided_slice %309 {offsets = [0, 0], sizes = [16, 128], strides = [1, 1]} : vector<22x128xf32> to vector<16x128xf32>
    %311 = vector.extract_strided_slice %266 {offsets = [1, 0, 0], sizes = [1, 1, 128], strides = [1, 1, 1]} : vector<7x7x128xf32> to vector<1x1x128xf32>
    %312 = vector.shape_cast %311 : vector<1x1x128xf32> to vector<128xf32>
    %313 = vector.shape_cast %312 : vector<128xf32> to vector<1x128xf32>
    %314 = vector.broadcast %313 : vector<1x128xf32> to vector<22x128xf32>
    %315 = arith.mulf %9, %314 : vector<22x128xf32>
    %316 = vector.extract_strided_slice %266 {offsets = [1, 1, 0], sizes = [1, 1, 128], strides = [1, 1, 1]} : vector<7x7x128xf32> to vector<1x1x128xf32>
    %317 = vector.shape_cast %316 : vector<1x1x128xf32> to vector<128xf32>
    %318 = vector.shape_cast %317 : vector<128xf32> to vector<1x128xf32>
    %319 = vector.broadcast %318 : vector<1x128xf32> to vector<22x128xf32>
    %320 = arith.mulf %10, %319 : vector<22x128xf32>
    %321 = vector.extract_strided_slice %266 {offsets = [1, 2, 0], sizes = [1, 1, 128], strides = [1, 1, 1]} : vector<7x7x128xf32> to vector<1x1x128xf32>
    %322 = vector.shape_cast %321 : vector<1x1x128xf32> to vector<128xf32>
    %323 = vector.shape_cast %322 : vector<128xf32> to vector<1x128xf32>
    %324 = vector.broadcast %323 : vector<1x128xf32> to vector<22x128xf32>
    %325 = arith.mulf %11, %324 : vector<22x128xf32>
    %326 = vector.extract_strided_slice %266 {offsets = [1, 3, 0], sizes = [1, 1, 128], strides = [1, 1, 1]} : vector<7x7x128xf32> to vector<1x1x128xf32>
    %327 = vector.shape_cast %326 : vector<1x1x128xf32> to vector<128xf32>
    %328 = vector.shape_cast %327 : vector<128xf32> to vector<1x128xf32>
    %329 = vector.broadcast %328 : vector<1x128xf32> to vector<22x128xf32>
    %330 = arith.mulf %12, %329 : vector<22x128xf32>
    %331 = vector.extract_strided_slice %266 {offsets = [1, 4, 0], sizes = [1, 1, 128], strides = [1, 1, 1]} : vector<7x7x128xf32> to vector<1x1x128xf32>
    %332 = vector.shape_cast %331 : vector<1x1x128xf32> to vector<128xf32>
    %333 = vector.shape_cast %332 : vector<128xf32> to vector<1x128xf32>
    %334 = vector.broadcast %333 : vector<1x128xf32> to vector<22x128xf32>
    %335 = arith.mulf %13, %334 : vector<22x128xf32>
    %336 = vector.extract_strided_slice %266 {offsets = [1, 5, 0], sizes = [1, 1, 128], strides = [1, 1, 1]} : vector<7x7x128xf32> to vector<1x1x128xf32>
    %337 = vector.shape_cast %336 : vector<1x1x128xf32> to vector<128xf32>
    %338 = vector.shape_cast %337 : vector<128xf32> to vector<1x128xf32>
    %339 = vector.broadcast %338 : vector<1x128xf32> to vector<22x128xf32>
    %340 = arith.mulf %14, %339 : vector<22x128xf32>
    %341 = vector.extract_strided_slice %266 {offsets = [1, 6, 0], sizes = [1, 1, 128], strides = [1, 1, 1]} : vector<7x7x128xf32> to vector<1x1x128xf32>
    %342 = vector.shape_cast %341 : vector<1x1x128xf32> to vector<128xf32>
    %343 = vector.shape_cast %342 : vector<128xf32> to vector<1x128xf32>
    %344 = vector.broadcast %343 : vector<1x128xf32> to vector<22x128xf32>
    %345 = arith.mulf %15, %344 : vector<22x128xf32>
    %346 = arith.addf %315, %320 : vector<22x128xf32>
    %347 = arith.addf %325, %330 : vector<22x128xf32>
    %348 = arith.addf %335, %340 : vector<22x128xf32>
    %349 = arith.addf %346, %347 : vector<22x128xf32>
    %350 = arith.addf %348, %345 : vector<22x128xf32>
    %351 = arith.addf %349, %350 : vector<22x128xf32>
    %352 = vector.extract_strided_slice %351 {offsets = [1, 0], sizes = [16, 128], strides = [1, 1]} : vector<22x128xf32> to vector<16x128xf32>
    %353 = vector.extract_strided_slice %266 {offsets = [2, 0, 0], sizes = [1, 1, 128], strides = [1, 1, 1]} : vector<7x7x128xf32> to vector<1x1x128xf32>
    %354 = vector.shape_cast %353 : vector<1x1x128xf32> to vector<128xf32>
    %355 = vector.shape_cast %354 : vector<128xf32> to vector<1x128xf32>
    %356 = vector.broadcast %355 : vector<1x128xf32> to vector<22x128xf32>
    %357 = arith.mulf %9, %356 : vector<22x128xf32>
    %358 = vector.extract_strided_slice %266 {offsets = [2, 1, 0], sizes = [1, 1, 128], strides = [1, 1, 1]} : vector<7x7x128xf32> to vector<1x1x128xf32>
    %359 = vector.shape_cast %358 : vector<1x1x128xf32> to vector<128xf32>
    %360 = vector.shape_cast %359 : vector<128xf32> to vector<1x128xf32>
    %361 = vector.broadcast %360 : vector<1x128xf32> to vector<22x128xf32>
    %362 = arith.mulf %10, %361 : vector<22x128xf32>
    %363 = vector.extract_strided_slice %266 {offsets = [2, 2, 0], sizes = [1, 1, 128], strides = [1, 1, 1]} : vector<7x7x128xf32> to vector<1x1x128xf32>
    %364 = vector.shape_cast %363 : vector<1x1x128xf32> to vector<128xf32>
    %365 = vector.shape_cast %364 : vector<128xf32> to vector<1x128xf32>
    %366 = vector.broadcast %365 : vector<1x128xf32> to vector<22x128xf32>
    %367 = arith.mulf %11, %366 : vector<22x128xf32>
    %368 = vector.extract_strided_slice %266 {offsets = [2, 3, 0], sizes = [1, 1, 128], strides = [1, 1, 1]} : vector<7x7x128xf32> to vector<1x1x128xf32>
    %369 = vector.shape_cast %368 : vector<1x1x128xf32> to vector<128xf32>
    %370 = vector.shape_cast %369 : vector<128xf32> to vector<1x128xf32>
    %371 = vector.broadcast %370 : vector<1x128xf32> to vector<22x128xf32>
    %372 = arith.mulf %12, %371 : vector<22x128xf32>
    %373 = vector.extract_strided_slice %266 {offsets = [2, 4, 0], sizes = [1, 1, 128], strides = [1, 1, 1]} : vector<7x7x128xf32> to vector<1x1x128xf32>
    %374 = vector.shape_cast %373 : vector<1x1x128xf32> to vector<128xf32>
    %375 = vector.shape_cast %374 : vector<128xf32> to vector<1x128xf32>
    %376 = vector.broadcast %375 : vector<1x128xf32> to vector<22x128xf32>
    %377 = arith.mulf %13, %376 : vector<22x128xf32>
    %378 = vector.extract_strided_slice %266 {offsets = [2, 5, 0], sizes = [1, 1, 128], strides = [1, 1, 1]} : vector<7x7x128xf32> to vector<1x1x128xf32>
    %379 = vector.shape_cast %378 : vector<1x1x128xf32> to vector<128xf32>
    %380 = vector.shape_cast %379 : vector<128xf32> to vector<1x128xf32>
    %381 = vector.broadcast %380 : vector<1x128xf32> to vector<22x128xf32>
    %382 = arith.mulf %14, %381 : vector<22x128xf32>
    %383 = vector.extract_strided_slice %266 {offsets = [2, 6, 0], sizes = [1, 1, 128], strides = [1, 1, 1]} : vector<7x7x128xf32> to vector<1x1x128xf32>
    %384 = vector.shape_cast %383 : vector<1x1x128xf32> to vector<128xf32>
    %385 = vector.shape_cast %384 : vector<128xf32> to vector<1x128xf32>
    %386 = vector.broadcast %385 : vector<1x128xf32> to vector<22x128xf32>
    %387 = arith.mulf %15, %386 : vector<22x128xf32>
    %388 = arith.addf %357, %362 : vector<22x128xf32>
    %389 = arith.addf %367, %372 : vector<22x128xf32>
    %390 = arith.addf %377, %382 : vector<22x128xf32>
    %391 = arith.addf %388, %389 : vector<22x128xf32>
    %392 = arith.addf %390, %387 : vector<22x128xf32>
    %393 = arith.addf %391, %392 : vector<22x128xf32>
    %394 = vector.extract_strided_slice %393 {offsets = [2, 0], sizes = [16, 128], strides = [1, 1]} : vector<22x128xf32> to vector<16x128xf32>
    %395 = vector.extract_strided_slice %266 {offsets = [3, 0, 0], sizes = [1, 1, 128], strides = [1, 1, 1]} : vector<7x7x128xf32> to vector<1x1x128xf32>
    %396 = vector.shape_cast %395 : vector<1x1x128xf32> to vector<128xf32>
    %397 = vector.shape_cast %396 : vector<128xf32> to vector<1x128xf32>
    %398 = vector.broadcast %397 : vector<1x128xf32> to vector<22x128xf32>
    %399 = arith.mulf %9, %398 : vector<22x128xf32>
    %400 = vector.extract_strided_slice %266 {offsets = [3, 1, 0], sizes = [1, 1, 128], strides = [1, 1, 1]} : vector<7x7x128xf32> to vector<1x1x128xf32>
    %401 = vector.shape_cast %400 : vector<1x1x128xf32> to vector<128xf32>
    %402 = vector.shape_cast %401 : vector<128xf32> to vector<1x128xf32>
    %403 = vector.broadcast %402 : vector<1x128xf32> to vector<22x128xf32>
    %404 = arith.mulf %10, %403 : vector<22x128xf32>
    %405 = vector.extract_strided_slice %266 {offsets = [3, 2, 0], sizes = [1, 1, 128], strides = [1, 1, 1]} : vector<7x7x128xf32> to vector<1x1x128xf32>
    %406 = vector.shape_cast %405 : vector<1x1x128xf32> to vector<128xf32>
    %407 = vector.shape_cast %406 : vector<128xf32> to vector<1x128xf32>
    %408 = vector.broadcast %407 : vector<1x128xf32> to vector<22x128xf32>
    %409 = arith.mulf %11, %408 : vector<22x128xf32>
    %410 = vector.extract_strided_slice %266 {offsets = [3, 3, 0], sizes = [1, 1, 128], strides = [1, 1, 1]} : vector<7x7x128xf32> to vector<1x1x128xf32>
    %411 = vector.shape_cast %410 : vector<1x1x128xf32> to vector<128xf32>
    %412 = vector.shape_cast %411 : vector<128xf32> to vector<1x128xf32>
    %413 = vector.broadcast %412 : vector<1x128xf32> to vector<22x128xf32>
    %414 = arith.mulf %12, %413 : vector<22x128xf32>
    %415 = vector.extract_strided_slice %266 {offsets = [3, 4, 0], sizes = [1, 1, 128], strides = [1, 1, 1]} : vector<7x7x128xf32> to vector<1x1x128xf32>
    %416 = vector.shape_cast %415 : vector<1x1x128xf32> to vector<128xf32>
    %417 = vector.shape_cast %416 : vector<128xf32> to vector<1x128xf32>
    %418 = vector.broadcast %417 : vector<1x128xf32> to vector<22x128xf32>
    %419 = arith.mulf %13, %418 : vector<22x128xf32>
    %420 = vector.extract_strided_slice %266 {offsets = [3, 5, 0], sizes = [1, 1, 128], strides = [1, 1, 1]} : vector<7x7x128xf32> to vector<1x1x128xf32>
    %421 = vector.shape_cast %420 : vector<1x1x128xf32> to vector<128xf32>
    %422 = vector.shape_cast %421 : vector<128xf32> to vector<1x128xf32>
    %423 = vector.broadcast %422 : vector<1x128xf32> to vector<22x128xf32>
    %424 = arith.mulf %14, %423 : vector<22x128xf32>
    %425 = vector.extract_strided_slice %266 {offsets = [3, 6, 0], sizes = [1, 1, 128], strides = [1, 1, 1]} : vector<7x7x128xf32> to vector<1x1x128xf32>
    %426 = vector.shape_cast %425 : vector<1x1x128xf32> to vector<128xf32>
    %427 = vector.shape_cast %426 : vector<128xf32> to vector<1x128xf32>
    %428 = vector.broadcast %427 : vector<1x128xf32> to vector<22x128xf32>
    %429 = arith.mulf %15, %428 : vector<22x128xf32>
    %430 = arith.addf %399, %404 : vector<22x128xf32>
    %431 = arith.addf %409, %414 : vector<22x128xf32>
    %432 = arith.addf %419, %424 : vector<22x128xf32>
    %433 = arith.addf %430, %431 : vector<22x128xf32>
    %434 = arith.addf %432, %429 : vector<22x128xf32>
    %435 = arith.addf %433, %434 : vector<22x128xf32>
    %436 = vector.extract_strided_slice %435 {offsets = [3, 0], sizes = [16, 128], strides = [1, 1]} : vector<22x128xf32> to vector<16x128xf32>
    %437 = vector.extract_strided_slice %266 {offsets = [4, 0, 0], sizes = [1, 1, 128], strides = [1, 1, 1]} : vector<7x7x128xf32> to vector<1x1x128xf32>
    %438 = vector.shape_cast %437 : vector<1x1x128xf32> to vector<128xf32>
    %439 = vector.shape_cast %438 : vector<128xf32> to vector<1x128xf32>
    %440 = vector.broadcast %439 : vector<1x128xf32> to vector<22x128xf32>
    %441 = arith.mulf %9, %440 : vector<22x128xf32>
    %442 = vector.extract_strided_slice %266 {offsets = [4, 1, 0], sizes = [1, 1, 128], strides = [1, 1, 1]} : vector<7x7x128xf32> to vector<1x1x128xf32>
    %443 = vector.shape_cast %442 : vector<1x1x128xf32> to vector<128xf32>
    %444 = vector.shape_cast %443 : vector<128xf32> to vector<1x128xf32>
    %445 = vector.broadcast %444 : vector<1x128xf32> to vector<22x128xf32>
    %446 = arith.mulf %10, %445 : vector<22x128xf32>
    %447 = vector.extract_strided_slice %266 {offsets = [4, 2, 0], sizes = [1, 1, 128], strides = [1, 1, 1]} : vector<7x7x128xf32> to vector<1x1x128xf32>
    %448 = vector.shape_cast %447 : vector<1x1x128xf32> to vector<128xf32>
    %449 = vector.shape_cast %448 : vector<128xf32> to vector<1x128xf32>
    %450 = vector.broadcast %449 : vector<1x128xf32> to vector<22x128xf32>
    %451 = arith.mulf %11, %450 : vector<22x128xf32>
    %452 = vector.extract_strided_slice %266 {offsets = [4, 3, 0], sizes = [1, 1, 128], strides = [1, 1, 1]} : vector<7x7x128xf32> to vector<1x1x128xf32>
    %453 = vector.shape_cast %452 : vector<1x1x128xf32> to vector<128xf32>
    %454 = vector.shape_cast %453 : vector<128xf32> to vector<1x128xf32>
    %455 = vector.broadcast %454 : vector<1x128xf32> to vector<22x128xf32>
    %456 = arith.mulf %12, %455 : vector<22x128xf32>
    %457 = vector.extract_strided_slice %266 {offsets = [4, 4, 0], sizes = [1, 1, 128], strides = [1, 1, 1]} : vector<7x7x128xf32> to vector<1x1x128xf32>
    %458 = vector.shape_cast %457 : vector<1x1x128xf32> to vector<128xf32>
    %459 = vector.shape_cast %458 : vector<128xf32> to vector<1x128xf32>
    %460 = vector.broadcast %459 : vector<1x128xf32> to vector<22x128xf32>
    %461 = arith.mulf %13, %460 : vector<22x128xf32>
    %462 = vector.extract_strided_slice %266 {offsets = [4, 5, 0], sizes = [1, 1, 128], strides = [1, 1, 1]} : vector<7x7x128xf32> to vector<1x1x128xf32>
    %463 = vector.shape_cast %462 : vector<1x1x128xf32> to vector<128xf32>
    %464 = vector.shape_cast %463 : vector<128xf32> to vector<1x128xf32>
    %465 = vector.broadcast %464 : vector<1x128xf32> to vector<22x128xf32>
    %466 = arith.mulf %14, %465 : vector<22x128xf32>
    %467 = vector.extract_strided_slice %266 {offsets = [4, 6, 0], sizes = [1, 1, 128], strides = [1, 1, 1]} : vector<7x7x128xf32> to vector<1x1x128xf32>
    %468 = vector.shape_cast %467 : vector<1x1x128xf32> to vector<128xf32>
    %469 = vector.shape_cast %468 : vector<128xf32> to vector<1x128xf32>
    %470 = vector.broadcast %469 : vector<1x128xf32> to vector<22x128xf32>
    %471 = arith.mulf %15, %470 : vector<22x128xf32>
    %472 = arith.addf %441, %446 : vector<22x128xf32>
    %473 = arith.addf %451, %456 : vector<22x128xf32>
    %474 = arith.addf %461, %466 : vector<22x128xf32>
    %475 = arith.addf %472, %473 : vector<22x128xf32>
    %476 = arith.addf %474, %471 : vector<22x128xf32>
    %477 = arith.addf %475, %476 : vector<22x128xf32>
    %478 = vector.extract_strided_slice %477 {offsets = [4, 0], sizes = [16, 128], strides = [1, 1]} : vector<22x128xf32> to vector<16x128xf32>
    %479 = vector.extract_strided_slice %266 {offsets = [5, 0, 0], sizes = [1, 1, 128], strides = [1, 1, 1]} : vector<7x7x128xf32> to vector<1x1x128xf32>
    %480 = vector.shape_cast %479 : vector<1x1x128xf32> to vector<128xf32>
    %481 = vector.shape_cast %480 : vector<128xf32> to vector<1x128xf32>
    %482 = vector.broadcast %481 : vector<1x128xf32> to vector<22x128xf32>
    %483 = arith.mulf %9, %482 : vector<22x128xf32>
    %484 = vector.extract_strided_slice %266 {offsets = [5, 1, 0], sizes = [1, 1, 128], strides = [1, 1, 1]} : vector<7x7x128xf32> to vector<1x1x128xf32>
    %485 = vector.shape_cast %484 : vector<1x1x128xf32> to vector<128xf32>
    %486 = vector.shape_cast %485 : vector<128xf32> to vector<1x128xf32>
    %487 = vector.broadcast %486 : vector<1x128xf32> to vector<22x128xf32>
    %488 = arith.mulf %10, %487 : vector<22x128xf32>
    %489 = vector.extract_strided_slice %266 {offsets = [5, 2, 0], sizes = [1, 1, 128], strides = [1, 1, 1]} : vector<7x7x128xf32> to vector<1x1x128xf32>
    %490 = vector.shape_cast %489 : vector<1x1x128xf32> to vector<128xf32>
    %491 = vector.shape_cast %490 : vector<128xf32> to vector<1x128xf32>
    %492 = vector.broadcast %491 : vector<1x128xf32> to vector<22x128xf32>
    %493 = arith.mulf %11, %492 : vector<22x128xf32>
    %494 = vector.extract_strided_slice %266 {offsets = [5, 3, 0], sizes = [1, 1, 128], strides = [1, 1, 1]} : vector<7x7x128xf32> to vector<1x1x128xf32>
    %495 = vector.shape_cast %494 : vector<1x1x128xf32> to vector<128xf32>
    %496 = vector.shape_cast %495 : vector<128xf32> to vector<1x128xf32>
    %497 = vector.broadcast %496 : vector<1x128xf32> to vector<22x128xf32>
    %498 = arith.mulf %12, %497 : vector<22x128xf32>
    %499 = vector.extract_strided_slice %266 {offsets = [5, 4, 0], sizes = [1, 1, 128], strides = [1, 1, 1]} : vector<7x7x128xf32> to vector<1x1x128xf32>
    %500 = vector.shape_cast %499 : vector<1x1x128xf32> to vector<128xf32>
    %501 = vector.shape_cast %500 : vector<128xf32> to vector<1x128xf32>
    %502 = vector.broadcast %501 : vector<1x128xf32> to vector<22x128xf32>
    %503 = arith.mulf %13, %502 : vector<22x128xf32>
    %504 = vector.extract_strided_slice %266 {offsets = [5, 5, 0], sizes = [1, 1, 128], strides = [1, 1, 1]} : vector<7x7x128xf32> to vector<1x1x128xf32>
    %505 = vector.shape_cast %504 : vector<1x1x128xf32> to vector<128xf32>
    %506 = vector.shape_cast %505 : vector<128xf32> to vector<1x128xf32>
    %507 = vector.broadcast %506 : vector<1x128xf32> to vector<22x128xf32>
    %508 = arith.mulf %14, %507 : vector<22x128xf32>
    %509 = vector.extract_strided_slice %266 {offsets = [5, 6, 0], sizes = [1, 1, 128], strides = [1, 1, 1]} : vector<7x7x128xf32> to vector<1x1x128xf32>
    %510 = vector.shape_cast %509 : vector<1x1x128xf32> to vector<128xf32>
    %511 = vector.shape_cast %510 : vector<128xf32> to vector<1x128xf32>
    %512 = vector.broadcast %511 : vector<1x128xf32> to vector<22x128xf32>
    %513 = arith.mulf %15, %512 : vector<22x128xf32>
    %514 = arith.addf %483, %488 : vector<22x128xf32>
    %515 = arith.addf %493, %498 : vector<22x128xf32>
    %516 = arith.addf %503, %508 : vector<22x128xf32>
    %517 = arith.addf %514, %515 : vector<22x128xf32>
    %518 = arith.addf %516, %513 : vector<22x128xf32>
    %519 = arith.addf %517, %518 : vector<22x128xf32>
    %520 = vector.extract_strided_slice %519 {offsets = [5, 0], sizes = [16, 128], strides = [1, 1]} : vector<22x128xf32> to vector<16x128xf32>
    %521 = vector.extract_strided_slice %266 {offsets = [6, 0, 0], sizes = [1, 1, 128], strides = [1, 1, 1]} : vector<7x7x128xf32> to vector<1x1x128xf32>
    %522 = vector.shape_cast %521 : vector<1x1x128xf32> to vector<128xf32>
    %523 = vector.shape_cast %522 : vector<128xf32> to vector<1x128xf32>
    %524 = vector.broadcast %523 : vector<1x128xf32> to vector<22x128xf32>
    %525 = arith.mulf %9, %524 : vector<22x128xf32>
    %526 = vector.extract_strided_slice %266 {offsets = [6, 1, 0], sizes = [1, 1, 128], strides = [1, 1, 1]} : vector<7x7x128xf32> to vector<1x1x128xf32>
    %527 = vector.shape_cast %526 : vector<1x1x128xf32> to vector<128xf32>
    %528 = vector.shape_cast %527 : vector<128xf32> to vector<1x128xf32>
    %529 = vector.broadcast %528 : vector<1x128xf32> to vector<22x128xf32>
    %530 = arith.mulf %10, %529 : vector<22x128xf32>
    %531 = vector.extract_strided_slice %266 {offsets = [6, 2, 0], sizes = [1, 1, 128], strides = [1, 1, 1]} : vector<7x7x128xf32> to vector<1x1x128xf32>
    %532 = vector.shape_cast %531 : vector<1x1x128xf32> to vector<128xf32>
    %533 = vector.shape_cast %532 : vector<128xf32> to vector<1x128xf32>
    %534 = vector.broadcast %533 : vector<1x128xf32> to vector<22x128xf32>
    %535 = arith.mulf %11, %534 : vector<22x128xf32>
    %536 = vector.extract_strided_slice %266 {offsets = [6, 3, 0], sizes = [1, 1, 128], strides = [1, 1, 1]} : vector<7x7x128xf32> to vector<1x1x128xf32>
    %537 = vector.shape_cast %536 : vector<1x1x128xf32> to vector<128xf32>
    %538 = vector.shape_cast %537 : vector<128xf32> to vector<1x128xf32>
    %539 = vector.broadcast %538 : vector<1x128xf32> to vector<22x128xf32>
    %540 = arith.mulf %12, %539 : vector<22x128xf32>
    %541 = vector.extract_strided_slice %266 {offsets = [6, 4, 0], sizes = [1, 1, 128], strides = [1, 1, 1]} : vector<7x7x128xf32> to vector<1x1x128xf32>
    %542 = vector.shape_cast %541 : vector<1x1x128xf32> to vector<128xf32>
    %543 = vector.shape_cast %542 : vector<128xf32> to vector<1x128xf32>
    %544 = vector.broadcast %543 : vector<1x128xf32> to vector<22x128xf32>
    %545 = arith.mulf %13, %544 : vector<22x128xf32>
    %546 = vector.extract_strided_slice %266 {offsets = [6, 5, 0], sizes = [1, 1, 128], strides = [1, 1, 1]} : vector<7x7x128xf32> to vector<1x1x128xf32>
    %547 = vector.shape_cast %546 : vector<1x1x128xf32> to vector<128xf32>
    %548 = vector.shape_cast %547 : vector<128xf32> to vector<1x128xf32>
    %549 = vector.broadcast %548 : vector<1x128xf32> to vector<22x128xf32>
    %550 = arith.mulf %14, %549 : vector<22x128xf32>
    %551 = vector.extract_strided_slice %266 {offsets = [6, 6, 0], sizes = [1, 1, 128], strides = [1, 1, 1]} : vector<7x7x128xf32> to vector<1x1x128xf32>
    %552 = vector.shape_cast %551 : vector<1x1x128xf32> to vector<128xf32>
    %553 = vector.shape_cast %552 : vector<128xf32> to vector<1x128xf32>
    %554 = vector.broadcast %553 : vector<1x128xf32> to vector<22x128xf32>
    %555 = arith.mulf %15, %554 : vector<22x128xf32>
    %556 = arith.addf %525, %530 : vector<22x128xf32>
    %557 = arith.addf %535, %540 : vector<22x128xf32>
    %558 = arith.addf %545, %550 : vector<22x128xf32>
    %559 = arith.addf %556, %557 : vector<22x128xf32>
    %560 = arith.addf %558, %555 : vector<22x128xf32>
    %561 = arith.addf %559, %560 : vector<22x128xf32>
    %562 = vector.extract_strided_slice %561 {offsets = [6, 0], sizes = [16, 128], strides = [1, 1]} : vector<22x128xf32> to vector<16x128xf32>
    %563 = arith.addf %310, %352 : vector<16x128xf32>
    %564 = arith.addf %394, %436 : vector<16x128xf32>
    %565 = arith.addf %478, %520 : vector<16x128xf32>
    %566 = arith.addf %563, %564 : vector<16x128xf32>
    %567 = arith.addf %565, %562 : vector<16x128xf32>
    %568 = arith.addf %566, %567 : vector<16x128xf32>
    %569 = vector.shape_cast %268 : vector<128xf32> to vector<1x128xf32>
    %570 = vector.broadcast %569 : vector<1x128xf32> to vector<16x128xf32>
    %571 = arith.addf %568, %570 : vector<16x128xf32>
    %cst_37 = arith.constant 0.000000e+00 : f32
    %cst_38 = arith.constant 6.000000e+00 : f32
    %572 = vector.broadcast %cst_37 : f32 to vector<16x128xf32>
    %573 = arith.maximumf %572, %571 : vector<16x128xf32>
    %574 = vector.broadcast %cst_38 : f32 to vector<16x128xf32>
    %575 = arith.minimumf %574, %573 : vector<16x128xf32>
    %576 = tpu.concatenate %32, %99, %264, %575 in 1 : vector<16x128xf32>, vector<16x128xf32>, vector<16x128xf32>, vector<16x128xf32> -> vector<16x512xf32>
    %cst_39 = arith.constant dense<0.000000e+00> : vector<16x128xf32>
    %577 = tpu.matmul %576, %0, %cst_39 {dimension_numbers = #tpu.dot_dimension_numbers<[1], [0], [0], [1], [0, 0, 1, 1], [], []>} : vector<16x512xf32>, vector<512x128xf32>, vector<16x128xf32> -> vector<16x128xf32>
    %578 = vector.shape_cast %2 : vector<128xf32> to vector<1x128xf32>
    %579 = vector.broadcast %578 : vector<1x128xf32> to vector<16x128xf32>
    %580 = arith.addf %577, %579 : vector<16x128xf32>
    %cst_40 = arith.constant 0.000000e+00 : f32
    %581 = vector.broadcast %cst_40 : f32 to vector<16x128xf32>
    %582 = arith.maximumf %580, %581 : vector<16x128xf32>
    %c0_41 = arith.constant 0 : index
    %c0_42 = arith.constant 0 : index
    %c0_43 = arith.constant 0 : index
    %583 = vector.load %arg6[%c0_41, %c0_42, %c0_43] : memref<2x16x128xf32, #tpu.memory_space<vmem>>, vector<1x16x128xf32>
    %584 = vector.shape_cast %583 : vector<1x16x128xf32> to vector<16x128xf32>
    %585 = vector.shape_cast %582 : vector<16x128xf32> to vector<1x16x128xf32>
    tpu.vector_store %arg6[%c0_41, %c0_42, %c0_43], %585 {strides = array<i32>} : memref<2x16x128xf32, #tpu.memory_space<vmem>>, vector<1x16x128xf32>,
    %c1_44 = arith.constant 1 : index
    %c0_45 = arith.constant 0 : index
    %c0_46 = arith.constant 0 : index
    %586 = vector.load %arg1[%c1_44, %c0_45, %c0_46] : memref<2x16x128xf32, #tpu.memory_space<vmem>>, vector<1x16x128xf32>
    %587 = vector.shape_cast %586 : vector<1x16x128xf32> to vector<16x128xf32>
    %c8_47 = arith.constant 8 : index
    %c128_48 = arith.constant 128 : index
    %588 = vector.load %arg7[%c8_47, %c128_48] : memref<32x384xf32, #tpu.memory_space<vmem>>, vector<16x128xf32>
    tpu.vector_store %arg7[%c8_47, %c128_48], %587 {strides = array<i32>} : memref<32x384xf32, #tpu.memory_space<vmem>>, vector<16x128xf32>,
    %c0_49 = arith.constant 0 : index
    %c0_50 = arith.constant 0 : index
    %589 = vector.load %arg7[%c0_49, %c0_50] : memref<32x384xf32, #tpu.memory_space<vmem>>, vector<32x384xf32>
    %590 = vector.extract_strided_slice %589 {offsets = [5, 104], sizes = [22, 128], strides = [1, 1]} : vector<32x384xf32> to vector<22x128xf32>
    %591 = vector.extract_strided_slice %589 {offsets = [5, 112], sizes = [22, 128], strides = [1, 1]} : vector<32x384xf32> to vector<22x128xf32>
    %592 = vector.extract_strided_slice %589 {offsets = [5, 120], sizes = [22, 128], strides = [1, 1]} : vector<32x384xf32> to vector<22x128xf32>
    %593 = vector.extract_strided_slice %589 {offsets = [5, 128], sizes = [22, 128], strides = [1, 1]} : vector<32x384xf32> to vector<22x128xf32>
    %594 = vector.extract_strided_slice %589 {offsets = [5, 136], sizes = [22, 128], strides = [1, 1]} : vector<32x384xf32> to vector<22x128xf32>
    %595 = vector.extract_strided_slice %589 {offsets = [5, 144], sizes = [22, 128], strides = [1, 1]} : vector<32x384xf32> to vector<22x128xf32>
    %596 = vector.extract_strided_slice %589 {offsets = [5, 152], sizes = [22, 128], strides = [1, 1]} : vector<32x384xf32> to vector<22x128xf32>
    %c0_51 = arith.constant 0 : index
    %c0_52 = arith.constant 0 : index
    %c0_53 = arith.constant 0 : index
    %c0_54 = arith.constant 0 : index
    %597 = vector.load %arg2[%c0_51, %c0_52, %c0_53, %c0_54] : memref<4x7x7x128xf32, #tpu.memory_space<vmem>>, vector<1x7x7x128xf32>
    %598 = vector.shape_cast %597 : vector<1x7x7x128xf32> to vector<7x7x128xf32>
    %c0_55 = arith.constant 0 : index
    %c0_56 = arith.constant 0 : index
    %599 = vector.load %arg3[%c0_55, %c0_56] : memref<4x128xf32, #tpu.memory_space<vmem>>, vector<1x128xf32>
    %600 = vector.shape_cast %599 : vector<1x128xf32> to vector<128xf32>
    %601 = vector.extract_strided_slice %598 {offsets = [3, 3, 0], sizes = [1, 1, 128], strides = [1, 1, 1]} : vector<7x7x128xf32> to vector<1x1x128xf32>
    %602 = vector.shape_cast %601 : vector<1x1x128xf32> to vector<128xf32>
    %603 = vector.shape_cast %602 : vector<128xf32> to vector<1x128xf32>
    %604 = vector.broadcast %603 : vector<1x128xf32> to vector<22x128xf32>
    %605 = arith.mulf %593, %604 : vector<22x128xf32>
    %606 = vector.extract_strided_slice %605 {offsets = [3, 0], sizes = [16, 128], strides = [1, 1]} : vector<22x128xf32> to vector<16x128xf32>
    %607 = vector.shape_cast %600 : vector<128xf32> to vector<1x128xf32>
    %608 = vector.broadcast %607 : vector<1x128xf32> to vector<16x128xf32>
    %609 = arith.addf %606, %608 : vector<16x128xf32>
    %cst_57 = arith.constant 0.000000e+00 : f32
    %cst_58 = arith.constant 6.000000e+00 : f32
    %610 = vector.broadcast %cst_57 : f32 to vector<16x128xf32>
    %611 = arith.maximumf %610, %609 : vector<16x128xf32>
    %612 = vector.broadcast %cst_58 : f32 to vector<16x128xf32>
    %613 = arith.minimumf %612, %611 : vector<16x128xf32>
    %c1_59 = arith.constant 1 : index
    %c0_60 = arith.constant 0 : index
    %c0_61 = arith.constant 0 : index
    %c0_62 = arith.constant 0 : index
    %614 = vector.load %arg2[%c1_59, %c0_60, %c0_61, %c0_62] : memref<4x7x7x128xf32, #tpu.memory_space<vmem>>, vector<1x7x7x128xf32>
    %615 = vector.shape_cast %614 : vector<1x7x7x128xf32> to vector<7x7x128xf32>
    %c1_63 = arith.constant 1 : index
    %c0_64 = arith.constant 0 : index
    %616 = vector.load %arg3[%c1_63, %c0_64] : memref<4x128xf32, #tpu.memory_space<vmem>>, vector<1x128xf32>
    %617 = vector.shape_cast %616 : vector<1x128xf32> to vector<128xf32>
    %618 = vector.extract_strided_slice %615 {offsets = [2, 2, 0], sizes = [1, 1, 128], strides = [1, 1, 1]} : vector<7x7x128xf32> to vector<1x1x128xf32>
    %619 = vector.shape_cast %618 : vector<1x1x128xf32> to vector<128xf32>
    %620 = vector.shape_cast %619 : vector<128xf32> to vector<1x128xf32>
    %621 = vector.broadcast %620 : vector<1x128xf32> to vector<22x128xf32>
    %622 = arith.mulf %592, %621 : vector<22x128xf32>
    %623 = vector.extract_strided_slice %615 {offsets = [2, 3, 0], sizes = [1, 1, 128], strides = [1, 1, 1]} : vector<7x7x128xf32> to vector<1x1x128xf32>
    %624 = vector.shape_cast %623 : vector<1x1x128xf32> to vector<128xf32>
    %625 = vector.shape_cast %624 : vector<128xf32> to vector<1x128xf32>
    %626 = vector.broadcast %625 : vector<1x128xf32> to vector<22x128xf32>
    %627 = arith.mulf %593, %626 : vector<22x128xf32>
    %628 = vector.extract_strided_slice %615 {offsets = [2, 4, 0], sizes = [1, 1, 128], strides = [1, 1, 1]} : vector<7x7x128xf32> to vector<1x1x128xf32>
    %629 = vector.shape_cast %628 : vector<1x1x128xf32> to vector<128xf32>
    %630 = vector.shape_cast %629 : vector<128xf32> to vector<1x128xf32>
    %631 = vector.broadcast %630 : vector<1x128xf32> to vector<22x128xf32>
    %632 = arith.mulf %594, %631 : vector<22x128xf32>
    %633 = arith.addf %622, %627 : vector<22x128xf32>
    %634 = arith.addf %633, %632 : vector<22x128xf32>
    %635 = vector.extract_strided_slice %634 {offsets = [2, 0], sizes = [16, 128], strides = [1, 1]} : vector<22x128xf32> to vector<16x128xf32>
    %636 = vector.extract_strided_slice %615 {offsets = [3, 2, 0], sizes = [1, 1, 128], strides = [1, 1, 1]} : vector<7x7x128xf32> to vector<1x1x128xf32>
    %637 = vector.shape_cast %636 : vector<1x1x128xf32> to vector<128xf32>
    %638 = vector.shape_cast %637 : vector<128xf32> to vector<1x128xf32>
    %639 = vector.broadcast %638 : vector<1x128xf32> to vector<22x128xf32>
    %640 = arith.mulf %592, %639 : vector<22x128xf32>
    %641 = vector.extract_strided_slice %615 {offsets = [3, 3, 0], sizes = [1, 1, 128], strides = [1, 1, 1]} : vector<7x7x128xf32> to vector<1x1x128xf32>
    %642 = vector.shape_cast %641 : vector<1x1x128xf32> to vector<128xf32>
    %643 = vector.shape_cast %642 : vector<128xf32> to vector<1x128xf32>
    %644 = vector.broadcast %643 : vector<1x128xf32> to vector<22x128xf32>
    %645 = arith.mulf %593, %644 : vector<22x128xf32>
    %646 = vector.extract_strided_slice %615 {offsets = [3, 4, 0], sizes = [1, 1, 128], strides = [1, 1, 1]} : vector<7x7x128xf32> to vector<1x1x128xf32>
    %647 = vector.shape_cast %646 : vector<1x1x128xf32> to vector<128xf32>
    %648 = vector.shape_cast %647 : vector<128xf32> to vector<1x128xf32>
    %649 = vector.broadcast %648 : vector<1x128xf32> to vector<22x128xf32>
    %650 = arith.mulf %594, %649 : vector<22x128xf32>
    %651 = arith.addf %640, %645 : vector<22x128xf32>
    %652 = arith.addf %651, %650 : vector<22x128xf32>
    %653 = vector.extract_strided_slice %652 {offsets = [3, 0], sizes = [16, 128], strides = [1, 1]} : vector<22x128xf32> to vector<16x128xf32>
    %654 = vector.extract_strided_slice %615 {offsets = [4, 2, 0], sizes = [1, 1, 128], strides = [1, 1, 1]} : vector<7x7x128xf32> to vector<1x1x128xf32>
    %655 = vector.shape_cast %654 : vector<1x1x128xf32> to vector<128xf32>
    %656 = vector.shape_cast %655 : vector<128xf32> to vector<1x128xf32>
    %657 = vector.broadcast %656 : vector<1x128xf32> to vector<22x128xf32>
    %658 = arith.mulf %592, %657 : vector<22x128xf32>
    %659 = vector.extract_strided_slice %615 {offsets = [4, 3, 0], sizes = [1, 1, 128], strides = [1, 1, 1]} : vector<7x7x128xf32> to vector<1x1x128xf32>
    %660 = vector.shape_cast %659 : vector<1x1x128xf32> to vector<128xf32>
    %661 = vector.shape_cast %660 : vector<128xf32> to vector<1x128xf32>
    %662 = vector.broadcast %661 : vector<1x128xf32> to vector<22x128xf32>
    %663 = arith.mulf %593, %662 : vector<22x128xf32>
    %664 = vector.extract_strided_slice %615 {offsets = [4, 4, 0], sizes = [1, 1, 128], strides = [1, 1, 1]} : vector<7x7x128xf32> to vector<1x1x128xf32>
    %665 = vector.shape_cast %664 : vector<1x1x128xf32> to vector<128xf32>
    %666 = vector.shape_cast %665 : vector<128xf32> to vector<1x128xf32>
    %667 = vector.broadcast %666 : vector<1x128xf32> to vector<22x128xf32>
    %668 = arith.mulf %594, %667 : vector<22x128xf32>
    %669 = arith.addf %658, %663 : vector<22x128xf32>
    %670 = arith.addf %669, %668 : vector<22x128xf32>
    %671 = vector.extract_strided_slice %670 {offsets = [4, 0], sizes = [16, 128], strides = [1, 1]} : vector<22x128xf32> to vector<16x128xf32>
    %672 = arith.addf %635, %653 : vector<16x128xf32>
    %673 = arith.addf %672, %671 : vector<16x128xf32>
    %674 = vector.shape_cast %617 : vector<128xf32> to vector<1x128xf32>
    %675 = vector.broadcast %674 : vector<1x128xf32> to vector<16x128xf32>
    %676 = arith.addf %673, %675 : vector<16x128xf32>
    %cst_65 = arith.constant 0.000000e+00 : f32
    %cst_66 = arith.constant 6.000000e+00 : f32
    %677 = vector.broadcast %cst_65 : f32 to vector<16x128xf32>
    %678 = arith.maximumf %677, %676 : vector<16x128xf32>
    %679 = vector.broadcast %cst_66 : f32 to vector<16x128xf32>
    %680 = arith.minimumf %679, %678 : vector<16x128xf32>
    %c2_67 = arith.constant 2 : index
    %c0_68 = arith.constant 0 : index
    %c0_69 = arith.constant 0 : index
    %c0_70 = arith.constant 0 : index
    %681 = vector.load %arg2[%c2_67, %c0_68, %c0_69, %c0_70] : memref<4x7x7x128xf32, #tpu.memory_space<vmem>>, vector<1x7x7x128xf32>
    %682 = vector.shape_cast %681 : vector<1x7x7x128xf32> to vector<7x7x128xf32>
    %c2_71 = arith.constant 2 : index
    %c0_72 = arith.constant 0 : index
    %683 = vector.load %arg3[%c2_71, %c0_72] : memref<4x128xf32, #tpu.memory_space<vmem>>, vector<1x128xf32>
    %684 = vector.shape_cast %683 : vector<1x128xf32> to vector<128xf32>
    %685 = vector.extract_strided_slice %682 {offsets = [1, 1, 0], sizes = [1, 1, 128], strides = [1, 1, 1]} : vector<7x7x128xf32> to vector<1x1x128xf32>
    %686 = vector.shape_cast %685 : vector<1x1x128xf32> to vector<128xf32>
    %687 = vector.shape_cast %686 : vector<128xf32> to vector<1x128xf32>
    %688 = vector.broadcast %687 : vector<1x128xf32> to vector<22x128xf32>
    %689 = arith.mulf %591, %688 : vector<22x128xf32>
    %690 = vector.extract_strided_slice %682 {offsets = [1, 2, 0], sizes = [1, 1, 128], strides = [1, 1, 1]} : vector<7x7x128xf32> to vector<1x1x128xf32>
    %691 = vector.shape_cast %690 : vector<1x1x128xf32> to vector<128xf32>
    %692 = vector.shape_cast %691 : vector<128xf32> to vector<1x128xf32>
    %693 = vector.broadcast %692 : vector<1x128xf32> to vector<22x128xf32>
    %694 = arith.mulf %592, %693 : vector<22x128xf32>
    %695 = vector.extract_strided_slice %682 {offsets = [1, 3, 0], sizes = [1, 1, 128], strides = [1, 1, 1]} : vector<7x7x128xf32> to vector<1x1x128xf32>
    %696 = vector.shape_cast %695 : vector<1x1x128xf32> to vector<128xf32>
    %697 = vector.shape_cast %696 : vector<128xf32> to vector<1x128xf32>
    %698 = vector.broadcast %697 : vector<1x128xf32> to vector<22x128xf32>
    %699 = arith.mulf %593, %698 : vector<22x128xf32>
    %700 = vector.extract_strided_slice %682 {offsets = [1, 4, 0], sizes = [1, 1, 128], strides = [1, 1, 1]} : vector<7x7x128xf32> to vector<1x1x128xf32>
    %701 = vector.shape_cast %700 : vector<1x1x128xf32> to vector<128xf32>
    %702 = vector.shape_cast %701 : vector<128xf32> to vector<1x128xf32>
    %703 = vector.broadcast %702 : vector<1x128xf32> to vector<22x128xf32>
    %704 = arith.mulf %594, %703 : vector<22x128xf32>
    %705 = vector.extract_strided_slice %682 {offsets = [1, 5, 0], sizes = [1, 1, 128], strides = [1, 1, 1]} : vector<7x7x128xf32> to vector<1x1x128xf32>
    %706 = vector.shape_cast %705 : vector<1x1x128xf32> to vector<128xf32>
    %707 = vector.shape_cast %706 : vector<128xf32> to vector<1x128xf32>
    %708 = vector.broadcast %707 : vector<1x128xf32> to vector<22x128xf32>
    %709 = arith.mulf %595, %708 : vector<22x128xf32>
    %710 = arith.addf %689, %694 : vector<22x128xf32>
    %711 = arith.addf %699, %704 : vector<22x128xf32>
    %712 = arith.addf %710, %711 : vector<22x128xf32>
    %713 = arith.addf %712, %709 : vector<22x128xf32>
    %714 = vector.extract_strided_slice %713 {offsets = [1, 0], sizes = [16, 128], strides = [1, 1]} : vector<22x128xf32> to vector<16x128xf32>
    %715 = vector.extract_strided_slice %682 {offsets = [2, 1, 0], sizes = [1, 1, 128], strides = [1, 1, 1]} : vector<7x7x128xf32> to vector<1x1x128xf32>
    %716 = vector.shape_cast %715 : vector<1x1x128xf32> to vector<128xf32>
    %717 = vector.shape_cast %716 : vector<128xf32> to vector<1x128xf32>
    %718 = vector.broadcast %717 : vector<1x128xf32> to vector<22x128xf32>
    %719 = arith.mulf %591, %718 : vector<22x128xf32>
    %720 = vector.extract_strided_slice %682 {offsets = [2, 2, 0], sizes = [1, 1, 128], strides = [1, 1, 1]} : vector<7x7x128xf32> to vector<1x1x128xf32>
    %721 = vector.shape_cast %720 : vector<1x1x128xf32> to vector<128xf32>
    %722 = vector.shape_cast %721 : vector<128xf32> to vector<1x128xf32>
    %723 = vector.broadcast %722 : vector<1x128xf32> to vector<22x128xf32>
    %724 = arith.mulf %592, %723 : vector<22x128xf32>
    %725 = vector.extract_strided_slice %682 {offsets = [2, 3, 0], sizes = [1, 1, 128], strides = [1, 1, 1]} : vector<7x7x128xf32> to vector<1x1x128xf32>
    %726 = vector.shape_cast %725 : vector<1x1x128xf32> to vector<128xf32>
    %727 = vector.shape_cast %726 : vector<128xf32> to vector<1x128xf32>
    %728 = vector.broadcast %727 : vector<1x128xf32> to vector<22x128xf32>
    %729 = arith.mulf %593, %728 : vector<22x128xf32>
    %730 = vector.extract_strided_slice %682 {offsets = [2, 4, 0], sizes = [1, 1, 128], strides = [1, 1, 1]} : vector<7x7x128xf32> to vector<1x1x128xf32>
    %731 = vector.shape_cast %730 : vector<1x1x128xf32> to vector<128xf32>
    %732 = vector.shape_cast %731 : vector<128xf32> to vector<1x128xf32>
    %733 = vector.broadcast %732 : vector<1x128xf32> to vector<22x128xf32>
    %734 = arith.mulf %594, %733 : vector<22x128xf32>
    %735 = vector.extract_strided_slice %682 {offsets = [2, 5, 0], sizes = [1, 1, 128], strides = [1, 1, 1]} : vector<7x7x128xf32> to vector<1x1x128xf32>
    %736 = vector.shape_cast %735 : vector<1x1x128xf32> to vector<128xf32>
    %737 = vector.shape_cast %736 : vector<128xf32> to vector<1x128xf32>
    %738 = vector.broadcast %737 : vector<1x128xf32> to vector<22x128xf32>
    %739 = arith.mulf %595, %738 : vector<22x128xf32>
    %740 = arith.addf %719, %724 : vector<22x128xf32>
    %741 = arith.addf %729, %734 : vector<22x128xf32>
    %742 = arith.addf %740, %741 : vector<22x128xf32>
    %743 = arith.addf %742, %739 : vector<22x128xf32>
    %744 = vector.extract_strided_slice %743 {offsets = [2, 0], sizes = [16, 128], strides = [1, 1]} : vector<22x128xf32> to vector<16x128xf32>
    %745 = vector.extract_strided_slice %682 {offsets = [3, 1, 0], sizes = [1, 1, 128], strides = [1, 1, 1]} : vector<7x7x128xf32> to vector<1x1x128xf32>
    %746 = vector.shape_cast %745 : vector<1x1x128xf32> to vector<128xf32>
    %747 = vector.shape_cast %746 : vector<128xf32> to vector<1x128xf32>
    %748 = vector.broadcast %747 : vector<1x128xf32> to vector<22x128xf32>
    %749 = arith.mulf %591, %748 : vector<22x128xf32>
    %750 = vector.extract_strided_slice %682 {offsets = [3, 2, 0], sizes = [1, 1, 128], strides = [1, 1, 1]} : vector<7x7x128xf32> to vector<1x1x128xf32>
    %751 = vector.shape_cast %750 : vector<1x1x128xf32> to vector<128xf32>
    %752 = vector.shape_cast %751 : vector<128xf32> to vector<1x128xf32>
    %753 = vector.broadcast %752 : vector<1x128xf32> to vector<22x128xf32>
    %754 = arith.mulf %592, %753 : vector<22x128xf32>
    %755 = vector.extract_strided_slice %682 {offsets = [3, 3, 0], sizes = [1, 1, 128], strides = [1, 1, 1]} : vector<7x7x128xf32> to vector<1x1x128xf32>
    %756 = vector.shape_cast %755 : vector<1x1x128xf32> to vector<128xf32>
    %757 = vector.shape_cast %756 : vector<128xf32> to vector<1x128xf32>
    %758 = vector.broadcast %757 : vector<1x128xf32> to vector<22x128xf32>
    %759 = arith.mulf %593, %758 : vector<22x128xf32>
    %760 = vector.extract_strided_slice %682 {offsets = [3, 4, 0], sizes = [1, 1, 128], strides = [1, 1, 1]} : vector<7x7x128xf32> to vector<1x1x128xf32>
    %761 = vector.shape_cast %760 : vector<1x1x128xf32> to vector<128xf32>
    %762 = vector.shape_cast %761 : vector<128xf32> to vector<1x128xf32>
    %763 = vector.broadcast %762 : vector<1x128xf32> to vector<22x128xf32>
    %764 = arith.mulf %594, %763 : vector<22x128xf32>
    %765 = vector.extract_strided_slice %682 {offsets = [3, 5, 0], sizes = [1, 1, 128], strides = [1, 1, 1]} : vector<7x7x128xf32> to vector<1x1x128xf32>
    %766 = vector.shape_cast %765 : vector<1x1x128xf32> to vector<128xf32>
    %767 = vector.shape_cast %766 : vector<128xf32> to vector<1x128xf32>
    %768 = vector.broadcast %767 : vector<1x128xf32> to vector<22x128xf32>
    %769 = arith.mulf %595, %768 : vector<22x128xf32>
    %770 = arith.addf %749, %754 : vector<22x128xf32>
    %771 = arith.addf %759, %764 : vector<22x128xf32>
    %772 = arith.addf %770, %771 : vector<22x128xf32>
    %773 = arith.addf %772, %769 : vector<22x128xf32>
    %774 = vector.extract_strided_slice %773 {offsets = [3, 0], sizes = [16, 128], strides = [1, 1]} : vector<22x128xf32> to vector<16x128xf32>
    %775 = vector.extract_strided_slice %682 {offsets = [4, 1, 0], sizes = [1, 1, 128], strides = [1, 1, 1]} : vector<7x7x128xf32> to vector<1x1x128xf32>
    %776 = vector.shape_cast %775 : vector<1x1x128xf32> to vector<128xf32>
    %777 = vector.shape_cast %776 : vector<128xf32> to vector<1x128xf32>
    %778 = vector.broadcast %777 : vector<1x128xf32> to vector<22x128xf32>
    %779 = arith.mulf %591, %778 : vector<22x128xf32>
    %780 = vector.extract_strided_slice %682 {offsets = [4, 2, 0], sizes = [1, 1, 128], strides = [1, 1, 1]} : vector<7x7x128xf32> to vector<1x1x128xf32>
    %781 = vector.shape_cast %780 : vector<1x1x128xf32> to vector<128xf32>
    %782 = vector.shape_cast %781 : vector<128xf32> to vector<1x128xf32>
    %783 = vector.broadcast %782 : vector<1x128xf32> to vector<22x128xf32>
    %784 = arith.mulf %592, %783 : vector<22x128xf32>
    %785 = vector.extract_strided_slice %682 {offsets = [4, 3, 0], sizes = [1, 1, 128], strides = [1, 1, 1]} : vector<7x7x128xf32> to vector<1x1x128xf32>
    %786 = vector.shape_cast %785 : vector<1x1x128xf32> to vector<128xf32>
    %787 = vector.shape_cast %786 : vector<128xf32> to vector<1x128xf32>
    %788 = vector.broadcast %787 : vector<1x128xf32> to vector<22x128xf32>
    %789 = arith.mulf %593, %788 : vector<22x128xf32>
    %790 = vector.extract_strided_slice %682 {offsets = [4, 4, 0], sizes = [1, 1, 128], strides = [1, 1, 1]} : vector<7x7x128xf32> to vector<1x1x128xf32>
    %791 = vector.shape_cast %790 : vector<1x1x128xf32> to vector<128xf32>
    %792 = vector.shape_cast %791 : vector<128xf32> to vector<1x128xf32>
    %793 = vector.broadcast %792 : vector<1x128xf32> to vector<22x128xf32>
    %794 = arith.mulf %594, %793 : vector<22x128xf32>
    %795 = vector.extract_strided_slice %682 {offsets = [4, 5, 0], sizes = [1, 1, 128], strides = [1, 1, 1]} : vector<7x7x128xf32> to vector<1x1x128xf32>
    %796 = vector.shape_cast %795 : vector<1x1x128xf32> to vector<128xf32>
    %797 = vector.shape_cast %796 : vector<128xf32> to vector<1x128xf32>
    %798 = vector.broadcast %797 : vector<1x128xf32> to vector<22x128xf32>
    %799 = arith.mulf %595, %798 : vector<22x128xf32>
    %800 = arith.addf %779, %784 : vector<22x128xf32>
    %801 = arith.addf %789, %794 : vector<22x128xf32>
    %802 = arith.addf %800, %801 : vector<22x128xf32>
    %803 = arith.addf %802, %799 : vector<22x128xf32>
    %804 = vector.extract_strided_slice %803 {offsets = [4, 0], sizes = [16, 128], strides = [1, 1]} : vector<22x128xf32> to vector<16x128xf32>
    %805 = vector.extract_strided_slice %682 {offsets = [5, 1, 0], sizes = [1, 1, 128], strides = [1, 1, 1]} : vector<7x7x128xf32> to vector<1x1x128xf32>
    %806 = vector.shape_cast %805 : vector<1x1x128xf32> to vector<128xf32>
    %807 = vector.shape_cast %806 : vector<128xf32> to vector<1x128xf32>
    %808 = vector.broadcast %807 : vector<1x128xf32> to vector<22x128xf32>
    %809 = arith.mulf %591, %808 : vector<22x128xf32>
    %810 = vector.extract_strided_slice %682 {offsets = [5, 2, 0], sizes = [1, 1, 128], strides = [1, 1, 1]} : vector<7x7x128xf32> to vector<1x1x128xf32>
    %811 = vector.shape_cast %810 : vector<1x1x128xf32> to vector<128xf32>
    %812 = vector.shape_cast %811 : vector<128xf32> to vector<1x128xf32>
    %813 = vector.broadcast %812 : vector<1x128xf32> to vector<22x128xf32>
    %814 = arith.mulf %592, %813 : vector<22x128xf32>
    %815 = vector.extract_strided_slice %682 {offsets = [5, 3, 0], sizes = [1, 1, 128], strides = [1, 1, 1]} : vector<7x7x128xf32> to vector<1x1x128xf32>
    %816 = vector.shape_cast %815 : vector<1x1x128xf32> to vector<128xf32>
    %817 = vector.shape_cast %816 : vector<128xf32> to vector<1x128xf32>
    %818 = vector.broadcast %817 : vector<1x128xf32> to vector<22x128xf32>
    %819 = arith.mulf %593, %818 : vector<22x128xf32>
    %820 = vector.extract_strided_slice %682 {offsets = [5, 4, 0], sizes = [1, 1, 128], strides = [1, 1, 1]} : vector<7x7x128xf32> to vector<1x1x128xf32>
    %821 = vector.shape_cast %820 : vector<1x1x128xf32> to vector<128xf32>
    %822 = vector.shape_cast %821 : vector<128xf32> to vector<1x128xf32>
    %823 = vector.broadcast %822 : vector<1x128xf32> to vector<22x128xf32>
    %824 = arith.mulf %594, %823 : vector<22x128xf32>
    %825 = vector.extract_strided_slice %682 {offsets = [5, 5, 0], sizes = [1, 1, 128], strides = [1, 1, 1]} : vector<7x7x128xf32> to vector<1x1x128xf32>
    %826 = vector.shape_cast %825 : vector<1x1x128xf32> to vector<128xf32>
    %827 = vector.shape_cast %826 : vector<128xf32> to vector<1x128xf32>
    %828 = vector.broadcast %827 : vector<1x128xf32> to vector<22x128xf32>
    %829 = arith.mulf %595, %828 : vector<22x128xf32>
    %830 = arith.addf %809, %814 : vector<22x128xf32>
    %831 = arith.addf %819, %824 : vector<22x128xf32>
    %832 = arith.addf %830, %831 : vector<22x128xf32>
    %833 = arith.addf %832, %829 : vector<22x128xf32>
    %834 = vector.extract_strided_slice %833 {offsets = [5, 0], sizes = [16, 128], strides = [1, 1]} : vector<22x128xf32> to vector<16x128xf32>
    %835 = arith.addf %714, %744 : vector<16x128xf32>
    %836 = arith.addf %774, %804 : vector<16x128xf32>
    %837 = arith.addf %835, %836 : vector<16x128xf32>
    %838 = arith.addf %837, %834 : vector<16x128xf32>
    %839 = vector.shape_cast %684 : vector<128xf32> to vector<1x128xf32>
    %840 = vector.broadcast %839 : vector<1x128xf32> to vector<16x128xf32>
    %841 = arith.addf %838, %840 : vector<16x128xf32>
    %cst_73 = arith.constant 0.000000e+00 : f32
    %cst_74 = arith.constant 6.000000e+00 : f32
    %842 = vector.broadcast %cst_73 : f32 to vector<16x128xf32>
    %843 = arith.maximumf %842, %841 : vector<16x128xf32>
    %844 = vector.broadcast %cst_74 : f32 to vector<16x128xf32>
    %845 = arith.minimumf %844, %843 : vector<16x128xf32>
    %c3_75 = arith.constant 3 : index
    %c0_76 = arith.constant 0 : index
    %c0_77 = arith.constant 0 : index
    %c0_78 = arith.constant 0 : index
    %846 = vector.load %arg2[%c3_75, %c0_76, %c0_77, %c0_78] : memref<4x7x7x128xf32, #tpu.memory_space<vmem>>, vector<1x7x7x128xf32>
    %847 = vector.shape_cast %846 : vector<1x7x7x128xf32> to vector<7x7x128xf32>
    %c3_79 = arith.constant 3 : index
    %c0_80 = arith.constant 0 : index
    %848 = vector.load %arg3[%c3_79, %c0_80] : memref<4x128xf32, #tpu.memory_space<vmem>>, vector<1x128xf32>
    %849 = vector.shape_cast %848 : vector<1x128xf32> to vector<128xf32>
    %850 = vector.extract_strided_slice %847 {offsets = [0, 0, 0], sizes = [1, 1, 128], strides = [1, 1, 1]} : vector<7x7x128xf32> to vector<1x1x128xf32>
    %851 = vector.shape_cast %850 : vector<1x1x128xf32> to vector<128xf32>
    %852 = vector.shape_cast %851 : vector<128xf32> to vector<1x128xf32>
    %853 = vector.broadcast %852 : vector<1x128xf32> to vector<22x128xf32>
    %854 = arith.mulf %590, %853 : vector<22x128xf32>
    %855 = vector.extract_strided_slice %847 {offsets = [0, 1, 0], sizes = [1, 1, 128], strides = [1, 1, 1]} : vector<7x7x128xf32> to vector<1x1x128xf32>
    %856 = vector.shape_cast %855 : vector<1x1x128xf32> to vector<128xf32>
    %857 = vector.shape_cast %856 : vector<128xf32> to vector<1x128xf32>
    %858 = vector.broadcast %857 : vector<1x128xf32> to vector<22x128xf32>
    %859 = arith.mulf %591, %858 : vector<22x128xf32>
    %860 = vector.extract_strided_slice %847 {offsets = [0, 2, 0], sizes = [1, 1, 128], strides = [1, 1, 1]} : vector<7x7x128xf32> to vector<1x1x128xf32>
    %861 = vector.shape_cast %860 : vector<1x1x128xf32> to vector<128xf32>
    %862 = vector.shape_cast %861 : vector<128xf32> to vector<1x128xf32>
    %863 = vector.broadcast %862 : vector<1x128xf32> to vector<22x128xf32>
    %864 = arith.mulf %592, %863 : vector<22x128xf32>
    %865 = vector.extract_strided_slice %847 {offsets = [0, 3, 0], sizes = [1, 1, 128], strides = [1, 1, 1]} : vector<7x7x128xf32> to vector<1x1x128xf32>
    %866 = vector.shape_cast %865 : vector<1x1x128xf32> to vector<128xf32>
    %867 = vector.shape_cast %866 : vector<128xf32> to vector<1x128xf32>
    %868 = vector.broadcast %867 : vector<1x128xf32> to vector<22x128xf32>
    %869 = arith.mulf %593, %868 : vector<22x128xf32>
    %870 = vector.extract_strided_slice %847 {offsets = [0, 4, 0], sizes = [1, 1, 128], strides = [1, 1, 1]} : vector<7x7x128xf32> to vector<1x1x128xf32>
    %871 = vector.shape_cast %870 : vector<1x1x128xf32> to vector<128xf32>
    %872 = vector.shape_cast %871 : vector<128xf32> to vector<1x128xf32>
    %873 = vector.broadcast %872 : vector<1x128xf32> to vector<22x128xf32>
    %874 = arith.mulf %594, %873 : vector<22x128xf32>
    %875 = vector.extract_strided_slice %847 {offsets = [0, 5, 0], sizes = [1, 1, 128], strides = [1, 1, 1]} : vector<7x7x128xf32> to vector<1x1x128xf32>
    %876 = vector.shape_cast %875 : vector<1x1x128xf32> to vector<128xf32>
    %877 = vector.shape_cast %876 : vector<128xf32> to vector<1x128xf32>
    %878 = vector.broadcast %877 : vector<1x128xf32> to vector<22x128xf32>
    %879 = arith.mulf %595, %878 : vector<22x128xf32>
    %880 = vector.extract_strided_slice %847 {offsets = [0, 6, 0], sizes = [1, 1, 128], strides = [1, 1, 1]} : vector<7x7x128xf32> to vector<1x1x128xf32>
    %881 = vector.shape_cast %880 : vector<1x1x128xf32> to vector<128xf32>
    %882 = vector.shape_cast %881 : vector<128xf32> to vector<1x128xf32>
    %883 = vector.broadcast %882 : vector<1x128xf32> to vector<22x128xf32>
    %884 = arith.mulf %596, %883 : vector<22x128xf32>
    %885 = arith.addf %854, %859 : vector<22x128xf32>
    %886 = arith.addf %864, %869 : vector<22x128xf32>
    %887 = arith.addf %874, %879 : vector<22x128xf32>
    %888 = arith.addf %885, %886 : vector<22x128xf32>
    %889 = arith.addf %887, %884 : vector<22x128xf32>
    %890 = arith.addf %888, %889 : vector<22x128xf32>
    %891 = vector.extract_strided_slice %890 {offsets = [0, 0], sizes = [16, 128], strides = [1, 1]} : vector<22x128xf32> to vector<16x128xf32>
    %892 = vector.extract_strided_slice %847 {offsets = [1, 0, 0], sizes = [1, 1, 128], strides = [1, 1, 1]} : vector<7x7x128xf32> to vector<1x1x128xf32>
    %893 = vector.shape_cast %892 : vector<1x1x128xf32> to vector<128xf32>
    %894 = vector.shape_cast %893 : vector<128xf32> to vector<1x128xf32>
    %895 = vector.broadcast %894 : vector<1x128xf32> to vector<22x128xf32>
    %896 = arith.mulf %590, %895 : vector<22x128xf32>
    %897 = vector.extract_strided_slice %847 {offsets = [1, 1, 0], sizes = [1, 1, 128], strides = [1, 1, 1]} : vector<7x7x128xf32> to vector<1x1x128xf32>
    %898 = vector.shape_cast %897 : vector<1x1x128xf32> to vector<128xf32>
    %899 = vector.shape_cast %898 : vector<128xf32> to vector<1x128xf32>
    %900 = vector.broadcast %899 : vector<1x128xf32> to vector<22x128xf32>
    %901 = arith.mulf %591, %900 : vector<22x128xf32>
    %902 = vector.extract_strided_slice %847 {offsets = [1, 2, 0], sizes = [1, 1, 128], strides = [1, 1, 1]} : vector<7x7x128xf32> to vector<1x1x128xf32>
    %903 = vector.shape_cast %902 : vector<1x1x128xf32> to vector<128xf32>
    %904 = vector.shape_cast %903 : vector<128xf32> to vector<1x128xf32>
    %905 = vector.broadcast %904 : vector<1x128xf32> to vector<22x128xf32>
    %906 = arith.mulf %592, %905 : vector<22x128xf32>
    %907 = vector.extract_strided_slice %847 {offsets = [1, 3, 0], sizes = [1, 1, 128], strides = [1, 1, 1]} : vector<7x7x128xf32> to vector<1x1x128xf32>
    %908 = vector.shape_cast %907 : vector<1x1x128xf32> to vector<128xf32>
    %909 = vector.shape_cast %908 : vector<128xf32> to vector<1x128xf32>
    %910 = vector.broadcast %909 : vector<1x128xf32> to vector<22x128xf32>
    %911 = arith.mulf %593, %910 : vector<22x128xf32>
    %912 = vector.extract_strided_slice %847 {offsets = [1, 4, 0], sizes = [1, 1, 128], strides = [1, 1, 1]} : vector<7x7x128xf32> to vector<1x1x128xf32>
    %913 = vector.shape_cast %912 : vector<1x1x128xf32> to vector<128xf32>
    %914 = vector.shape_cast %913 : vector<128xf32> to vector<1x128xf32>
    %915 = vector.broadcast %914 : vector<1x128xf32> to vector<22x128xf32>
    %916 = arith.mulf %594, %915 : vector<22x128xf32>
    %917 = vector.extract_strided_slice %847 {offsets = [1, 5, 0], sizes = [1, 1, 128], strides = [1, 1, 1]} : vector<7x7x128xf32> to vector<1x1x128xf32>
    %918 = vector.shape_cast %917 : vector<1x1x128xf32> to vector<128xf32>
    %919 = vector.shape_cast %918 : vector<128xf32> to vector<1x128xf32>
    %920 = vector.broadcast %919 : vector<1x128xf32> to vector<22x128xf32>
    %921 = arith.mulf %595, %920 : vector<22x128xf32>
    %922 = vector.extract_strided_slice %847 {offsets = [1, 6, 0], sizes = [1, 1, 128], strides = [1, 1, 1]} : vector<7x7x128xf32> to vector<1x1x128xf32>
    %923 = vector.shape_cast %922 : vector<1x1x128xf32> to vector<128xf32>
    %924 = vector.shape_cast %923 : vector<128xf32> to vector<1x128xf32>
    %925 = vector.broadcast %924 : vector<1x128xf32> to vector<22x128xf32>
    %926 = arith.mulf %596, %925 : vector<22x128xf32>
    %927 = arith.addf %896, %901 : vector<22x128xf32>
    %928 = arith.addf %906, %911 : vector<22x128xf32>
    %929 = arith.addf %916, %921 : vector<22x128xf32>
    %930 = arith.addf %927, %928 : vector<22x128xf32>
    %931 = arith.addf %929, %926 : vector<22x128xf32>
    %932 = arith.addf %930, %931 : vector<22x128xf32>
    %933 = vector.extract_strided_slice %932 {offsets = [1, 0], sizes = [16, 128], strides = [1, 1]} : vector<22x128xf32> to vector<16x128xf32>
    %934 = vector.extract_strided_slice %847 {offsets = [2, 0, 0], sizes = [1, 1, 128], strides = [1, 1, 1]} : vector<7x7x128xf32> to vector<1x1x128xf32>
    %935 = vector.shape_cast %934 : vector<1x1x128xf32> to vector<128xf32>
    %936 = vector.shape_cast %935 : vector<128xf32> to vector<1x128xf32>
    %937 = vector.broadcast %936 : vector<1x128xf32> to vector<22x128xf32>
    %938 = arith.mulf %590, %937 : vector<22x128xf32>
    %939 = vector.extract_strided_slice %847 {offsets = [2, 1, 0], sizes = [1, 1, 128], strides = [1, 1, 1]} : vector<7x7x128xf32> to vector<1x1x128xf32>
    %940 = vector.shape_cast %939 : vector<1x1x128xf32> to vector<128xf32>
    %941 = vector.shape_cast %940 : vector<128xf32> to vector<1x128xf32>
    %942 = vector.broadcast %941 : vector<1x128xf32> to vector<22x128xf32>
    %943 = arith.mulf %591, %942 : vector<22x128xf32>
    %944 = vector.extract_strided_slice %847 {offsets = [2, 2, 0], sizes = [1, 1, 128], strides = [1, 1, 1]} : vector<7x7x128xf32> to vector<1x1x128xf32>
    %945 = vector.shape_cast %944 : vector<1x1x128xf32> to vector<128xf32>
    %946 = vector.shape_cast %945 : vector<128xf32> to vector<1x128xf32>
    %947 = vector.broadcast %946 : vector<1x128xf32> to vector<22x128xf32>
    %948 = arith.mulf %592, %947 : vector<22x128xf32>
    %949 = vector.extract_strided_slice %847 {offsets = [2, 3, 0], sizes = [1, 1, 128], strides = [1, 1, 1]} : vector<7x7x128xf32> to vector<1x1x128xf32>
    %950 = vector.shape_cast %949 : vector<1x1x128xf32> to vector<128xf32>
    %951 = vector.shape_cast %950 : vector<128xf32> to vector<1x128xf32>
    %952 = vector.broadcast %951 : vector<1x128xf32> to vector<22x128xf32>
    %953 = arith.mulf %593, %952 : vector<22x128xf32>
    %954 = vector.extract_strided_slice %847 {offsets = [2, 4, 0], sizes = [1, 1, 128], strides = [1, 1, 1]} : vector<7x7x128xf32> to vector<1x1x128xf32>
    %955 = vector.shape_cast %954 : vector<1x1x128xf32> to vector<128xf32>
    %956 = vector.shape_cast %955 : vector<128xf32> to vector<1x128xf32>
    %957 = vector.broadcast %956 : vector<1x128xf32> to vector<22x128xf32>
    %958 = arith.mulf %594, %957 : vector<22x128xf32>
    %959 = vector.extract_strided_slice %847 {offsets = [2, 5, 0], sizes = [1, 1, 128], strides = [1, 1, 1]} : vector<7x7x128xf32> to vector<1x1x128xf32>
    %960 = vector.shape_cast %959 : vector<1x1x128xf32> to vector<128xf32>
    %961 = vector.shape_cast %960 : vector<128xf32> to vector<1x128xf32>
    %962 = vector.broadcast %961 : vector<1x128xf32> to vector<22x128xf32>
    %963 = arith.mulf %595, %962 : vector<22x128xf32>
    %964 = vector.extract_strided_slice %847 {offsets = [2, 6, 0], sizes = [1, 1, 128], strides = [1, 1, 1]} : vector<7x7x128xf32> to vector<1x1x128xf32>
    %965 = vector.shape_cast %964 : vector<1x1x128xf32> to vector<128xf32>
    %966 = vector.shape_cast %965 : vector<128xf32> to vector<1x128xf32>
    %967 = vector.broadcast %966 : vector<1x128xf32> to vector<22x128xf32>
    %968 = arith.mulf %596, %967 : vector<22x128xf32>
    %969 = arith.addf %938, %943 : vector<22x128xf32>
    %970 = arith.addf %948, %953 : vector<22x128xf32>
    %971 = arith.addf %958, %963 : vector<22x128xf32>
    %972 = arith.addf %969, %970 : vector<22x128xf32>
    %973 = arith.addf %971, %968 : vector<22x128xf32>
    %974 = arith.addf %972, %973 : vector<22x128xf32>
    %975 = vector.extract_strided_slice %974 {offsets = [2, 0], sizes = [16, 128], strides = [1, 1]} : vector<22x128xf32> to vector<16x128xf32>
    %976 = vector.extract_strided_slice %847 {offsets = [3, 0, 0], sizes = [1, 1, 128], strides = [1, 1, 1]} : vector<7x7x128xf32> to vector<1x1x128xf32>
    %977 = vector.shape_cast %976 : vector<1x1x128xf32> to vector<128xf32>
    %978 = vector.shape_cast %977 : vector<128xf32> to vector<1x128xf32>
    %979 = vector.broadcast %978 : vector<1x128xf32> to vector<22x128xf32>
    %980 = arith.mulf %590, %979 : vector<22x128xf32>
    %981 = vector.extract_strided_slice %847 {offsets = [3, 1, 0], sizes = [1, 1, 128], strides = [1, 1, 1]} : vector<7x7x128xf32> to vector<1x1x128xf32>
    %982 = vector.shape_cast %981 : vector<1x1x128xf32> to vector<128xf32>
    %983 = vector.shape_cast %982 : vector<128xf32> to vector<1x128xf32>
    %984 = vector.broadcast %983 : vector<1x128xf32> to vector<22x128xf32>
    %985 = arith.mulf %591, %984 : vector<22x128xf32>
    %986 = vector.extract_strided_slice %847 {offsets = [3, 2, 0], sizes = [1, 1, 128], strides = [1, 1, 1]} : vector<7x7x128xf32> to vector<1x1x128xf32>
    %987 = vector.shape_cast %986 : vector<1x1x128xf32> to vector<128xf32>
    %988 = vector.shape_cast %987 : vector<128xf32> to vector<1x128xf32>
    %989 = vector.broadcast %988 : vector<1x128xf32> to vector<22x128xf32>
    %990 = arith.mulf %592, %989 : vector<22x128xf32>
    %991 = vector.extract_strided_slice %847 {offsets = [3, 3, 0], sizes = [1, 1, 128], strides = [1, 1, 1]} : vector<7x7x128xf32> to vector<1x1x128xf32>
    %992 = vector.shape_cast %991 : vector<1x1x128xf32> to vector<128xf32>
    %993 = vector.shape_cast %992 : vector<128xf32> to vector<1x128xf32>
    %994 = vector.broadcast %993 : vector<1x128xf32> to vector<22x128xf32>
    %995 = arith.mulf %593, %994 : vector<22x128xf32>
    %996 = vector.extract_strided_slice %847 {offsets = [3, 4, 0], sizes = [1, 1, 128], strides = [1, 1, 1]} : vector<7x7x128xf32> to vector<1x1x128xf32>
    %997 = vector.shape_cast %996 : vector<1x1x128xf32> to vector<128xf32>
    %998 = vector.shape_cast %997 : vector<128xf32> to vector<1x128xf32>
    %999 = vector.broadcast %998 : vector<1x128xf32> to vector<22x128xf32>
    %1000 = arith.mulf %594, %999 : vector<22x128xf32>
    %1001 = vector.extract_strided_slice %847 {offsets = [3, 5, 0], sizes = [1, 1, 128], strides = [1, 1, 1]} : vector<7x7x128xf32> to vector<1x1x128xf32>
    %1002 = vector.shape_cast %1001 : vector<1x1x128xf32> to vector<128xf32>
    %1003 = vector.shape_cast %1002 : vector<128xf32> to vector<1x128xf32>
    %1004 = vector.broadcast %1003 : vector<1x128xf32> to vector<22x128xf32>
    %1005 = arith.mulf %595, %1004 : vector<22x128xf32>
    %1006 = vector.extract_strided_slice %847 {offsets = [3, 6, 0], sizes = [1, 1, 128], strides = [1, 1, 1]} : vector<7x7x128xf32> to vector<1x1x128xf32>
    %1007 = vector.shape_cast %1006 : vector<1x1x128xf32> to vector<128xf32>
    %1008 = vector.shape_cast %1007 : vector<128xf32> to vector<1x128xf32>
    %1009 = vector.broadcast %1008 : vector<1x128xf32> to vector<22x128xf32>
    %1010 = arith.mulf %596, %1009 : vector<22x128xf32>
    %1011 = arith.addf %980, %985 : vector<22x128xf32>
    %1012 = arith.addf %990, %995 : vector<22x128xf32>
    %1013 = arith.addf %1000, %1005 : vector<22x128xf32>
    %1014 = arith.addf %1011, %1012 : vector<22x128xf32>
    %1015 = arith.addf %1013, %1010 : vector<22x128xf32>
    %1016 = arith.addf %1014, %1015 : vector<22x128xf32>
    %1017 = vector.extract_strided_slice %1016 {offsets = [3, 0], sizes = [16, 128], strides = [1, 1]} : vector<22x128xf32> to vector<16x128xf32>
    %1018 = vector.extract_strided_slice %847 {offsets = [4, 0, 0], sizes = [1, 1, 128], strides = [1, 1, 1]} : vector<7x7x128xf32> to vector<1x1x128xf32>
    %1019 = vector.shape_cast %1018 : vector<1x1x128xf32> to vector<128xf32>
    %1020 = vector.shape_cast %1019 : vector<128xf32> to vector<1x128xf32>
    %1021 = vector.broadcast %1020 : vector<1x128xf32> to vector<22x128xf32>
    %1022 = arith.mulf %590, %1021 : vector<22x128xf32>
    %1023 = vector.extract_strided_slice %847 {offsets = [4, 1, 0], sizes = [1, 1, 128], strides = [1, 1, 1]} : vector<7x7x128xf32> to vector<1x1x128xf32>
    %1024 = vector.shape_cast %1023 : vector<1x1x128xf32> to vector<128xf32>
    %1025 = vector.shape_cast %1024 : vector<128xf32> to vector<1x128xf32>
    %1026 = vector.broadcast %1025 : vector<1x128xf32> to vector<22x128xf32>
    %1027 = arith.mulf %591, %1026 : vector<22x128xf32>
    %1028 = vector.extract_strided_slice %847 {offsets = [4, 2, 0], sizes = [1, 1, 128], strides = [1, 1, 1]} : vector<7x7x128xf32> to vector<1x1x128xf32>
    %1029 = vector.shape_cast %1028 : vector<1x1x128xf32> to vector<128xf32>
    %1030 = vector.shape_cast %1029 : vector<128xf32> to vector<1x128xf32>
    %1031 = vector.broadcast %1030 : vector<1x128xf32> to vector<22x128xf32>
    %1032 = arith.mulf %592, %1031 : vector<22x128xf32>
    %1033 = vector.extract_strided_slice %847 {offsets = [4, 3, 0], sizes = [1, 1, 128], strides = [1, 1, 1]} : vector<7x7x128xf32> to vector<1x1x128xf32>
    %1034 = vector.shape_cast %1033 : vector<1x1x128xf32> to vector<128xf32>
    %1035 = vector.shape_cast %1034 : vector<128xf32> to vector<1x128xf32>
    %1036 = vector.broadcast %1035 : vector<1x128xf32> to vector<22x128xf32>
    %1037 = arith.mulf %593, %1036 : vector<22x128xf32>
    %1038 = vector.extract_strided_slice %847 {offsets = [4, 4, 0], sizes = [1, 1, 128], strides = [1, 1, 1]} : vector<7x7x128xf32> to vector<1x1x128xf32>
    %1039 = vector.shape_cast %1038 : vector<1x1x128xf32> to vector<128xf32>
    %1040 = vector.shape_cast %1039 : vector<128xf32> to vector<1x128xf32>
    %1041 = vector.broadcast %1040 : vector<1x128xf32> to vector<22x128xf32>
    %1042 = arith.mulf %594, %1041 : vector<22x128xf32>
    %1043 = vector.extract_strided_slice %847 {offsets = [4, 5, 0], sizes = [1, 1, 128], strides = [1, 1, 1]} : vector<7x7x128xf32> to vector<1x1x128xf32>
    %1044 = vector.shape_cast %1043 : vector<1x1x128xf32> to vector<128xf32>
    %1045 = vector.shape_cast %1044 : vector<128xf32> to vector<1x128xf32>
    %1046 = vector.broadcast %1045 : vector<1x128xf32> to vector<22x128xf32>
    %1047 = arith.mulf %595, %1046 : vector<22x128xf32>
    %1048 = vector.extract_strided_slice %847 {offsets = [4, 6, 0], sizes = [1, 1, 128], strides = [1, 1, 1]} : vector<7x7x128xf32> to vector<1x1x128xf32>
    %1049 = vector.shape_cast %1048 : vector<1x1x128xf32> to vector<128xf32>
    %1050 = vector.shape_cast %1049 : vector<128xf32> to vector<1x128xf32>
    %1051 = vector.broadcast %1050 : vector<1x128xf32> to vector<22x128xf32>
    %1052 = arith.mulf %596, %1051 : vector<22x128xf32>
    %1053 = arith.addf %1022, %1027 : vector<22x128xf32>
    %1054 = arith.addf %1032, %1037 : vector<22x128xf32>
    %1055 = arith.addf %1042, %1047 : vector<22x128xf32>
    %1056 = arith.addf %1053, %1054 : vector<22x128xf32>
    %1057 = arith.addf %1055, %1052 : vector<22x128xf32>
    %1058 = arith.addf %1056, %1057 : vector<22x128xf32>
    %1059 = vector.extract_strided_slice %1058 {offsets = [4, 0], sizes = [16, 128], strides = [1, 1]} : vector<22x128xf32> to vector<16x128xf32>
    %1060 = vector.extract_strided_slice %847 {offsets = [5, 0, 0], sizes = [1, 1, 128], strides = [1, 1, 1]} : vector<7x7x128xf32> to vector<1x1x128xf32>
    %1061 = vector.shape_cast %1060 : vector<1x1x128xf32> to vector<128xf32>
    %1062 = vector.shape_cast %1061 : vector<128xf32> to vector<1x128xf32>
    %1063 = vector.broadcast %1062 : vector<1x128xf32> to vector<22x128xf32>
    %1064 = arith.mulf %590, %1063 : vector<22x128xf32>
    %1065 = vector.extract_strided_slice %847 {offsets = [5, 1, 0], sizes = [1, 1, 128], strides = [1, 1, 1]} : vector<7x7x128xf32> to vector<1x1x128xf32>
    %1066 = vector.shape_cast %1065 : vector<1x1x128xf32> to vector<128xf32>
    %1067 = vector.shape_cast %1066 : vector<128xf32> to vector<1x128xf32>
    %1068 = vector.broadcast %1067 : vector<1x128xf32> to vector<22x128xf32>
    %1069 = arith.mulf %591, %1068 : vector<22x128xf32>
    %1070 = vector.extract_strided_slice %847 {offsets = [5, 2, 0], sizes = [1, 1, 128], strides = [1, 1, 1]} : vector<7x7x128xf32> to vector<1x1x128xf32>
    %1071 = vector.shape_cast %1070 : vector<1x1x128xf32> to vector<128xf32>
    %1072 = vector.shape_cast %1071 : vector<128xf32> to vector<1x128xf32>
    %1073 = vector.broadcast %1072 : vector<1x128xf32> to vector<22x128xf32>
    %1074 = arith.mulf %592, %1073 : vector<22x128xf32>
    %1075 = vector.extract_strided_slice %847 {offsets = [5, 3, 0], sizes = [1, 1, 128], strides = [1, 1, 1]} : vector<7x7x128xf32> to vector<1x1x128xf32>
    %1076 = vector.shape_cast %1075 : vector<1x1x128xf32> to vector<128xf32>
    %1077 = vector.shape_cast %1076 : vector<128xf32> to vector<1x128xf32>
    %1078 = vector.broadcast %1077 : vector<1x128xf32> to vector<22x128xf32>
    %1079 = arith.mulf %593, %1078 : vector<22x128xf32>
    %1080 = vector.extract_strided_slice %847 {offsets = [5, 4, 0], sizes = [1, 1, 128], strides = [1, 1, 1]} : vector<7x7x128xf32> to vector<1x1x128xf32>
    %1081 = vector.shape_cast %1080 : vector<1x1x128xf32> to vector<128xf32>
    %1082 = vector.shape_cast %1081 : vector<128xf32> to vector<1x128xf32>
    %1083 = vector.broadcast %1082 : vector<1x128xf32> to vector<22x128xf32>
    %1084 = arith.mulf %594, %1083 : vector<22x128xf32>
    %1085 = vector.extract_strided_slice %847 {offsets = [5, 5, 0], sizes = [1, 1, 128], strides = [1, 1, 1]} : vector<7x7x128xf32> to vector<1x1x128xf32>
    %1086 = vector.shape_cast %1085 : vector<1x1x128xf32> to vector<128xf32>
    %1087 = vector.shape_cast %1086 : vector<128xf32> to vector<1x128xf32>
    %1088 = vector.broadcast %1087 : vector<1x128xf32> to vector<22x128xf32>
    %1089 = arith.mulf %595, %1088 : vector<22x128xf32>
    %1090 = vector.extract_strided_slice %847 {offsets = [5, 6, 0], sizes = [1, 1, 128], strides = [1, 1, 1]} : vector<7x7x128xf32> to vector<1x1x128xf32>
    %1091 = vector.shape_cast %1090 : vector<1x1x128xf32> to vector<128xf32>
    %1092 = vector.shape_cast %1091 : vector<128xf32> to vector<1x128xf32>
    %1093 = vector.broadcast %1092 : vector<1x128xf32> to vector<22x128xf32>
    %1094 = arith.mulf %596, %1093 : vector<22x128xf32>
    %1095 = arith.addf %1064, %1069 : vector<22x128xf32>
    %1096 = arith.addf %1074, %1079 : vector<22x128xf32>
    %1097 = arith.addf %1084, %1089 : vector<22x128xf32>
    %1098 = arith.addf %1095, %1096 : vector<22x128xf32>
    %1099 = arith.addf %1097, %1094 : vector<22x128xf32>
    %1100 = arith.addf %1098, %1099 : vector<22x128xf32>
    %1101 = vector.extract_strided_slice %1100 {offsets = [5, 0], sizes = [16, 128], strides = [1, 1]} : vector<22x128xf32> to vector<16x128xf32>
    %1102 = vector.extract_strided_slice %847 {offsets = [6, 0, 0], sizes = [1, 1, 128], strides = [1, 1, 1]} : vector<7x7x128xf32> to vector<1x1x128xf32>
    %1103 = vector.shape_cast %1102 : vector<1x1x128xf32> to vector<128xf32>
    %1104 = vector.shape_cast %1103 : vector<128xf32> to vector<1x128xf32>
    %1105 = vector.broadcast %1104 : vector<1x128xf32> to vector<22x128xf32>
    %1106 = arith.mulf %590, %1105 : vector<22x128xf32>
    %1107 = vector.extract_strided_slice %847 {offsets = [6, 1, 0], sizes = [1, 1, 128], strides = [1, 1, 1]} : vector<7x7x128xf32> to vector<1x1x128xf32>
    %1108 = vector.shape_cast %1107 : vector<1x1x128xf32> to vector<128xf32>
    %1109 = vector.shape_cast %1108 : vector<128xf32> to vector<1x128xf32>
    %1110 = vector.broadcast %1109 : vector<1x128xf32> to vector<22x128xf32>
    %1111 = arith.mulf %591, %1110 : vector<22x128xf32>
    %1112 = vector.extract_strided_slice %847 {offsets = [6, 2, 0], sizes = [1, 1, 128], strides = [1, 1, 1]} : vector<7x7x128xf32> to vector<1x1x128xf32>
    %1113 = vector.shape_cast %1112 : vector<1x1x128xf32> to vector<128xf32>
    %1114 = vector.shape_cast %1113 : vector<128xf32> to vector<1x128xf32>
    %1115 = vector.broadcast %1114 : vector<1x128xf32> to vector<22x128xf32>
    %1116 = arith.mulf %592, %1115 : vector<22x128xf32>
    %1117 = vector.extract_strided_slice %847 {offsets = [6, 3, 0], sizes = [1, 1, 128], strides = [1, 1, 1]} : vector<7x7x128xf32> to vector<1x1x128xf32>
    %1118 = vector.shape_cast %1117 : vector<1x1x128xf32> to vector<128xf32>
    %1119 = vector.shape_cast %1118 : vector<128xf32> to vector<1x128xf32>
    %1120 = vector.broadcast %1119 : vector<1x128xf32> to vector<22x128xf32>
    %1121 = arith.mulf %593, %1120 : vector<22x128xf32>
    %1122 = vector.extract_strided_slice %847 {offsets = [6, 4, 0], sizes = [1, 1, 128], strides = [1, 1, 1]} : vector<7x7x128xf32> to vector<1x1x128xf32>
    %1123 = vector.shape_cast %1122 : vector<1x1x128xf32> to vector<128xf32>
    %1124 = vector.shape_cast %1123 : vector<128xf32> to vector<1x128xf32>
    %1125 = vector.broadcast %1124 : vector<1x128xf32> to vector<22x128xf32>
    %1126 = arith.mulf %594, %1125 : vector<22x128xf32>
    %1127 = vector.extract_strided_slice %847 {offsets = [6, 5, 0], sizes = [1, 1, 128], strides = [1, 1, 1]} : vector<7x7x128xf32> to vector<1x1x128xf32>
    %1128 = vector.shape_cast %1127 : vector<1x1x128xf32> to vector<128xf32>
    %1129 = vector.shape_cast %1128 : vector<128xf32> to vector<1x128xf32>
    %1130 = vector.broadcast %1129 : vector<1x128xf32> to vector<22x128xf32>
    %1131 = arith.mulf %595, %1130 : vector<22x128xf32>
    %1132 = vector.extract_strided_slice %847 {offsets = [6, 6, 0], sizes = [1, 1, 128], strides = [1, 1, 1]} : vector<7x7x128xf32> to vector<1x1x128xf32>
    %1133 = vector.shape_cast %1132 : vector<1x1x128xf32> to vector<128xf32>
    %1134 = vector.shape_cast %1133 : vector<128xf32> to vector<1x128xf32>
    %1135 = vector.broadcast %1134 : vector<1x128xf32> to vector<22x128xf32>
    %1136 = arith.mulf %596, %1135 : vector<22x128xf32>
    %1137 = arith.addf %1106, %1111 : vector<22x128xf32>
    %1138 = arith.addf %1116, %1121 : vector<22x128xf32>
    %1139 = arith.addf %1126, %1131 : vector<22x128xf32>
    %1140 = arith.addf %1137, %1138 : vector<22x128xf32>
    %1141 = arith.addf %1139, %1136 : vector<22x128xf32>
    %1142 = arith.addf %1140, %1141 : vector<22x128xf32>
    %1143 = vector.extract_strided_slice %1142 {offsets = [6, 0], sizes = [16, 128], strides = [1, 1]} : vector<22x128xf32> to vector<16x128xf32>
    %1144 = arith.addf %891, %933 : vector<16x128xf32>
    %1145 = arith.addf %975, %1017 : vector<16x128xf32>
    %1146 = arith.addf %1059, %1101 : vector<16x128xf32>
    %1147 = arith.addf %1144, %1145 : vector<16x128xf32>
    %1148 = arith.addf %1146, %1143 : vector<16x128xf32>
    %1149 = arith.addf %1147, %1148 : vector<16x128xf32>
    %1150 = vector.shape_cast %849 : vector<128xf32> to vector<1x128xf32>
    %1151 = vector.broadcast %1150 : vector<1x128xf32> to vector<16x128xf32>
    %1152 = arith.addf %1149, %1151 : vector<16x128xf32>
    %cst_81 = arith.constant 0.000000e+00 : f32
    %cst_82 = arith.constant 6.000000e+00 : f32
    %1153 = vector.broadcast %cst_81 : f32 to vector<16x128xf32>
    %1154 = arith.maximumf %1153, %1152 : vector<16x128xf32>
    %1155 = vector.broadcast %cst_82 : f32 to vector<16x128xf32>
    %1156 = arith.minimumf %1155, %1154 : vector<16x128xf32>
    %1157 = tpu.concatenate %613, %680, %845, %1156 in 1 : vector<16x128xf32>, vector<16x128xf32>, vector<16x128xf32>, vector<16x128xf32> -> vector<16x512xf32>
    %cst_83 = arith.constant dense<0.000000e+00> : vector<16x128xf32>
    %1158 = tpu.matmul %1157, %0, %cst_83 {dimension_numbers = #tpu.dot_dimension_numbers<[1], [0], [0], [1], [0, 0, 1, 1], [], []>} : vector<16x512xf32>, vector<512x128xf32>, vector<16x128xf32> -> vector<16x128xf32>
    %1159 = vector.shape_cast %2 : vector<128xf32> to vector<1x128xf32>
    %1160 = vector.broadcast %1159 : vector<1x128xf32> to vector<16x128xf32>
    %1161 = arith.addf %1158, %1160 : vector<16x128xf32>
    %cst_84 = arith.constant 0.000000e+00 : f32
    %1162 = vector.broadcast %cst_84 : f32 to vector<16x128xf32>
    %1163 = arith.maximumf %1161, %1162 : vector<16x128xf32>
    %c1_85 = arith.constant 1 : index
    %c0_86 = arith.constant 0 : index
    %c0_87 = arith.constant 0 : index
    %1164 = vector.load %arg6[%c1_85, %c0_86, %c0_87] : memref<2x16x128xf32, #tpu.memory_space<vmem>>, vector<1x16x128xf32>
    %1165 = vector.shape_cast %1164 : vector<1x16x128xf32> to vector<16x128xf32>
    %1166 = vector.shape_cast %1163 : vector<16x128xf32> to vector<1x16x128xf32>
    tpu.vector_store %arg6[%c1_85, %c0_86, %c0_87], %1166 {strides = array<i32>} : memref<2x16x128xf32, #tpu.memory_space<vmem>>, vector<1x16x128xf32>,
    return
  }
  func.func @transform_0(%arg0: i32) -> (i32, i32, i32) {
    %c0_i32 = arith.constant 0 : i32
    %c0_i32_0 = arith.constant 0 : i32
    %c0_i32_1 = arith.constant 0 : i32
    return %arg0, %c0_i32, %c0_i32_0 : i32, i32, i32
  }
  func.func @transform_1(%arg0: i32) -> (i32, i32, i32, i32) {
    %c0_i32 = arith.constant 0 : i32
    %c0_i32_0 = arith.constant 0 : i32
    %c0_i32_1 = arith.constant 0 : i32
    %c0_i32_2 = arith.constant 0 : i32
    %c0_i32_3 = arith.constant 0 : i32
    return %c0_i32, %c0_i32_0, %c0_i32_1, %c0_i32_2 : i32, i32, i32, i32
  }
  func.func @transform_2(%arg0: i32) -> (i32, i32) {
    %c0_i32 = arith.constant 0 : i32
    %c0_i32_0 = arith.constant 0 : i32
    %c0_i32_1 = arith.constant 0 : i32
    return %c0_i32, %c0_i32_0 : i32, i32
  }
  func.func @transform_3(%arg0: i32) -> (i32, i32) {
    %c0_i32 = arith.constant 0 : i32
    %c0_i32_0 = arith.constant 0 : i32
    %c0_i32_1 = arith.constant 0 : i32
    return %c0_i32, %c0_i32_0 : i32, i32
  }
  func.func @transform_4(%arg0: i32) -> (i32, i32) {
    %c0_i32 = arith.constant 0 : i32
    %c0_i32_0 = arith.constant 0 : i32
    %c0_i32_1 = arith.constant 0 : i32
    return %c0_i32, %c0_i32_0 : i32, i32
  }
  func.func @transform_5(%arg0: i32) -> (i32, i32, i32) {
    %c0_i32 = arith.constant 0 : i32
    %c0_i32_0 = arith.constant 0 : i32
    %c0_i32_1 = arith.constant 0 : i32
    return %arg0, %c0_i32, %c0_i32_0 : i32, i32, i32
  }
}

</mosaic_0001>

<llo_original>
// kernel: fwd.1
$region0: #{fwd.1}
  #allocation0 [shape = 'u32[]', space=smem, size = 0x4, offset = 0x4, fixed_abs, tag = 'smem constant byte address 0x4 - core index']
  #allocation1 [shape = 'u32[144,128]{1,0:T(1,128)}', space=vmem, size = 0x12000, scoped, tag = 'internal scratch']
  #allocation2 [shape = 'f32[32,384]{1,0:T(8,128)}', space=vmem, size = 0xc000, scoped, tag = 'scratch operand']
  %s0 = inlined_call_operand.vmem [shape: f32[2,16,128], index: 0, kind: input, shape index: {}]
  %s1 = inlined_call_operand.vmem [shape: f32[4,7,7,128], index: 1, kind: input, shape index: {}]
  %s2 = inlined_call_operand.vmem [shape: f32[4,128], index: 2, kind: input, shape index: {}]
  %s3 = inlined_call_operand.vmem [shape: f32[512,128], index: 3, kind: input, shape index: {}]
  %s4 = inlined_call_operand.vmem [shape: f32[1,128], index: 4, kind: input, shape index: {}]
  %s5 = inlined_call_operand.vmem [shape: f32[2,16,128], index: 5, kind: output, shape index: {}]
  %s6 = sld [smem:[#allocation0]]
  $region30: #{fwd.1} parent=0
    _
  %s8 = ssub.s32 1, %s6
  %s9 = scalar_select 0, %s8, %s6
  // Predicated region
  $region2: #{fwd.1} parent=0 // pred_check
    _
  $region3: #{fwd.1} parent=0 // pred_check_branch
    %11 = sbr.rel (0) target = $region5
  $region4: #{fwd.1} parent=0 // pred_region
    _
  $region5: #{fwd.1} parent=0 // pred_fallthru
    _
  // Predicated region
  $region6: #{fwd.1} parent=0 // pred_check
    _
  $region7: #{fwd.1} parent=0 // pred_check_branch
    %13 = sbr.rel (0) target = $region9
  $region8: #{fwd.1} parent=0 // pred_region
    _
  $region9: #{fwd.1} parent=0 // pred_fallthru
    _
  // Predicated region
  $region10: #{fwd.1} parent=0 // pred_check
    _
  $region11: #{fwd.1} parent=0 // pred_check_branch
    %15 = sbr.rel (0) target = $region13
  $region12: #{fwd.1} parent=0 // pred_region
    _
  $region13: #{fwd.1} parent=0 // pred_fallthru
    _
  // Predicated region
  $region14: #{fwd.1} parent=0 // pred_check
    _
  $region15: #{fwd.1} parent=0 // pred_check_branch
    %17 = sbr.rel (0) target = $region17
  $region16: #{fwd.1} parent=0 // pred_region
    _
  $region17: #{fwd.1} parent=0 // pred_fallthru
    _
  // Predicated region
  $region18: #{fwd.1} parent=0 // pred_check
    _
  $region19: #{fwd.1} parent=0 // pred_check_branch
    %19 = sbr.rel (0) target = $region21
  $region20: #{fwd.1} parent=0 // pred_region
    _
  $region21: #{fwd.1} parent=0 // pred_fallthru
    _
  %v20 = vld [vmem:[%s3] sm:$0xff]
  %v21 = vld [vmem:[%s3 + $0x8] sm:$0xff]
  %v22 = vld [vmem:[%s3 + $0x10] sm:$0xff]
  %v23 = vld [vmem:[%s3 + $0x18] sm:$0xff]
  %v24 = vld [vmem:[%s3 + $0x20] sm:$0xff]
  %v25 = vld [vmem:[%s3 + $0x28] sm:$0xff]
  %v26 = vld [vmem:[%s3 + $0x30] sm:$0xff]
  %v27 = vld [vmem:[%s3 + $0x38] sm:$0xff]
  %v28 = vld [vmem:[%s3 + $0x40] sm:$0xff]
  %v29 = vld [vmem:[%s3 + $0x48] sm:$0xff]
  %v30 = vld [vmem:[%s3 + $0x50] sm:$0xff]
  %v31 = vld [vmem:[%s3 + $0x58] sm:$0xff]
  %v32 = vld [vmem:[%s3 + $0x60] sm:$0xff]
  %v33 = vld [vmem:[%s3 + $0x68] sm:$0xff]
  %v34 = vld [vmem:[%s3 + $0x70] sm:$0xff]
  %v35 = vld [vmem:[%s3 + $0x78] sm:$0xff]
  %v36 = vld [vmem:[%s3 + $0x80] sm:$0xff]
  %v37 = vld [vmem:[%s3 + $0x88] sm:$0xff]
  %v38 = vld [vmem:[%s3 + $0x90] sm:$0xff]
  %v39 = vld [vmem:[%s3 + $0x98] sm:$0xff]
  %v40 = vld [vmem:[%s3 + $0xa0] sm:$0xff]
  %v41 = vld [vmem:[%s3 + $0xa8] sm:$0xff]
  %v42 = vld [vmem:[%s3 + $0xb0] sm:$0xff]
  %v43 = vld [vmem:[%s3 + $0xb8] sm:$0xff]
  %v44 = vld [vmem:[%s3 + $0xc0] sm:$0xff]
  %v45 = vld [vmem:[%s3 + $0xc8] sm:$0xff]
  %v46 = vld [vmem:[%s3 + $0xd0] sm:$0xff]
  %v47 = vld [vmem:[%s3 + $0xd8] sm:$0xff]
  %v48 = vld [vmem:[%s3 + $0xe0] sm:$0xff]
  %v49 = vld [vmem:[%s3 + $0xe8] sm:$0xff]
  %v50 = vld [vmem:[%s3 + $0xf0] sm:$0xff]
  %v51 = vld [vmem:[%s3 + $0xf8] sm:$0xff]
  %v52 = vld [vmem:[%s3 + $0x100] sm:$0xff]
  %v53 = vld [vmem:[%s3 + $0x108] sm:$0xff]
  %v54 = vld [vmem:[%s3 + $0x110] sm:$0xff]
  %v55 = vld [vmem:[%s3 + $0x118] sm:$0xff]
  %v56 = vld [vmem:[%s3 + $0x120] sm:$0xff]
  %v57 = vld [vmem:[%s3 + $0x128] sm:$0xff]
  %v58 = vld [vmem:[%s3 + $0x130] sm:$0xff]
  %v59 = vld [vmem:[%s3 + $0x138] sm:$0xff]
  %v60 = vld [vmem:[%s3 + $0x140] sm:$0xff]
  %v61 = vld [vmem:[%s3 + $0x148] sm:$0xff]
  %v62 = vld [vmem:[%s3 + $0x150] sm:$0xff]
  %v63 = vld [vmem:[%s3 + $0x158] sm:$0xff]
  %v64 = vld [vmem:[%s3 + $0x160] sm:$0xff]
  %v65 = vld [vmem:[%s3 + $0x168] sm:$0xff]
  %v66 = vld [vmem:[%s3 + $0x170] sm:$0xff]
  %v67 = vld [vmem:[%s3 + $0x178] sm:$0xff]
  %v68 = vld [vmem:[%s3 + $0x180] sm:$0xff]
  %v69 = vld [vmem:[%s3 + $0x188] sm:$0xff]
  %v70 = vld [vmem:[%s3 + $0x190] sm:$0xff]
  %v71 = vld [vmem:[%s3 + $0x198] sm:$0xff]
  %v72 = vld [vmem:[%s3 + $0x1a0] sm:$0xff]
  %v73 = vld [vmem:[%s3 + $0x1a8] sm:$0xff]
  %v74 = vld [vmem:[%s3 + $0x1b0] sm:$0xff]
  %v75 = vld [vmem:[%s3 + $0x1b8] sm:$0xff]
  %v76 = vld [vmem:[%s3 + $0x1c0] sm:$0xff]
  %v77 = vld [vmem:[%s3 + $0x1c8] sm:$0xff]
  %v78 = vld [vmem:[%s3 + $0x1d0] sm:$0xff]
  %v79 = vld [vmem:[%s3 + $0x1d8] sm:$0xff]
  %v80 = vld [vmem:[%s3 + $0x1e0] sm:$0xff]
  %v81 = vld [vmem:[%s3 + $0x1e8] sm:$0xff]
  %v82 = vld [vmem:[%s3 + $0x1f0] sm:$0xff]
  %v83 = vld [vmem:[%s3 + $0x1f8] sm:$0xff]
  %v84 = vld [vmem:[%s4] sm:$0x1]
  %85 = vst [vmem:[#allocation2] sm:$0xff] 0.0
  %86 = vst [vmem:[#allocation2 + $0x8] sm:$0xff] 0.0
  %87 = vst [vmem:[#allocation2 + $0x10] sm:$0xff] 0.0
  %88 = vst [vmem:[#allocation2 + $0x18] sm:$0xff] 0.0
  %89 = vst [vmem:[#allocation2 + $0x20] sm:$0xff] 0.0
  %90 = vst [vmem:[#allocation2 + $0x28] sm:$0xff] 0.0
  %91 = vst [vmem:[#allocation2 + $0x30] sm:$0xff] 0.0
  %92 = vst [vmem:[#allocation2 + $0x38] sm:$0xff] 0.0
  %93 = vst [vmem:[#allocation2 + $0x40] sm:$0xff] 0.0
  %94 = vst [vmem:[#allocation2 + $0x48] sm:$0xff] 0.0
  %95 = vst [vmem:[#allocation2 + $0x50] sm:$0xff] 0.0
  %96 = vst [vmem:[#allocation2 + $0x58] sm:$0xff] 0.0
  %v97 = vld [vmem:[%s0] sm:$0xff]
  %v98 = vld [vmem:[%s0 + $0x8] sm:$0xff]
  %99 = vst [vmem:[#allocation2 + $0x20] sm:$0xff] %v97
  %100 = vst [vmem:[#allocation2 + $0x38] sm:$0xff] %v98
  %v101 = vld [vmem:[#allocation2] sm:$0xff]
  %v102 = vld [vmem:[#allocation2 + $0x8] sm:$0xff]
  %v103 = vld [vmem:[#allocation2 + $0x10] sm:$0xff]
  %v104 = vld [vmem:[#allocation2 + $0x18] sm:$0xff]
  %v105 = vld [vmem:[#allocation2 + $0x20] sm:$0xff]
  %v106 = vld [vmem:[#allocation2 + $0x28] sm:$0xff]
  %v107 = vld [vmem:[#allocation2 + $0x30] sm:$0xff]
  %v108 = vld [vmem:[#allocation2 + $0x38] sm:$0xff]
  %v109 = vld [vmem:[#allocation2 + $0x40] sm:$0xff]
  %v110 = vld [vmem:[#allocation2 + $0x48] sm:$0xff]
  %v111 = vld [vmem:[#allocation2 + $0x50] sm:$0xff]
  %v112 = vld [vmem:[#allocation2 + $0x58] sm:$0xff]
  %v113 = vld [vmem:[%s1 + $0x18] sm:$0x7f]
  %v114 = vld [vmem:[%s2] sm:$0x1]
  %v115 = vlaneseq
  %v116 = vshrl.u32 %v115, 7
  %v117 = vsub.s32 3, %v116
  %v118 = vrot.slane %v113, %v117
  %v119 = vmul.f32 %v105, %v118
  %v120 = vmul.f32 %v108, %v118
  %v121 = vlaneseq
  %v122 = vshrl.u32 %v121, 7
  %v123 = vsub.s32 0, %v122
  %v124 = vrot.slane %v114, %v123
  %v125 = vadd.f32 %v119, %v124
  %v126 = vadd.f32 %v120, %v124
  %v127 = vmax.f32 %v125, 0.0
  %v128 = vmax.f32 %v126, 0.0
  %v129 = vmin.f32 %v127, 6.0
  %v130 = vmin.f32 %v128, 6.0
  %s131 = scalar_lea.vmem %s1, 56
  %v132 = vld [vmem:[%s131 + $0x10] sm:$0x7f]
  %v133 = vld [vmem:[%s131 + $0x18] sm:$0x7f]
  %v134 = vld [vmem:[%s131 + $0x20] sm:$0x7f]
  %v135 = vld [vmem:[%s2 + $0x1] sm:$0x1]
  %v136 = vlaneseq
  %v137 = vshrl.u32 %v136, 7
  %v138 = vsub.s32 2, %v137
  %v139 = vrot.slane %v132, %v138
  %141 = vrot.lane.b32.xlu0 %v139, 120
  %v142 = vpop.permute.xlu0 %141
  %v144 = vmul.f32 %v101, %v142
  %v145 = vmul.f32 %v102, %v142
  %v146 = vmul.f32 %v104, %v142
  %v147 = vmul.f32 %v105, %v142
  %v148 = vmul.f32 %v107, %v142
  %v149 = vmul.f32 %v108, %v142
  %v150 = vlaneseq
  %v151 = vshrl.u32 %v150, 7
  %v152 = vsub.s32 3, %v151
  %v153 = vrot.slane %v132, %v152
  %v154 = vmul.f32 %v102, %v153
  %v155 = vmul.f32 %v105, %v153
  %v156 = vmul.f32 %v108, %v153
  %v157 = vlaneseq
  %v158 = vshrl.u32 %v157, 7
  %v159 = vsub.s32 4, %v158
  %v160 = vrot.slane %v132, %v159
  %162 = vrot.lane.b32.xlu0 %v160, 8
  %v163 = vpop.permute.xlu0 %162
  %v165 = vmul.f32 %v102, %v163
  %v166 = vmul.f32 %v103, %v163
  %v167 = vmul.f32 %v105, %v163
  %v168 = vmul.f32 %v106, %v163
  %v169 = vmul.f32 %v108, %v163
  %v170 = vmul.f32 %v109, %v163
  %174 = vrot.lane.b32.xlu0 %v154, 120
  %v175 = vpop.permute.xlu0 %174
  %176 = vrot.lane.b32.xlu0 %v155, 120
  %v177 = vpop.permute.xlu0 %176
  %178 = vrot.lane.b32.xlu0 %v156, 120
  %v179 = vpop.permute.xlu0 %178
  %v183 = vadd.f32 %v144, %v175
  %v184 = vadd.f32 %v145, %v175
  %v185 = vadd.f32 %v146, %v177
  %v186 = vadd.f32 %v147, %v177
  %v187 = vadd.f32 %v148, %v179
  %v188 = vadd.f32 %v149, %v179
  %195 = vrot.lane.b32.xlu0 %v165, 112
  %v196 = vpop.permute.xlu0 %195
  %197 = vrot.lane.b32.xlu0 %v166, 112
  %v198 = vpop.permute.xlu0 %197
  %199 = vrot.lane.b32.xlu0 %v167, 112
  %v200 = vpop.permute.xlu0 %199
  %201 = vrot.lane.b32.xlu0 %v168, 112
  %v202 = vpop.permute.xlu0 %201
  %203 = vrot.lane.b32.xlu0 %v169, 112
  %v204 = vpop.permute.xlu0 %203
  %205 = vrot.lane.b32.xlu0 %v170, 112
  %v206 = vpop.permute.xlu0 %205
  %vm207 = vcmask 916480
  %v208 = vsel %vm207, %v196, %v198
  %v209 = vsel %vm207, %v200, %v202
  %v210 = vsel %vm207, %v204, %v206
  %v217 = vadd.f32 %v183, %v196
  %v218 = vadd.f32 %v184, %v208
  %v219 = vadd.f32 %v185, %v200
  %v220 = vadd.f32 %v186, %v209
  %v221 = vadd.f32 %v187, %v204
  %v222 = vadd.f32 %v188, %v210
  %v223 = vlaneseq
  %v224 = vshrl.u32 %v223, 7
  %v225 = vsub.s32 2, %v224
  %v226 = vrot.slane %v133, %v225
  %228 = vrot.lane.b32.xlu0 %v226, 120
  %v229 = vpop.permute.xlu0 %228
  %v231 = vmul.f32 %v104, %v229
  %v232 = vmul.f32 %v105, %v229
  %v233 = vmul.f32 %v107, %v229
  %v234 = vmul.f32 %v108, %v229
  %v235 = vlaneseq
  %v236 = vshrl.u32 %v235, 7
  %v237 = vsub.s32 3, %v236
  %v238 = vrot.slane %v133, %v237
  %v239 = vmul.f32 %v105, %v238
  %v240 = vmul.f32 %v108, %v238
  %v241 = vlaneseq
  %v242 = vshrl.u32 %v241, 7
  %v243 = vsub.s32 4, %v242
  %v244 = vrot.slane %v133, %v243
  %246 = vrot.lane.b32.xlu0 %v244, 8
  %v247 = vpop.permute.xlu0 %246
  %v249 = vmul.f32 %v105, %v247
  %v250 = vmul.f32 %v106, %v247
  %v251 = vmul.f32 %v108, %v247
  %v252 = vmul.f32 %v109, %v247
  %255 = vrot.lane.b32.xlu0 %v239, 120
  %v256 = vpop.permute.xlu0 %255
  %257 = vrot.lane.b32.xlu0 %v240, 120
  %v258 = vpop.permute.xlu0 %257
  %v261 = vadd.f32 %v231, %v256
  %v262 = vadd.f32 %v232, %v256
  %v263 = vadd.f32 %v233, %v258
  %v264 = vadd.f32 %v234, %v258
  %269 = vrot.lane.b32.xlu0 %v249, 112
  %v270 = vpop.permute.xlu0 %269
  %271 = vrot.lane.b32.xlu0 %v250, 112
  %v272 = vpop.permute.xlu0 %271
  %273 = vrot.lane.b32.xlu0 %v251, 112
  %v274 = vpop.permute.xlu0 %273
  %275 = vrot.lane.b32.xlu0 %v252, 112
  %v276 = vpop.permute.xlu0 %275
  %v277 = vsel %vm207, %v270, %v272
  %v278 = vsel %vm207, %v274, %v276
  %v283 = vadd.f32 %v261, %v270
  %v284 = vadd.f32 %v262, %v277
  %v285 = vadd.f32 %v263, %v274
  %v286 = vadd.f32 %v264, %v278
  %v287 = vlaneseq
  %v288 = vshrl.u32 %v287, 7
  %v289 = vsub.s32 2, %v288
  %v290 = vrot.slane %v134, %v289
  %292 = vrot.lane.b32.xlu0 %v290, 120
  %v293 = vpop.permute.xlu0 %292
  %v295 = vmul.f32 %v104, %v293
  %v296 = vmul.f32 %v105, %v293
  %v297 = vmul.f32 %v107, %v293
  %v298 = vmul.f32 %v108, %v293
  %v299 = vmul.f32 %v110, %v293
  %v300 = vmul.f32 %v111, %v293
  %v301 = vlaneseq
  %v302 = vshrl.u32 %v301, 7
  %v303 = vsub.s32 3, %v302
  %v304 = vrot.slane %v134, %v303
  %v305 = vmul.f32 %v105, %v304
  %v306 = vmul.f32 %v108, %v304
  %v307 = vmul.f32 %v111, %v304
  %v308 = vlaneseq
  %v309 = vshrl.u32 %v308, 7
  %v310 = vsub.s32 4, %v309
  %v311 = vrot.slane %v134, %v310
  %313 = vrot.lane.b32.xlu0 %v311, 8
  %v314 = vpop.permute.xlu0 %313
  %v316 = vmul.f32 %v105, %v314
  %v317 = vmul.f32 %v106, %v314
  %v318 = vmul.f32 %v108, %v314
  %v319 = vmul.f32 %v109, %v314
  %v320 = vmul.f32 %v111, %v314
  %v321 = vmul.f32 %v112, %v314
  %325 = vrot.lane.b32.xlu0 %v305, 120
  %v326 = vpop.permute.xlu0 %325
  %327 = vrot.lane.b32.xlu0 %v306, 120
  %v328 = vpop.permute.xlu0 %327
  %329 = vrot.lane.b32.xlu0 %v307, 120
  %v330 = vpop.permute.xlu0 %329
  %v334 = vadd.f32 %v295, %v326
  %v335 = vadd.f32 %v296, %v326
  %v336 = vadd.f32 %v297, %v328
  %v337 = vadd.f32 %v298, %v328
  %v338 = vadd.f32 %v299, %v330
  %v339 = vadd.f32 %v300, %v330
  %346 = vrot.lane.b32.xlu0 %v316, 112
  %v347 = vpop.permute.xlu0 %346
  %348 = vrot.lane.b32.xlu0 %v317, 112
  %v349 = vpop.permute.xlu0 %348
  %350 = vrot.lane.b32.xlu0 %v318, 112
  %v351 = vpop.permute.xlu0 %350
  %352 = vrot.lane.b32.xlu0 %v319, 112
  %v353 = vpop.permute.xlu0 %352
  %354 = vrot.lane.b32.xlu0 %v320, 112
  %v355 = vpop.permute.xlu0 %354
  %356 = vrot.lane.b32.xlu0 %v321, 112
  %v357 = vpop.permute.xlu0 %356
  %v358 = vsel %vm207, %v347, %v349
  %v359 = vsel %vm207, %v351, %v353
  %v360 = vsel %vm207, %v355, %v357
  %v367 = vadd.f32 %v334, %v347
  %v368 = vadd.f32 %v335, %v358
  %v369 = vadd.f32 %v336, %v351
  %v370 = vadd.f32 %v337, %v359
  %v371 = vadd.f32 %v338, %v355
  %v372 = vadd.f32 %v339, %v360
  %vm377 = vcmask 1046528
  %v378 = vrot.slane %v283, 1
  %v379 = vrot.slane %v284, 1
  %v380 = vrot.slane %v285, 1
  %v381 = vsel %vm377, %v378, %v380
  %v382 = vrot.slane %v286, 1
  %v383 = vsel %vm377, %v379, %v382
  %v390 = vadd.f32 %v217, %v378
  %v391 = vadd.f32 %v218, %v379
  %v392 = vadd.f32 %v219, %v381
  %v393 = vadd.f32 %v220, %v383
  %v394 = vadd.f32 %v221, %v380
  %v395 = vadd.f32 %v222, %v382
  %vm402 = vcmask 1045504
  %v403 = vrot.slane %v367, 2
  %v404 = vrot.slane %v368, 2
  %v405 = vrot.slane %v369, 2
  %v406 = vsel %vm402, %v403, %v405
  %v407 = vrot.slane %v370, 2
  %v408 = vsel %vm402, %v404, %v407
  %v409 = vrot.slane %v371, 2
  %v410 = vsel %vm402, %v405, %v409
  %v411 = vrot.slane %v372, 2
  %v412 = vsel %vm402, %v407, %v411
  %v419 = vadd.f32 %v390, %v403
  %v420 = vadd.f32 %v391, %v404
  %v421 = vadd.f32 %v392, %v406
  %v422 = vadd.f32 %v393, %v408
  %v423 = vadd.f32 %v394, %v410
  %v424 = vadd.f32 %v395, %v412
  %v425 = vlaneseq
  %v426 = vshrl.u32 %v425, 7
  %v427 = vsub.s32 0, %v426
  %v428 = vrot.slane %v135, %v427
  %430 = vrot.lane.b32.xlu0 %v428, 120
  %v431 = vpop.permute.xlu0 %430
  %v433 = vadd.f32 %v419, %v431
  %v434 = vadd.f32 %v420, %v431
  %v435 = vadd.f32 %v421, %v431
  %v436 = vadd.f32 %v422, %v431
  %v437 = vadd.f32 %v423, %v431
  %v438 = vadd.f32 %v424, %v431
  %v439 = vmax.f32 %v433, 0.0
  %v440 = vmax.f32 %v434, 0.0
  %v441 = vmax.f32 %v435, 0.0
  %v442 = vmax.f32 %v436, 0.0
  %v443 = vmax.f32 %v437, 0.0
  %v444 = vmax.f32 %v438, 0.0
  %v445 = vmin.f32 %v439, 6.0
  %v446 = vmin.f32 %v440, 6.0
  %v447 = vmin.f32 %v441, 6.0
  %v448 = vmin.f32 %v442, 6.0
  %v449 = vmin.f32 %v443, 6.0
  %v450 = vmin.f32 %v444, 6.0
  %s451 = scalar_lea.vmem %s1, 112
  %v452 = vld [vmem:[%s451 + $0x8] sm:$0x7f]
  %v453 = vld [vmem:[%s451 + $0x10] sm:$0x7f]
  %v454 = vld [vmem:[%s451 + $0x18] sm:$0x7f]
  %v455 = vld [vmem:[%s451 + $0x20] sm:$0x7f]
  %v456 = vld [vmem:[%s451 + $0x28] sm:$0x7f]
  %v457 = vld [vmem:[%s2 + $0x2] sm:$0x1]
  %v458 = vlaneseq
  %v459 = vshrl.u32 %v458, 7
  %v460 = vsub.s32 1, %v459
  %v461 = vrot.slane %v452, %v460
  %463 = vrot.lane.b32.xlu0 %v461, 112
  %v464 = vpop.permute.xlu0 %463
  %v466 = vmul.f32 %v101, %v464
  %v467 = vmul.f32 %v102, %v464
  %v468 = vmul.f32 %v104, %v464
  %v469 = vmul.f32 %v105, %v464
  %v470 = vmul.f32 %v107, %v464
  %v471 = vmul.f32 %v108, %v464
  %v472 = vlaneseq
  %v473 = vshrl.u32 %v472, 7
  %v474 = vsub.s32 2, %v473
  %v475 = vrot.slane %v452, %v474
  %477 = vrot.lane.b32.xlu0 %v475, 120
  %v478 = vpop.permute.xlu0 %477
  %v480 = vmul.f32 %v101, %v478
  %v481 = vmul.f32 %v102, %v478
  %v482 = vmul.f32 %v104, %v478
  %v483 = vmul.f32 %v105, %v478
  %v484 = vmul.f32 %v107, %v478
  %v485 = vmul.f32 %v108, %v478
  %v486 = vlaneseq
  %v487 = vshrl.u32 %v486, 7
  %v488 = vsub.s32 3, %v487
  %v489 = vrot.slane %v452, %v488
  %v490 = vmul.f32 %v102, %v489
  %v491 = vmul.f32 %v105, %v489
  %v492 = vmul.f32 %v108, %v489
  %v493 = vlaneseq
  %v494 = vshrl.u32 %v493, 7
  %v495 = vsub.s32 4, %v494
  %v496 = vrot.slane %v452, %v495
  %498 = vrot.lane.b32.xlu0 %v496, 8
  %v499 = vpop.permute.xlu0 %498
  %v501 = vmul.f32 %v102, %v499
  %v502 = vmul.f32 %v103, %v499
  %v503 = vmul.f32 %v105, %v499
  %v504 = vmul.f32 %v106, %v499
  %v505 = vmul.f32 %v108, %v499
  %v506 = vmul.f32 %v109, %v499
  %v507 = vlaneseq
  %v508 = vshrl.u32 %v507, 7
  %v509 = vsub.s32 5, %v508
  %v510 = vrot.slane %v452, %v509
  %512 = vrot.lane.b32.xlu0 %v510, 16
  %v513 = vpop.permute.xlu0 %512
  %v515 = vmul.f32 %v102, %v513
  %v516 = vmul.f32 %v103, %v513
  %v517 = vmul.f32 %v105, %v513
  %v518 = vmul.f32 %v106, %v513
  %v519 = vmul.f32 %v108, %v513
  %v520 = vmul.f32 %v109, %v513
  %527 = vrot.lane.b32.xlu0 %v480, 120
  %v528 = vpop.permute.xlu0 %527
  %529 = vrot.lane.b32.xlu0 %v481, 120
  %v530 = vpop.permute.xlu0 %529
  %531 = vrot.lane.b32.xlu0 %v482, 120
  %v532 = vpop.permute.xlu0 %531
  %533 = vrot.lane.b32.xlu0 %v483, 120
  %v534 = vpop.permute.xlu0 %533
  %535 = vrot.lane.b32.xlu0 %v484, 120
  %v536 = vpop.permute.xlu0 %535
  %537 = vrot.lane.b32.xlu0 %v485, 120
  %v538 = vpop.permute.xlu0 %537
  %vm539 = vcmask 982016
  %v540 = vsel %vm539, %v528, %v530
  %v541 = vsel %vm539, %v532, %v534
  %v542 = vsel %vm539, %v536, %v538
  %v549 = vadd.f32 %v466, %v540
  %v550 = vadd.f32 %v467, %v530
  %v551 = vadd.f32 %v468, %v541
  %v552 = vadd.f32 %v469, %v534
  %v553 = vadd.f32 %v470, %v542
  %v554 = vadd.f32 %v471, %v538
  %561 = vrot.lane.b32.xlu0 %v501, 120
  %v562 = vpop.permute.xlu0 %561
  %563 = vrot.lane.b32.xlu0 %v502, 120
  %v564 = vpop.permute.xlu0 %563
  %565 = vrot.lane.b32.xlu0 %v503, 120
  %v566 = vpop.permute.xlu0 %565
  %567 = vrot.lane.b32.xlu0 %v504, 120
  %v568 = vpop.permute.xlu0 %567
  %569 = vrot.lane.b32.xlu0 %v505, 120
  %v570 = vpop.permute.xlu0 %569
  %571 = vrot.lane.b32.xlu0 %v506, 120
  %v572 = vpop.permute.xlu0 %571
  %v573 = vsel %vm539, %v562, %v564
  %v574 = vsel %vm539, %v566, %v568
  %v575 = vsel %vm539, %v570, %v572
  %v579 = vadd.f32 %v490, %v573
  %v580 = vadd.f32 %v491, %v574
  %v581 = vadd.f32 %v492, %v575
  %585 = vrot.lane.b32.xlu0 %v579, 112
  %v586 = vpop.permute.xlu0 %585
  %587 = vrot.lane.b32.xlu0 %v580, 112
  %v588 = vpop.permute.xlu0 %587
  %589 = vrot.lane.b32.xlu0 %v581, 112
  %v590 = vpop.permute.xlu0 %589
  %v594 = vadd.f32 %v549, %v586
  %v595 = vadd.f32 %v550, %v586
  %v596 = vadd.f32 %v551, %v588
  %v597 = vadd.f32 %v552, %v588
  %v598 = vadd.f32 %v553, %v590
  %v599 = vadd.f32 %v554, %v590
  %606 = vrot.lane.b32.xlu0 %v515, 96
  %v607 = vpop.permute.xlu0 %606
  %608 = vrot.lane.b32.xlu0 %v516, 96
  %v609 = vpop.permute.xlu0 %608
  %610 = vrot.lane.b32.xlu0 %v517, 96
  %v611 = vpop.permute.xlu0 %610
  %612 = vrot.lane.b32.xlu0 %v518, 96
  %v613 = vpop.permute.xlu0 %612
  %614 = vrot.lane.b32.xlu0 %v519, 96
  %v615 = vpop.permute.xlu0 %614
  %616 = vrot.lane.b32.xlu0 %v520, 96
  %v617 = vpop.permute.xlu0 %616
  %vm618 = vcmask 785408
  %v619 = vsel %vm618, %v607, %v609
  %v620 = vsel %vm618, %v611, %v613
  %v621 = vsel %vm618, %v615, %v617
  %v628 = vadd.f32 %v594, %v607
  %v629 = vadd.f32 %v595, %v619
  %v630 = vadd.f32 %v596, %v611
  %v631 = vadd.f32 %v597, %v620
  %v632 = vadd.f32 %v598, %v615
  %v633 = vadd.f32 %v599, %v621
  %v634 = vlaneseq
  %v635 = vshrl.u32 %v634, 7
  %v636 = vsub.s32 1, %v635
  %v637 = vrot.slane %v453, %v636
  %639 = vrot.lane.b32.xlu0 %v637, 112
  %v640 = vpop.permute.xlu0 %639
  %v642 = vmul.f32 %v101, %v640
  %v643 = vmul.f32 %v102, %v640
  %v644 = vmul.f32 %v104, %v640
  %v645 = vmul.f32 %v105, %v640
  %v646 = vmul.f32 %v107, %v640
  %v647 = vmul.f32 %v108, %v640
  %v648 = vlaneseq
  %v649 = vshrl.u32 %v648, 7
  %v650 = vsub.s32 2, %v649
  %v651 = vrot.slane %v453, %v650
  %653 = vrot.lane.b32.xlu0 %v651, 120
  %v654 = vpop.permute.xlu0 %653
  %v656 = vmul.f32 %v101, %v654
  %v657 = vmul.f32 %v102, %v654
  %v658 = vmul.f32 %v104, %v654
  %v659 = vmul.f32 %v105, %v654
  %v660 = vmul.f32 %v107, %v654
  %v661 = vmul.f32 %v108, %v654
  %v662 = vlaneseq
  %v663 = vshrl.u32 %v662, 7
  %v664 = vsub.s32 3, %v663
  %v665 = vrot.slane %v453, %v664
  %v666 = vmul.f32 %v102, %v665
  %v667 = vmul.f32 %v105, %v665
  %v668 = vmul.f32 %v108, %v665
  %v669 = vlaneseq
  %v670 = vshrl.u32 %v669, 7
  %v671 = vsub.s32 4, %v670
  %v672 = vrot.slane %v453, %v671
  %674 = vrot.lane.b32.xlu0 %v672, 8
  %v675 = vpop.permute.xlu0 %674
  %v677 = vmul.f32 %v102, %v675
  %v678 = vmul.f32 %v103, %v675
  %v679 = vmul.f32 %v105, %v675
  %v680 = vmul.f32 %v106, %v675
  %v681 = vmul.f32 %v108, %v675
  %v682 = vmul.f32 %v109, %v675
  %v683 = vlaneseq
  %v684 = vshrl.u32 %v683, 7
  %v685 = vsub.s32 5, %v684
  %v686 = vrot.slane %v453, %v685
  %688 = vrot.lane.b32.xlu0 %v686, 16
  %v689 = vpop.permute.xlu0 %688
  %v691 = vmul.f32 %v102, %v689
  %v692 = vmul.f32 %v103, %v689
  %v693 = vmul.f32 %v105, %v689
  %v694 = vmul.f32 %v106, %v689
  %v695 = vmul.f32 %v108, %v689
  %v696 = vmul.f32 %v109, %v689
  %703 = vrot.lane.b32.xlu0 %v656, 120
  %v704 = vpop.permute.xlu0 %703
  %705 = vrot.lane.b32.xlu0 %v657, 120
  %v706 = vpop.permute.xlu0 %705
  %707 = vrot.lane.b32.xlu0 %v658, 120
  %v708 = vpop.permute.xlu0 %707
  %709 = vrot.lane.b32.xlu0 %v659, 120
  %v710 = vpop.permute.xlu0 %709
  %711 = vrot.lane.b32.xlu0 %v660, 120
  %v712 = vpop.permute.xlu0 %711
  %713 = vrot.lane.b32.xlu0 %v661, 120
  %v714 = vpop.permute.xlu0 %713
  %v715 = vsel %vm539, %v704, %v706
  %v716 = vsel %vm539, %v708, %v710
  %v717 = vsel %vm539, %v712, %v714
  %v724 = vadd.f32 %v642, %v715
  %v725 = vadd.f32 %v643, %v706
  %v726 = vadd.f32 %v644, %v716
  %v727 = vadd.f32 %v645, %v710
  %v728 = vadd.f32 %v646, %v717
  %v729 = vadd.f32 %v647, %v714
  %736 = vrot.lane.b32.xlu0 %v677, 120
  %v737 = vpop.permute.xlu0 %736
  %738 = vrot.lane.b32.xlu0 %v678, 120
  %v739 = vpop.permute.xlu0 %738
  %740 = vrot.lane.b32.xlu0 %v679, 120
  %v741 = vpop.permute.xlu0 %740
  %742 = vrot.lane.b32.xlu0 %v680, 120
  %v743 = vpop.permute.xlu0 %742
  %744 = vrot.lane.b32.xlu0 %v681, 120
  %v745 = vpop.permute.xlu0 %744
  %746 = vrot.lane.b32.xlu0 %v682, 120
  %v747 = vpop.permute.xlu0 %746
  %v748 = vsel %vm539, %v737, %v739
  %v749 = vsel %vm539, %v741, %v743
  %v750 = vsel %vm539, %v745, %v747
  %v754 = vadd.f32 %v666, %v748
  %v755 = vadd.f32 %v667, %v749
  %v756 = vadd.f32 %v668, %v750
  %760 = vrot.lane.b32.xlu0 %v754, 112
  %v761 = vpop.permute.xlu0 %760
  %762 = vrot.lane.b32.xlu0 %v755, 112
  %v763 = vpop.permute.xlu0 %762
  %764 = vrot.lane.b32.xlu0 %v756, 112
  %v765 = vpop.permute.xlu0 %764
  %v769 = vadd.f32 %v724, %v761
  %v770 = vadd.f32 %v725, %v761
  %v771 = vadd.f32 %v726, %v763
  %v772 = vadd.f32 %v727, %v763
  %v773 = vadd.f32 %v728, %v765
  %v774 = vadd.f32 %v729, %v765
  %781 = vrot.lane.b32.xlu0 %v691, 96
  %v782 = vpop.permute.xlu0 %781
  %783 = vrot.lane.b32.xlu0 %v692, 96
  %v784 = vpop.permute.xlu0 %783
  %785 = vrot.lane.b32.xlu0 %v693, 96
  %v786 = vpop.permute.xlu0 %785
  %787 = vrot.lane.b32.xlu0 %v694, 96
  %v788 = vpop.permute.xlu0 %787
  %789 = vrot.lane.b32.xlu0 %v695, 96
  %v790 = vpop.permute.xlu0 %789
  %791 = vrot.lane.b32.xlu0 %v696, 96
  %v792 = vpop.permute.xlu0 %791
  %v793 = vsel %vm618, %v782, %v784
  %v794 = vsel %vm618, %v786, %v788
  %v795 = vsel %vm618, %v790, %v792
  %v802 = vadd.f32 %v769, %v782
  %v803 = vadd.f32 %v770, %v793
  %v804 = vadd.f32 %v771, %v786
  %v805 = vadd.f32 %v772, %v794
  %v806 = vadd.f32 %v773, %v790
  %v807 = vadd.f32 %v774, %v795
  %v808 = vlaneseq
  %v809 = vshrl.u32 %v808, 7
  %v810 = vsub.s32 1, %v809
  %v811 = vrot.slane %v454, %v810
  %813 = vrot.lane.b32.xlu0 %v811, 112
  %v814 = vpop.permute.xlu0 %813
  %v816 = vmul.f32 %v104, %v814
  %v817 = vmul.f32 %v105, %v814
  %v818 = vmul.f32 %v107, %v814
  %v819 = vmul.f32 %v108, %v814
  %v820 = vlaneseq
  %v821 = vshrl.u32 %v820, 7
  %v822 = vsub.s32 2, %v821
  %v823 = vrot.slane %v454, %v822
  %825 = vrot.lane.b32.xlu0 %v823, 120
  %v826 = vpop.permute.xlu0 %825
  %v828 = vmul.f32 %v104, %v826
  %v829 = vmul.f32 %v105, %v826
  %v830 = vmul.f32 %v107, %v826
  %v831 = vmul.f32 %v108, %v826
  %v832 = vlaneseq
  %v833 = vshrl.u32 %v832, 7
  %v834 = vsub.s32 3, %v833
  %v835 = vrot.slane %v454, %v834
  %v836 = vmul.f32 %v105, %v835
  %v837 = vmul.f32 %v108, %v835
  %v838 = vlaneseq
  %v839 = vshrl.u32 %v838, 7
  %v840 = vsub.s32 4, %v839
  %v841 = vrot.slane %v454, %v840
  %843 = vrot.lane.b32.xlu0 %v841, 8
  %v844 = vpop.permute.xlu0 %843
  %v846 = vmul.f32 %v105, %v844
  %v847 = vmul.f32 %v106, %v844
  %v848 = vmul.f32 %v108, %v844
  %v849 = vmul.f32 %v109, %v844
  %v850 = vlaneseq
  %v851 = vshrl.u32 %v850, 7
  %v852 = vsub.s32 5, %v851
  %v853 = vrot.slane %v454, %v852
  %855 = vrot.lane.b32.xlu0 %v853, 16
  %v856 = vpop.permute.xlu0 %855
  %v858 = vmul.f32 %v105, %v856
  %v859 = vmul.f32 %v106, %v856
  %v860 = vmul.f32 %v108, %v856
  %v861 = vmul.f32 %v109, %v856
  %866 = vrot.lane.b32.xlu0 %v828, 120
  %v867 = vpop.permute.xlu0 %866
  %868 = vrot.lane.b32.xlu0 %v829, 120
  %v869 = vpop.permute.xlu0 %868
  %870 = vrot.lane.b32.xlu0 %v830, 120
  %v871 = vpop.permute.xlu0 %870
  %872 = vrot.lane.b32.xlu0 %v831, 120
  %v873 = vpop.permute.xlu0 %872
  %v874 = vsel %vm539, %v867, %v869
  %v875 = vsel %vm539, %v871, %v873
  %v880 = vadd.f32 %v816, %v874
  %v881 = vadd.f32 %v817, %v869
  %v882 = vadd.f32 %v818, %v875
  %v883 = vadd.f32 %v819, %v873
  %888 = vrot.lane.b32.xlu0 %v846, 120
  %v889 = vpop.permute.xlu0 %888
  %890 = vrot.lane.b32.xlu0 %v847, 120
  %v891 = vpop.permute.xlu0 %890
  %892 = vrot.lane.b32.xlu0 %v848, 120
  %v893 = vpop.permute.xlu0 %892
  %894 = vrot.lane.b32.xlu0 %v849, 120
  %v895 = vpop.permute.xlu0 %894
  %v896 = vsel %vm539, %v889, %v891
  %v897 = vsel %vm539, %v893, %v895
  %v900 = vadd.f32 %v836, %v896
  %v901 = vadd.f32 %v837, %v897
  %904 = vrot.lane.b32.xlu0 %v900, 112
  %v905 = vpop.permute.xlu0 %904
  %906 = vrot.lane.b32.xlu0 %v901, 112
  %v907 = vpop.permute.xlu0 %906
  %v910 = vadd.f32 %v880, %v905
  %v911 = vadd.f32 %v881, %v905
  %v912 = vadd.f32 %v882, %v907
  %v913 = vadd.f32 %v883, %v907
  %918 = vrot.lane.b32.xlu0 %v858, 96
  %v919 = vpop.permute.xlu0 %918
  %920 = vrot.lane.b32.xlu0 %v859, 96
  %v921 = vpop.permute.xlu0 %920
  %922 = vrot.lane.b32.xlu0 %v860, 96
  %v923 = vpop.permute.xlu0 %922
  %924 = vrot.lane.b32.xlu0 %v861, 96
  %v925 = vpop.permute.xlu0 %924
  %v926 = vsel %vm618, %v919, %v921
  %v927 = vsel %vm618, %v923, %v925
  %v932 = vadd.f32 %v910, %v919
  %v933 = vadd.f32 %v911, %v926
  %v934 = vadd.f32 %v912, %v923
  %v935 = vadd.f32 %v913, %v927
  %v936 = vlaneseq
  %v937 = vshrl.u32 %v936, 7
  %v938 = vsub.s32 1, %v937
  %v939 = vrot.slane %v455, %v938
  %941 = vrot.lane.b32.xlu0 %v939, 112
  %v942 = vpop.permute.xlu0 %941
  %v944 = vmul.f32 %v104, %v942
  %v945 = vmul.f32 %v105, %v942
  %v946 = vmul.f32 %v107, %v942
  %v947 = vmul.f32 %v108, %v942
  %v948 = vmul.f32 %v110, %v942
  %v949 = vmul.f32 %v111, %v942
  %v950 = vlaneseq
  %v951 = vshrl.u32 %v950, 7
  %v952 = vsub.s32 2, %v951
  %v953 = vrot.slane %v455, %v952
  %955 = vrot.lane.b32.xlu0 %v953, 120
  %v956 = vpop.permute.xlu0 %955
  %v958 = vmul.f32 %v104, %v956
  %v959 = vmul.f32 %v105, %v956
  %v960 = vmul.f32 %v107, %v956
  %v961 = vmul.f32 %v108, %v956
  %v962 = vmul.f32 %v110, %v956
  %v963 = vmul.f32 %v111, %v956
  %v964 = vlaneseq
  %v965 = vshrl.u32 %v964, 7
  %v966 = vsub.s32 3, %v965
  %v967 = vrot.slane %v455, %v966
  %v968 = vmul.f32 %v105, %v967
  %v969 = vmul.f32 %v108, %v967
  %v970 = vmul.f32 %v111, %v967
  %v971 = vlaneseq
  %v972 = vshrl.u32 %v971, 7
  %v973 = vsub.s32 4, %v972
  %v974 = vrot.slane %v455, %v973
  %976 = vrot.lane.b32.xlu0 %v974, 8
  %v977 = vpop.permute.xlu0 %976
  %v979 = vmul.f32 %v105, %v977
  %v980 = vmul.f32 %v106, %v977
  %v981 = vmul.f32 %v108, %v977
  %v982 = vmul.f32 %v109, %v977
  %v983 = vmul.f32 %v111, %v977
  %v984 = vmul.f32 %v112, %v977
  %v985 = vlaneseq
  %v986 = vshrl.u32 %v985, 7
  %v987 = vsub.s32 5, %v986
  %v988 = vrot.slane %v455, %v987
  %990 = vrot.lane.b32.xlu0 %v988, 16
  %v991 = vpop.permute.xlu0 %990
  %v993 = vmul.f32 %v105, %v991
  %v994 = vmul.f32 %v106, %v991
  %v995 = vmul.f32 %v108, %v991
  %v996 = vmul.f32 %v109, %v991
  %v997 = vmul.f32 %v111, %v991
  %v998 = vmul.f32 %v112, %v991
  %1005 = vrot.lane.b32.xlu0 %v958, 120
  %v1006 = vpop.permute.xlu0 %1005
  %1007 = vrot.lane.b32.xlu0 %v959, 120
  %v1008 = vpop.permute.xlu0 %1007
  %1009 = vrot.lane.b32.xlu0 %v960, 120
  %v1010 = vpop.permute.xlu0 %1009
  %1011 = vrot.lane.b32.xlu0 %v961, 120
  %v1012 = vpop.permute.xlu0 %1011
  %1013 = vrot.lane.b32.xlu0 %v962, 120
  %v1014 = vpop.permute.xlu0 %1013
  %1015 = vrot.lane.b32.xlu0 %v963, 120
  %v1016 = vpop.permute.xlu0 %1015
  %v1017 = vsel %vm539, %v1006, %v1008
  %v1018 = vsel %vm539, %v1010, %v1012
  %v1019 = vsel %vm539, %v1014, %v1016
  %v1026 = vadd.f32 %v944, %v1017
  %v1027 = vadd.f32 %v945, %v1008
  %v1028 = vadd.f32 %v946, %v1018
  %v1029 = vadd.f32 %v947, %v1012
  %v1030 = vadd.f32 %v948, %v1019
  %v1031 = vadd.f32 %v949, %v1016
  %1038 = vrot.lane.b32.xlu0 %v979, 120
  %v1039 = vpop.permute.xlu0 %1038
  %1040 = vrot.lane.b32.xlu0 %v980, 120
  %v1041 = vpop.permute.xlu0 %1040
  %1042 = vrot.lane.b32.xlu0 %v981, 120
  %v1043 = vpop.permute.xlu0 %1042
  %1044 = vrot.lane.b32.xlu0 %v982, 120
  %v1045 = vpop.permute.xlu0 %1044
  %1046 = vrot.lane.b32.xlu0 %v983, 120
  %v1047 = vpop.permute.xlu0 %1046
  %1048 = vrot.lane.b32.xlu0 %v984, 120
  %v1049 = vpop.permute.xlu0 %1048
  %v1050 = vsel %vm539, %v1039, %v1041
  %v1051 = vsel %vm539, %v1043, %v1045
  %v1052 = vsel %vm539, %v1047, %v1049
  %v1056 = vadd.f32 %v968, %v1050
  %v1057 = vadd.f32 %v969, %v1051
  %v1058 = vadd.f32 %v970, %v1052
  %1062 = vrot.lane.b32.xlu0 %v1056, 112
  %v1063 = vpop.permute.xlu0 %1062
  %1064 = vrot.lane.b32.xlu0 %v1057, 112
  %v1065 = vpop.permute.xlu0 %1064
  %1066 = vrot.lane.b32.xlu0 %v1058, 112
  %v1067 = vpop.permute.xlu0 %1066
  %v1071 = vadd.f32 %v1026, %v1063
  %v1072 = vadd.f32 %v1027, %v1063
  %v1073 = vadd.f32 %v1028, %v1065
  %v1074 = vadd.f32 %v1029, %v1065
  %v1075 = vadd.f32 %v1030, %v1067
  %v1076 = vadd.f32 %v1031, %v1067
  %1083 = vrot.lane.b32.xlu0 %v993, 96
  %v1084 = vpop.permute.xlu0 %1083
  %1085 = vrot.lane.b32.xlu0 %v994, 96
  %v1086 = vpop.permute.xlu0 %1085
  %1087 = vrot.lane.b32.xlu0 %v995, 96
  %v1088 = vpop.permute.xlu0 %1087
  %1089 = vrot.lane.b32.xlu0 %v996, 96
  %v1090 = vpop.permute.xlu0 %1089
  %1091 = vrot.lane.b32.xlu0 %v997, 96
  %v1092 = vpop.permute.xlu0 %1091
  %1093 = vrot.lane.b32.xlu0 %v998, 96
  %v1094 = vpop.permute.xlu0 %1093
  %v1095 = vsel %vm618, %v1084, %v1086
  %v1096 = vsel %vm618, %v1088, %v1090
  %v1097 = vsel %vm618, %v1092, %v1094
  %v1104 = vadd.f32 %v1071, %v1084
  %v1105 = vadd.f32 %v1072, %v1095
  %v1106 = vadd.f32 %v1073, %v1088
  %v1107 = vadd.f32 %v1074, %v1096
  %v1108 = vadd.f32 %v1075, %v1092
  %v1109 = vadd.f32 %v1076, %v1097
  %v1110 = vlaneseq
  %v1111 = vshrl.u32 %v1110, 7
  %v1112 = vsub.s32 1, %v1111
  %v1113 = vrot.slane %v456, %v1112
  %1115 = vrot.lane.b32.xlu0 %v1113, 112
  %v1116 = vpop.permute.xlu0 %1115
  %v1118 = vmul.f32 %v104, %v1116
  %v1119 = vmul.f32 %v105, %v1116
  %v1120 = vmul.f32 %v107, %v1116
  %v1121 = vmul.f32 %v108, %v1116
  %v1122 = vmul.f32 %v110, %v1116
  %v1123 = vmul.f32 %v111, %v1116
  %v1124 = vlaneseq
  %v1125 = vshrl.u32 %v1124, 7
  %v1126 = vsub.s32 2, %v1125
  %v1127 = vrot.slane %v456, %v1126
  %1129 = vrot.lane.b32.xlu0 %v1127, 120
  %v1130 = vpop.permute.xlu0 %1129
  %v1132 = vmul.f32 %v104, %v1130
  %v1133 = vmul.f32 %v105, %v1130
  %v1134 = vmul.f32 %v107, %v1130
  %v1135 = vmul.f32 %v108, %v1130
  %v1136 = vmul.f32 %v110, %v1130
  %v1137 = vmul.f32 %v111, %v1130
  %v1138 = vlaneseq
  %v1139 = vshrl.u32 %v1138, 7
  %v1140 = vsub.s32 3, %v1139
  %v1141 = vrot.slane %v456, %v1140
  %v1142 = vmul.f32 %v105, %v1141
  %v1143 = vmul.f32 %v108, %v1141
  %v1144 = vmul.f32 %v111, %v1141
  %v1145 = vlaneseq
  %v1146 = vshrl.u32 %v1145, 7
  %v1147 = vsub.s32 4, %v1146
  %v1148 = vrot.slane %v456, %v1147
  %1150 = vrot.lane.b32.xlu0 %v1148, 8
  %v1151 = vpop.permute.xlu0 %1150
  %v1153 = vmul.f32 %v105, %v1151
  %v1154 = vmul.f32 %v106, %v1151
  %v1155 = vmul.f32 %v108, %v1151
  %v1156 = vmul.f32 %v109, %v1151
  %v1157 = vmul.f32 %v111, %v1151
  %v1158 = vmul.f32 %v112, %v1151
  %v1159 = vlaneseq
  %v1160 = vshrl.u32 %v1159, 7
  %v1161 = vsub.s32 5, %v1160
  %v1162 = vrot.slane %v456, %v1161
  %1164 = vrot.lane.b32.xlu0 %v1162, 16
  %v1165 = vpop.permute.xlu0 %1164
  %v1167 = vmul.f32 %v105, %v1165
  %v1168 = vmul.f32 %v106, %v1165
  %v1169 = vmul.f32 %v108, %v1165
  %v1170 = vmul.f32 %v109, %v1165
  %v1171 = vmul.f32 %v111, %v1165
  %v1172 = vmul.f32 %v112, %v1165
  %1179 = vrot.lane.b32.xlu0 %v1132, 120
  %v1180 = vpop.permute.xlu0 %1179
  %1181 = vrot.lane.b32.xlu0 %v1133, 120
  %v1182 = vpop.permute.xlu0 %1181
  %1183 = vrot.lane.b32.xlu0 %v1134, 120
  %v1184 = vpop.permute.xlu0 %1183
  %1185 = vrot.lane.b32.xlu0 %v1135, 120
  %v1186 = vpop.permute.xlu0 %1185
  %1187 = vrot.lane.b32.xlu0 %v1136, 120
  %v1188 = vpop.permute.xlu0 %1187
  %1189 = vrot.lane.b32.xlu0 %v1137, 120
  %v1190 = vpop.permute.xlu0 %1189
  %v1191 = vsel %vm539, %v1180, %v1182
  %v1192 = vsel %vm539, %v1184, %v1186
  %v1193 = vsel %vm539, %v1188, %v1190
  %v1200 = vadd.f32 %v1118, %v1191
  %v1201 = vadd.f32 %v1119, %v1182
  %v1202 = vadd.f32 %v1120, %v1192
  %v1203 = vadd.f32 %v1121, %v1186
  %v1204 = vadd.f32 %v1122, %v1193
  %v1205 = vadd.f32 %v1123, %v1190
  %1212 = vrot.lane.b32.xlu0 %v1153, 120
  %v1213 = vpop.permute.xlu0 %1212
  %1214 = vrot.lane.b32.xlu0 %v1154, 120
  %v1215 = vpop.permute.xlu0 %1214
  %1216 = vrot.lane.b32.xlu0 %v1155, 120
  %v1217 = vpop.permute.xlu0 %1216
  %1218 = vrot.lane.b32.xlu0 %v1156, 120
  %v1219 = vpop.permute.xlu0 %1218
  %1220 = vrot.lane.b32.xlu0 %v1157, 120
  %v1221 = vpop.permute.xlu0 %1220
  %1222 = vrot.lane.b32.xlu0 %v1158, 120
  %v1223 = vpop.permute.xlu0 %1222
  %v1224 = vsel %vm539, %v1213, %v1215
  %v1225 = vsel %vm539, %v1217, %v1219
  %v1226 = vsel %vm539, %v1221, %v1223
  %v1230 = vadd.f32 %v1142, %v1224
  %v1231 = vadd.f32 %v1143, %v1225
  %v1232 = vadd.f32 %v1144, %v1226
  %1236 = vrot.lane.b32.xlu0 %v1230, 112
  %v1237 = vpop.permute.xlu0 %1236
  %1238 = vrot.lane.b32.xlu0 %v1231, 112
  %v1239 = vpop.permute.xlu0 %1238
  %1240 = vrot.lane.b32.xlu0 %v1232, 112
  %v1241 = vpop.permute.xlu0 %1240
  %v1245 = vadd.f32 %v1200, %v1237
  %v1246 = vadd.f32 %v1201, %v1237
  %v1247 = vadd.f32 %v1202, %v1239
  %v1248 = vadd.f32 %v1203, %v1239
  %v1249 = vadd.f32 %v1204, %v1241
  %v1250 = vadd.f32 %v1205, %v1241
  %1257 = vrot.lane.b32.xlu0 %v1167, 96
  %v1258 = vpop.permute.xlu0 %1257
  %1259 = vrot.lane.b32.xlu0 %v1168, 96
  %v1260 = vpop.permute.xlu0 %1259
  %1261 = vrot.lane.b32.xlu0 %v1169, 96
  %v1262 = vpop.permute.xlu0 %1261
  %1263 = vrot.lane.b32.xlu0 %v1170, 96
  %v1264 = vpop.permute.xlu0 %1263
  %1265 = vrot.lane.b32.xlu0 %v1171, 96
  %v1266 = vpop.permute.xlu0 %1265
  %1267 = vrot.lane.b32.xlu0 %v1172, 96
  %v1268 = vpop.permute.xlu0 %1267
  %v1269 = vsel %vm618, %v1258, %v1260
  %v1270 = vsel %vm618, %v1262, %v1264
  %v1271 = vsel %vm618, %v1266, %v1268
  %v1278 = vadd.f32 %v1245, %v1258
  %v1279 = vadd.f32 %v1246, %v1269
  %v1280 = vadd.f32 %v1247, %v1262
  %v1281 = vadd.f32 %v1248, %v1270
  %v1282 = vadd.f32 %v1249, %v1266
  %v1283 = vadd.f32 %v1250, %v1271
  %v1290 = vrot.slane %v802, 1
  %v1291 = vrot.slane %v804, 1
  %v1292 = vsel %vm377, %v1290, %v1291
  %v1293 = vrot.slane %v803, 1
  %v1294 = vrot.slane %v805, 1
  %v1295 = vsel %vm377, %v1293, %v1294
  %v1296 = vrot.slane %v806, 1
  %v1297 = vsel %vm377, %v1291, %v1296
  %v1298 = vrot.slane %v807, 1
  %v1299 = vsel %vm377, %v1294, %v1298
  %v1306 = vadd.f32 %v628, %v1292
  %v1307 = vadd.f32 %v629, %v1295
  %v1308 = vadd.f32 %v630, %v1297
  %v1309 = vadd.f32 %v631, %v1299
  %v1310 = vadd.f32 %v632, %v1296
  %v1311 = vadd.f32 %v633, %v1298
  %v1318 = vrot.slane %v1104, 1
  %v1319 = vrot.slane %v1106, 1
  %v1320 = vsel %vm377, %v1318, %v1319
  %v1321 = vrot.slane %v1105, 1
  %v1322 = vrot.slane %v1107, 1
  %v1323 = vsel %vm377, %v1321, %v1322
  %v1324 = vrot.slane %v1108, 1
  %v1325 = vsel %vm377, %v1319, %v1324
  %v1326 = vrot.slane %v1109, 1
  %v1327 = vsel %vm377, %v1322, %v1326
  %v1332 = vadd.f32 %v932, %v1320
  %v1333 = vadd.f32 %v933, %v1323
  %v1334 = vadd.f32 %v934, %v1325
  %v1335 = vadd.f32 %v935, %v1327
  %v1340 = vrot.slane %v1332, 2
  %v1341 = vrot.slane %v1333, 2
  %v1342 = vrot.slane %v1334, 2
  %v1343 = vsel %vm402, %v1340, %v1342
  %v1344 = vrot.slane %v1335, 2
  %v1345 = vsel %vm402, %v1341, %v1344
  %v1352 = vadd.f32 %v1306, %v1340
  %v1353 = vadd.f32 %v1307, %v1341
  %v1354 = vadd.f32 %v1308, %v1343
  %v1355 = vadd.f32 %v1309, %v1345
  %v1356 = vadd.f32 %v1310, %v1342
  %v1357 = vadd.f32 %v1311, %v1344
  %vm1364 = vcmask 1043456
  %v1365 = vrot.slane %v1278, 4
  %v1366 = vrot.slane %v1279, 4
  %v1367 = vrot.slane %v1280, 4
  %v1368 = vsel %vm1364, %v1365, %v1367
  %v1369 = vrot.slane %v1281, 4
  %v1370 = vsel %vm1364, %v1366, %v1369
  %v1371 = vrot.slane %v1282, 4
  %v1372 = vsel %vm1364, %v1367, %v1371
  %v1373 = vrot.slane %v1283, 4
  %v1374 = vsel %vm1364, %v1369, %v1373
  %v1381 = vadd.f32 %v1352, %v1365
  %v1382 = vadd.f32 %v1353, %v1366
  %v1383 = vadd.f32 %v1354, %v1368
  %v1384 = vadd.f32 %v1355, %v1370
  %v1385 = vadd.f32 %v1356, %v1372
  %v1386 = vadd.f32 %v1357, %v1374
  %v1387 = vlaneseq
  %v1388 = vshrl.u32 %v1387, 7
  %v1389 = vsub.s32 0, %v1388
  %v1390 = vrot.slane %v457, %v1389
  %1392 = vrot.lane.b32.xlu0 %v1390, 112
  %v1393 = vpop.permute.xlu0 %1392
  %v1395 = vadd.f32 %v1381, %v1393
  %v1396 = vadd.f32 %v1382, %v1393
  %v1397 = vadd.f32 %v1383, %v1393
  %v1398 = vadd.f32 %v1384, %v1393
  %v1399 = vadd.f32 %v1385, %v1393
  %v1400 = vadd.f32 %v1386, %v1393
  %v1401 = vmax.f32 %v1395, 0.0
  %v1402 = vmax.f32 %v1396, 0.0
  %v1403 = vmax.f32 %v1397, 0.0
  %v1404 = vmax.f32 %v1398, 0.0
  %v1405 = vmax.f32 %v1399, 0.0
  %v1406 = vmax.f32 %v1400, 0.0
  %v1407 = vmin.f32 %v1401, 6.0
  %v1408 = vmin.f32 %v1402, 6.0
  %v1409 = vmin.f32 %v1403, 6.0
  %v1410 = vmin.f32 %v1404, 6.0
  %v1411 = vmin.f32 %v1405, 6.0
  %v1412 = vmin.f32 %v1406, 6.0
  %s1413 = scalar_lea.vmem %s1, 168
  %v1414 = vld [vmem:[%s1413] sm:$0x7f]
  %v1415 = vld [vmem:[%s1413 + $0x8] sm:$0x7f]
  %v1416 = vld [vmem:[%s1413 + $0x10] sm:$0x7f]
  %v1417 = vld [vmem:[%s1413 + $0x18] sm:$0x7f]
  %v1418 = vld [vmem:[%s1413 + $0x20] sm:$0x7f]
  %v1419 = vld [vmem:[%s1413 + $0x28] sm:$0x7f]
  %v1420 = vld [vmem:[%s1413 + $0x30] sm:$0x7f]
  %v1421 = vld [vmem:[%s2 + $0x3] sm:$0x1]
  %v1422 = vlaneseq
  %v1423 = vshrl.u32 %v1422, 7
  %v1424 = vsub.s32 0, %v1423
  %v1425 = vrot.slane %v1414, %v1424
  %1427 = vrot.lane.b32.xlu0 %v1425, 104
  %v1428 = vpop.permute.xlu0 %1427
  %v1430 = vmul.f32 %v101, %v1428
  %v1431 = vmul.f32 %v102, %v1428
  %v1432 = vmul.f32 %v104, %v1428
  %v1433 = vmul.f32 %v105, %v1428
  %v1434 = vmul.f32 %v107, %v1428
  %v1435 = vmul.f32 %v108, %v1428
  %v1436 = vlaneseq
  %v1437 = vshrl.u32 %v1436, 7
  %v1438 = vsub.s32 1, %v1437
  %v1439 = vrot.slane %v1414, %v1438
  %1441 = vrot.lane.b32.xlu0 %v1439, 112
  %v1442 = vpop.permute.xlu0 %1441
  %v1444 = vmul.f32 %v101, %v1442
  %v1445 = vmul.f32 %v102, %v1442
  %v1446 = vmul.f32 %v104, %v1442
  %v1447 = vmul.f32 %v105, %v1442
  %v1448 = vmul.f32 %v107, %v1442
  %v1449 = vmul.f32 %v108, %v1442
  %v1450 = vlaneseq
  %v1451 = vshrl.u32 %v1450, 7
  %v1452 = vsub.s32 2, %v1451
  %v1453 = vrot.slane %v1414, %v1452
  %1455 = vrot.lane.b32.xlu0 %v1453, 120
  %v1456 = vpop.permute.xlu0 %1455
  %v1458 = vmul.f32 %v101, %v1456
  %v1459 = vmul.f32 %v102, %v1456
  %v1460 = vmul.f32 %v104, %v1456
  %v1461 = vmul.f32 %v105, %v1456
  %v1462 = vmul.f32 %v107, %v1456
  %v1463 = vmul.f32 %v108, %v1456
  %v1464 = vlaneseq
  %v1465 = vshrl.u32 %v1464, 7
  %v1466 = vsub.s32 3, %v1465
  %v1467 = vrot.slane %v1414, %v1466
  %v1468 = vmul.f32 %v102, %v1467
  %v1469 = vmul.f32 %v105, %v1467
  %v1470 = vmul.f32 %v108, %v1467
  %v1471 = vlaneseq
  %v1472 = vshrl.u32 %v1471, 7
  %v1473 = vsub.s32 4, %v1472
  %v1474 = vrot.slane %v1414, %v1473
  %1476 = vrot.lane.b32.xlu0 %v1474, 8
  %v1477 = vpop.permute.xlu0 %1476
  %v1479 = vmul.f32 %v102, %v1477
  %v1480 = vmul.f32 %v103, %v1477
  %v1481 = vmul.f32 %v105, %v1477
  %v1482 = vmul.f32 %v106, %v1477
  %v1483 = vmul.f32 %v108, %v1477
  %v1484 = vmul.f32 %v109, %v1477
  %v1485 = vlaneseq
  %v1486 = vshrl.u32 %v1485, 7
  %v1487 = vsub.s32 5, %v1486
  %v1488 = vrot.slane %v1414, %v1487
  %1490 = vrot.lane.b32.xlu0 %v1488, 16
  %v1491 = vpop.permute.xlu0 %1490
  %v1493 = vmul.f32 %v102, %v1491
  %v1494 = vmul.f32 %v103, %v1491
  %v1495 = vmul.f32 %v105, %v1491
  %v1496 = vmul.f32 %v106, %v1491
  %v1497 = vmul.f32 %v108, %v1491
  %v1498 = vmul.f32 %v109, %v1491
  %v1499 = vlaneseq
  %v1500 = vshrl.u32 %v1499, 7
  %v1501 = vsub.s32 6, %v1500
  %v1502 = vrot.slane %v1414, %v1501
  %1504 = vrot.lane.b32.xlu0 %v1502, 24
  %v1505 = vpop.permute.xlu0 %1504
  %v1507 = vmul.f32 %v102, %v1505
  %v1508 = vmul.f32 %v103, %v1505
  %v1509 = vmul.f32 %v105, %v1505
  %v1510 = vmul.f32 %v106, %v1505
  %v1511 = vmul.f32 %v108, %v1505
  %v1512 = vmul.f32 %v109, %v1505
  %1519 = vrot.lane.b32.xlu0 %v1444, 120
  %v1520 = vpop.permute.xlu0 %1519
  %1521 = vrot.lane.b32.xlu0 %v1445, 120
  %v1522 = vpop.permute.xlu0 %1521
  %1523 = vrot.lane.b32.xlu0 %v1446, 120
  %v1524 = vpop.permute.xlu0 %1523
  %1525 = vrot.lane.b32.xlu0 %v1447, 120
  %v1526 = vpop.permute.xlu0 %1525
  %1527 = vrot.lane.b32.xlu0 %v1448, 120
  %v1528 = vpop.permute.xlu0 %1527
  %1529 = vrot.lane.b32.xlu0 %v1449, 120
  %v1530 = vpop.permute.xlu0 %1529
  %v1531 = vsel %vm539, %v1520, %v1522
  %v1532 = vsel %vm539, %v1524, %v1526
  %v1533 = vsel %vm539, %v1528, %v1530
  %v1540 = vadd.f32 %v1430, %v1531
  %v1541 = vadd.f32 %v1431, %v1522
  %v1542 = vadd.f32 %v1432, %v1532
  %v1543 = vadd.f32 %v1433, %v1526
  %v1544 = vadd.f32 %v1434, %v1533
  %v1545 = vadd.f32 %v1435, %v1530
  %1549 = vrot.lane.b32.xlu0 %v1468, 120
  %v1550 = vpop.permute.xlu0 %1549
  %1551 = vrot.lane.b32.xlu0 %v1469, 120
  %v1552 = vpop.permute.xlu0 %1551
  %1553 = vrot.lane.b32.xlu0 %v1470, 120
  %v1554 = vpop.permute.xlu0 %1553
  %v1558 = vadd.f32 %v1458, %v1550
  %v1559 = vadd.f32 %v1459, %v1550
  %v1560 = vadd.f32 %v1460, %v1552
  %v1561 = vadd.f32 %v1461, %v1552
  %v1562 = vadd.f32 %v1462, %v1554
  %v1563 = vadd.f32 %v1463, %v1554
  %1570 = vrot.lane.b32.xlu0 %v1493, 120
  %v1571 = vpop.permute.xlu0 %1570
  %1572 = vrot.lane.b32.xlu0 %v1494, 120
  %v1573 = vpop.permute.xlu0 %1572
  %1574 = vrot.lane.b32.xlu0 %v1495, 120
  %v1575 = vpop.permute.xlu0 %1574
  %1576 = vrot.lane.b32.xlu0 %v1496, 120
  %v1577 = vpop.permute.xlu0 %1576
  %1578 = vrot.lane.b32.xlu0 %v1497, 120
  %v1579 = vpop.permute.xlu0 %1578
  %1580 = vrot.lane.b32.xlu0 %v1498, 120
  %v1581 = vpop.permute.xlu0 %1580
  %v1582 = vsel %vm539, %v1571, %v1573
  %v1583 = vsel %vm539, %v1575, %v1577
  %v1584 = vsel %vm539, %v1579, %v1581
  %v1591 = vadd.f32 %v1479, %v1582
  %v1592 = vadd.f32 %v1480, %v1573
  %v1593 = vadd.f32 %v1481, %v1583
  %v1594 = vadd.f32 %v1482, %v1577
  %v1595 = vadd.f32 %v1483, %v1584
  %v1596 = vadd.f32 %v1484, %v1581
  %1603 = vrot.lane.b32.xlu0 %v1558, 112
  %v1604 = vpop.permute.xlu0 %1603
  %1605 = vrot.lane.b32.xlu0 %v1559, 112
  %v1606 = vpop.permute.xlu0 %1605
  %1607 = vrot.lane.b32.xlu0 %v1560, 112
  %v1608 = vpop.permute.xlu0 %1607
  %1609 = vrot.lane.b32.xlu0 %v1561, 112
  %v1610 = vpop.permute.xlu0 %1609
  %1611 = vrot.lane.b32.xlu0 %v1562, 112
  %v1612 = vpop.permute.xlu0 %1611
  %1613 = vrot.lane.b32.xlu0 %v1563, 112
  %v1614 = vpop.permute.xlu0 %1613
  %v1615 = vsel %vm207, %v1604, %v1606
  %v1616 = vsel %vm207, %v1608, %v1610
  %v1617 = vsel %vm207, %v1612, %v1614
  %v1624 = vadd.f32 %v1540, %v1615
  %v1625 = vadd.f32 %v1541, %v1606
  %v1626 = vadd.f32 %v1542, %v1616
  %v1627 = vadd.f32 %v1543, %v1610
  %v1628 = vadd.f32 %v1544, %v1617
  %v1629 = vadd.f32 %v1545, %v1614
  %1636 = vrot.lane.b32.xlu0 %v1507, 112
  %v1637 = vpop.permute.xlu0 %1636
  %1638 = vrot.lane.b32.xlu0 %v1508, 112
  %v1639 = vpop.permute.xlu0 %1638
  %1640 = vrot.lane.b32.xlu0 %v1509, 112
  %v1641 = vpop.permute.xlu0 %1640
  %1642 = vrot.lane.b32.xlu0 %v1510, 112
  %v1643 = vpop.permute.xlu0 %1642
  %1644 = vrot.lane.b32.xlu0 %v1511, 112
  %v1645 = vpop.permute.xlu0 %1644
  %1646 = vrot.lane.b32.xlu0 %v1512, 112
  %v1647 = vpop.permute.xlu0 %1646
  %v1648 = vsel %vm207, %v1637, %v1639
  %v1649 = vsel %vm207, %v1641, %v1643
  %v1650 = vsel %vm207, %v1645, %v1647
  %v1657 = vadd.f32 %v1591, %v1648
  %v1658 = vadd.f32 %v1592, %v1639
  %v1659 = vadd.f32 %v1593, %v1649
  %v1660 = vadd.f32 %v1594, %v1643
  %v1661 = vadd.f32 %v1595, %v1650
  %v1662 = vadd.f32 %v1596, %v1647
  %1669 = vrot.lane.b32.xlu0 %v1657, 96
  %v1670 = vpop.permute.xlu0 %1669
  %1671 = vrot.lane.b32.xlu0 %v1658, 96
  %v1672 = vpop.permute.xlu0 %1671
  %1673 = vrot.lane.b32.xlu0 %v1659, 96
  %v1674 = vpop.permute.xlu0 %1673
  %1675 = vrot.lane.b32.xlu0 %v1660, 96
  %v1676 = vpop.permute.xlu0 %1675
  %1677 = vrot.lane.b32.xlu0 %v1661, 96
  %v1678 = vpop.permute.xlu0 %1677
  %1679 = vrot.lane.b32.xlu0 %v1662, 96
  %v1680 = vpop.permute.xlu0 %1679
  %v1681 = vsel %vm618, %v1670, %v1672
  %v1682 = vsel %vm618, %v1674, %v1676
  %v1683 = vsel %vm618, %v1678, %v1680
  %v1690 = vadd.f32 %v1624, %v1670
  %v1691 = vadd.f32 %v1625, %v1681
  %v1692 = vadd.f32 %v1626, %v1674
  %v1693 = vadd.f32 %v1627, %v1682
  %v1694 = vadd.f32 %v1628, %v1678
  %v1695 = vadd.f32 %v1629, %v1683
  %v1696 = vlaneseq
  %v1697 = vshrl.u32 %v1696, 7
  %v1698 = vsub.s32 0, %v1697
  %v1699 = vrot.slane %v1415, %v1698
  %1701 = vrot.lane.b32.xlu0 %v1699, 104
  %v1702 = vpop.permute.xlu0 %1701
  %v1704 = vmul.f32 %v101, %v1702
  %v1705 = vmul.f32 %v102, %v1702
  %v1706 = vmul.f32 %v104, %v1702
  %v1707 = vmul.f32 %v105, %v1702
  %v1708 = vmul.f32 %v107, %v1702
  %v1709 = vmul.f32 %v108, %v1702
  %v1710 = vlaneseq
  %v1711 = vshrl.u32 %v1710, 7
  %v1712 = vsub.s32 1, %v1711
  %v1713 = vrot.slane %v1415, %v1712
  %1715 = vrot.lane.b32.xlu0 %v1713, 112
  %v1716 = vpop.permute.xlu0 %1715
  %v1718 = vmul.f32 %v101, %v1716
  %v1719 = vmul.f32 %v102, %v1716
  %v1720 = vmul.f32 %v104, %v1716
  %v1721 = vmul.f32 %v105, %v1716
  %v1722 = vmul.f32 %v107, %v1716
  %v1723 = vmul.f32 %v108, %v1716
  %v1724 = vlaneseq
  %v1725 = vshrl.u32 %v1724, 7
  %v1726 = vsub.s32 2, %v1725
  %v1727 = vrot.slane %v1415, %v1726
  %1729 = vrot.lane.b32.xlu0 %v1727, 120
  %v1730 = vpop.permute.xlu0 %1729
  %v1732 = vmul.f32 %v101, %v1730
  %v1733 = vmul.f32 %v102, %v1730
  %v1734 = vmul.f32 %v104, %v1730
  %v1735 = vmul.f32 %v105, %v1730
  %v1736 = vmul.f32 %v107, %v1730
  %v1737 = vmul.f32 %v108, %v1730
  %v1738 = vlaneseq
  %v1739 = vshrl.u32 %v1738, 7
  %v1740 = vsub.s32 3, %v1739
  %v1741 = vrot.slane %v1415, %v1740
  %v1742 = vmul.f32 %v102, %v1741
  %v1743 = vmul.f32 %v105, %v1741
  %v1744 = vmul.f32 %v108, %v1741
  %v1745 = vlaneseq
  %v1746 = vshrl.u32 %v1745, 7
  %v1747 = vsub.s32 4, %v1746
  %v1748 = vrot.slane %v1415, %v1747
  %1750 = vrot.lane.b32.xlu0 %v1748, 8
  %v1751 = vpop.permute.xlu0 %1750
  %v1753 = vmul.f32 %v102, %v1751
  %v1754 = vmul.f32 %v103, %v1751
  %v1755 = vmul.f32 %v105, %v1751
  %v1756 = vmul.f32 %v106, %v1751
  %v1757 = vmul.f32 %v108, %v1751
  %v1758 = vmul.f32 %v109, %v1751
  %v1759 = vlaneseq
  %v1760 = vshrl.u32 %v1759, 7
  %v1761 = vsub.s32 5, %v1760
  %v1762 = vrot.slane %v1415, %v1761
  %1764 = vrot.lane.b32.xlu0 %v1762, 16
  %v1765 = vpop.permute.xlu0 %1764
  %v1767 = vmul.f32 %v102, %v1765
  %v1768 = vmul.f32 %v103, %v1765
  %v1769 = vmul.f32 %v105, %v1765
  %v1770 = vmul.f32 %v106, %v1765
  %v1771 = vmul.f32 %v108, %v1765
  %v1772 = vmul.f32 %v109, %v1765
  %v1773 = vlaneseq
  %v1774 = vshrl.u32 %v1773, 7
  %v1775 = vsub.s32 6, %v1774
  %v1776 = vrot.slane %v1415, %v1775
  %1778 = vrot.lane.b32.xlu0 %v1776, 24
  %v1779 = vpop.permute.xlu0 %1778
  %v1781 = vmul.f32 %v102, %v1779
  %v1782 = vmul.f32 %v103, %v1779
  %v1783 = vmul.f32 %v105, %v1779
  %v1784 = vmul.f32 %v106, %v1779
  %v1785 = vmul.f32 %v108, %v1779
  %v1786 = vmul.f32 %v109, %v1779
  %1793 = vrot.lane.b32.xlu0 %v1718, 120
  %v1794 = vpop.permute.xlu0 %1793
  %1795 = vrot.lane.b32.xlu0 %v1719, 120
  %v1796 = vpop.permute.xlu0 %1795
  %1797 = vrot.lane.b32.xlu0 %v1720, 120
  %v1798 = vpop.permute.xlu0 %1797
  %1799 = vrot.lane.b32.xlu0 %v1721, 120
  %v1800 = vpop.permute.xlu0 %1799
  %1801 = vrot.lane.b32.xlu0 %v1722, 120
  %v1802 = vpop.permute.xlu0 %1801
  %1803 = vrot.lane.b32.xlu0 %v1723, 120
  %v1804 = vpop.permute.xlu0 %1803
  %v1805 = vsel %vm539, %v1794, %v1796
  %v1806 = vsel %vm539, %v1798, %v1800
  %v1807 = vsel %vm539, %v1802, %v1804
  %v1814 = vadd.f32 %v1704, %v1805
  %v1815 = vadd.f32 %v1705, %v1796
  %v1816 = vadd.f32 %v1706, %v1806
  %v1817 = vadd.f32 %v1707, %v1800
  %v1818 = vadd.f32 %v1708, %v1807
  %v1819 = vadd.f32 %v1709, %v1804
  %1823 = vrot.lane.b32.xlu0 %v1742, 120
  %v1824 = vpop.permute.xlu0 %1823
  %1825 = vrot.lane.b32.xlu0 %v1743, 120
  %v1826 = vpop.permute.xlu0 %1825
  %1827 = vrot.lane.b32.xlu0 %v1744, 120
  %v1828 = vpop.permute.xlu0 %1827
  %v1832 = vadd.f32 %v1732, %v1824
  %v1833 = vadd.f32 %v1733, %v1824
  %v1834 = vadd.f32 %v1734, %v1826
  %v1835 = vadd.f32 %v1735, %v1826
  %v1836 = vadd.f32 %v1736, %v1828
  %v1837 = vadd.f32 %v1737, %v1828
  %1844 = vrot.lane.b32.xlu0 %v1767, 120
  %v1845 = vpop.permute.xlu0 %1844
  %1846 = vrot.lane.b32.xlu0 %v1768, 120
  %v1847 = vpop.permute.xlu0 %1846
  %1848 = vrot.lane.b32.xlu0 %v1769, 120
  %v1849 = vpop.permute.xlu0 %1848
  %1850 = vrot.lane.b32.xlu0 %v1770, 120
  %v1851 = vpop.permute.xlu0 %1850
  %1852 = vrot.lane.b32.xlu0 %v1771, 120
  %v1853 = vpop.permute.xlu0 %1852
  %1854 = vrot.lane.b32.xlu0 %v1772, 120
  %v1855 = vpop.permute.xlu0 %1854
  %v1856 = vsel %vm539, %v1845, %v1847
  %v1857 = vsel %vm539, %v1849, %v1851
  %v1858 = vsel %vm539, %v1853, %v1855
  %v1865 = vadd.f32 %v1753, %v1856
  %v1866 = vadd.f32 %v1754, %v1847
  %v1867 = vadd.f32 %v1755, %v1857
  %v1868 = vadd.f32 %v1756, %v1851
  %v1869 = vadd.f32 %v1757, %v1858
  %v1870 = vadd.f32 %v1758, %v1855
  %1877 = vrot.lane.b32.xlu0 %v1832, 112
  %v1878 = vpop.permute.xlu0 %1877
  %1879 = vrot.lane.b32.xlu0 %v1833, 112
  %v1880 = vpop.permute.xlu0 %1879
  %1881 = vrot.lane.b32.xlu0 %v1834, 112
  %v1882 = vpop.permute.xlu0 %1881
  %1883 = vrot.lane.b32.xlu0 %v1835, 112
  %v1884 = vpop.permute.xlu0 %1883
  %1885 = vrot.lane.b32.xlu0 %v1836, 112
  %v1886 = vpop.permute.xlu0 %1885
  %1887 = vrot.lane.b32.xlu0 %v1837, 112
  %v1888 = vpop.permute.xlu0 %1887
  %v1889 = vsel %vm207, %v1878, %v1880
  %v1890 = vsel %vm207, %v1882, %v1884
  %v1891 = vsel %vm207, %v1886, %v1888
  %v1898 = vadd.f32 %v1814, %v1889
  %v1899 = vadd.f32 %v1815, %v1880
  %v1900 = vadd.f32 %v1816, %v1890
  %v1901 = vadd.f32 %v1817, %v1884
  %v1902 = vadd.f32 %v1818, %v1891
  %v1903 = vadd.f32 %v1819, %v1888
  %1910 = vrot.lane.b32.xlu0 %v1781, 112
  %v1911 = vpop.permute.xlu0 %1910
  %1912 = vrot.lane.b32.xlu0 %v1782, 112
  %v1913 = vpop.permute.xlu0 %1912
  %1914 = vrot.lane.b32.xlu0 %v1783, 112
  %v1915 = vpop.permute.xlu0 %1914
  %1916 = vrot.lane.b32.xlu0 %v1784, 112
  %v1917 = vpop.permute.xlu0 %1916
  %1918 = vrot.lane.b32.xlu0 %v1785, 112
  %v1919 = vpop.permute.xlu0 %1918
  %1920 = vrot.lane.b32.xlu0 %v1786, 112
  %v1921 = vpop.permute.xlu0 %1920
  %v1922 = vsel %vm207, %v1911, %v1913
  %v1923 = vsel %vm207, %v1915, %v1917
  %v1924 = vsel %vm207, %v1919, %v1921
  %v1931 = vadd.f32 %v1865, %v1922
  %v1932 = vadd.f32 %v1866, %v1913
  %v1933 = vadd.f32 %v1867, %v1923
  %v1934 = vadd.f32 %v1868, %v1917
  %v1935 = vadd.f32 %v1869, %v1924
  %v1936 = vadd.f32 %v1870, %v1921
  %1943 = vrot.lane.b32.xlu0 %v1931, 96
  %v1944 = vpop.permute.xlu0 %1943
  %1945 = vrot.lane.b32.xlu0 %v1932, 96
  %v1946 = vpop.permute.xlu0 %1945
  %1947 = vrot.lane.b32.xlu0 %v1933, 96
  %v1948 = vpop.permute.xlu0 %1947
  %1949 = vrot.lane.b32.xlu0 %v1934, 96
  %v1950 = vpop.permute.xlu0 %1949
  %1951 = vrot.lane.b32.xlu0 %v1935, 96
  %v1952 = vpop.permute.xlu0 %1951
  %1953 = vrot.lane.b32.xlu0 %v1936, 96
  %v1954 = vpop.permute.xlu0 %1953
  %v1955 = vsel %vm618, %v1944, %v1946
  %v1956 = vsel %vm618, %v1948, %v1950
  %v1957 = vsel %vm618, %v1952, %v1954
  %v1964 = vadd.f32 %v1898, %v1944
  %v1965 = vadd.f32 %v1899, %v1955
  %v1966 = vadd.f32 %v1900, %v1948
  %v1967 = vadd.f32 %v1901, %v1956
  %v1968 = vadd.f32 %v1902, %v1952
  %v1969 = vadd.f32 %v1903, %v1957
  %v1970 = vlaneseq
  %v1971 = vshrl.u32 %v1970, 7
  %v1972 = vsub.s32 0, %v1971
  %v1973 = vrot.slane %v1416, %v1972
  %1975 = vrot.lane.b32.xlu0 %v1973, 104
  %v1976 = vpop.permute.xlu0 %1975
  %v1978 = vmul.f32 %v101, %v1976
  %v1979 = vmul.f32 %v102, %v1976
  %v1980 = vmul.f32 %v104, %v1976
  %v1981 = vmul.f32 %v105, %v1976
  %v1982 = vmul.f32 %v107, %v1976
  %v1983 = vmul.f32 %v108, %v1976
  %v1984 = vlaneseq
  %v1985 = vshrl.u32 %v1984, 7
  %v1986 = vsub.s32 1, %v1985
  %v1987 = vrot.slane %v1416, %v1986
  %1989 = vrot.lane.b32.xlu0 %v1987, 112
  %v1990 = vpop.permute.xlu0 %1989
  %v1992 = vmul.f32 %v101, %v1990
  %v1993 = vmul.f32 %v102, %v1990
  %v1994 = vmul.f32 %v104, %v1990
  %v1995 = vmul.f32 %v105, %v1990
  %v1996 = vmul.f32 %v107, %v1990
  %v1997 = vmul.f32 %v108, %v1990
  %v1998 = vlaneseq
  %v1999 = vshrl.u32 %v1998, 7
  %v2000 = vsub.s32 2, %v1999
  %v2001 = vrot.slane %v1416, %v2000
  %2003 = vrot.lane.b32.xlu0 %v2001, 120
  %v2004 = vpop.permute.xlu0 %2003
  %v2006 = vmul.f32 %v101, %v2004
  %v2007 = vmul.f32 %v102, %v2004
  %v2008 = vmul.f32 %v104, %v2004
  %v2009 = vmul.f32 %v105, %v2004
  %v2010 = vmul.f32 %v107, %v2004
  %v2011 = vmul.f32 %v108, %v2004
  %v2012 = vlaneseq
  %v2013 = vshrl.u32 %v2012, 7
  %v2014 = vsub.s32 3, %v2013
  %v2015 = vrot.slane %v1416, %v2014
  %v2016 = vmul.f32 %v102, %v2015
  %v2017 = vmul.f32 %v105, %v2015
  %v2018 = vmul.f32 %v108, %v2015
  %v2019 = vlaneseq
  %v2020 = vshrl.u32 %v2019, 7
  %v2021 = vsub.s32 4, %v2020
  %v2022 = vrot.slane %v1416, %v2021
  %2024 = vrot.lane.b32.xlu0 %v2022, 8
  %v2025 = vpop.permute.xlu0 %2024
  %v2027 = vmul.f32 %v102, %v2025
  %v2028 = vmul.f32 %v103, %v2025
  %v2029 = vmul.f32 %v105, %v2025
  %v2030 = vmul.f32 %v106, %v2025
  %v2031 = vmul.f32 %v108, %v2025
  %v2032 = vmul.f32 %v109, %v2025
  %v2033 = vlaneseq
  %v2034 = vshrl.u32 %v2033, 7
  %v2035 = vsub.s32 5, %v2034
  %v2036 = vrot.slane %v1416, %v2035
  %2038 = vrot.lane.b32.xlu0 %v2036, 16
  %v2039 = vpop.permute.xlu0 %2038
  %v2041 = vmul.f32 %v102, %v2039
  %v2042 = vmul.f32 %v103, %v2039
  %v2043 = vmul.f32 %v105, %v2039
  %v2044 = vmul.f32 %v106, %v2039
  %v2045 = vmul.f32 %v108, %v2039
  %v2046 = vmul.f32 %v109, %v2039
  %v2047 = vlaneseq
  %v2048 = vshrl.u32 %v2047, 7
  %v2049 = vsub.s32 6, %v2048
  %v2050 = vrot.slane %v1416, %v2049
  %2052 = vrot.lane.b32.xlu0 %v2050, 24
  %v2053 = vpop.permute.xlu0 %2052
  %v2055 = vmul.f32 %v102, %v2053
  %v2056 = vmul.f32 %v103, %v2053
  %v2057 = vmul.f32 %v105, %v2053
  %v2058 = vmul.f32 %v106, %v2053
  %v2059 = vmul.f32 %v108, %v2053
  %v2060 = vmul.f32 %v109, %v2053
  %2067 = vrot.lane.b32.xlu0 %v1992, 120
  %v2068 = vpop.permute.xlu0 %2067
  %2069 = vrot.lane.b32.xlu0 %v1993, 120
  %v2070 = vpop.permute.xlu0 %2069
  %2071 = vrot.lane.b32.xlu0 %v1994, 120
  %v2072 = vpop.permute.xlu0 %2071
  %2073 = vrot.lane.b32.xlu0 %v1995, 120
  %v2074 = vpop.permute.xlu0 %2073
  %2075 = vrot.lane.b32.xlu0 %v1996, 120
  %v2076 = vpop.permute.xlu0 %2075
  %2077 = vrot.lane.b32.xlu0 %v1997, 120
  %v2078 = vpop.permute.xlu0 %2077
  %v2079 = vsel %vm539, %v2068, %v2070
  %v2080 = vsel %vm539, %v2072, %v2074
  %v2081 = vsel %vm539, %v2076, %v2078
  %v2088 = vadd.f32 %v1978, %v2079
  %v2089 = vadd.f32 %v1979, %v2070
  %v2090 = vadd.f32 %v1980, %v2080
  %v2091 = vadd.f32 %v1981, %v2074
  %v2092 = vadd.f32 %v1982, %v2081
  %v2093 = vadd.f32 %v1983, %v2078
  %2097 = vrot.lane.b32.xlu0 %v2016, 120
  %v2098 = vpop.permute.xlu0 %2097
  %2099 = vrot.lane.b32.xlu0 %v2017, 120
  %v2100 = vpop.permute.xlu0 %2099
  %2101 = vrot.lane.b32.xlu0 %v2018, 120
  %v2102 = vpop.permute.xlu0 %2101
  %v2106 = vadd.f32 %v2006, %v2098
  %v2107 = vadd.f32 %v2007, %v2098
  %v2108 = vadd.f32 %v2008, %v2100
  %v2109 = vadd.f32 %v2009, %v2100
  %v2110 = vadd.f32 %v2010, %v2102
  %v2111 = vadd.f32 %v2011, %v2102
  %2118 = vrot.lane.b32.xlu0 %v2041, 120
  %v2119 = vpop.permute.xlu0 %2118
  %2120 = vrot.lane.b32.xlu0 %v2042, 120
  %v2121 = vpop.permute.xlu0 %2120
  %2122 = vrot.lane.b32.xlu0 %v2043, 120
  %v2123 = vpop.permute.xlu0 %2122
  %2124 = vrot.lane.b32.xlu0 %v2044, 120
  %v2125 = vpop.permute.xlu0 %2124
  %2126 = vrot.lane.b32.xlu0 %v2045, 120
  %v2127 = vpop.permute.xlu0 %2126
  %2128 = vrot.lane.b32.xlu0 %v2046, 120
  %v2129 = vpop.permute.xlu0 %2128
  %v2130 = vsel %vm539, %v2119, %v2121
  %v2131 = vsel %vm539, %v2123, %v2125
  %v2132 = vsel %vm539, %v2127, %v2129
  %v2139 = vadd.f32 %v2027, %v2130
  %v2140 = vadd.f32 %v2028, %v2121
  %v2141 = vadd.f32 %v2029, %v2131
  %v2142 = vadd.f32 %v2030, %v2125
  %v2143 = vadd.f32 %v2031, %v2132
  %v2144 = vadd.f32 %v2032, %v2129
  %2151 = vrot.lane.b32.xlu0 %v2106, 112
  %v2152 = vpop.permute.xlu0 %2151
  %2153 = vrot.lane.b32.xlu0 %v2107, 112
  %v2154 = vpop.permute.xlu0 %2153
  %2155 = vrot.lane.b32.xlu0 %v2108, 112
  %v2156 = vpop.permute.xlu0 %2155
  %2157 = vrot.lane.b32.xlu0 %v2109, 112
  %v2158 = vpop.permute.xlu0 %2157
  %2159 = vrot.lane.b32.xlu0 %v2110, 112
  %v2160 = vpop.permute.xlu0 %2159
  %2161 = vrot.lane.b32.xlu0 %v2111, 112
  %v2162 = vpop.permute.xlu0 %2161
  %v2163 = vsel %vm207, %v2152, %v2154
  %v2164 = vsel %vm207, %v2156, %v2158
  %v2165 = vsel %vm207, %v2160, %v2162
  %v2172 = vadd.f32 %v2088, %v2163
  %v2173 = vadd.f32 %v2089, %v2154
  %v2174 = vadd.f32 %v2090, %v2164
  %v2175 = vadd.f32 %v2091, %v2158
  %v2176 = vadd.f32 %v2092, %v2165
  %v2177 = vadd.f32 %v2093, %v2162
  %2184 = vrot.lane.b32.xlu0 %v2055, 112
  %v2185 = vpop.permute.xlu0 %2184
  %2186 = vrot.lane.b32.xlu0 %v2056, 112
  %v2187 = vpop.permute.xlu0 %2186
  %2188 = vrot.lane.b32.xlu0 %v2057, 112
  %v2189 = vpop.permute.xlu0 %2188
  %2190 = vrot.lane.b32.xlu0 %v2058, 112
  %v2191 = vpop.permute.xlu0 %2190
  %2192 = vrot.lane.b32.xlu0 %v2059, 112
  %v2193 = vpop.permute.xlu0 %2192
  %2194 = vrot.lane.b32.xlu0 %v2060, 112
  %v2195 = vpop.permute.xlu0 %2194
  %v2196 = vsel %vm207, %v2185, %v2187
  %v2197 = vsel %vm207, %v2189, %v2191
  %v2198 = vsel %vm207, %v2193, %v2195
  %v2205 = vadd.f32 %v2139, %v2196
  %v2206 = vadd.f32 %v2140, %v2187
  %v2207 = vadd.f32 %v2141, %v2197
  %v2208 = vadd.f32 %v2142, %v2191
  %v2209 = vadd.f32 %v2143, %v2198
  %v2210 = vadd.f32 %v2144, %v2195
  %2217 = vrot.lane.b32.xlu0 %v2205, 96
  %v2218 = vpop.permute.xlu0 %2217
  %2219 = vrot.lane.b32.xlu0 %v2206, 96
  %v2220 = vpop.permute.xlu0 %2219
  %2221 = vrot.lane.b32.xlu0 %v2207, 96
  %v2222 = vpop.permute.xlu0 %2221
  %2223 = vrot.lane.b32.xlu0 %v2208, 96
  %v2224 = vpop.permute.xlu0 %2223
  %2225 = vrot.lane.b32.xlu0 %v2209, 96
  %v2226 = vpop.permute.xlu0 %2225
  %2227 = vrot.lane.b32.xlu0 %v2210, 96
  %v2228 = vpop.permute.xlu0 %2227
  %v2229 = vsel %vm618, %v2218, %v2220
  %v2230 = vsel %vm618, %v2222, %v2224
  %v2231 = vsel %vm618, %v2226, %v2228
  %v2238 = vadd.f32 %v2172, %v2218
  %v2239 = vadd.f32 %v2173, %v2229
  %v2240 = vadd.f32 %v2174, %v2222
  %v2241 = vadd.f32 %v2175, %v2230
  %v2242 = vadd.f32 %v2176, %v2226
  %v2243 = vadd.f32 %v2177, %v2231
  %v2244 = vlaneseq
  %v2245 = vshrl.u32 %v2244, 7
  %v2246 = vsub.s32 0, %v2245
  %v2247 = vrot.slane %v1417, %v2246
  %2249 = vrot.lane.b32.xlu0 %v2247, 104
  %v2250 = vpop.permute.xlu0 %2249
  %v2252 = vmul.f32 %v104, %v2250
  %v2253 = vmul.f32 %v105, %v2250
  %v2254 = vmul.f32 %v107, %v2250
  %v2255 = vmul.f32 %v108, %v2250
  %v2256 = vlaneseq
  %v2257 = vshrl.u32 %v2256, 7
  %v2258 = vsub.s32 1, %v2257
  %v2259 = vrot.slane %v1417, %v2258
  %2261 = vrot.lane.b32.xlu0 %v2259, 112
  %v2262 = vpop.permute.xlu0 %2261
  %v2264 = vmul.f32 %v104, %v2262
  %v2265 = vmul.f32 %v105, %v2262
  %v2266 = vmul.f32 %v107, %v2262
  %v2267 = vmul.f32 %v108, %v2262
  %v2268 = vlaneseq
  %v2269 = vshrl.u32 %v2268, 7
  %v2270 = vsub.s32 2, %v2269
  %v2271 = vrot.slane %v1417, %v2270
  %2273 = vrot.lane.b32.xlu0 %v2271, 120
  %v2274 = vpop.permute.xlu0 %2273
  %v2276 = vmul.f32 %v104, %v2274
  %v2277 = vmul.f32 %v105, %v2274
  %v2278 = vmul.f32 %v107, %v2274
  %v2279 = vmul.f32 %v108, %v2274
  %v2280 = vlaneseq
  %v2281 = vshrl.u32 %v2280, 7
  %v2282 = vsub.s32 3, %v2281
  %v2283 = vrot.slane %v1417, %v2282
  %v2284 = vmul.f32 %v105, %v2283
  %v2285 = vmul.f32 %v108, %v2283
  %v2286 = vlaneseq
  %v2287 = vshrl.u32 %v2286, 7
  %v2288 = vsub.s32 4, %v2287
  %v2289 = vrot.slane %v1417, %v2288
  %2291 = vrot.lane.b32.xlu0 %v2289, 8
  %v2292 = vpop.permute.xlu0 %2291
  %v2294 = vmul.f32 %v105, %v2292
  %v2295 = vmul.f32 %v106, %v2292
  %v2296 = vmul.f32 %v108, %v2292
  %v2297 = vmul.f32 %v109, %v2292
  %v2298 = vlaneseq
  %v2299 = vshrl.u32 %v2298, 7
  %v2300 = vsub.s32 5, %v2299
  %v2301 = vrot.slane %v1417, %v2300
  %2303 = vrot.lane.b32.xlu0 %v2301, 16
  %v2304 = vpop.permute.xlu0 %2303
  %v2306 = vmul.f32 %v105, %v2304
  %v2307 = vmul.f32 %v106, %v2304
  %v2308 = vmul.f32 %v108, %v2304
  %v2309 = vmul.f32 %v109, %v2304
  %v2310 = vlaneseq
  %v2311 = vshrl.u32 %v2310, 7
  %v2312 = vsub.s32 6, %v2311
  %v2313 = vrot.slane %v1417, %v2312
  %2315 = vrot.lane.b32.xlu0 %v2313, 24
  %v2316 = vpop.permute.xlu0 %2315
  %v2318 = vmul.f32 %v105, %v2316
  %v2319 = vmul.f32 %v106, %v2316
  %v2320 = vmul.f32 %v108, %v2316
  %v2321 = vmul.f32 %v109, %v2316
  %2326 = vrot.lane.b32.xlu0 %v2264, 120
  %v2327 = vpop.permute.xlu0 %2326
  %2328 = vrot.lane.b32.xlu0 %v2265, 120
  %v2329 = vpop.permute.xlu0 %2328
  %2330 = vrot.lane.b32.xlu0 %v2266, 120
  %v2331 = vpop.permute.xlu0 %2330
  %2332 = vrot.lane.b32.xlu0 %v2267, 120
  %v2333 = vpop.permute.xlu0 %2332
  %v2334 = vsel %vm539, %v2327, %v2329
  %v2335 = vsel %vm539, %v2331, %v2333
  %v2340 = vadd.f32 %v2252, %v2334
  %v2341 = vadd.f32 %v2253, %v2329
  %v2342 = vadd.f32 %v2254, %v2335
  %v2343 = vadd.f32 %v2255, %v2333
  %2346 = vrot.lane.b32.xlu0 %v2284, 120
  %v2347 = vpop.permute.xlu0 %2346
  %2348 = vrot.lane.b32.xlu0 %v2285, 120
  %v2349 = vpop.permute.xlu0 %2348
  %v2352 = vadd.f32 %v2276, %v2347
  %v2353 = vadd.f32 %v2277, %v2347
  %v2354 = vadd.f32 %v2278, %v2349
  %v2355 = vadd.f32 %v2279, %v2349
  %2360 = vrot.lane.b32.xlu0 %v2306, 120
  %v2361 = vpop.permute.xlu0 %2360
  %2362 = vrot.lane.b32.xlu0 %v2307, 120
  %v2363 = vpop.permute.xlu0 %2362
  %2364 = vrot.lane.b32.xlu0 %v2308, 120
  %v2365 = vpop.permute.xlu0 %2364
  %2366 = vrot.lane.b32.xlu0 %v2309, 120
  %v2367 = vpop.permute.xlu0 %2366
  %v2368 = vsel %vm539, %v2361, %v2363
  %v2369 = vsel %vm539, %v2365, %v2367
  %v2374 = vadd.f32 %v2294, %v2368
  %v2375 = vadd.f32 %v2295, %v2363
  %v2376 = vadd.f32 %v2296, %v2369
  %v2377 = vadd.f32 %v2297, %v2367
  %2382 = vrot.lane.b32.xlu0 %v2352, 112
  %v2383 = vpop.permute.xlu0 %2382
  %2384 = vrot.lane.b32.xlu0 %v2353, 112
  %v2385 = vpop.permute.xlu0 %2384
  %2386 = vrot.lane.b32.xlu0 %v2354, 112
  %v2387 = vpop.permute.xlu0 %2386
  %2388 = vrot.lane.b32.xlu0 %v2355, 112
  %v2389 = vpop.permute.xlu0 %2388
  %v2390 = vsel %vm207, %v2383, %v2385
  %v2391 = vsel %vm207, %v2387, %v2389
  %v2396 = vadd.f32 %v2340, %v2390
  %v2397 = vadd.f32 %v2341, %v2385
  %v2398 = vadd.f32 %v2342, %v2391
  %v2399 = vadd.f32 %v2343, %v2389
  %2404 = vrot.lane.b32.xlu0 %v2318, 112
  %v2405 = vpop.permute.xlu0 %2404
  %2406 = vrot.lane.b32.xlu0 %v2319, 112
  %v2407 = vpop.permute.xlu0 %2406
  %2408 = vrot.lane.b32.xlu0 %v2320, 112
  %v2409 = vpop.permute.xlu0 %2408
  %2410 = vrot.lane.b32.xlu0 %v2321, 112
  %v2411 = vpop.permute.xlu0 %2410
  %v2412 = vsel %vm207, %v2405, %v2407
  %v2413 = vsel %vm207, %v2409, %v2411
  %v2418 = vadd.f32 %v2374, %v2412
  %v2419 = vadd.f32 %v2375, %v2407
  %v2420 = vadd.f32 %v2376, %v2413
  %v2421 = vadd.f32 %v2377, %v2411
  %2426 = vrot.lane.b32.xlu0 %v2418, 96
  %v2427 = vpop.permute.xlu0 %2426
  %2428 = vrot.lane.b32.xlu0 %v2419, 96
  %v2429 = vpop.permute.xlu0 %2428
  %2430 = vrot.lane.b32.xlu0 %v2420, 96
  %v2431 = vpop.permute.xlu0 %2430
  %2432 = vrot.lane.b32.xlu0 %v2421, 96
  %v2433 = vpop.permute.xlu0 %2432
  %v2434 = vsel %vm618, %v2427, %v2429
  %v2435 = vsel %vm618, %v2431, %v2433
  %v2440 = vadd.f32 %v2396, %v2427
  %v2441 = vadd.f32 %v2397, %v2434
  %v2442 = vadd.f32 %v2398, %v2431
  %v2443 = vadd.f32 %v2399, %v2435
  %v2444 = vlaneseq
  %v2445 = vshrl.u32 %v2444, 7
  %v2446 = vsub.s32 0, %v2445
  %v2447 = vrot.slane %v1418, %v2446
  %2449 = vrot.lane.b32.xlu0 %v2447, 104
  %v2450 = vpop.permute.xlu0 %2449
  %v2452 = vmul.f32 %v104, %v2450
  %v2453 = vmul.f32 %v105, %v2450
  %v2454 = vmul.f32 %v107, %v2450
  %v2455 = vmul.f32 %v108, %v2450
  %v2456 = vmul.f32 %v110, %v2450
  %v2457 = vmul.f32 %v111, %v2450
  %v2458 = vlaneseq
  %v2459 = vshrl.u32 %v2458, 7
  %v2460 = vsub.s32 1, %v2459
  %v2461 = vrot.slane %v1418, %v2460
  %2463 = vrot.lane.b32.xlu0 %v2461, 112
  %v2464 = vpop.permute.xlu0 %2463
  %v2466 = vmul.f32 %v104, %v2464
  %v2467 = vmul.f32 %v105, %v2464
  %v2468 = vmul.f32 %v107, %v2464
  %v2469 = vmul.f32 %v108, %v2464
  %v2470 = vmul.f32 %v110, %v2464
  %v2471 = vmul.f32 %v111, %v2464
  %v2472 = vlaneseq
  %v2473 = vshrl.u32 %v2472, 7
  %v2474 = vsub.s32 2, %v2473
  %v2475 = vrot.slane %v1418, %v2474
  %2477 = vrot.lane.b32.xlu0 %v2475, 120
  %v2478 = vpop.permute.xlu0 %2477
  %v2480 = vmul.f32 %v104, %v2478
  %v2481 = vmul.f32 %v105, %v2478
  %v2482 = vmul.f32 %v107, %v2478
  %v2483 = vmul.f32 %v108, %v2478
  %v2484 = vmul.f32 %v110, %v2478
  %v2485 = vmul.f32 %v111, %v2478
  %v2486 = vlaneseq
  %v2487 = vshrl.u32 %v2486, 7
  %v2488 = vsub.s32 3, %v2487
  %v2489 = vrot.slane %v1418, %v2488
  %v2490 = vmul.f32 %v105, %v2489
  %v2491 = vmul.f32 %v108, %v2489
  %v2492 = vmul.f32 %v111, %v2489
  %v2493 = vlaneseq
  %v2494 = vshrl.u32 %v2493, 7
  %v2495 = vsub.s32 4, %v2494
  %v2496 = vrot.slane %v1418, %v2495
  %2498 = vrot.lane.b32.xlu0 %v2496, 8
  %v2499 = vpop.permute.xlu0 %2498
  %v2501 = vmul.f32 %v105, %v2499
  %v2502 = vmul.f32 %v106, %v2499
  %v2503 = vmul.f32 %v108, %v2499
  %v2504 = vmul.f32 %v109, %v2499
  %v2505 = vmul.f32 %v111, %v2499
  %v2506 = vmul.f32 %v112, %v2499
  %v2507 = vlaneseq
  %v2508 = vshrl.u32 %v2507, 7
  %v2509 = vsub.s32 5, %v2508
  %v2510 = vrot.slane %v1418, %v2509
  %2512 = vrot.lane.b32.xlu0 %v2510, 16
  %v2513 = vpop.permute.xlu0 %2512
  %v2515 = vmul.f32 %v105, %v2513
  %v2516 = vmul.f32 %v106, %v2513
  %v2517 = vmul.f32 %v108, %v2513
  %v2518 = vmul.f32 %v109, %v2513
  %v2519 = vmul.f32 %v111, %v2513
  %v2520 = vmul.f32 %v112, %v2513
  %v2521 = vlaneseq
  %v2522 = vshrl.u32 %v2521, 7
  %v2523 = vsub.s32 6, %v2522
  %v2524 = vrot.slane %v1418, %v2523
  %2526 = vrot.lane.b32.xlu0 %v2524, 24
  %v2527 = vpop.permute.xlu0 %2526
  %v2529 = vmul.f32 %v105, %v2527
  %v2530 = vmul.f32 %v106, %v2527
  %v2531 = vmul.f32 %v108, %v2527
  %v2532 = vmul.f32 %v109, %v2527
  %v2533 = vmul.f32 %v111, %v2527
  %v2534 = vmul.f32 %v112, %v2527
  %2541 = vrot.lane.b32.xlu0 %v2466, 120
  %v2542 = vpop.permute.xlu0 %2541
  %2543 = vrot.lane.b32.xlu0 %v2467, 120
  %v2544 = vpop.permute.xlu0 %2543
  %2545 = vrot.lane.b32.xlu0 %v2468, 120
  %v2546 = vpop.permute.xlu0 %2545
  %2547 = vrot.lane.b32.xlu0 %v2469, 120
  %v2548 = vpop.permute.xlu0 %2547
  %2549 = vrot.lane.b32.xlu0 %v2470, 120
  %v2550 = vpop.permute.xlu0 %2549
  %2551 = vrot.lane.b32.xlu0 %v2471, 120
  %v2552 = vpop.permute.xlu0 %2551
  %v2553 = vsel %vm539, %v2542, %v2544
  %v2554 = vsel %vm539, %v2546, %v2548
  %v2555 = vsel %vm539, %v2550, %v2552
  %v2562 = vadd.f32 %v2452, %v2553
  %v2563 = vadd.f32 %v2453, %v2544
  %v2564 = vadd.f32 %v2454, %v2554
  %v2565 = vadd.f32 %v2455, %v2548
  %v2566 = vadd.f32 %v2456, %v2555
  %v2567 = vadd.f32 %v2457, %v2552
  %2571 = vrot.lane.b32.xlu0 %v2490, 120
  %v2572 = vpop.permute.xlu0 %2571
  %2573 = vrot.lane.b32.xlu0 %v2491, 120
  %v2574 = vpop.permute.xlu0 %2573
  %2575 = vrot.lane.b32.xlu0 %v2492, 120
  %v2576 = vpop.permute.xlu0 %2575
  %v2580 = vadd.f32 %v2480, %v2572
  %v2581 = vadd.f32 %v2481, %v2572
  %v2582 = vadd.f32 %v2482, %v2574
  %v2583 = vadd.f32 %v2483, %v2574
  %v2584 = vadd.f32 %v2484, %v2576
  %v2585 = vadd.f32 %v2485, %v2576
  %2592 = vrot.lane.b32.xlu0 %v2515, 120
  %v2593 = vpop.permute.xlu0 %2592
  %2594 = vrot.lane.b32.xlu0 %v2516, 120
  %v2595 = vpop.permute.xlu0 %2594
  %2596 = vrot.lane.b32.xlu0 %v2517, 120
  %v2597 = vpop.permute.xlu0 %2596
  %2598 = vrot.lane.b32.xlu0 %v2518, 120
  %v2599 = vpop.permute.xlu0 %2598
  %2600 = vrot.lane.b32.xlu0 %v2519, 120
  %v2601 = vpop.permute.xlu0 %2600
  %2602 = vrot.lane.b32.xlu0 %v2520, 120
  %v2603 = vpop.permute.xlu0 %2602
  %v2604 = vsel %vm539, %v2593, %v2595
  %v2605 = vsel %vm539, %v2597, %v2599
  %v2606 = vsel %vm539, %v2601, %v2603
  %v2613 = vadd.f32 %v2501, %v2604
  %v2614 = vadd.f32 %v2502, %v2595
  %v2615 = vadd.f32 %v2503, %v2605
  %v2616 = vadd.f32 %v2504, %v2599
  %v2617 = vadd.f32 %v2505, %v2606
  %v2618 = vadd.f32 %v2506, %v2603
  %2625 = vrot.lane.b32.xlu0 %v2580, 112
  %v2626 = vpop.permute.xlu0 %2625
  %2627 = vrot.lane.b32.xlu0 %v2581, 112
  %v2628 = vpop.permute.xlu0 %2627
  %2629 = vrot.lane.b32.xlu0 %v2582, 112
  %v2630 = vpop.permute.xlu0 %2629
  %2631 = vrot.lane.b32.xlu0 %v2583, 112
  %v2632 = vpop.permute.xlu0 %2631
  %2633 = vrot.lane.b32.xlu0 %v2584, 112
  %v2634 = vpop.permute.xlu0 %2633
  %2635 = vrot.lane.b32.xlu0 %v2585, 112
  %v2636 = vpop.permute.xlu0 %2635
  %v2637 = vsel %vm207, %v2626, %v2628
  %v2638 = vsel %vm207, %v2630, %v2632
  %v2639 = vsel %vm207, %v2634, %v2636
  %v2646 = vadd.f32 %v2562, %v2637
  %v2647 = vadd.f32 %v2563, %v2628
  %v2648 = vadd.f32 %v2564, %v2638
  %v2649 = vadd.f32 %v2565, %v2632
  %v2650 = vadd.f32 %v2566, %v2639
  %v2651 = vadd.f32 %v2567, %v2636
  %2658 = vrot.lane.b32.xlu0 %v2529, 112
  %v2659 = vpop.permute.xlu0 %2658
  %2660 = vrot.lane.b32.xlu0 %v2530, 112
  %v2661 = vpop.permute.xlu0 %2660
  %2662 = vrot.lane.b32.xlu0 %v2531, 112
  %v2663 = vpop.permute.xlu0 %2662
  %2664 = vrot.lane.b32.xlu0 %v2532, 112
  %v2665 = vpop.permute.xlu0 %2664
  %2666 = vrot.lane.b32.xlu0 %v2533, 112
  %v2667 = vpop.permute.xlu0 %2666
  %2668 = vrot.lane.b32.xlu0 %v2534, 112
  %v2669 = vpop.permute.xlu0 %2668
  %v2670 = vsel %vm207, %v2659, %v2661
  %v2671 = vsel %vm207, %v2663, %v2665
  %v2672 = vsel %vm207, %v2667, %v2669
  %v2679 = vadd.f32 %v2613, %v2670
  %v2680 = vadd.f32 %v2614, %v2661
  %v2681 = vadd.f32 %v2615, %v2671
  %v2682 = vadd.f32 %v2616, %v2665
  %v2683 = vadd.f32 %v2617, %v2672
  %v2684 = vadd.f32 %v2618, %v2669
  %2691 = vrot.lane.b32.xlu0 %v2679, 96
  %v2692 = vpop.permute.xlu0 %2691
  %2693 = vrot.lane.b32.xlu0 %v2680, 96
  %v2694 = vpop.permute.xlu0 %2693
  %2695 = vrot.lane.b32.xlu0 %v2681, 96
  %v2696 = vpop.permute.xlu0 %2695
  %2697 = vrot.lane.b32.xlu0 %v2682, 96
  %v2698 = vpop.permute.xlu0 %2697
  %2699 = vrot.lane.b32.xlu0 %v2683, 96
  %v2700 = vpop.permute.xlu0 %2699
  %2701 = vrot.lane.b32.xlu0 %v2684, 96
  %v2702 = vpop.permute.xlu0 %2701
  %v2703 = vsel %vm618, %v2692, %v2694
  %v2704 = vsel %vm618, %v2696, %v2698
  %v2705 = vsel %vm618, %v2700, %v2702
  %v2712 = vadd.f32 %v2646, %v2692
  %v2713 = vadd.f32 %v2647, %v2703
  %v2714 = vadd.f32 %v2648, %v2696
  %v2715 = vadd.f32 %v2649, %v2704
  %v2716 = vadd.f32 %v2650, %v2700
  %v2717 = vadd.f32 %v2651, %v2705
  %v2718 = vlaneseq
  %v2719 = vshrl.u32 %v2718, 7
  %v2720 = vsub.s32 0, %v2719
  %v2721 = vrot.slane %v1419, %v2720
  %2723 = vrot.lane.b32.xlu0 %v2721, 104
  %v2724 = vpop.permute.xlu0 %2723
  %v2726 = vmul.f32 %v104, %v2724
  %v2727 = vmul.f32 %v105, %v2724
  %v2728 = vmul.f32 %v107, %v2724
  %v2729 = vmul.f32 %v108, %v2724
  %v2730 = vmul.f32 %v110, %v2724
  %v2731 = vmul.f32 %v111, %v2724
  %v2732 = vlaneseq
  %v2733 = vshrl.u32 %v2732, 7
  %v2734 = vsub.s32 1, %v2733
  %v2735 = vrot.slane %v1419, %v2734
  %2737 = vrot.lane.b32.xlu0 %v2735, 112
  %v2738 = vpop.permute.xlu0 %2737
  %v2740 = vmul.f32 %v104, %v2738
  %v2741 = vmul.f32 %v105, %v2738
  %v2742 = vmul.f32 %v107, %v2738
  %v2743 = vmul.f32 %v108, %v2738
  %v2744 = vmul.f32 %v110, %v2738
  %v2745 = vmul.f32 %v111, %v2738
  %v2746 = vlaneseq
  %v2747 = vshrl.u32 %v2746, 7
  %v2748 = vsub.s32 2, %v2747
  %v2749 = vrot.slane %v1419, %v2748
  %2751 = vrot.lane.b32.xlu0 %v2749, 120
  %v2752 = vpop.permute.xlu0 %2751
  %v2754 = vmul.f32 %v104, %v2752
  %v2755 = vmul.f32 %v105, %v2752
  %v2756 = vmul.f32 %v107, %v2752
  %v2757 = vmul.f32 %v108, %v2752
  %v2758 = vmul.f32 %v110, %v2752
  %v2759 = vmul.f32 %v111, %v2752
  %v2760 = vlaneseq
  %v2761 = vshrl.u32 %v2760, 7
  %v2762 = vsub.s32 3, %v2761
  %v2763 = vrot.slane %v1419, %v2762
  %v2764 = vmul.f32 %v105, %v2763
  %v2765 = vmul.f32 %v108, %v2763
  %v2766 = vmul.f32 %v111, %v2763
  %v2767 = vlaneseq
  %v2768 = vshrl.u32 %v2767, 7
  %v2769 = vsub.s32 4, %v2768
  %v2770 = vrot.slane %v1419, %v2769
  %2772 = vrot.lane.b32.xlu0 %v2770, 8
  %v2773 = vpop.permute.xlu0 %2772
  %v2775 = vmul.f32 %v105, %v2773
  %v2776 = vmul.f32 %v106, %v2773
  %v2777 = vmul.f32 %v108, %v2773
  %v2778 = vmul.f32 %v109, %v2773
  %v2779 = vmul.f32 %v111, %v2773
  %v2780 = vmul.f32 %v112, %v2773
  %v2781 = vlaneseq
  %v2782 = vshrl.u32 %v2781, 7
  %v2783 = vsub.s32 5, %v2782
  %v2784 = vrot.slane %v1419, %v2783
  %2786 = vrot.lane.b32.xlu0 %v2784, 16
  %v2787 = vpop.permute.xlu0 %2786
  %v2789 = vmul.f32 %v105, %v2787
  %v2790 = vmul.f32 %v106, %v2787
  %v2791 = vmul.f32 %v108, %v2787
  %v2792 = vmul.f32 %v109, %v2787
  %v2793 = vmul.f32 %v111, %v2787
  %v2794 = vmul.f32 %v112, %v2787
  %v2795 = vlaneseq
  %v2796 = vshrl.u32 %v2795, 7
  %v2797 = vsub.s32 6, %v2796
  %v2798 = vrot.slane %v1419, %v2797
  %2800 = vrot.lane.b32.xlu0 %v2798, 24
  %v2801 = vpop.permute.xlu0 %2800
  %v2803 = vmul.f32 %v105, %v2801
  %v2804 = vmul.f32 %v106, %v2801
  %v2805 = vmul.f32 %v108, %v2801
  %v2806 = vmul.f32 %v109, %v2801
  %v2807 = vmul.f32 %v111, %v2801
  %v2808 = vmul.f32 %v112, %v2801
  %2815 = vrot.lane.b32.xlu0 %v2740, 120
  %v2816 = vpop.permute.xlu0 %2815
  %2817 = vrot.lane.b32.xlu0 %v2741, 120
  %v2818 = vpop.permute.xlu0 %2817
  %2819 = vrot.lane.b32.xlu0 %v2742, 120
  %v2820 = vpop.permute.xlu0 %2819
  %2821 = vrot.lane.b32.xlu0 %v2743, 120
  %v2822 = vpop.permute.xlu0 %2821
  %2823 = vrot.lane.b32.xlu0 %v2744, 120
  %v2824 = vpop.permute.xlu0 %2823
  %2825 = vrot.lane.b32.xlu0 %v2745, 120
  %v2826 = vpop.permute.xlu0 %2825
  %v2827 = vsel %vm539, %v2816, %v2818
  %v2828 = vsel %vm539, %v2820, %v2822
  %v2829 = vsel %vm539, %v2824, %v2826
  %v2836 = vadd.f32 %v2726, %v2827
  %v2837 = vadd.f32 %v2727, %v2818
  %v2838 = vadd.f32 %v2728, %v2828
  %v2839 = vadd.f32 %v2729, %v2822
  %v2840 = vadd.f32 %v2730, %v2829
  %v2841 = vadd.f32 %v2731, %v2826
  %2845 = vrot.lane.b32.xlu0 %v2764, 120
  %v2846 = vpop.permute.xlu0 %2845
  %2847 = vrot.lane.b32.xlu0 %v2765, 120
  %v2848 = vpop.permute.xlu0 %2847
  %2849 = vrot.lane.b32.xlu0 %v2766, 120
  %v2850 = vpop.permute.xlu0 %2849
  %v2854 = vadd.f32 %v2754, %v2846
  %v2855 = vadd.f32 %v2755, %v2846
  %v2856 = vadd.f32 %v2756, %v2848
  %v2857 = vadd.f32 %v2757, %v2848
  %v2858 = vadd.f32 %v2758, %v2850
  %v2859 = vadd.f32 %v2759, %v2850
  %2866 = vrot.lane.b32.xlu0 %v2789, 120
  %v2867 = vpop.permute.xlu0 %2866
  %2868 = vrot.lane.b32.xlu0 %v2790, 120
  %v2869 = vpop.permute.xlu0 %2868
  %2870 = vrot.lane.b32.xlu0 %v2791, 120
  %v2871 = vpop.permute.xlu0 %2870
  %2872 = vrot.lane.b32.xlu0 %v2792, 120
  %v2873 = vpop.permute.xlu0 %2872
  %2874 = vrot.lane.b32.xlu0 %v2793, 120
  %v2875 = vpop.permute.xlu0 %2874
  %2876 = vrot.lane.b32.xlu0 %v2794, 120
  %v2877 = vpop.permute.xlu0 %2876
  %v2878 = vsel %vm539, %v2867, %v2869
  %v2879 = vsel %vm539, %v2871, %v2873
  %v2880 = vsel %vm539, %v2875, %v2877
  %v2887 = vadd.f32 %v2775, %v2878
  %v2888 = vadd.f32 %v2776, %v2869
  %v2889 = vadd.f32 %v2777, %v2879
  %v2890 = vadd.f32 %v2778, %v2873
  %v2891 = vadd.f32 %v2779, %v2880
  %v2892 = vadd.f32 %v2780, %v2877
  %2899 = vrot.lane.b32.xlu0 %v2854, 112
  %v2900 = vpop.permute.xlu0 %2899
  %2901 = vrot.lane.b32.xlu0 %v2855, 112
  %v2902 = vpop.permute.xlu0 %2901
  %2903 = vrot.lane.b32.xlu0 %v2856, 112
  %v2904 = vpop.permute.xlu0 %2903
  %2905 = vrot.lane.b32.xlu0 %v2857, 112
  %v2906 = vpop.permute.xlu0 %2905
  %2907 = vrot.lane.b32.xlu0 %v2858, 112
  %v2908 = vpop.permute.xlu0 %2907
  %2909 = vrot.lane.b32.xlu0 %v2859, 112
  %v2910 = vpop.permute.xlu0 %2909
  %v2911 = vsel %vm207, %v2900, %v2902
  %v2912 = vsel %vm207, %v2904, %v2906
  %v2913 = vsel %vm207, %v2908, %v2910
  %v2920 = vadd.f32 %v2836, %v2911
  %v2921 = vadd.f32 %v2837, %v2902
  %v2922 = vadd.f32 %v2838, %v2912
  %v2923 = vadd.f32 %v2839, %v2906
  %v2924 = vadd.f32 %v2840, %v2913
  %v2925 = vadd.f32 %v2841, %v2910
  %2932 = vrot.lane.b32.xlu0 %v2803, 112
  %v2933 = vpop.permute.xlu0 %2932
  %2934 = vrot.lane.b32.xlu0 %v2804, 112
  %v2935 = vpop.permute.xlu0 %2934
  %2936 = vrot.lane.b32.xlu0 %v2805, 112
  %v2937 = vpop.permute.xlu0 %2936
  %2938 = vrot.lane.b32.xlu0 %v2806, 112
  %v2939 = vpop.permute.xlu0 %2938
  %2940 = vrot.lane.b32.xlu0 %v2807, 112
  %v2941 = vpop.permute.xlu0 %2940
  %2942 = vrot.lane.b32.xlu0 %v2808, 112
  %v2943 = vpop.permute.xlu0 %2942
  %v2944 = vsel %vm207, %v2933, %v2935
  %v2945 = vsel %vm207, %v2937, %v2939
  %v2946 = vsel %vm207, %v2941, %v2943
  %v2953 = vadd.f32 %v2887, %v2944
  %v2954 = vadd.f32 %v2888, %v2935
  %v2955 = vadd.f32 %v2889, %v2945
  %v2956 = vadd.f32 %v2890, %v2939
  %v2957 = vadd.f32 %v2891, %v2946
  %v2958 = vadd.f32 %v2892, %v2943
  %2965 = vrot.lane.b32.xlu0 %v2953, 96
  %v2966 = vpop.permute.xlu0 %2965
  %2967 = vrot.lane.b32.xlu0 %v2954, 96
  %v2968 = vpop.permute.xlu0 %2967
  %2969 = vrot.lane.b32.xlu0 %v2955, 96
  %v2970 = vpop.permute.xlu0 %2969
  %2971 = vrot.lane.b32.xlu0 %v2956, 96
  %v2972 = vpop.permute.xlu0 %2971
  %2973 = vrot.lane.b32.xlu0 %v2957, 96
  %v2974 = vpop.permute.xlu0 %2973
  %2975 = vrot.lane.b32.xlu0 %v2958, 96
  %v2976 = vpop.permute.xlu0 %2975
  %v2977 = vsel %vm618, %v2966, %v2968
  %v2978 = vsel %vm618, %v2970, %v2972
  %v2979 = vsel %vm618, %v2974, %v2976
  %v2986 = vadd.f32 %v2920, %v2966
  %v2987 = vadd.f32 %v2921, %v2977
  %v2988 = vadd.f32 %v2922, %v2970
  %v2989 = vadd.f32 %v2923, %v2978
  %v2990 = vadd.f32 %v2924, %v2974
  %v2991 = vadd.f32 %v2925, %v2979
  %v2992 = vlaneseq
  %v2993 = vshrl.u32 %v2992, 7
  %v2994 = vsub.s32 0, %v2993
  %v2995 = vrot.slane %v1420, %v2994
  %2997 = vrot.lane.b32.xlu0 %v2995, 104
  %v2998 = vpop.permute.xlu0 %2997
  %v3000 = vmul.f32 %v104, %v2998
  %v3001 = vmul.f32 %v105, %v2998
  %v3002 = vmul.f32 %v107, %v2998
  %v3003 = vmul.f32 %v108, %v2998
  %v3004 = vmul.f32 %v110, %v2998
  %v3005 = vmul.f32 %v111, %v2998
  %v3006 = vlaneseq
  %v3007 = vshrl.u32 %v3006, 7
  %v3008 = vsub.s32 1, %v3007
  %v3009 = vrot.slane %v1420, %v3008
  %3011 = vrot.lane.b32.xlu0 %v3009, 112
  %v3012 = vpop.permute.xlu0 %3011
  %v3014 = vmul.f32 %v104, %v3012
  %v3015 = vmul.f32 %v105, %v3012
  %v3016 = vmul.f32 %v107, %v3012
  %v3017 = vmul.f32 %v108, %v3012
  %v3018 = vmul.f32 %v110, %v3012
  %v3019 = vmul.f32 %v111, %v3012
  %v3020 = vlaneseq
  %v3021 = vshrl.u32 %v3020, 7
  %v3022 = vsub.s32 2, %v3021
  %v3023 = vrot.slane %v1420, %v3022
  %3025 = vrot.lane.b32.xlu0 %v3023, 120
  %v3026 = vpop.permute.xlu0 %3025
  %v3028 = vmul.f32 %v104, %v3026
  %v3029 = vmul.f32 %v105, %v3026
  %v3030 = vmul.f32 %v107, %v3026
  %v3031 = vmul.f32 %v108, %v3026
  %v3032 = vmul.f32 %v110, %v3026
  %v3033 = vmul.f32 %v111, %v3026
  %v3034 = vlaneseq
  %v3035 = vshrl.u32 %v3034, 7
  %v3036 = vsub.s32 3, %v3035
  %v3037 = vrot.slane %v1420, %v3036
  %v3038 = vmul.f32 %v105, %v3037
  %v3039 = vmul.f32 %v108, %v3037
  %v3040 = vmul.f32 %v111, %v3037
  %v3041 = vlaneseq
  %v3042 = vshrl.u32 %v3041, 7
  %v3043 = vsub.s32 4, %v3042
  %v3044 = vrot.slane %v1420, %v3043
  %3046 = vrot.lane.b32.xlu0 %v3044, 8
  %v3047 = vpop.permute.xlu0 %3046
  %v3049 = vmul.f32 %v105, %v3047
  %v3050 = vmul.f32 %v106, %v3047
  %v3051 = vmul.f32 %v108, %v3047
  %v3052 = vmul.f32 %v109, %v3047
  %v3053 = vmul.f32 %v111, %v3047
  %v3054 = vmul.f32 %v112, %v3047
  %v3055 = vlaneseq
  %v3056 = vshrl.u32 %v3055, 7
  %v3057 = vsub.s32 5, %v3056
  %v3058 = vrot.slane %v1420, %v3057
  %3060 = vrot.lane.b32.xlu0 %v3058, 16
  %v3061 = vpop.permute.xlu0 %3060
  %v3063 = vmul.f32 %v105, %v3061
  %v3064 = vmul.f32 %v106, %v3061
  %v3065 = vmul.f32 %v108, %v3061
  %v3066 = vmul.f32 %v109, %v3061
  %v3067 = vmul.f32 %v111, %v3061
  %v3068 = vmul.f32 %v112, %v3061
  %v3069 = vlaneseq
  %v3070 = vshrl.u32 %v3069, 7
  %v3071 = vsub.s32 6, %v3070
  %v3072 = vrot.slane %v1420, %v3071
  %3074 = vrot.lane.b32.xlu0 %v3072, 24
  %v3075 = vpop.permute.xlu0 %3074
  %v3077 = vmul.f32 %v105, %v3075
  %v3078 = vmul.f32 %v106, %v3075
  %v3079 = vmul.f32 %v108, %v3075
  %v3080 = vmul.f32 %v109, %v3075
  %v3081 = vmul.f32 %v111, %v3075
  %v3082 = vmul.f32 %v112, %v3075
  %3089 = vrot.lane.b32.xlu0 %v3014, 120
  %v3090 = vpop.permute.xlu0 %3089
  %3091 = vrot.lane.b32.xlu0 %v3015, 120
  %v3092 = vpop.permute.xlu0 %3091
  %3093 = vrot.lane.b32.xlu0 %v3016, 120
  %v3094 = vpop.permute.xlu0 %3093
  %3095 = vrot.lane.b32.xlu0 %v3017, 120
  %v3096 = vpop.permute.xlu0 %3095
  %3097 = vrot.lane.b32.xlu0 %v3018, 120
  %v3098 = vpop.permute.xlu0 %3097
  %3099 = vrot.lane.b32.xlu0 %v3019, 120
  %v3100 = vpop.permute.xlu0 %3099
  %v3101 = vsel %vm539, %v3090, %v3092
  %v3102 = vsel %vm539, %v3094, %v3096
  %v3103 = vsel %vm539, %v3098, %v3100
  %v3110 = vadd.f32 %v3000, %v3101
  %v3111 = vadd.f32 %v3001, %v3092
  %v3112 = vadd.f32 %v3002, %v3102
  %v3113 = vadd.f32 %v3003, %v3096
  %v3114 = vadd.f32 %v3004, %v3103
  %v3115 = vadd.f32 %v3005, %v3100
  %3119 = vrot.lane.b32.xlu0 %v3038, 120
  %v3120 = vpop.permute.xlu0 %3119
  %3121 = vrot.lane.b32.xlu0 %v3039, 120
  %v3122 = vpop.permute.xlu0 %3121
  %3123 = vrot.lane.b32.xlu0 %v3040, 120
  %v3124 = vpop.permute.xlu0 %3123
  %v3128 = vadd.f32 %v3028, %v3120
  %v3129 = vadd.f32 %v3029, %v3120
  %v3130 = vadd.f32 %v3030, %v3122
  %v3131 = vadd.f32 %v3031, %v3122
  %v3132 = vadd.f32 %v3032, %v3124
  %v3133 = vadd.f32 %v3033, %v3124
  %3140 = vrot.lane.b32.xlu0 %v3063, 120
  %v3141 = vpop.permute.xlu0 %3140
  %3142 = vrot.lane.b32.xlu0 %v3064, 120
  %v3143 = vpop.permute.xlu0 %3142
  %3144 = vrot.lane.b32.xlu0 %v3065, 120
  %v3145 = vpop.permute.xlu0 %3144
  %3146 = vrot.lane.b32.xlu0 %v3066, 120
  %v3147 = vpop.permute.xlu0 %3146
  %3148 = vrot.lane.b32.xlu0 %v3067, 120
  %v3149 = vpop.permute.xlu0 %3148
  %3150 = vrot.lane.b32.xlu0 %v3068, 120
  %v3151 = vpop.permute.xlu0 %3150
  %v3152 = vsel %vm539, %v3141, %v3143
  %v3153 = vsel %vm539, %v3145, %v3147
  %v3154 = vsel %vm539, %v3149, %v3151
  %v3161 = vadd.f32 %v3049, %v3152
  %v3162 = vadd.f32 %v3050, %v3143
  %v3163 = vadd.f32 %v3051, %v3153
  %v3164 = vadd.f32 %v3052, %v3147
  %v3165 = vadd.f32 %v3053, %v3154
  %v3166 = vadd.f32 %v3054, %v3151
  %3173 = vrot.lane.b32.xlu0 %v3128, 112
  %v3174 = vpop.permute.xlu0 %3173
  %3175 = vrot.lane.b32.xlu0 %v3129, 112
  %v3176 = vpop.permute.xlu0 %3175
  %3177 = vrot.lane.b32.xlu0 %v3130, 112
  %v3178 = vpop.permute.xlu0 %3177
  %3179 = vrot.lane.b32.xlu0 %v3131, 112
  %v3180 = vpop.permute.xlu0 %3179
  %3181 = vrot.lane.b32.xlu0 %v3132, 112
  %v3182 = vpop.permute.xlu0 %3181
  %3183 = vrot.lane.b32.xlu0 %v3133, 112
  %v3184 = vpop.permute.xlu0 %3183
  %v3185 = vsel %vm207, %v3174, %v3176
  %v3186 = vsel %vm207, %v3178, %v3180
  %v3187 = vsel %vm207, %v3182, %v3184
  %v3194 = vadd.f32 %v3110, %v3185
  %v3195 = vadd.f32 %v3111, %v3176
  %v3196 = vadd.f32 %v3112, %v3186
  %v3197 = vadd.f32 %v3113, %v3180
  %v3198 = vadd.f32 %v3114, %v3187
  %v3199 = vadd.f32 %v3115, %v3184
  %3206 = vrot.lane.b32.xlu0 %v3077, 112
  %v3207 = vpop.permute.xlu0 %3206
  %3208 = vrot.lane.b32.xlu0 %v3078, 112
  %v3209 = vpop.permute.xlu0 %3208
  %3210 = vrot.lane.b32.xlu0 %v3079, 112
  %v3211 = vpop.permute.xlu0 %3210
  %3212 = vrot.lane.b32.xlu0 %v3080, 112
  %v3213 = vpop.permute.xlu0 %3212
  %3214 = vrot.lane.b32.xlu0 %v3081, 112
  %v3215 = vpop.permute.xlu0 %3214
  %3216 = vrot.lane.b32.xlu0 %v3082, 112
  %v3217 = vpop.permute.xlu0 %3216
  %v3218 = vsel %vm207, %v3207, %v3209
  %v3219 = vsel %vm207, %v3211, %v3213
  %v3220 = vsel %vm207, %v3215, %v3217
  %v3227 = vadd.f32 %v3161, %v3218
  %v3228 = vadd.f32 %v3162, %v3209
  %v3229 = vadd.f32 %v3163, %v3219
  %v3230 = vadd.f32 %v3164, %v3213
  %v3231 = vadd.f32 %v3165, %v3220
  %v3232 = vadd.f32 %v3166, %v3217
  %3239 = vrot.lane.b32.xlu0 %v3227, 96
  %v3240 = vpop.permute.xlu0 %3239
  %3241 = vrot.lane.b32.xlu0 %v3228, 96
  %v3242 = vpop.permute.xlu0 %3241
  %3243 = vrot.lane.b32.xlu0 %v3229, 96
  %v3244 = vpop.permute.xlu0 %3243
  %3245 = vrot.lane.b32.xlu0 %v3230, 96
  %v3246 = vpop.permute.xlu0 %3245
  %3247 = vrot.lane.b32.xlu0 %v3231, 96
  %v3248 = vpop.permute.xlu0 %3247
  %3249 = vrot.lane.b32.xlu0 %v3232, 96
  %v3250 = vpop.permute.xlu0 %3249
  %v3251 = vsel %vm618, %v3240, %v3242
  %v3252 = vsel %vm618, %v3244, %v3246
  %v3253 = vsel %vm618, %v3248, %v3250
  %v3260 = vadd.f32 %v3194, %v3240
  %v3261 = vadd.f32 %v3195, %v3251
  %v3262 = vadd.f32 %v3196, %v3244
  %v3263 = vadd.f32 %v3197, %v3252
  %v3264 = vadd.f32 %v3198, %v3248
  %v3265 = vadd.f32 %v3199, %v3253
  %v3272 = vrot.slane %v1964, 1
  %v3273 = vrot.slane %v1966, 1
  %v3274 = vsel %vm377, %v3272, %v3273
  %v3275 = vrot.slane %v1965, 1
  %v3276 = vrot.slane %v1967, 1
  %v3277 = vsel %vm377, %v3275, %v3276
  %v3278 = vrot.slane %v1968, 1
  %v3279 = vsel %vm377, %v3273, %v3278
  %v3280 = vrot.slane %v1969, 1
  %v3281 = vsel %vm377, %v3276, %v3280
  %v3288 = vadd.f32 %v1690, %v3274
  %v3289 = vadd.f32 %v1691, %v3277
  %v3290 = vadd.f32 %v1692, %v3279
  %v3291 = vadd.f32 %v1693, %v3281
  %v3292 = vadd.f32 %v1694, %v3278
  %v3293 = vadd.f32 %v1695, %v3280
  %v3298 = vrot.slane %v2440, 1
  %v3299 = vrot.slane %v2441, 1
  %v3300 = vrot.slane %v2442, 1
  %v3301 = vsel %vm377, %v3298, %v3300
  %v3302 = vrot.slane %v2443, 1
  %v3303 = vsel %vm377, %v3299, %v3302
  %v3310 = vadd.f32 %v2238, %v3298
  %v3311 = vadd.f32 %v2239, %v3299
  %v3312 = vadd.f32 %v2240, %v3301
  %v3313 = vadd.f32 %v2241, %v3303
  %v3314 = vadd.f32 %v2242, %v3300
  %v3315 = vadd.f32 %v2243, %v3302
  %v3322 = vrot.slane %v2986, 1
  %v3323 = vrot.slane %v2988, 1
  %v3324 = vsel %vm377, %v3322, %v3323
  %v3325 = vrot.slane %v2987, 1
  %v3326 = vrot.slane %v2989, 1
  %v3327 = vsel %vm377, %v3325, %v3326
  %v3328 = vrot.slane %v2990, 1
  %v3329 = vsel %vm377, %v3323, %v3328
  %v3330 = vrot.slane %v2991, 1
  %v3331 = vsel %vm377, %v3326, %v3330
  %v3338 = vadd.f32 %v2712, %v3324
  %v3339 = vadd.f32 %v2713, %v3327
  %v3340 = vadd.f32 %v2714, %v3329
  %v3341 = vadd.f32 %v2715, %v3331
  %v3342 = vadd.f32 %v2716, %v3328
  %v3343 = vadd.f32 %v2717, %v3330
  %v3350 = vrot.slane %v3310, 2
  %v3351 = vrot.slane %v3312, 2
  %v3352 = vsel %vm402, %v3350, %v3351
  %v3353 = vrot.slane %v3311, 2
  %v3354 = vrot.slane %v3313, 2
  %v3355 = vsel %vm402, %v3353, %v3354
  %v3356 = vrot.slane %v3314, 2
  %v3357 = vsel %vm402, %v3351, %v3356
  %v3358 = vrot.slane %v3315, 2
  %v3359 = vsel %vm402, %v3354, %v3358
  %v3366 = vadd.f32 %v3288, %v3352
  %v3367 = vadd.f32 %v3289, %v3355
  %v3368 = vadd.f32 %v3290, %v3357
  %v3369 = vadd.f32 %v3291, %v3359
  %v3370 = vadd.f32 %v3292, %v3356
  %v3371 = vadd.f32 %v3293, %v3358
  %v3378 = vrot.slane %v3260, 2
  %v3379 = vrot.slane %v3262, 2
  %v3380 = vsel %vm402, %v3378, %v3379
  %v3381 = vrot.slane %v3261, 2
  %v3382 = vrot.slane %v3263, 2
  %v3383 = vsel %vm402, %v3381, %v3382
  %v3384 = vrot.slane %v3264, 2
  %v3385 = vsel %vm402, %v3379, %v3384
  %v3386 = vrot.slane %v3265, 2
  %v3387 = vsel %vm402, %v3382, %v3386
  %v3394 = vadd.f32 %v3338, %v3380
  %v3395 = vadd.f32 %v3339, %v3383
  %v3396 = vadd.f32 %v3340, %v3385
  %v3397 = vadd.f32 %v3341, %v3387
  %v3398 = vadd.f32 %v3342, %v3384
  %v3399 = vadd.f32 %v3343, %v3386
  %v3406 = vrot.slane %v3394, 4
  %v3407 = vrot.slane %v3395, 4
  %v3408 = vrot.slane %v3396, 4
  %v3409 = vsel %vm1364, %v3406, %v3408
  %v3410 = vrot.slane %v3397, 4
  %v3411 = vsel %vm1364, %v3407, %v3410
  %v3412 = vrot.slane %v3398, 4
  %v3413 = vsel %vm1364, %v3408, %v3412
  %v3414 = vrot.slane %v3399, 4
  %v3415 = vsel %vm1364, %v3410, %v3414
  %v3422 = vadd.f32 %v3366, %v3406
  %v3423 = vadd.f32 %v3367, %v3407
  %v3424 = vadd.f32 %v3368, %v3409
  %v3425 = vadd.f32 %v3369, %v3411
  %v3426 = vadd.f32 %v3370, %v3413
  %v3427 = vadd.f32 %v3371, %v3415
  %v3428 = vlaneseq
  %v3429 = vshrl.u32 %v3428, 7
  %v3430 = vsub.s32 0, %v3429
  %v3431 = vrot.slane %v1421, %v3430
  %3433 = vrot.lane.b32.xlu0 %v3431, 104
  %v3434 = vpop.permute.xlu0 %3433
  %v3436 = vadd.f32 %v3422, %v3434
  %v3437 = vadd.f32 %v3423, %v3434
  %v3438 = vadd.f32 %v3424, %v3434
  %v3439 = vadd.f32 %v3425, %v3434
  %v3440 = vadd.f32 %v3426, %v3434
  %v3441 = vadd.f32 %v3427, %v3434
  %v3442 = vmax.f32 %v3436, 0.0
  %v3443 = vmax.f32 %v3437, 0.0
  %v3444 = vmax.f32 %v3438, 0.0
  %v3445 = vmax.f32 %v3439, 0.0
  %v3446 = vmax.f32 %v3440, 0.0
  %v3447 = vmax.f32 %v3441, 0.0
  %v3448 = vmin.f32 %v3442, 6.0
  %v3449 = vmin.f32 %v3443, 6.0
  %v3450 = vmin.f32 %v3444, 6.0
  %v3451 = vmin.f32 %v3445, 6.0
  %v3452 = vmin.f32 %v3446, 6.0
  %v3453 = vmin.f32 %v3447, 6.0
  %vm3460 = vcmask 1040384
  %v3461 = vrot.slane %v445, 7
  %v3462 = vrot.slane %v447, 7
  %v3463 = vsel %vm3460, %v3461, %v3462
  %v3464 = vrot.slane %v446, 7
  %v3465 = vrot.slane %v448, 7
  %v3466 = vsel %vm3460, %v3464, %v3465
  %v3467 = vrot.slane %v449, 7
  %v3468 = vsel %vm3460, %v3462, %v3467
  %v3469 = vrot.slane %v450, 7
  %v3470 = vsel %vm3460, %v3465, %v3469
  %3471 = vrot.lane.b32.xlu0 %v3463, 8
  %v3472 = vpop.permute.xlu0 %3471
  %3473 = vrot.lane.b32.xlu0 %v3466, 8
  %v3474 = vpop.permute.xlu0 %3473
  %3475 = vrot.lane.b32.xlu0 %v3468, 8
  %v3476 = vpop.permute.xlu0 %3475
  %3477 = vrot.lane.b32.xlu0 %v3470, 8
  %v3478 = vpop.permute.xlu0 %3477
  %vm3479 = vcmask 64512
  %v3480 = vsel %vm3479, %v3472, %v3474
  %v3481 = vsel %vm3479, %v3476, %v3478
  %vm3490 = vcmask 1041408
  %v3491 = vrot.slane %v1407, 6
  %v3492 = vrot.slane %v1409, 6
  %v3493 = vsel %vm3490, %v3491, %v3492
  %v3494 = vrot.slane %v1408, 6
  %v3495 = vrot.slane %v1410, 6
  %v3496 = vsel %vm3490, %v3494, %v3495
  %v3497 = vrot.slane %v1411, 6
  %v3498 = vsel %vm3490, %v3492, %v3497
  %v3499 = vrot.slane %v1412, 6
  %v3500 = vsel %vm3490, %v3495, %v3499
  %3501 = vrot.lane.b32.xlu0 %v3493, 16
  %v3502 = vpop.permute.xlu0 %3501
  %3503 = vrot.lane.b32.xlu0 %v3496, 16
  %v3504 = vpop.permute.xlu0 %3503
  %3505 = vrot.lane.b32.xlu0 %v3498, 16
  %v3506 = vpop.permute.xlu0 %3505
  %3507 = vrot.lane.b32.xlu0 %v3500, 16
  %v3508 = vpop.permute.xlu0 %3507
  %vm3509 = vcmask 130048
  %v3510 = vsel %vm3509, %v3502, %v3504
  %v3511 = vsel %vm3509, %v3506, %v3508
  %vm3520 = vcmask 1042432
  %v3521 = vrot.slane %v3448, 5
  %v3522 = vrot.slane %v3450, 5
  %v3523 = vsel %vm3520, %v3521, %v3522
  %v3524 = vrot.slane %v3449, 5
  %v3525 = vrot.slane %v3451, 5
  %v3526 = vsel %vm3520, %v3524, %v3525
  %v3527 = vrot.slane %v3452, 5
  %v3528 = vsel %vm3520, %v3522, %v3527
  %v3529 = vrot.slane %v3453, 5
  %v3530 = vsel %vm3520, %v3525, %v3529
  %3531 = vrot.lane.b32.xlu0 %v3523, 24
  %v3532 = vpop.permute.xlu0 %3531
  %3533 = vrot.lane.b32.xlu0 %v3526, 24
  %v3534 = vpop.permute.xlu0 %3533
  %3535 = vrot.lane.b32.xlu0 %v3528, 24
  %v3536 = vpop.permute.xlu0 %3535
  %3537 = vrot.lane.b32.xlu0 %v3530, 24
  %v3538 = vpop.permute.xlu0 %3537
  %vm3539 = vcmask 195584
  %v3540 = vsel %vm3539, %v3532, %v3534
  %v3541 = vsel %vm3539, %v3536, %v3538
  %v3545 = vlaneseq
  %v3546 = vshrl.u32 %v3545, 7
  %v3547 = vsub.s32 0, %v3546
  %v3548 = vrot.slane %v84, %v3547
  %3550 = vmatprep.subr.mxu0 0.0
  %3551 = vmatpush1.msra.mxu0 %v20
  %3552 = vmatprep.subr.mxu0 0.0
  %3553 = vmatpush1.msra.mxu0 %v21
  %3554 = vmatprep.subr.mxu0 0.0
  %3555 = vmatpush1.msra.mxu0 %v22
  %3556 = vmatprep.subr.mxu0 0.0
  %3557 = vmatpush1.msra.mxu0 %v23
  %3558 = vmatprep.subr.mxu0 0.0
  %3559 = vmatpush1.msra.mxu0 %v24
  %3560 = vmatprep.subr.mxu0 0.0
  %3561 = vmatpush1.msra.mxu0 %v25
  %3562 = vmatprep.subr.mxu0 0.0
  %3563 = vmatpush1.msra.mxu0 %v26
  %3564 = vmatprep.subr.mxu0 0.0
  %3565 = vmatpush1.msra.mxu0 %v27
  %3566 = vmatprep.subr.mxu0 0.0
  %3567 = vmatpush1.msra.mxu0 %v28
  %3568 = vmatprep.subr.mxu0 0.0
  %3569 = vmatpush1.msra.mxu0 %v29
  %3570 = vmatprep.subr.mxu0 0.0
  %3571 = vmatpush1.msra.mxu0 %v30
  %3572 = vmatprep.subr.mxu0 0.0
  %3573 = vmatpush1.msra.mxu0 %v31
  %3574 = vmatprep.subr.mxu0 0.0
  %3575 = vmatpush1.msra.mxu0 %v32
  %3576 = vmatprep.subr.mxu0 0.0
  %3577 = vmatpush1.msra.mxu0 %v33
  %3578 = vmatprep.subr.mxu0 0.0
  %3579 = vmatpush1.msra.mxu0 %v34
  %3580 = vmatprep.subr.mxu0 0.0
  %3581 = vmatpush1.msra.mxu0 %v35
  %3582 = vmatprep.subr.mxu0 0.0
  %3583 = vmatpush1.msra.mxu0 %v36
  %3584 = vmatprep.subr.mxu0 0.0
  %3585 = vmatpush1.msra.mxu0 %v37
  %3586 = vmatprep.subr.mxu0 0.0
  %3587 = vmatpush1.msra.mxu0 %v38
  %3588 = vmatprep.subr.mxu0 0.0
  %3589 = vmatpush1.msra.mxu0 %v39
  %3590 = vmatprep.subr.mxu0 0.0
  %3591 = vmatpush1.msra.mxu0 %v40
  %3592 = vmatprep.subr.mxu0 0.0
  %3593 = vmatpush1.msra.mxu0 %v41
  %3594 = vmatprep.subr.mxu0 0.0
  %3595 = vmatpush1.msra.mxu0 %v42
  %3596 = vmatprep.subr.mxu0 0.0
  %3597 = vmatpush1.msra.mxu0 %v43
  %3598 = vmatprep.subr.mxu0 0.0
  %3599 = vmatpush1.msra.mxu0 %v44
  %3600 = vmatprep.subr.mxu0 0.0
  %3601 = vmatpush1.msra.mxu0 %v45
  %3602 = vmatprep.subr.mxu0 0.0
  %3603 = vmatpush1.msra.mxu0 %v46
  %3604 = vmatprep.subr.mxu0 0.0
  %3605 = vmatpush1.msra.mxu0 %v47
  %3606 = vmatprep.subr.mxu0 0.0
  %3607 = vmatpush1.msra.mxu0 %v48
  %3608 = vmatprep.subr.mxu0 0.0
  %3609 = vmatpush1.msra.mxu0 %v49
  %3610 = vmatprep.subr.mxu0 0.0
  %3611 = vmatpush1.msra.mxu0 %v50
  %3612 = vmatprep.subr.mxu0 0.0
  %3613 = vmatpush1.msra.mxu0 %v51
  %3614 = vmatprep.mubr.f32.mxu0 %v3480
  %3615 = vmatmul.mubr.f32.gmra.mrb[0].mxu0 %v129
  %v3616 = vpop.f32.mrb[0].mxu0
  %v3617 = vadd.f32 %v3548, %v3616
  %v3618 = vpop.f32.mrb[0].mxu0
  %3619 = vmatprep.mubr.f32.mxu0 %v3481
  %3620 = vmatmul.mubr.f32.gmra.mrb[0].mxu0 %v130
  %v3621 = vpop.f32.mrb[0].mxu0
  %v3622 = vadd.f32 %v3548, %v3621
  %v3623 = vpop.f32.mrb[0].mxu0
  %3624 = vdwg.mxu0
  %3625 = vmatprep.subr.mxu0 0.0
  %3626 = vmatpush1.msra.mxu0 %v52
  %3627 = vmatprep.subr.mxu0 0.0
  %3628 = vmatpush1.msra.mxu0 %v53
  %3629 = vmatprep.subr.mxu0 0.0
  %3630 = vmatpush1.msra.mxu0 %v54
  %3631 = vmatprep.subr.mxu0 0.0
  %3632 = vmatpush1.msra.mxu0 %v55
  %3633 = vmatprep.subr.mxu0 0.0
  %3634 = vmatpush1.msra.mxu0 %v56
  %3635 = vmatprep.subr.mxu0 0.0
  %3636 = vmatpush1.msra.mxu0 %v57
  %3637 = vmatprep.subr.mxu0 0.0
  %3638 = vmatpush1.msra.mxu0 %v58
  %3639 = vmatprep.subr.mxu0 0.0
  %3640 = vmatpush1.msra.mxu0 %v59
  %3641 = vmatprep.subr.mxu0 0.0
  %3642 = vmatpush1.msra.mxu0 %v60
  %3643 = vmatprep.subr.mxu0 0.0
  %3644 = vmatpush1.msra.mxu0 %v61
  %3645 = vmatprep.subr.mxu0 0.0
  %3646 = vmatpush1.msra.mxu0 %v62
  %3647 = vmatprep.subr.mxu0 0.0
  %3648 = vmatpush1.msra.mxu0 %v63
  %3649 = vmatprep.subr.mxu0 0.0
  %3650 = vmatpush1.msra.mxu0 %v64
  %3651 = vmatprep.subr.mxu0 0.0
  %3652 = vmatpush1.msra.mxu0 %v65
  %3653 = vmatprep.subr.mxu0 0.0
  %3654 = vmatpush1.msra.mxu0 %v66
  %3655 = vmatprep.subr.mxu0 0.0
  %3656 = vmatpush1.msra.mxu0 %v67
  %3657 = vmatprep.subr.mxu0 0.0
  %3658 = vmatpush1.msra.mxu0 %v68
  %3659 = vmatprep.subr.mxu0 0.0
  %3660 = vmatpush1.msra.mxu0 %v69
  %3661 = vmatprep.subr.mxu0 0.0
  %3662 = vmatpush1.msra.mxu0 %v70
  %3663 = vmatprep.subr.mxu0 0.0
  %3664 = vmatpush1.msra.mxu0 %v71
  %3665 = vmatprep.subr.mxu0 0.0
  %3666 = vmatpush1.msra.mxu0 %v72
  %3667 = vmatprep.subr.mxu0 0.0
  %3668 = vmatpush1.msra.mxu0 %v73
  %3669 = vmatprep.subr.mxu0 0.0
  %3670 = vmatpush1.msra.mxu0 %v74
  %3671 = vmatprep.subr.mxu0 0.0
  %3672 = vmatpush1.msra.mxu0 %v75
  %3673 = vmatprep.subr.mxu0 0.0
  %3674 = vmatpush1.msra.mxu0 %v76
  %3675 = vmatprep.subr.mxu0 0.0
  %3676 = vmatpush1.msra.mxu0 %v77
  %3677 = vmatprep.subr.mxu0 0.0
  %3678 = vmatpush1.msra.mxu0 %v78
  %3679 = vmatprep.subr.mxu0 0.0
  %3680 = vmatpush1.msra.mxu0 %v79
  %3681 = vmatprep.subr.mxu0 0.0
  %3682 = vmatpush1.msra.mxu0 %v80
  %3683 = vmatprep.subr.mxu0 0.0
  %3684 = vmatpush1.msra.mxu0 %v81
  %3685 = vmatprep.subr.mxu0 0.0
  %3686 = vmatpush1.msra.mxu0 %v82
  %3687 = vmatprep.subr.mxu0 0.0
  %3688 = vmatpush1.msra.mxu0 %v83
  %3689 = vmatprep.mubr.f32.mxu0 %v3540
  %3690 = vmatmul.mubr.f32.gmra.mrb[0].mxu0 %v3510
  %v3691 = vpop.f32.mrb[0].mxu0
  %v3692 = vadd.f32 %v3617, %v3691
  %v3693 = vpop.f32.mrb[0].mxu0
  %3694 = vmatprep.mubr.f32.mxu0 %v3541
  %3695 = vmatmul.mubr.f32.gmra.mrb[0].mxu0 %v3511
  %v3696 = vpop.f32.mrb[0].mxu0
  %v3697 = vadd.f32 %v3622, %v3696
  %v3698 = vpop.f32.mrb[0].mxu0
  %3699 = vdwg.mxu0
  %v3700 = vmax.f32 %v3692, 0.0
  %v3701 = vmax.f32 %v3697, 0.0
  %3702 = vst [vmem:[%s5] sm:$0xff] %v3700
  %3703 = vst [vmem:[%s5 + $0x8] sm:$0xff] %v3701
  %s3704 = scalar_lea.vmem %s0, 16
  %v3705 = vld [vmem:[%s3704] sm:$0xff]
  %v3706 = vld [vmem:[%s3704 + $0x8] sm:$0xff]
  %3707 = vst [vmem:[#allocation2 + $0x20] sm:$0xff] %v3705
  %3708 = vst [vmem:[#allocation2 + $0x38] sm:$0xff] %v3706
  %v3709 = vld [vmem:[#allocation2] sm:$0xff]
  %v3710 = vld [vmem:[#allocation2 + $0x8] sm:$0xff]
  %v3711 = vld [vmem:[#allocation2 + $0x10] sm:$0xff]
  %v3712 = vld [vmem:[#allocation2 + $0x18] sm:$0xff]
  %v3713 = vld [vmem:[#allocation2 + $0x20] sm:$0xff]
  %v3714 = vld [vmem:[#allocation2 + $0x28] sm:$0xff]
  %v3715 = vld [vmem:[#allocation2 + $0x30] sm:$0xff]
  %v3716 = vld [vmem:[#allocation2 + $0x38] sm:$0xff]
  %v3717 = vld [vmem:[#allocation2 + $0x40] sm:$0xff]
  %v3718 = vld [vmem:[#allocation2 + $0x48] sm:$0xff]
  %v3719 = vld [vmem:[#allocation2 + $0x50] sm:$0xff]
  %v3720 = vld [vmem:[#allocation2 + $0x58] sm:$0xff]
  %v3721 = vld [vmem:[%s1 + $0x18] sm:$0x7f]
  %v3722 = vld [vmem:[%s2] sm:$0x1]
  %v3723 = vlaneseq
  %v3724 = vshrl.u32 %v3723, 7
  %v3725 = vsub.s32 3, %v3724
  %v3726 = vrot.slane %v3721, %v3725
  %v3727 = vmul.f32 %v3713, %v3726
  %v3728 = vmul.f32 %v3716, %v3726
  %v3729 = vlaneseq
  %v3730 = vshrl.u32 %v3729, 7
  %v3731 = vsub.s32 0, %v3730
  %v3732 = vrot.slane %v3722, %v3731
  %v3733 = vadd.f32 %v3727, %v3732
  %v3734 = vadd.f32 %v3728, %v3732
  %v3735 = vmax.f32 %v3733, 0.0
  %v3736 = vmax.f32 %v3734, 0.0
  %v3737 = vmin.f32 %v3735, 6.0
  %v3738 = vmin.f32 %v3736, 6.0
  %v3739 = vld [vmem:[%s131 + $0x10] sm:$0x7f]
  %v3740 = vld [vmem:[%s131 + $0x18] sm:$0x7f]
  %v3741 = vld [vmem:[%s131 + $0x20] sm:$0x7f]
  %v3742 = vld [vmem:[%s2 + $0x1] sm:$0x1]
  %v3743 = vlaneseq
  %v3744 = vshrl.u32 %v3743, 7
  %v3745 = vsub.s32 2, %v3744
  %v3746 = vrot.slane %v3739, %v3745
  %3748 = vrot.lane.b32.xlu0 %v3746, 120
  %v3749 = vpop.permute.xlu0 %3748
  %v3751 = vmul.f32 %v3709, %v3749
  %v3752 = vmul.f32 %v3710, %v3749
  %v3753 = vmul.f32 %v3712, %v3749
  %v3754 = vmul.f32 %v3713, %v3749
  %v3755 = vmul.f32 %v3715, %v3749
  %v3756 = vmul.f32 %v3716, %v3749
  %v3757 = vlaneseq
  %v3758 = vshrl.u32 %v3757, 7
  %v3759 = vsub.s32 3, %v3758
  %v3760 = vrot.slane %v3739, %v3759
  %v3761 = vmul.f32 %v3710, %v3760
  %v3762 = vmul.f32 %v3713, %v3760
  %v3763 = vmul.f32 %v3716, %v3760
  %v3764 = vlaneseq
  %v3765 = vshrl.u32 %v3764, 7
  %v3766 = vsub.s32 4, %v3765
  %v3767 = vrot.slane %v3739, %v3766
  %3769 = vrot.lane.b32.xlu0 %v3767, 8
  %v3770 = vpop.permute.xlu0 %3769
  %v3772 = vmul.f32 %v3710, %v3770
  %v3773 = vmul.f32 %v3711, %v3770
  %v3774 = vmul.f32 %v3713, %v3770
  %v3775 = vmul.f32 %v3714, %v3770
  %v3776 = vmul.f32 %v3716, %v3770
  %v3777 = vmul.f32 %v3717, %v3770
  %3781 = vrot.lane.b32.xlu0 %v3761, 120
  %v3782 = vpop.permute.xlu0 %3781
  %3783 = vrot.lane.b32.xlu0 %v3762, 120
  %v3784 = vpop.permute.xlu0 %3783
  %3785 = vrot.lane.b32.xlu0 %v3763, 120
  %v3786 = vpop.permute.xlu0 %3785
  %v3790 = vadd.f32 %v3751, %v3782
  %v3791 = vadd.f32 %v3752, %v3782
  %v3792 = vadd.f32 %v3753, %v3784
  %v3793 = vadd.f32 %v3754, %v3784
  %v3794 = vadd.f32 %v3755, %v3786
  %v3795 = vadd.f32 %v3756, %v3786
  %3802 = vrot.lane.b32.xlu0 %v3772, 112
  %v3803 = vpop.permute.xlu0 %3802
  %3804 = vrot.lane.b32.xlu0 %v3773, 112
  %v3805 = vpop.permute.xlu0 %3804
  %3806 = vrot.lane.b32.xlu0 %v3774, 112
  %v3807 = vpop.permute.xlu0 %3806
  %3808 = vrot.lane.b32.xlu0 %v3775, 112
  %v3809 = vpop.permute.xlu0 %3808
  %3810 = vrot.lane.b32.xlu0 %v3776, 112
  %v3811 = vpop.permute.xlu0 %3810
  %3812 = vrot.lane.b32.xlu0 %v3777, 112
  %v3813 = vpop.permute.xlu0 %3812
  %v3814 = vsel %vm207, %v3803, %v3805
  %v3815 = vsel %vm207, %v3807, %v3809
  %v3816 = vsel %vm207, %v3811, %v3813
  %v3823 = vadd.f32 %v3790, %v3803
  %v3824 = vadd.f32 %v3791, %v3814
  %v3825 = vadd.f32 %v3792, %v3807
  %v3826 = vadd.f32 %v3793, %v3815
  %v3827 = vadd.f32 %v3794, %v3811
  %v3828 = vadd.f32 %v3795, %v3816
  %v3829 = vlaneseq
  %v3830 = vshrl.u32 %v3829, 7
  %v3831 = vsub.s32 2, %v3830
  %v3832 = vrot.slane %v3740, %v3831
  %3834 = vrot.lane.b32.xlu0 %v3832, 120
  %v3835 = vpop.permute.xlu0 %3834
  %v3837 = vmul.f32 %v3712, %v3835
  %v3838 = vmul.f32 %v3713, %v3835
  %v3839 = vmul.f32 %v3715, %v3835
  %v3840 = vmul.f32 %v3716, %v3835
  %v3841 = vlaneseq
  %v3842 = vshrl.u32 %v3841, 7
  %v3843 = vsub.s32 3, %v3842
  %v3844 = vrot.slane %v3740, %v3843
  %v3845 = vmul.f32 %v3713, %v3844
  %v3846 = vmul.f32 %v3716, %v3844
  %v3847 = vlaneseq
  %v3848 = vshrl.u32 %v3847, 7
  %v3849 = vsub.s32 4, %v3848
  %v3850 = vrot.slane %v3740, %v3849
  %3852 = vrot.lane.b32.xlu0 %v3850, 8
  %v3853 = vpop.permute.xlu0 %3852
  %v3855 = vmul.f32 %v3713, %v3853
  %v3856 = vmul.f32 %v3714, %v3853
  %v3857 = vmul.f32 %v3716, %v3853
  %v3858 = vmul.f32 %v3717, %v3853
  %3861 = vrot.lane.b32.xlu0 %v3845, 120
  %v3862 = vpop.permute.xlu0 %3861
  %3863 = vrot.lane.b32.xlu0 %v3846, 120
  %v3864 = vpop.permute.xlu0 %3863
  %v3867 = vadd.f32 %v3837, %v3862
  %v3868 = vadd.f32 %v3838, %v3862
  %v3869 = vadd.f32 %v3839, %v3864
  %v3870 = vadd.f32 %v3840, %v3864
  %3875 = vrot.lane.b32.xlu0 %v3855, 112
  %v3876 = vpop.permute.xlu0 %3875
  %3877 = vrot.lane.b32.xlu0 %v3856, 112
  %v3878 = vpop.permute.xlu0 %3877
  %3879 = vrot.lane.b32.xlu0 %v3857, 112
  %v3880 = vpop.permute.xlu0 %3879
  %3881 = vrot.lane.b32.xlu0 %v3858, 112
  %v3882 = vpop.permute.xlu0 %3881
  %v3883 = vsel %vm207, %v3876, %v3878
  %v3884 = vsel %vm207, %v3880, %v3882
  %v3889 = vadd.f32 %v3867, %v3876
  %v3890 = vadd.f32 %v3868, %v3883
  %v3891 = vadd.f32 %v3869, %v3880
  %v3892 = vadd.f32 %v3870, %v3884
  %v3893 = vlaneseq
  %v3894 = vshrl.u32 %v3893, 7
  %v3895 = vsub.s32 2, %v3894
  %v3896 = vrot.slane %v3741, %v3895
  %3898 = vrot.lane.b32.xlu0 %v3896, 120
  %v3899 = vpop.permute.xlu0 %3898
  %v3901 = vmul.f32 %v3712, %v3899
  %v3902 = vmul.f32 %v3713, %v3899
  %v3903 = vmul.f32 %v3715, %v3899
  %v3904 = vmul.f32 %v3716, %v3899
  %v3905 = vmul.f32 %v3718, %v3899
  %v3906 = vmul.f32 %v3719, %v3899
  %v3907 = vlaneseq
  %v3908 = vshrl.u32 %v3907, 7
  %v3909 = vsub.s32 3, %v3908
  %v3910 = vrot.slane %v3741, %v3909
  %v3911 = vmul.f32 %v3713, %v3910
  %v3912 = vmul.f32 %v3716, %v3910
  %v3913 = vmul.f32 %v3719, %v3910
  %v3914 = vlaneseq
  %v3915 = vshrl.u32 %v3914, 7
  %v3916 = vsub.s32 4, %v3915
  %v3917 = vrot.slane %v3741, %v3916
  %3919 = vrot.lane.b32.xlu0 %v3917, 8
  %v3920 = vpop.permute.xlu0 %3919
  %v3922 = vmul.f32 %v3713, %v3920
  %v3923 = vmul.f32 %v3714, %v3920
  %v3924 = vmul.f32 %v3716, %v3920
  %v3925 = vmul.f32 %v3717, %v3920
  %v3926 = vmul.f32 %v3719, %v3920
  %v3927 = vmul.f32 %v3720, %v3920
  %3931 = vrot.lane.b32.xlu0 %v3911, 120
  %v3932 = vpop.permute.xlu0 %3931
  %3933 = vrot.lane.b32.xlu0 %v3912, 120
  %v3934 = vpop.permute.xlu0 %3933
  %3935 = vrot.lane.b32.xlu0 %v3913, 120
  %v3936 = vpop.permute.xlu0 %3935
  %v3940 = vadd.f32 %v3901, %v3932
  %v3941 = vadd.f32 %v3902, %v3932
  %v3942 = vadd.f32 %v3903, %v3934
  %v3943 = vadd.f32 %v3904, %v3934
  %v3944 = vadd.f32 %v3905, %v3936
  %v3945 = vadd.f32 %v3906, %v3936
  %3952 = vrot.lane.b32.xlu0 %v3922, 112
  %v3953 = vpop.permute.xlu0 %3952
  %3954 = vrot.lane.b32.xlu0 %v3923, 112
  %v3955 = vpop.permute.xlu0 %3954
  %3956 = vrot.lane.b32.xlu0 %v3924, 112
  %v3957 = vpop.permute.xlu0 %3956
  %3958 = vrot.lane.b32.xlu0 %v3925, 112
  %v3959 = vpop.permute.xlu0 %3958
  %3960 = vrot.lane.b32.xlu0 %v3926, 112
  %v3961 = vpop.permute.xlu0 %3960
  %3962 = vrot.lane.b32.xlu0 %v3927, 112
  %v3963 = vpop.permute.xlu0 %3962
  %v3964 = vsel %vm207, %v3953, %v3955
  %v3965 = vsel %vm207, %v3957, %v3959
  %v3966 = vsel %vm207, %v3961, %v3963
  %v3973 = vadd.f32 %v3940, %v3953
  %v3974 = vadd.f32 %v3941, %v3964
  %v3975 = vadd.f32 %v3942, %v3957
  %v3976 = vadd.f32 %v3943, %v3965
  %v3977 = vadd.f32 %v3944, %v3961
  %v3978 = vadd.f32 %v3945, %v3966
  %v3983 = vrot.slane %v3889, 1
  %v3984 = vrot.slane %v3890, 1
  %v3985 = vrot.slane %v3891, 1
  %v3986 = vsel %vm377, %v3983, %v3985
  %v3987 = vrot.slane %v3892, 1
  %v3988 = vsel %vm377, %v3984, %v3987
  %v3995 = vadd.f32 %v3823, %v3983
  %v3996 = vadd.f32 %v3824, %v3984
  %v3997 = vadd.f32 %v3825, %v3986
  %v3998 = vadd.f32 %v3826, %v3988
  %v3999 = vadd.f32 %v3827, %v3985
  %v4000 = vadd.f32 %v3828, %v3987
  %v4007 = vrot.slane %v3973, 2
  %v4008 = vrot.slane %v3974, 2
  %v4009 = vrot.slane %v3975, 2
  %v4010 = vsel %vm402, %v4007, %v4009
  %v4011 = vrot.slane %v3976, 2
  %v4012 = vsel %vm402, %v4008, %v4011
  %v4013 = vrot.slane %v3977, 2
  %v4014 = vsel %vm402, %v4009, %v4013
  %v4015 = vrot.slane %v3978, 2
  %v4016 = vsel %vm402, %v4011, %v4015
  %v4023 = vadd.f32 %v3995, %v4007
  %v4024 = vadd.f32 %v3996, %v4008
  %v4025 = vadd.f32 %v3997, %v4010
  %v4026 = vadd.f32 %v3998, %v4012
  %v4027 = vadd.f32 %v3999, %v4014
  %v4028 = vadd.f32 %v4000, %v4016
  %v4029 = vlaneseq
  %v4030 = vshrl.u32 %v4029, 7
  %v4031 = vsub.s32 0, %v4030
  %v4032 = vrot.slane %v3742, %v4031
  %4034 = vrot.lane.b32.xlu0 %v4032, 120
  %v4035 = vpop.permute.xlu0 %4034
  %v4037 = vadd.f32 %v4023, %v4035
  %v4038 = vadd.f32 %v4024, %v4035
  %v4039 = vadd.f32 %v4025, %v4035
  %v4040 = vadd.f32 %v4026, %v4035
  %v4041 = vadd.f32 %v4027, %v4035
  %v4042 = vadd.f32 %v4028, %v4035
  %v4043 = vmax.f32 %v4037, 0.0
  %v4044 = vmax.f32 %v4038, 0.0
  %v4045 = vmax.f32 %v4039, 0.0
  %v4046 = vmax.f32 %v4040, 0.0
  %v4047 = vmax.f32 %v4041, 0.0
  %v4048 = vmax.f32 %v4042, 0.0
  %v4049 = vmin.f32 %v4043, 6.0
  %v4050 = vmin.f32 %v4044, 6.0
  %v4051 = vmin.f32 %v4045, 6.0
  %v4052 = vmin.f32 %v4046, 6.0
  %v4053 = vmin.f32 %v4047, 6.0
  %v4054 = vmin.f32 %v4048, 6.0
  %v4055 = vld [vmem:[%s451 + $0x8] sm:$0x7f]
  %v4056 = vld [vmem:[%s451 + $0x10] sm:$0x7f]
  %v4057 = vld [vmem:[%s451 + $0x18] sm:$0x7f]
  %v4058 = vld [vmem:[%s451 + $0x20] sm:$0x7f]
  %v4059 = vld [vmem:[%s451 + $0x28] sm:$0x7f]
  %v4060 = vld [vmem:[%s2 + $0x2] sm:$0x1]
  %v4061 = vlaneseq
  %v4062 = vshrl.u32 %v4061, 7
  %v4063 = vsub.s32 1, %v4062
  %v4064 = vrot.slane %v4055, %v4063
  %4066 = vrot.lane.b32.xlu0 %v4064, 112
  %v4067 = vpop.permute.xlu0 %4066
  %v4069 = vmul.f32 %v3709, %v4067
  %v4070 = vmul.f32 %v3710, %v4067
  %v4071 = vmul.f32 %v3712, %v4067
  %v4072 = vmul.f32 %v3713, %v4067
  %v4073 = vmul.f32 %v3715, %v4067
  %v4074 = vmul.f32 %v3716, %v4067
  %v4075 = vlaneseq
  %v4076 = vshrl.u32 %v4075, 7
  %v4077 = vsub.s32 2, %v4076
  %v4078 = vrot.slane %v4055, %v4077
  %4080 = vrot.lane.b32.xlu0 %v4078, 120
  %v4081 = vpop.permute.xlu0 %4080
  %v4083 = vmul.f32 %v3709, %v4081
  %v4084 = vmul.f32 %v3710, %v4081
  %v4085 = vmul.f32 %v3712, %v4081
  %v4086 = vmul.f32 %v3713, %v4081
  %v4087 = vmul.f32 %v3715, %v4081
  %v4088 = vmul.f32 %v3716, %v4081
  %v4089 = vlaneseq
  %v4090 = vshrl.u32 %v4089, 7
  %v4091 = vsub.s32 3, %v4090
  %v4092 = vrot.slane %v4055, %v4091
  %v4093 = vmul.f32 %v3710, %v4092
  %v4094 = vmul.f32 %v3713, %v4092
  %v4095 = vmul.f32 %v3716, %v4092
  %v4096 = vlaneseq
  %v4097 = vshrl.u32 %v4096, 7
  %v4098 = vsub.s32 4, %v4097
  %v4099 = vrot.slane %v4055, %v4098
  %4101 = vrot.lane.b32.xlu0 %v4099, 8
  %v4102 = vpop.permute.xlu0 %4101
  %v4104 = vmul.f32 %v3710, %v4102
  %v4105 = vmul.f32 %v3711, %v4102
  %v4106 = vmul.f32 %v3713, %v4102
  %v4107 = vmul.f32 %v3714, %v4102
  %v4108 = vmul.f32 %v3716, %v4102
  %v4109 = vmul.f32 %v3717, %v4102
  %v4110 = vlaneseq
  %v4111 = vshrl.u32 %v4110, 7
  %v4112 = vsub.s32 5, %v4111
  %v4113 = vrot.slane %v4055, %v4112
  %4115 = vrot.lane.b32.xlu0 %v4113, 16
  %v4116 = vpop.permute.xlu0 %4115
  %v4118 = vmul.f32 %v3710, %v4116
  %v4119 = vmul.f32 %v3711, %v4116
  %v4120 = vmul.f32 %v3713, %v4116
  %v4121 = vmul.f32 %v3714, %v4116
  %v4122 = vmul.f32 %v3716, %v4116
  %v4123 = vmul.f32 %v3717, %v4116
  %4130 = vrot.lane.b32.xlu0 %v4083, 120
  %v4131 = vpop.permute.xlu0 %4130
  %4132 = vrot.lane.b32.xlu0 %v4084, 120
  %v4133 = vpop.permute.xlu0 %4132
  %4134 = vrot.lane.b32.xlu0 %v4085, 120
  %v4135 = vpop.permute.xlu0 %4134
  %4136 = vrot.lane.b32.xlu0 %v4086, 120
  %v4137 = vpop.permute.xlu0 %4136
  %4138 = vrot.lane.b32.xlu0 %v4087, 120
  %v4139 = vpop.permute.xlu0 %4138
  %4140 = vrot.lane.b32.xlu0 %v4088, 120
  %v4141 = vpop.permute.xlu0 %4140
  %v4142 = vsel %vm539, %v4131, %v4133
  %v4143 = vsel %vm539, %v4135, %v4137
  %v4144 = vsel %vm539, %v4139, %v4141
  %v4151 = vadd.f32 %v4069, %v4142
  %v4152 = vadd.f32 %v4070, %v4133
  %v4153 = vadd.f32 %v4071, %v4143
  %v4154 = vadd.f32 %v4072, %v4137
  %v4155 = vadd.f32 %v4073, %v4144
  %v4156 = vadd.f32 %v4074, %v4141
  %4163 = vrot.lane.b32.xlu0 %v4104, 120
  %v4164 = vpop.permute.xlu0 %4163
  %4165 = vrot.lane.b32.xlu0 %v4105, 120
  %v4166 = vpop.permute.xlu0 %4165
  %4167 = vrot.lane.b32.xlu0 %v4106, 120
  %v4168 = vpop.permute.xlu0 %4167
  %4169 = vrot.lane.b32.xlu0 %v4107, 120
  %v4170 = vpop.permute.xlu0 %4169
  %4171 = vrot.lane.b32.xlu0 %v4108, 120
  %v4172 = vpop.permute.xlu0 %4171
  %4173 = vrot.lane.b32.xlu0 %v4109, 120
  %v4174 = vpop.permute.xlu0 %4173
  %v4175 = vsel %vm539, %v4164, %v4166
  %v4176 = vsel %vm539, %v4168, %v4170
  %v4177 = vsel %vm539, %v4172, %v4174
  %v4181 = vadd.f32 %v4093, %v4175
  %v4182 = vadd.f32 %v4094, %v4176
  %v4183 = vadd.f32 %v4095, %v4177
  %4187 = vrot.lane.b32.xlu0 %v4181, 112
  %v4188 = vpop.permute.xlu0 %4187
  %4189 = vrot.lane.b32.xlu0 %v4182, 112
  %v4190 = vpop.permute.xlu0 %4189
  %4191 = vrot.lane.b32.xlu0 %v4183, 112
  %v4192 = vpop.permute.xlu0 %4191
  %v4196 = vadd.f32 %v4151, %v4188
  %v4197 = vadd.f32 %v4152, %v4188
  %v4198 = vadd.f32 %v4153, %v4190
  %v4199 = vadd.f32 %v4154, %v4190
  %v4200 = vadd.f32 %v4155, %v4192
  %v4201 = vadd.f32 %v4156, %v4192
  %4208 = vrot.lane.b32.xlu0 %v4118, 96
  %v4209 = vpop.permute.xlu0 %4208
  %4210 = vrot.lane.b32.xlu0 %v4119, 96
  %v4211 = vpop.permute.xlu0 %4210
  %4212 = vrot.lane.b32.xlu0 %v4120, 96
  %v4213 = vpop.permute.xlu0 %4212
  %4214 = vrot.lane.b32.xlu0 %v4121, 96
  %v4215 = vpop.permute.xlu0 %4214
  %4216 = vrot.lane.b32.xlu0 %v4122, 96
  %v4217 = vpop.permute.xlu0 %4216
  %4218 = vrot.lane.b32.xlu0 %v4123, 96
  %v4219 = vpop.permute.xlu0 %4218
  %v4220 = vsel %vm618, %v4209, %v4211
  %v4221 = vsel %vm618, %v4213, %v4215
  %v4222 = vsel %vm618, %v4217, %v4219
  %v4229 = vadd.f32 %v4196, %v4209
  %v4230 = vadd.f32 %v4197, %v4220
  %v4231 = vadd.f32 %v4198, %v4213
  %v4232 = vadd.f32 %v4199, %v4221
  %v4233 = vadd.f32 %v4200, %v4217
  %v4234 = vadd.f32 %v4201, %v4222
  %v4235 = vlaneseq
  %v4236 = vshrl.u32 %v4235, 7
  %v4237 = vsub.s32 1, %v4236
  %v4238 = vrot.slane %v4056, %v4237
  %4240 = vrot.lane.b32.xlu0 %v4238, 112
  %v4241 = vpop.permute.xlu0 %4240
  %v4243 = vmul.f32 %v3709, %v4241
  %v4244 = vmul.f32 %v3710, %v4241
  %v4245 = vmul.f32 %v3712, %v4241
  %v4246 = vmul.f32 %v3713, %v4241
  %v4247 = vmul.f32 %v3715, %v4241
  %v4248 = vmul.f32 %v3716, %v4241
  %v4249 = vlaneseq
  %v4250 = vshrl.u32 %v4249, 7
  %v4251 = vsub.s32 2, %v4250
  %v4252 = vrot.slane %v4056, %v4251
  %4254 = vrot.lane.b32.xlu0 %v4252, 120
  %v4255 = vpop.permute.xlu0 %4254
  %v4257 = vmul.f32 %v3709, %v4255
  %v4258 = vmul.f32 %v3710, %v4255
  %v4259 = vmul.f32 %v3712, %v4255
  %v4260 = vmul.f32 %v3713, %v4255
  %v4261 = vmul.f32 %v3715, %v4255
  %v4262 = vmul.f32 %v3716, %v4255
  %v4263 = vlaneseq
  %v4264 = vshrl.u32 %v4263, 7
  %v4265 = vsub.s32 3, %v4264
  %v4266 = vrot.slane %v4056, %v4265
  %v4267 = vmul.f32 %v3710, %v4266
  %v4268 = vmul.f32 %v3713, %v4266
  %v4269 = vmul.f32 %v3716, %v4266
  %v4270 = vlaneseq
  %v4271 = vshrl.u32 %v4270, 7
  %v4272 = vsub.s32 4, %v4271
  %v4273 = vrot.slane %v4056, %v4272
  %4275 = vrot.lane.b32.xlu0 %v4273, 8
  %v4276 = vpop.permute.xlu0 %4275
  %v4278 = vmul.f32 %v3710, %v4276
  %v4279 = vmul.f32 %v3711, %v4276
  %v4280 = vmul.f32 %v3713, %v4276
  %v4281 = vmul.f32 %v3714, %v4276
  %v4282 = vmul.f32 %v3716, %v4276
  %v4283 = vmul.f32 %v3717, %v4276
  %v4284 = vlaneseq
  %v4285 = vshrl.u32 %v4284, 7
  %v4286 = vsub.s32 5, %v4285
  %v4287 = vrot.slane %v4056, %v4286
  %4289 = vrot.lane.b32.xlu0 %v4287, 16
  %v4290 = vpop.permute.xlu0 %4289
  %v4292 = vmul.f32 %v3710, %v4290
  %v4293 = vmul.f32 %v3711, %v4290
  %v4294 = vmul.f32 %v3713, %v4290
  %v4295 = vmul.f32 %v3714, %v4290
  %v4296 = vmul.f32 %v3716, %v4290
  %v4297 = vmul.f32 %v3717, %v4290
  %4304 = vrot.lane.b32.xlu0 %v4257, 120
  %v4305 = vpop.permute.xlu0 %4304
  %4306 = vrot.lane.b32.xlu0 %v4258, 120
  %v4307 = vpop.permute.xlu0 %4306
  %4308 = vrot.lane.b32.xlu0 %v4259, 120
  %v4309 = vpop.permute.xlu0 %4308
  %4310 = vrot.lane.b32.xlu0 %v4260, 120
  %v4311 = vpop.permute.xlu0 %4310
  %4312 = vrot.lane.b32.xlu0 %v4261, 120
  %v4313 = vpop.permute.xlu0 %4312
  %4314 = vrot.lane.b32.xlu0 %v4262, 120
  %v4315 = vpop.permute.xlu0 %4314
  %v4316 = vsel %vm539, %v4305, %v4307
  %v4317 = vsel %vm539, %v4309, %v4311
  %v4318 = vsel %vm539, %v4313, %v4315
  %v4325 = vadd.f32 %v4243, %v4316
  %v4326 = vadd.f32 %v4244, %v4307
  %v4327 = vadd.f32 %v4245, %v4317
  %v4328 = vadd.f32 %v4246, %v4311
  %v4329 = vadd.f32 %v4247, %v4318
  %v4330 = vadd.f32 %v4248, %v4315
  %4337 = vrot.lane.b32.xlu0 %v4278, 120
  %v4338 = vpop.permute.xlu0 %4337
  %4339 = vrot.lane.b32.xlu0 %v4279, 120
  %v4340 = vpop.permute.xlu0 %4339
  %4341 = vrot.lane.b32.xlu0 %v4280, 120
  %v4342 = vpop.permute.xlu0 %4341
  %4343 = vrot.lane.b32.xlu0 %v4281, 120
  %v4344 = vpop.permute.xlu0 %4343
  %4345 = vrot.lane.b32.xlu0 %v4282, 120
  %v4346 = vpop.permute.xlu0 %4345
  %4347 = vrot.lane.b32.xlu0 %v4283, 120
  %v4348 = vpop.permute.xlu0 %4347
  %v4349 = vsel %vm539, %v4338, %v4340
  %v4350 = vsel %vm539, %v4342, %v4344
  %v4351 = vsel %vm539, %v4346, %v4348
  %v4355 = vadd.f32 %v4267, %v4349
  %v4356 = vadd.f32 %v4268, %v4350
  %v4357 = vadd.f32 %v4269, %v4351
  %4361 = vrot.lane.b32.xlu0 %v4355, 112
  %v4362 = vpop.permute.xlu0 %4361
  %4363 = vrot.lane.b32.xlu0 %v4356, 112
  %v4364 = vpop.permute.xlu0 %4363
  %4365 = vrot.lane.b32.xlu0 %v4357, 112
  %v4366 = vpop.permute.xlu0 %4365
  %v4370 = vadd.f32 %v4325, %v4362
  %v4371 = vadd.f32 %v4326, %v4362
  %v4372 = vadd.f32 %v4327, %v4364
  %v4373 = vadd.f32 %v4328, %v4364
  %v4374 = vadd.f32 %v4329, %v4366
  %v4375 = vadd.f32 %v4330, %v4366
  %4382 = vrot.lane.b32.xlu0 %v4292, 96
  %v4383 = vpop.permute.xlu0 %4382
  %4384 = vrot.lane.b32.xlu0 %v4293, 96
  %v4385 = vpop.permute.xlu0 %4384
  %4386 = vrot.lane.b32.xlu0 %v4294, 96
  %v4387 = vpop.permute.xlu0 %4386
  %4388 = vrot.lane.b32.xlu0 %v4295, 96
  %v4389 = vpop.permute.xlu0 %4388
  %4390 = vrot.lane.b32.xlu0 %v4296, 96
  %v4391 = vpop.permute.xlu0 %4390
  %4392 = vrot.lane.b32.xlu0 %v4297, 96
  %v4393 = vpop.permute.xlu0 %4392
  %v4394 = vsel %vm618, %v4383, %v4385
  %v4395 = vsel %vm618, %v4387, %v4389
  %v4396 = vsel %vm618, %v4391, %v4393
  %v4403 = vadd.f32 %v4370, %v4383
  %v4404 = vadd.f32 %v4371, %v4394
  %v4405 = vadd.f32 %v4372, %v4387
  %v4406 = vadd.f32 %v4373, %v4395
  %v4407 = vadd.f32 %v4374, %v4391
  %v4408 = vadd.f32 %v4375, %v4396
  %v4409 = vlaneseq
  %v4410 = vshrl.u32 %v4409, 7
  %v4411 = vsub.s32 1, %v4410
  %v4412 = vrot.slane %v4057, %v4411
  %4414 = vrot.lane.b32.xlu0 %v4412, 112
  %v4415 = vpop.permute.xlu0 %4414
  %v4417 = vmul.f32 %v3712, %v4415
  %v4418 = vmul.f32 %v3713, %v4415
  %v4419 = vmul.f32 %v3715, %v4415
  %v4420 = vmul.f32 %v3716, %v4415
  %v4421 = vlaneseq
  %v4422 = vshrl.u32 %v4421, 7
  %v4423 = vsub.s32 2, %v4422
  %v4424 = vrot.slane %v4057, %v4423
  %4426 = vrot.lane.b32.xlu0 %v4424, 120
  %v4427 = vpop.permute.xlu0 %4426
  %v4429 = vmul.f32 %v3712, %v4427
  %v4430 = vmul.f32 %v3713, %v4427
  %v4431 = vmul.f32 %v3715, %v4427
  %v4432 = vmul.f32 %v3716, %v4427
  %v4433 = vlaneseq
  %v4434 = vshrl.u32 %v4433, 7
  %v4435 = vsub.s32 3, %v4434
  %v4436 = vrot.slane %v4057, %v4435
  %v4437 = vmul.f32 %v3713, %v4436
  %v4438 = vmul.f32 %v3716, %v4436
  %v4439 = vlaneseq
  %v4440 = vshrl.u32 %v4439, 7
  %v4441 = vsub.s32 4, %v4440
  %v4442 = vrot.slane %v4057, %v4441
  %4444 = vrot.lane.b32.xlu0 %v4442, 8
  %v4445 = vpop.permute.xlu0 %4444
  %v4447 = vmul.f32 %v3713, %v4445
  %v4448 = vmul.f32 %v3714, %v4445
  %v4449 = vmul.f32 %v3716, %v4445
  %v4450 = vmul.f32 %v3717, %v4445
  %v4451 = vlaneseq
  %v4452 = vshrl.u32 %v4451, 7
  %v4453 = vsub.s32 5, %v4452
  %v4454 = vrot.slane %v4057, %v4453
  %4456 = vrot.lane.b32.xlu0 %v4454, 16
  %v4457 = vpop.permute.xlu0 %4456
  %v4459 = vmul.f32 %v3713, %v4457
  %v4460 = vmul.f32 %v3714, %v4457
  %v4461 = vmul.f32 %v3716, %v4457
  %v4462 = vmul.f32 %v3717, %v4457
  %4467 = vrot.lane.b32.xlu0 %v4429, 120
  %v4468 = vpop.permute.xlu0 %4467
  %4469 = vrot.lane.b32.xlu0 %v4430, 120
  %v4470 = vpop.permute.xlu0 %4469
  %4471 = vrot.lane.b32.xlu0 %v4431, 120
  %v4472 = vpop.permute.xlu0 %4471
  %4473 = vrot.lane.b32.xlu0 %v4432, 120
  %v4474 = vpop.permute.xlu0 %4473
  %v4475 = vsel %vm539, %v4468, %v4470
  %v4476 = vsel %vm539, %v4472, %v4474
  %v4481 = vadd.f32 %v4417, %v4475
  %v4482 = vadd.f32 %v4418, %v4470
  %v4483 = vadd.f32 %v4419, %v4476
  %v4484 = vadd.f32 %v4420, %v4474
  %4489 = vrot.lane.b32.xlu0 %v4447, 120
  %v4490 = vpop.permute.xlu0 %4489
  %4491 = vrot.lane.b32.xlu0 %v4448, 120
  %v4492 = vpop.permute.xlu0 %4491
  %4493 = vrot.lane.b32.xlu0 %v4449, 120
  %v4494 = vpop.permute.xlu0 %4493
  %4495 = vrot.lane.b32.xlu0 %v4450, 120
  %v4496 = vpop.permute.xlu0 %4495
  %v4497 = vsel %vm539, %v4490, %v4492
  %v4498 = vsel %vm539, %v4494, %v4496
  %v4501 = vadd.f32 %v4437, %v4497
  %v4502 = vadd.f32 %v4438, %v4498
  %4505 = vrot.lane.b32.xlu0 %v4501, 112
  %v4506 = vpop.permute.xlu0 %4505
  %4507 = vrot.lane.b32.xlu0 %v4502, 112
  %v4508 = vpop.permute.xlu0 %4507
  %v4511 = vadd.f32 %v4481, %v4506
  %v4512 = vadd.f32 %v4482, %v4506
  %v4513 = vadd.f32 %v4483, %v4508
  %v4514 = vadd.f32 %v4484, %v4508
  %4519 = vrot.lane.b32.xlu0 %v4459, 96
  %v4520 = vpop.permute.xlu0 %4519
  %4521 = vrot.lane.b32.xlu0 %v4460, 96
  %v4522 = vpop.permute.xlu0 %4521
  %4523 = vrot.lane.b32.xlu0 %v4461, 96
  %v4524 = vpop.permute.xlu0 %4523
  %4525 = vrot.lane.b32.xlu0 %v4462, 96
  %v4526 = vpop.permute.xlu0 %4525
  %v4527 = vsel %vm618, %v4520, %v4522
  %v4528 = vsel %vm618, %v4524, %v4526
  %v4533 = vadd.f32 %v4511, %v4520
  %v4534 = vadd.f32 %v4512, %v4527
  %v4535 = vadd.f32 %v4513, %v4524
  %v4536 = vadd.f32 %v4514, %v4528
  %v4537 = vlaneseq
  %v4538 = vshrl.u32 %v4537, 7
  %v4539 = vsub.s32 1, %v4538
  %v4540 = vrot.slane %v4058, %v4539
  %4542 = vrot.lane.b32.xlu0 %v4540, 112
  %v4543 = vpop.permute.xlu0 %4542
  %v4545 = vmul.f32 %v3712, %v4543
  %v4546 = vmul.f32 %v3713, %v4543
  %v4547 = vmul.f32 %v3715, %v4543
  %v4548 = vmul.f32 %v3716, %v4543
  %v4549 = vmul.f32 %v3718, %v4543
  %v4550 = vmul.f32 %v3719, %v4543
  %v4551 = vlaneseq
  %v4552 = vshrl.u32 %v4551, 7
  %v4553 = vsub.s32 2, %v4552
  %v4554 = vrot.slane %v4058, %v4553
  %4556 = vrot.lane.b32.xlu0 %v4554, 120
  %v4557 = vpop.permute.xlu0 %4556
  %v4559 = vmul.f32 %v3712, %v4557
  %v4560 = vmul.f32 %v3713, %v4557
  %v4561 = vmul.f32 %v3715, %v4557
  %v4562 = vmul.f32 %v3716, %v4557
  %v4563 = vmul.f32 %v3718, %v4557
  %v4564 = vmul.f32 %v3719, %v4557
  %v4565 = vlaneseq
  %v4566 = vshrl.u32 %v4565, 7
  %v4567 = vsub.s32 3, %v4566
  %v4568 = vrot.slane %v4058, %v4567
  %v4569 = vmul.f32 %v3713, %v4568
  %v4570 = vmul.f32 %v3716, %v4568
  %v4571 = vmul.f32 %v3719, %v4568
  %v4572 = vlaneseq
  %v4573 = vshrl.u32 %v4572, 7
  %v4574 = vsub.s32 4, %v4573
  %v4575 = vrot.slane %v4058, %v4574
  %4577 = vrot.lane.b32.xlu0 %v4575, 8
  %v4578 = vpop.permute.xlu0 %4577
  %v4580 = vmul.f32 %v3713, %v4578
  %v4581 = vmul.f32 %v3714, %v4578
  %v4582 = vmul.f32 %v3716, %v4578
  %v4583 = vmul.f32 %v3717, %v4578
  %v4584 = vmul.f32 %v3719, %v4578
  %v4585 = vmul.f32 %v3720, %v4578
  %v4586 = vlaneseq
  %v4587 = vshrl.u32 %v4586, 7
  %v4588 = vsub.s32 5, %v4587
  %v4589 = vrot.slane %v4058, %v4588
  %4591 = vrot.lane.b32.xlu0 %v4589, 16
  %v4592 = vpop.permute.xlu0 %4591
  %v4594 = vmul.f32 %v3713, %v4592
  %v4595 = vmul.f32 %v3714, %v4592
  %v4596 = vmul.f32 %v3716, %v4592
  %v4597 = vmul.f32 %v3717, %v4592
  %v4598 = vmul.f32 %v3719, %v4592
  %v4599 = vmul.f32 %v3720, %v4592
  %4606 = vrot.lane.b32.xlu0 %v4559, 120
  %v4607 = vpop.permute.xlu0 %4606
  %4608 = vrot.lane.b32.xlu0 %v4560, 120
  %v4609 = vpop.permute.xlu0 %4608
  %4610 = vrot.lane.b32.xlu0 %v4561, 120
  %v4611 = vpop.permute.xlu0 %4610
  %4612 = vrot.lane.b32.xlu0 %v4562, 120
  %v4613 = vpop.permute.xlu0 %4612
  %4614 = vrot.lane.b32.xlu0 %v4563, 120
  %v4615 = vpop.permute.xlu0 %4614
  %4616 = vrot.lane.b32.xlu0 %v4564, 120
  %v4617 = vpop.permute.xlu0 %4616
  %v4618 = vsel %vm539, %v4607, %v4609
  %v4619 = vsel %vm539, %v4611, %v4613
  %v4620 = vsel %vm539, %v4615, %v4617
  %v4627 = vadd.f32 %v4545, %v4618
  %v4628 = vadd.f32 %v4546, %v4609
  %v4629 = vadd.f32 %v4547, %v4619
  %v4630 = vadd.f32 %v4548, %v4613
  %v4631 = vadd.f32 %v4549, %v4620
  %v4632 = vadd.f32 %v4550, %v4617
  %4639 = vrot.lane.b32.xlu0 %v4580, 120
  %v4640 = vpop.permute.xlu0 %4639
  %4641 = vrot.lane.b32.xlu0 %v4581, 120
  %v4642 = vpop.permute.xlu0 %4641
  %4643 = vrot.lane.b32.xlu0 %v4582, 120
  %v4644 = vpop.permute.xlu0 %4643
  %4645 = vrot.lane.b32.xlu0 %v4583, 120
  %v4646 = vpop.permute.xlu0 %4645
  %4647 = vrot.lane.b32.xlu0 %v4584, 120
  %v4648 = vpop.permute.xlu0 %4647
  %4649 = vrot.lane.b32.xlu0 %v4585, 120
  %v4650 = vpop.permute.xlu0 %4649
  %v4651 = vsel %vm539, %v4640, %v4642
  %v4652 = vsel %vm539, %v4644, %v4646
  %v4653 = vsel %vm539, %v4648, %v4650
  %v4657 = vadd.f32 %v4569, %v4651
  %v4658 = vadd.f32 %v4570, %v4652
  %v4659 = vadd.f32 %v4571, %v4653
  %4663 = vrot.lane.b32.xlu0 %v4657, 112
  %v4664 = vpop.permute.xlu0 %4663
  %4665 = vrot.lane.b32.xlu0 %v4658, 112
  %v4666 = vpop.permute.xlu0 %4665
  %4667 = vrot.lane.b32.xlu0 %v4659, 112
  %v4668 = vpop.permute.xlu0 %4667
  %v4672 = vadd.f32 %v4627, %v4664
  %v4673 = vadd.f32 %v4628, %v4664
  %v4674 = vadd.f32 %v4629, %v4666
  %v4675 = vadd.f32 %v4630, %v4666
  %v4676 = vadd.f32 %v4631, %v4668
  %v4677 = vadd.f32 %v4632, %v4668
  %4684 = vrot.lane.b32.xlu0 %v4594, 96
  %v4685 = vpop.permute.xlu0 %4684
  %4686 = vrot.lane.b32.xlu0 %v4595, 96
  %v4687 = vpop.permute.xlu0 %4686
  %4688 = vrot.lane.b32.xlu0 %v4596, 96
  %v4689 = vpop.permute.xlu0 %4688
  %4690 = vrot.lane.b32.xlu0 %v4597, 96
  %v4691 = vpop.permute.xlu0 %4690
  %4692 = vrot.lane.b32.xlu0 %v4598, 96
  %v4693 = vpop.permute.xlu0 %4692
  %4694 = vrot.lane.b32.xlu0 %v4599, 96
  %v4695 = vpop.permute.xlu0 %4694
  %v4696 = vsel %vm618, %v4685, %v4687
  %v4697 = vsel %vm618, %v4689, %v4691
  %v4698 = vsel %vm618, %v4693, %v4695
  %v4705 = vadd.f32 %v4672, %v4685
  %v4706 = vadd.f32 %v4673, %v4696
  %v4707 = vadd.f32 %v4674, %v4689
  %v4708 = vadd.f32 %v4675, %v4697
  %v4709 = vadd.f32 %v4676, %v4693
  %v4710 = vadd.f32 %v4677, %v4698
  %v4711 = vlaneseq
  %v4712 = vshrl.u32 %v4711, 7
  %v4713 = vsub.s32 1, %v4712
  %v4714 = vrot.slane %v4059, %v4713
  %4716 = vrot.lane.b32.xlu0 %v4714, 112
  %v4717 = vpop.permute.xlu0 %4716
  %v4719 = vmul.f32 %v3712, %v4717
  %v4720 = vmul.f32 %v3713, %v4717
  %v4721 = vmul.f32 %v3715, %v4717
  %v4722 = vmul.f32 %v3716, %v4717
  %v4723 = vmul.f32 %v3718, %v4717
  %v4724 = vmul.f32 %v3719, %v4717
  %v4725 = vlaneseq
  %v4726 = vshrl.u32 %v4725, 7
  %v4727 = vsub.s32 2, %v4726
  %v4728 = vrot.slane %v4059, %v4727
  %4730 = vrot.lane.b32.xlu0 %v4728, 120
  %v4731 = vpop.permute.xlu0 %4730
  %v4733 = vmul.f32 %v3712, %v4731
  %v4734 = vmul.f32 %v3713, %v4731
  %v4735 = vmul.f32 %v3715, %v4731
  %v4736 = vmul.f32 %v3716, %v4731
  %v4737 = vmul.f32 %v3718, %v4731
  %v4738 = vmul.f32 %v3719, %v4731
  %v4739 = vlaneseq
  %v4740 = vshrl.u32 %v4739, 7
  %v4741 = vsub.s32 3, %v4740
  %v4742 = vrot.slane %v4059, %v4741
  %v4743 = vmul.f32 %v3713, %v4742
  %v4744 = vmul.f32 %v3716, %v4742
  %v4745 = vmul.f32 %v3719, %v4742
  %v4746 = vlaneseq
  %v4747 = vshrl.u32 %v4746, 7
  %v4748 = vsub.s32 4, %v4747
  %v4749 = vrot.slane %v4059, %v4748
  %4751 = vrot.lane.b32.xlu0 %v4749, 8
  %v4752 = vpop.permute.xlu0 %4751
  %v4754 = vmul.f32 %v3713, %v4752
  %v4755 = vmul.f32 %v3714, %v4752
  %v4756 = vmul.f32 %v3716, %v4752
  %v4757 = vmul.f32 %v3717, %v4752
  %v4758 = vmul.f32 %v3719, %v4752
  %v4759 = vmul.f32 %v3720, %v4752
  %v4760 = vlaneseq
  %v4761 = vshrl.u32 %v4760, 7
  %v4762 = vsub.s32 5, %v4761
  %v4763 = vrot.slane %v4059, %v4762
  %4765 = vrot.lane.b32.xlu0 %v4763, 16
  %v4766 = vpop.permute.xlu0 %4765
  %v4768 = vmul.f32 %v3713, %v4766
  %v4769 = vmul.f32 %v3714, %v4766
  %v4770 = vmul.f32 %v3716, %v4766
  %v4771 = vmul.f32 %v3717, %v4766
  %v4772 = vmul.f32 %v3719, %v4766
  %v4773 = vmul.f32 %v3720, %v4766
  %4780 = vrot.lane.b32.xlu0 %v4733, 120
  %v4781 = vpop.permute.xlu0 %4780
  %4782 = vrot.lane.b32.xlu0 %v4734, 120
  %v4783 = vpop.permute.xlu0 %4782
  %4784 = vrot.lane.b32.xlu0 %v4735, 120
  %v4785 = vpop.permute.xlu0 %4784
  %4786 = vrot.lane.b32.xlu0 %v4736, 120
  %v4787 = vpop.permute.xlu0 %4786
  %4788 = vrot.lane.b32.xlu0 %v4737, 120
  %v4789 = vpop.permute.xlu0 %4788
  %4790 = vrot.lane.b32.xlu0 %v4738, 120
  %v4791 = vpop.permute.xlu0 %4790
  %v4792 = vsel %vm539, %v4781, %v4783
  %v4793 = vsel %vm539, %v4785, %v4787
  %v4794 = vsel %vm539, %v4789, %v4791
  %v4801 = vadd.f32 %v4719, %v4792
  %v4802 = vadd.f32 %v4720, %v4783
  %v4803 = vadd.f32 %v4721, %v4793
  %v4804 = vadd.f32 %v4722, %v4787
  %v4805 = vadd.f32 %v4723, %v4794
  %v4806 = vadd.f32 %v4724, %v4791
  %4813 = vrot.lane.b32.xlu0 %v4754, 120
  %v4814 = vpop.permute.xlu0 %4813
  %4815 = vrot.lane.b32.xlu0 %v4755, 120
  %v4816 = vpop.permute.xlu0 %4815
  %4817 = vrot.lane.b32.xlu0 %v4756, 120
  %v4818 = vpop.permute.xlu0 %4817
  %4819 = vrot.lane.b32.xlu0 %v4757, 120
  %v4820 = vpop.permute.xlu0 %4819
  %4821 = vrot.lane.b32.xlu0 %v4758, 120
  %v4822 = vpop.permute.xlu0 %4821
  %4823 = vrot.lane.b32.xlu0 %v4759, 120
  %v4824 = vpop.permute.xlu0 %4823
  %v4825 = vsel %vm539, %v4814, %v4816
  %v4826 = vsel %vm539, %v4818, %v4820
  %v4827 = vsel %vm539, %v4822, %v4824
  %v4831 = vadd.f32 %v4743, %v4825
  %v4832 = vadd.f32 %v4744, %v4826
  %v4833 = vadd.f32 %v4745, %v4827
  %4837 = vrot.lane.b32.xlu0 %v4831, 112
  %v4838 = vpop.permute.xlu0 %4837
  %4839 = vrot.lane.b32.xlu0 %v4832, 112
  %v4840 = vpop.permute.xlu0 %4839
  %4841 = vrot.lane.b32.xlu0 %v4833, 112
  %v4842 = vpop.permute.xlu0 %4841
  %v4846 = vadd.f32 %v4801, %v4838
  %v4847 = vadd.f32 %v4802, %v4838
  %v4848 = vadd.f32 %v4803, %v4840
  %v4849 = vadd.f32 %v4804, %v4840
  %v4850 = vadd.f32 %v4805, %v4842
  %v4851 = vadd.f32 %v4806, %v4842
  %4858 = vrot.lane.b32.xlu0 %v4768, 96
  %v4859 = vpop.permute.xlu0 %4858
  %4860 = vrot.lane.b32.xlu0 %v4769, 96
  %v4861 = vpop.permute.xlu0 %4860
  %4862 = vrot.lane.b32.xlu0 %v4770, 96
  %v4863 = vpop.permute.xlu0 %4862
  %4864 = vrot.lane.b32.xlu0 %v4771, 96
  %v4865 = vpop.permute.xlu0 %4864
  %4866 = vrot.lane.b32.xlu0 %v4772, 96
  %v4867 = vpop.permute.xlu0 %4866
  %4868 = vrot.lane.b32.xlu0 %v4773, 96
  %v4869 = vpop.permute.xlu0 %4868
  %v4870 = vsel %vm618, %v4859, %v4861
  %v4871 = vsel %vm618, %v4863, %v4865
  %v4872 = vsel %vm618, %v4867, %v4869
  %v4879 = vadd.f32 %v4846, %v4859
  %v4880 = vadd.f32 %v4847, %v4870
  %v4881 = vadd.f32 %v4848, %v4863
  %v4882 = vadd.f32 %v4849, %v4871
  %v4883 = vadd.f32 %v4850, %v4867
  %v4884 = vadd.f32 %v4851, %v4872
  %v4891 = vrot.slane %v4403, 1
  %v4892 = vrot.slane %v4405, 1
  %v4893 = vsel %vm377, %v4891, %v4892
  %v4894 = vrot.slane %v4404, 1
  %v4895 = vrot.slane %v4406, 1
  %v4896 = vsel %vm377, %v4894, %v4895
  %v4897 = vrot.slane %v4407, 1
  %v4898 = vsel %vm377, %v4892, %v4897
  %v4899 = vrot.slane %v4408, 1
  %v4900 = vsel %vm377, %v4895, %v4899
  %v4907 = vadd.f32 %v4229, %v4893
  %v4908 = vadd.f32 %v4230, %v4896
  %v4909 = vadd.f32 %v4231, %v4898
  %v4910 = vadd.f32 %v4232, %v4900
  %v4911 = vadd.f32 %v4233, %v4897
  %v4912 = vadd.f32 %v4234, %v4899
  %v4919 = vrot.slane %v4705, 1
  %v4920 = vrot.slane %v4707, 1
  %v4921 = vsel %vm377, %v4919, %v4920
  %v4922 = vrot.slane %v4706, 1
  %v4923 = vrot.slane %v4708, 1
  %v4924 = vsel %vm377, %v4922, %v4923
  %v4925 = vrot.slane %v4709, 1
  %v4926 = vsel %vm377, %v4920, %v4925
  %v4927 = vrot.slane %v4710, 1
  %v4928 = vsel %vm377, %v4923, %v4927
  %v4933 = vadd.f32 %v4533, %v4921
  %v4934 = vadd.f32 %v4534, %v4924
  %v4935 = vadd.f32 %v4535, %v4926
  %v4936 = vadd.f32 %v4536, %v4928
  %v4941 = vrot.slane %v4933, 2
  %v4942 = vrot.slane %v4934, 2
  %v4943 = vrot.slane %v4935, 2
  %v4944 = vsel %vm402, %v4941, %v4943
  %v4945 = vrot.slane %v4936, 2
  %v4946 = vsel %vm402, %v4942, %v4945
  %v4953 = vadd.f32 %v4907, %v4941
  %v4954 = vadd.f32 %v4908, %v4942
  %v4955 = vadd.f32 %v4909, %v4944
  %v4956 = vadd.f32 %v4910, %v4946
  %v4957 = vadd.f32 %v4911, %v4943
  %v4958 = vadd.f32 %v4912, %v4945
  %v4965 = vrot.slane %v4879, 4
  %v4966 = vrot.slane %v4880, 4
  %v4967 = vrot.slane %v4881, 4
  %v4968 = vsel %vm1364, %v4965, %v4967
  %v4969 = vrot.slane %v4882, 4
  %v4970 = vsel %vm1364, %v4966, %v4969
  %v4971 = vrot.slane %v4883, 4
  %v4972 = vsel %vm1364, %v4967, %v4971
  %v4973 = vrot.slane %v4884, 4
  %v4974 = vsel %vm1364, %v4969, %v4973
  %v4981 = vadd.f32 %v4953, %v4965
  %v4982 = vadd.f32 %v4954, %v4966
  %v4983 = vadd.f32 %v4955, %v4968
  %v4984 = vadd.f32 %v4956, %v4970
  %v4985 = vadd.f32 %v4957, %v4972
  %v4986 = vadd.f32 %v4958, %v4974
  %v4987 = vlaneseq
  %v4988 = vshrl.u32 %v4987, 7
  %v4989 = vsub.s32 0, %v4988
  %v4990 = vrot.slane %v4060, %v4989
  %4992 = vrot.lane.b32.xlu0 %v4990, 112
  %v4993 = vpop.permute.xlu0 %4992
  %v4995 = vadd.f32 %v4981, %v4993
  %v4996 = vadd.f32 %v4982, %v4993
  %v4997 = vadd.f32 %v4983, %v4993
  %v4998 = vadd.f32 %v4984, %v4993
  %v4999 = vadd.f32 %v4985, %v4993
  %v5000 = vadd.f32 %v4986, %v4993
  %v5001 = vmax.f32 %v4995, 0.0
  %v5002 = vmax.f32 %v4996, 0.0
  %v5003 = vmax.f32 %v4997, 0.0
  %v5004 = vmax.f32 %v4998, 0.0
  %v5005 = vmax.f32 %v4999, 0.0
  %v5006 = vmax.f32 %v5000, 0.0
  %v5007 = vmin.f32 %v5001, 6.0
  %v5008 = vmin.f32 %v5002, 6.0
  %v5009 = vmin.f32 %v5003, 6.0
  %v5010 = vmin.f32 %v5004, 6.0
  %v5011 = vmin.f32 %v5005, 6.0
  %v5012 = vmin.f32 %v5006, 6.0
  %v5013 = vld [vmem:[%s1413] sm:$0x7f]
  %v5014 = vld [vmem:[%s1413 + $0x8] sm:$0x7f]
  %v5015 = vld [vmem:[%s1413 + $0x10] sm:$0x7f]
  %v5016 = vld [vmem:[%s1413 + $0x18] sm:$0x7f]
  %v5017 = vld [vmem:[%s1413 + $0x20] sm:$0x7f]
  %v5018 = vld [vmem:[%s1413 + $0x28] sm:$0x7f]
  %v5019 = vld [vmem:[%s1413 + $0x30] sm:$0x7f]
  %v5020 = vld [vmem:[%s2 + $0x3] sm:$0x1]
  %v5021 = vlaneseq
  %v5022 = vshrl.u32 %v5021, 7
  %v5023 = vsub.s32 0, %v5022
  %v5024 = vrot.slane %v5013, %v5023
  %5026 = vrot.lane.b32.xlu0 %v5024, 104
  %v5027 = vpop.permute.xlu0 %5026
  %v5029 = vmul.f32 %v3709, %v5027
  %v5030 = vmul.f32 %v3710, %v5027
  %v5031 = vmul.f32 %v3712, %v5027
  %v5032 = vmul.f32 %v3713, %v5027
  %v5033 = vmul.f32 %v3715, %v5027
  %v5034 = vmul.f32 %v3716, %v5027
  %v5035 = vlaneseq
  %v5036 = vshrl.u32 %v5035, 7
  %v5037 = vsub.s32 1, %v5036
  %v5038 = vrot.slane %v5013, %v5037
  %5040 = vrot.lane.b32.xlu0 %v5038, 112
  %v5041 = vpop.permute.xlu0 %5040
  %v5043 = vmul.f32 %v3709, %v5041
  %v5044 = vmul.f32 %v3710, %v5041
  %v5045 = vmul.f32 %v3712, %v5041
  %v5046 = vmul.f32 %v3713, %v5041
  %v5047 = vmul.f32 %v3715, %v5041
  %v5048 = vmul.f32 %v3716, %v5041
  %v5049 = vlaneseq
  %v5050 = vshrl.u32 %v5049, 7
  %v5051 = vsub.s32 2, %v5050
  %v5052 = vrot.slane %v5013, %v5051
  %5054 = vrot.lane.b32.xlu0 %v5052, 120
  %v5055 = vpop.permute.xlu0 %5054
  %v5057 = vmul.f32 %v3709, %v5055
  %v5058 = vmul.f32 %v3710, %v5055
  %v5059 = vmul.f32 %v3712, %v5055
  %v5060 = vmul.f32 %v3713, %v5055
  %v5061 = vmul.f32 %v3715, %v5055
  %v5062 = vmul.f32 %v3716, %v5055
  %v5063 = vlaneseq
  %v5064 = vshrl.u32 %v5063, 7
  %v5065 = vsub.s32 3, %v5064
  %v5066 = vrot.slane %v5013, %v5065
  %v5067 = vmul.f32 %v3710, %v5066
  %v5068 = vmul.f32 %v3713, %v5066
  %v5069 = vmul.f32 %v3716, %v5066
  %v5070 = vlaneseq
  %v5071 = vshrl.u32 %v5070, 7
  %v5072 = vsub.s32 4, %v5071
  %v5073 = vrot.slane %v5013, %v5072
  %5075 = vrot.lane.b32.xlu0 %v5073, 8
  %v5076 = vpop.permute.xlu0 %5075
  %v5078 = vmul.f32 %v3710, %v5076
  %v5079 = vmul.f32 %v3711, %v5076
  %v5080 = vmul.f32 %v3713, %v5076
  %v5081 = vmul.f32 %v3714, %v5076
  %v5082 = vmul.f32 %v3716, %v5076
  %v5083 = vmul.f32 %v3717, %v5076
  %v5084 = vlaneseq
  %v5085 = vshrl.u32 %v5084, 7
  %v5086 = vsub.s32 5, %v5085
  %v5087 = vrot.slane %v5013, %v5086
  %5089 = vrot.lane.b32.xlu0 %v5087, 16
  %v5090 = vpop.permute.xlu0 %5089
  %v5092 = vmul.f32 %v3710, %v5090
  %v5093 = vmul.f32 %v3711, %v5090
  %v5094 = vmul.f32 %v3713, %v5090
  %v5095 = vmul.f32 %v3714, %v5090
  %v5096 = vmul.f32 %v3716, %v5090
  %v5097 = vmul.f32 %v3717, %v5090
  %v5098 = vlaneseq
  %v5099 = vshrl.u32 %v5098, 7
  %v5100 = vsub.s32 6, %v5099
  %v5101 = vrot.slane %v5013, %v5100
  %5103 = vrot.lane.b32.xlu0 %v5101, 24
  %v5104 = vpop.permute.xlu0 %5103
  %v5106 = vmul.f32 %v3710, %v5104
  %v5107 = vmul.f32 %v3711, %v5104
  %v5108 = vmul.f32 %v3713, %v5104
  %v5109 = vmul.f32 %v3714, %v5104
  %v5110 = vmul.f32 %v3716, %v5104
  %v5111 = vmul.f32 %v3717, %v5104
  %5118 = vrot.lane.b32.xlu0 %v5043, 120
  %v5119 = vpop.permute.xlu0 %5118
  %5120 = vrot.lane.b32.xlu0 %v5044, 120
  %v5121 = vpop.permute.xlu0 %5120
  %5122 = vrot.lane.b32.xlu0 %v5045, 120
  %v5123 = vpop.permute.xlu0 %5122
  %5124 = vrot.lane.b32.xlu0 %v5046, 120
  %v5125 = vpop.permute.xlu0 %5124
  %5126 = vrot.lane.b32.xlu0 %v5047, 120
  %v5127 = vpop.permute.xlu0 %5126
  %5128 = vrot.lane.b32.xlu0 %v5048, 120
  %v5129 = vpop.permute.xlu0 %5128
  %v5130 = vsel %vm539, %v5119, %v5121
  %v5131 = vsel %vm539, %v5123, %v5125
  %v5132 = vsel %vm539, %v5127, %v5129
  %v5139 = vadd.f32 %v5029, %v5130
  %v5140 = vadd.f32 %v5030, %v5121
  %v5141 = vadd.f32 %v5031, %v5131
  %v5142 = vadd.f32 %v5032, %v5125
  %v5143 = vadd.f32 %v5033, %v5132
  %v5144 = vadd.f32 %v5034, %v5129
  %5148 = vrot.lane.b32.xlu0 %v5067, 120
  %v5149 = vpop.permute.xlu0 %5148
  %5150 = vrot.lane.b32.xlu0 %v5068, 120
  %v5151 = vpop.permute.xlu0 %5150
  %5152 = vrot.lane.b32.xlu0 %v5069, 120
  %v5153 = vpop.permute.xlu0 %5152
  %v5157 = vadd.f32 %v5057, %v5149
  %v5158 = vadd.f32 %v5058, %v5149
  %v5159 = vadd.f32 %v5059, %v5151
  %v5160 = vadd.f32 %v5060, %v5151
  %v5161 = vadd.f32 %v5061, %v5153
  %v5162 = vadd.f32 %v5062, %v5153
  %5169 = vrot.lane.b32.xlu0 %v5092, 120
  %v5170 = vpop.permute.xlu0 %5169
  %5171 = vrot.lane.b32.xlu0 %v5093, 120
  %v5172 = vpop.permute.xlu0 %5171
  %5173 = vrot.lane.b32.xlu0 %v5094, 120
  %v5174 = vpop.permute.xlu0 %5173
  %5175 = vrot.lane.b32.xlu0 %v5095, 120
  %v5176 = vpop.permute.xlu0 %5175
  %5177 = vrot.lane.b32.xlu0 %v5096, 120
  %v5178 = vpop.permute.xlu0 %5177
  %5179 = vrot.lane.b32.xlu0 %v5097, 120
  %v5180 = vpop.permute.xlu0 %5179
  %v5181 = vsel %vm539, %v5170, %v5172
  %v5182 = vsel %vm539, %v5174, %v5176
  %v5183 = vsel %vm539, %v5178, %v5180
  %v5190 = vadd.f32 %v5078, %v5181
  %v5191 = vadd.f32 %v5079, %v5172
  %v5192 = vadd.f32 %v5080, %v5182
  %v5193 = vadd.f32 %v5081, %v5176
  %v5194 = vadd.f32 %v5082, %v5183
  %v5195 = vadd.f32 %v5083, %v5180
  %5202 = vrot.lane.b32.xlu0 %v5157, 112
  %v5203 = vpop.permute.xlu0 %5202
  %5204 = vrot.lane.b32.xlu0 %v5158, 112
  %v5205 = vpop.permute.xlu0 %5204
  %5206 = vrot.lane.b32.xlu0 %v5159, 112
  %v5207 = vpop.permute.xlu0 %5206
  %5208 = vrot.lane.b32.xlu0 %v5160, 112
  %v5209 = vpop.permute.xlu0 %5208
  %5210 = vrot.lane.b32.xlu0 %v5161, 112
  %v5211 = vpop.permute.xlu0 %5210
  %5212 = vrot.lane.b32.xlu0 %v5162, 112
  %v5213 = vpop.permute.xlu0 %5212
  %v5214 = vsel %vm207, %v5203, %v5205
  %v5215 = vsel %vm207, %v5207, %v5209
  %v5216 = vsel %vm207, %v5211, %v5213
  %v5223 = vadd.f32 %v5139, %v5214
  %v5224 = vadd.f32 %v5140, %v5205
  %v5225 = vadd.f32 %v5141, %v5215
  %v5226 = vadd.f32 %v5142, %v5209
  %v5227 = vadd.f32 %v5143, %v5216
  %v5228 = vadd.f32 %v5144, %v5213
  %5235 = vrot.lane.b32.xlu0 %v5106, 112
  %v5236 = vpop.permute.xlu0 %5235
  %5237 = vrot.lane.b32.xlu0 %v5107, 112
  %v5238 = vpop.permute.xlu0 %5237
  %5239 = vrot.lane.b32.xlu0 %v5108, 112
  %v5240 = vpop.permute.xlu0 %5239
  %5241 = vrot.lane.b32.xlu0 %v5109, 112
  %v5242 = vpop.permute.xlu0 %5241
  %5243 = vrot.lane.b32.xlu0 %v5110, 112
  %v5244 = vpop.permute.xlu0 %5243
  %5245 = vrot.lane.b32.xlu0 %v5111, 112
  %v5246 = vpop.permute.xlu0 %5245
  %v5247 = vsel %vm207, %v5236, %v5238
  %v5248 = vsel %vm207, %v5240, %v5242
  %v5249 = vsel %vm207, %v5244, %v5246
  %v5256 = vadd.f32 %v5190, %v5247
  %v5257 = vadd.f32 %v5191, %v5238
  %v5258 = vadd.f32 %v5192, %v5248
  %v5259 = vadd.f32 %v5193, %v5242
  %v5260 = vadd.f32 %v5194, %v5249
  %v5261 = vadd.f32 %v5195, %v5246
  %5268 = vrot.lane.b32.xlu0 %v5256, 96
  %v5269 = vpop.permute.xlu0 %5268
  %5270 = vrot.lane.b32.xlu0 %v5257, 96
  %v5271 = vpop.permute.xlu0 %5270
  %5272 = vrot.lane.b32.xlu0 %v5258, 96
  %v5273 = vpop.permute.xlu0 %5272
  %5274 = vrot.lane.b32.xlu0 %v5259, 96
  %v5275 = vpop.permute.xlu0 %5274
  %5276 = vrot.lane.b32.xlu0 %v5260, 96
  %v5277 = vpop.permute.xlu0 %5276
  %5278 = vrot.lane.b32.xlu0 %v5261, 96
  %v5279 = vpop.permute.xlu0 %5278
  %v5280 = vsel %vm618, %v5269, %v5271
  %v5281 = vsel %vm618, %v5273, %v5275
  %v5282 = vsel %vm618, %v5277, %v5279
  %v5289 = vadd.f32 %v5223, %v5269
  %v5290 = vadd.f32 %v5224, %v5280
  %v5291 = vadd.f32 %v5225, %v5273
  %v5292 = vadd.f32 %v5226, %v5281
  %v5293 = vadd.f32 %v5227, %v5277
  %v5294 = vadd.f32 %v5228, %v5282
  %v5295 = vlaneseq
  %v5296 = vshrl.u32 %v5295, 7
  %v5297 = vsub.s32 0, %v5296
  %v5298 = vrot.slane %v5014, %v5297
  %5300 = vrot.lane.b32.xlu0 %v5298, 104
  %v5301 = vpop.permute.xlu0 %5300
  %v5303 = vmul.f32 %v3709, %v5301
  %v5304 = vmul.f32 %v3710, %v5301
  %v5305 = vmul.f32 %v3712, %v5301
  %v5306 = vmul.f32 %v3713, %v5301
  %v5307 = vmul.f32 %v3715, %v5301
  %v5308 = vmul.f32 %v3716, %v5301
  %v5309 = vlaneseq
  %v5310 = vshrl.u32 %v5309, 7
  %v5311 = vsub.s32 1, %v5310
  %v5312 = vrot.slane %v5014, %v5311
  %5314 = vrot.lane.b32.xlu0 %v5312, 112
  %v5315 = vpop.permute.xlu0 %5314
  %v5317 = vmul.f32 %v3709, %v5315
  %v5318 = vmul.f32 %v3710, %v5315
  %v5319 = vmul.f32 %v3712, %v5315
  %v5320 = vmul.f32 %v3713, %v5315
  %v5321 = vmul.f32 %v3715, %v5315
  %v5322 = vmul.f32 %v3716, %v5315
  %v5323 = vlaneseq
  %v5324 = vshrl.u32 %v5323, 7
  %v5325 = vsub.s32 2, %v5324
  %v5326 = vrot.slane %v5014, %v5325
  %5328 = vrot.lane.b32.xlu0 %v5326, 120
  %v5329 = vpop.permute.xlu0 %5328
  %v5331 = vmul.f32 %v3709, %v5329
  %v5332 = vmul.f32 %v3710, %v5329
  %v5333 = vmul.f32 %v3712, %v5329
  %v5334 = vmul.f32 %v3713, %v5329
  %v5335 = vmul.f32 %v3715, %v5329
  %v5336 = vmul.f32 %v3716, %v5329
  %v5337 = vlaneseq
  %v5338 = vshrl.u32 %v5337, 7
  %v5339 = vsub.s32 3, %v5338
  %v5340 = vrot.slane %v5014, %v5339
  %v5341 = vmul.f32 %v3710, %v5340
  %v5342 = vmul.f32 %v3713, %v5340
  %v5343 = vmul.f32 %v3716, %v5340
  %v5344 = vlaneseq
  %v5345 = vshrl.u32 %v5344, 7
  %v5346 = vsub.s32 4, %v5345
  %v5347 = vrot.slane %v5014, %v5346
  %5349 = vrot.lane.b32.xlu0 %v5347, 8
  %v5350 = vpop.permute.xlu0 %5349
  %v5352 = vmul.f32 %v3710, %v5350
  %v5353 = vmul.f32 %v3711, %v5350
  %v5354 = vmul.f32 %v3713, %v5350
  %v5355 = vmul.f32 %v3714, %v5350
  %v5356 = vmul.f32 %v3716, %v5350
  %v5357 = vmul.f32 %v3717, %v5350
  %v5358 = vlaneseq
  %v5359 = vshrl.u32 %v5358, 7
  %v5360 = vsub.s32 5, %v5359
  %v5361 = vrot.slane %v5014, %v5360
  %5363 = vrot.lane.b32.xlu0 %v5361, 16
  %v5364 = vpop.permute.xlu0 %5363
  %v5366 = vmul.f32 %v3710, %v5364
  %v5367 = vmul.f32 %v3711, %v5364
  %v5368 = vmul.f32 %v3713, %v5364
  %v5369 = vmul.f32 %v3714, %v5364
  %v5370 = vmul.f32 %v3716, %v5364
  %v5371 = vmul.f32 %v3717, %v5364
  %v5372 = vlaneseq
  %v5373 = vshrl.u32 %v5372, 7
  %v5374 = vsub.s32 6, %v5373
  %v5375 = vrot.slane %v5014, %v5374
  %5377 = vrot.lane.b32.xlu0 %v5375, 24
  %v5378 = vpop.permute.xlu0 %5377
  %v5380 = vmul.f32 %v3710, %v5378
  %v5381 = vmul.f32 %v3711, %v5378
  %v5382 = vmul.f32 %v3713, %v5378
  %v5383 = vmul.f32 %v3714, %v5378
  %v5384 = vmul.f32 %v3716, %v5378
  %v5385 = vmul.f32 %v3717, %v5378
  %5392 = vrot.lane.b32.xlu0 %v5317, 120
  %v5393 = vpop.permute.xlu0 %5392
  %5394 = vrot.lane.b32.xlu0 %v5318, 120
  %v5395 = vpop.permute.xlu0 %5394
  %5396 = vrot.lane.b32.xlu0 %v5319, 120
  %v5397 = vpop.permute.xlu0 %5396
  %5398 = vrot.lane.b32.xlu0 %v5320, 120
  %v5399 = vpop.permute.xlu0 %5398
  %5400 = vrot.lane.b32.xlu0 %v5321, 120
  %v5401 = vpop.permute.xlu0 %5400
  %5402 = vrot.lane.b32.xlu0 %v5322, 120
  %v5403 = vpop.permute.xlu0 %5402
  %v5404 = vsel %vm539, %v5393, %v5395
  %v5405 = vsel %vm539, %v5397, %v5399
  %v5406 = vsel %vm539, %v5401, %v5403
  %v5413 = vadd.f32 %v5303, %v5404
  %v5414 = vadd.f32 %v5304, %v5395
  %v5415 = vadd.f32 %v5305, %v5405
  %v5416 = vadd.f32 %v5306, %v5399
  %v5417 = vadd.f32 %v5307, %v5406
  %v5418 = vadd.f32 %v5308, %v5403
  %5422 = vrot.lane.b32.xlu0 %v5341, 120
  %v5423 = vpop.permute.xlu0 %5422
  %5424 = vrot.lane.b32.xlu0 %v5342, 120
  %v5425 = vpop.permute.xlu0 %5424
  %5426 = vrot.lane.b32.xlu0 %v5343, 120
  %v5427 = vpop.permute.xlu0 %5426
  %v5431 = vadd.f32 %v5331, %v5423
  %v5432 = vadd.f32 %v5332, %v5423
  %v5433 = vadd.f32 %v5333, %v5425
  %v5434 = vadd.f32 %v5334, %v5425
  %v5435 = vadd.f32 %v5335, %v5427
  %v5436 = vadd.f32 %v5336, %v5427
  %5443 = vrot.lane.b32.xlu0 %v5366, 120
  %v5444 = vpop.permute.xlu0 %5443
  %5445 = vrot.lane.b32.xlu0 %v5367, 120
  %v5446 = vpop.permute.xlu0 %5445
  %5447 = vrot.lane.b32.xlu0 %v5368, 120
  %v5448 = vpop.permute.xlu0 %5447
  %5449 = vrot.lane.b32.xlu0 %v5369, 120
  %v5450 = vpop.permute.xlu0 %5449
  %5451 = vrot.lane.b32.xlu0 %v5370, 120
  %v5452 = vpop.permute.xlu0 %5451
  %5453 = vrot.lane.b32.xlu0 %v5371, 120
  %v5454 = vpop.permute.xlu0 %5453
  %v5455 = vsel %vm539, %v5444, %v5446
  %v5456 = vsel %vm539, %v5448, %v5450
  %v5457 = vsel %vm539, %v5452, %v5454
  %v5464 = vadd.f32 %v5352, %v5455
  %v5465 = vadd.f32 %v5353, %v5446
  %v5466 = vadd.f32 %v5354, %v5456
  %v5467 = vadd.f32 %v5355, %v5450
  %v5468 = vadd.f32 %v5356, %v5457
  %v5469 = vadd.f32 %v5357, %v5454
  %5476 = vrot.lane.b32.xlu0 %v5431, 112
  %v5477 = vpop.permute.xlu0 %5476
  %5478 = vrot.lane.b32.xlu0 %v5432, 112
  %v5479 = vpop.permute.xlu0 %5478
  %5480 = vrot.lane.b32.xlu0 %v5433, 112
  %v5481 = vpop.permute.xlu0 %5480
  %5482 = vrot.lane.b32.xlu0 %v5434, 112
  %v5483 = vpop.permute.xlu0 %5482
  %5484 = vrot.lane.b32.xlu0 %v5435, 112
  %v5485 = vpop.permute.xlu0 %5484
  %5486 = vrot.lane.b32.xlu0 %v5436, 112
  %v5487 = vpop.permute.xlu0 %5486
  %v5488 = vsel %vm207, %v5477, %v5479
  %v5489 = vsel %vm207, %v5481, %v5483
  %v5490 = vsel %vm207, %v5485, %v5487
  %v5497 = vadd.f32 %v5413, %v5488
  %v5498 = vadd.f32 %v5414, %v5479
  %v5499 = vadd.f32 %v5415, %v5489
  %v5500 = vadd.f32 %v5416, %v5483
  %v5501 = vadd.f32 %v5417, %v5490
  %v5502 = vadd.f32 %v5418, %v5487
  %5509 = vrot.lane.b32.xlu0 %v5380, 112
  %v5510 = vpop.permute.xlu0 %5509
  %5511 = vrot.lane.b32.xlu0 %v5381, 112
  %v5512 = vpop.permute.xlu0 %5511
  %5513 = vrot.lane.b32.xlu0 %v5382, 112
  %v5514 = vpop.permute.xlu0 %5513
  %5515 = vrot.lane.b32.xlu0 %v5383, 112
  %v5516 = vpop.permute.xlu0 %5515
  %5517 = vrot.lane.b32.xlu0 %v5384, 112
  %v5518 = vpop.permute.xlu0 %5517
  %5519 = vrot.lane.b32.xlu0 %v5385, 112
  %v5520 = vpop.permute.xlu0 %5519
  %v5521 = vsel %vm207, %v5510, %v5512
  %v5522 = vsel %vm207, %v5514, %v5516
  %v5523 = vsel %vm207, %v5518, %v5520
  %v5530 = vadd.f32 %v5464, %v5521
  %v5531 = vadd.f32 %v5465, %v5512
  %v5532 = vadd.f32 %v5466, %v5522
  %v5533 = vadd.f32 %v5467, %v5516
  %v5534 = vadd.f32 %v5468, %v5523
  %v5535 = vadd.f32 %v5469, %v5520
  %5542 = vrot.lane.b32.xlu0 %v5530, 96
  %v5543 = vpop.permute.xlu0 %5542
  %5544 = vrot.lane.b32.xlu0 %v5531, 96
  %v5545 = vpop.permute.xlu0 %5544
  %5546 = vrot.lane.b32.xlu0 %v5532, 96
  %v5547 = vpop.permute.xlu0 %5546
  %5548 = vrot.lane.b32.xlu0 %v5533, 96
  %v5549 = vpop.permute.xlu0 %5548
  %5550 = vrot.lane.b32.xlu0 %v5534, 96
  %v5551 = vpop.permute.xlu0 %5550
  %5552 = vrot.lane.b32.xlu0 %v5535, 96
  %v5553 = vpop.permute.xlu0 %5552
  %v5554 = vsel %vm618, %v5543, %v5545
  %v5555 = vsel %vm618, %v5547, %v5549
  %v5556 = vsel %vm618, %v5551, %v5553
  %v5563 = vadd.f32 %v5497, %v5543
  %v5564 = vadd.f32 %v5498, %v5554
  %v5565 = vadd.f32 %v5499, %v5547
  %v5566 = vadd.f32 %v5500, %v5555
  %v5567 = vadd.f32 %v5501, %v5551
  %v5568 = vadd.f32 %v5502, %v5556
  %v5569 = vlaneseq
  %v5570 = vshrl.u32 %v5569, 7
  %v5571 = vsub.s32 0, %v5570
  %v5572 = vrot.slane %v5015, %v5571
  %5574 = vrot.lane.b32.xlu0 %v5572, 104
  %v5575 = vpop.permute.xlu0 %5574
  %v5577 = vmul.f32 %v3709, %v5575
  %v5578 = vmul.f32 %v3710, %v5575
  %v5579 = vmul.f32 %v3712, %v5575
  %v5580 = vmul.f32 %v3713, %v5575
  %v5581 = vmul.f32 %v3715, %v5575
  %v5582 = vmul.f32 %v3716, %v5575
  %v5583 = vlaneseq
  %v5584 = vshrl.u32 %v5583, 7
  %v5585 = vsub.s32 1, %v5584
  %v5586 = vrot.slane %v5015, %v5585
  %5588 = vrot.lane.b32.xlu0 %v5586, 112
  %v5589 = vpop.permute.xlu0 %5588
  %v5591 = vmul.f32 %v3709, %v5589
  %v5592 = vmul.f32 %v3710, %v5589
  %v5593 = vmul.f32 %v3712, %v5589
  %v5594 = vmul.f32 %v3713, %v5589
  %v5595 = vmul.f32 %v3715, %v5589
  %v5596 = vmul.f32 %v3716, %v5589
  %v5597 = vlaneseq
  %v5598 = vshrl.u32 %v5597, 7
  %v5599 = vsub.s32 2, %v5598
  %v5600 = vrot.slane %v5015, %v5599
  %5602 = vrot.lane.b32.xlu0 %v5600, 120
  %v5603 = vpop.permute.xlu0 %5602
  %v5605 = vmul.f32 %v3709, %v5603
  %v5606 = vmul.f32 %v3710, %v5603
  %v5607 = vmul.f32 %v3712, %v5603
  %v5608 = vmul.f32 %v3713, %v5603
  %v5609 = vmul.f32 %v3715, %v5603
  %v5610 = vmul.f32 %v3716, %v5603
  %v5611 = vlaneseq
  %v5612 = vshrl.u32 %v5611, 7
  %v5613 = vsub.s32 3, %v5612
  %v5614 = vrot.slane %v5015, %v5613
  %v5615 = vmul.f32 %v3710, %v5614
  %v5616 = vmul.f32 %v3713, %v5614
  %v5617 = vmul.f32 %v3716, %v5614
  %v5618 = vlaneseq
  %v5619 = vshrl.u32 %v5618, 7
  %v5620 = vsub.s32 4, %v5619
  %v5621 = vrot.slane %v5015, %v5620
  %5623 = vrot.lane.b32.xlu0 %v5621, 8
  %v5624 = vpop.permute.xlu0 %5623
  %v5626 = vmul.f32 %v3710, %v5624
  %v5627 = vmul.f32 %v3711, %v5624
  %v5628 = vmul.f32 %v3713, %v5624
  %v5629 = vmul.f32 %v3714, %v5624
  %v5630 = vmul.f32 %v3716, %v5624
  %v5631 = vmul.f32 %v3717, %v5624
  %v5632 = vlaneseq
  %v5633 = vshrl.u32 %v5632, 7
  %v5634 = vsub.s32 5, %v5633
  %v5635 = vrot.slane %v5015, %v5634
  %5637 = vrot.lane.b32.xlu0 %v5635, 16
  %v5638 = vpop.permute.xlu0 %5637
  %v5640 = vmul.f32 %v3710, %v5638
  %v5641 = vmul.f32 %v3711, %v5638
  %v5642 = vmul.f32 %v3713, %v5638
  %v5643 = vmul.f32 %v3714, %v5638
  %v5644 = vmul.f32 %v3716, %v5638
  %v5645 = vmul.f32 %v3717, %v5638
  %v5646 = vlaneseq
  %v5647 = vshrl.u32 %v5646, 7
  %v5648 = vsub.s32 6, %v5647
  %v5649 = vrot.slane %v5015, %v5648
  %5651 = vrot.lane.b32.xlu0 %v5649, 24
  %v5652 = vpop.permute.xlu0 %5651
  %v5654 = vmul.f32 %v3710, %v5652
  %v5655 = vmul.f32 %v3711, %v5652
  %v5656 = vmul.f32 %v3713, %v5652
  %v5657 = vmul.f32 %v3714, %v5652
  %v5658 = vmul.f32 %v3716, %v5652
  %v5659 = vmul.f32 %v3717, %v5652
  %5666 = vrot.lane.b32.xlu0 %v5591, 120
  %v5667 = vpop.permute.xlu0 %5666
  %5668 = vrot.lane.b32.xlu0 %v5592, 120
  %v5669 = vpop.permute.xlu0 %5668
  %5670 = vrot.lane.b32.xlu0 %v5593, 120
  %v5671 = vpop.permute.xlu0 %5670
  %5672 = vrot.lane.b32.xlu0 %v5594, 120
  %v5673 = vpop.permute.xlu0 %5672
  %5674 = vrot.lane.b32.xlu0 %v5595, 120
  %v5675 = vpop.permute.xlu0 %5674
  %5676 = vrot.lane.b32.xlu0 %v5596, 120
  %v5677 = vpop.permute.xlu0 %5676
  %v5678 = vsel %vm539, %v5667, %v5669
  %v5679 = vsel %vm539, %v5671, %v5673
  %v5680 = vsel %vm539, %v5675, %v5677
  %v5687 = vadd.f32 %v5577, %v5678
  %v5688 = vadd.f32 %v5578, %v5669
  %v5689 = vadd.f32 %v5579, %v5679
  %v5690 = vadd.f32 %v5580, %v5673
  %v5691 = vadd.f32 %v5581, %v5680
  %v5692 = vadd.f32 %v5582, %v5677
  %5696 = vrot.lane.b32.xlu0 %v5615, 120
  %v5697 = vpop.permute.xlu0 %5696
  %5698 = vrot.lane.b32.xlu0 %v5616, 120
  %v5699 = vpop.permute.xlu0 %5698
  %5700 = vrot.lane.b32.xlu0 %v5617, 120
  %v5701 = vpop.permute.xlu0 %5700
  %v5705 = vadd.f32 %v5605, %v5697
  %v5706 = vadd.f32 %v5606, %v5697
  %v5707 = vadd.f32 %v5607, %v5699
  %v5708 = vadd.f32 %v5608, %v5699
  %v5709 = vadd.f32 %v5609, %v5701
  %v5710 = vadd.f32 %v5610, %v5701
  %5717 = vrot.lane.b32.xlu0 %v5640, 120
  %v5718 = vpop.permute.xlu0 %5717
  %5719 = vrot.lane.b32.xlu0 %v5641, 120
  %v5720 = vpop.permute.xlu0 %5719
  %5721 = vrot.lane.b32.xlu0 %v5642, 120
  %v5722 = vpop.permute.xlu0 %5721
  %5723 = vrot.lane.b32.xlu0 %v5643, 120
  %v5724 = vpop.permute.xlu0 %5723
  %5725 = vrot.lane.b32.xlu0 %v5644, 120
  %v5726 = vpop.permute.xlu0 %5725
  %5727 = vrot.lane.b32.xlu0 %v5645, 120
  %v5728 = vpop.permute.xlu0 %5727
  %v5729 = vsel %vm539, %v5718, %v5720
  %v5730 = vsel %vm539, %v5722, %v5724
  %v5731 = vsel %vm539, %v5726, %v5728
  %v5738 = vadd.f32 %v5626, %v5729
  %v5739 = vadd.f32 %v5627, %v5720
  %v5740 = vadd.f32 %v5628, %v5730
  %v5741 = vadd.f32 %v5629, %v5724
  %v5742 = vadd.f32 %v5630, %v5731
  %v5743 = vadd.f32 %v5631, %v5728
  %5750 = vrot.lane.b32.xlu0 %v5705, 112
  %v5751 = vpop.permute.xlu0 %5750
  %5752 = vrot.lane.b32.xlu0 %v5706, 112
  %v5753 = vpop.permute.xlu0 %5752
  %5754 = vrot.lane.b32.xlu0 %v5707, 112
  %v5755 = vpop.permute.xlu0 %5754
  %5756 = vrot.lane.b32.xlu0 %v5708, 112
  %v5757 = vpop.permute.xlu0 %5756
  %5758 = vrot.lane.b32.xlu0 %v5709, 112
  %v5759 = vpop.permute.xlu0 %5758
  %5760 = vrot.lane.b32.xlu0 %v5710, 112
  %v5761 = vpop.permute.xlu0 %5760
  %v5762 = vsel %vm207, %v5751, %v5753
  %v5763 = vsel %vm207, %v5755, %v5757
  %v5764 = vsel %vm207, %v5759, %v5761
  %v5771 = vadd.f32 %v5687, %v5762
  %v5772 = vadd.f32 %v5688, %v5753
  %v5773 = vadd.f32 %v5689, %v5763
  %v5774 = vadd.f32 %v5690, %v5757
  %v5775 = vadd.f32 %v5691, %v5764
  %v5776 = vadd.f32 %v5692, %v5761
  %5783 = vrot.lane.b32.xlu0 %v5654, 112
  %v5784 = vpop.permute.xlu0 %5783
  %5785 = vrot.lane.b32.xlu0 %v5655, 112
  %v5786 = vpop.permute.xlu0 %5785
  %5787 = vrot.lane.b32.xlu0 %v5656, 112
  %v5788 = vpop.permute.xlu0 %5787
  %5789 = vrot.lane.b32.xlu0 %v5657, 112
  %v5790 = vpop.permute.xlu0 %5789
  %5791 = vrot.lane.b32.xlu0 %v5658, 112
  %v5792 = vpop.permute.xlu0 %5791
  %5793 = vrot.lane.b32.xlu0 %v5659, 112
  %v5794 = vpop.permute.xlu0 %5793
  %v5795 = vsel %vm207, %v5784, %v5786
  %v5796 = vsel %vm207, %v5788, %v5790
  %v5797 = vsel %vm207, %v5792, %v5794
  %v5804 = vadd.f32 %v5738, %v5795
  %v5805 = vadd.f32 %v5739, %v5786
  %v5806 = vadd.f32 %v5740, %v5796
  %v5807 = vadd.f32 %v5741, %v5790
  %v5808 = vadd.f32 %v5742, %v5797
  %v5809 = vadd.f32 %v5743, %v5794
  %5816 = vrot.lane.b32.xlu0 %v5804, 96
  %v5817 = vpop.permute.xlu0 %5816
  %5818 = vrot.lane.b32.xlu0 %v5805, 96
  %v5819 = vpop.permute.xlu0 %5818
  %5820 = vrot.lane.b32.xlu0 %v5806, 96
  %v5821 = vpop.permute.xlu0 %5820
  %5822 = vrot.lane.b32.xlu0 %v5807, 96
  %v5823 = vpop.permute.xlu0 %5822
  %5824 = vrot.lane.b32.xlu0 %v5808, 96
  %v5825 = vpop.permute.xlu0 %5824
  %5826 = vrot.lane.b32.xlu0 %v5809, 96
  %v5827 = vpop.permute.xlu0 %5826
  %v5828 = vsel %vm618, %v5817, %v5819
  %v5829 = vsel %vm618, %v5821, %v5823
  %v5830 = vsel %vm618, %v5825, %v5827
  %v5837 = vadd.f32 %v5771, %v5817
  %v5838 = vadd.f32 %v5772, %v5828
  %v5839 = vadd.f32 %v5773, %v5821
  %v5840 = vadd.f32 %v5774, %v5829
  %v5841 = vadd.f32 %v5775, %v5825
  %v5842 = vadd.f32 %v5776, %v5830
  %v5843 = vlaneseq
  %v5844 = vshrl.u32 %v5843, 7
  %v5845 = vsub.s32 0, %v5844
  %v5846 = vrot.slane %v5016, %v5845
  %5848 = vrot.lane.b32.xlu0 %v5846, 104
  %v5849 = vpop.permute.xlu0 %5848
  %v5851 = vmul.f32 %v3712, %v5849
  %v5852 = vmul.f32 %v3713, %v5849
  %v5853 = vmul.f32 %v3715, %v5849
  %v5854 = vmul.f32 %v3716, %v5849
  %v5855 = vlaneseq
  %v5856 = vshrl.u32 %v5855, 7
  %v5857 = vsub.s32 1, %v5856
  %v5858 = vrot.slane %v5016, %v5857
  %5860 = vrot.lane.b32.xlu0 %v5858, 112
  %v5861 = vpop.permute.xlu0 %5860
  %v5863 = vmul.f32 %v3712, %v5861
  %v5864 = vmul.f32 %v3713, %v5861
  %v5865 = vmul.f32 %v3715, %v5861
  %v5866 = vmul.f32 %v3716, %v5861
  %v5867 = vlaneseq
  %v5868 = vshrl.u32 %v5867, 7
  %v5869 = vsub.s32 2, %v5868
  %v5870 = vrot.slane %v5016, %v5869
  %5872 = vrot.lane.b32.xlu0 %v5870, 120
  %v5873 = vpop.permute.xlu0 %5872
  %v5875 = vmul.f32 %v3712, %v5873
  %v5876 = vmul.f32 %v3713, %v5873
  %v5877 = vmul.f32 %v3715, %v5873
  %v5878 = vmul.f32 %v3716, %v5873
  %v5879 = vlaneseq
  %v5880 = vshrl.u32 %v5879, 7
  %v5881 = vsub.s32 3, %v5880
  %v5882 = vrot.slane %v5016, %v5881
  %v5883 = vmul.f32 %v3713, %v5882
  %v5884 = vmul.f32 %v3716, %v5882
  %v5885 = vlaneseq
  %v5886 = vshrl.u32 %v5885, 7
  %v5887 = vsub.s32 4, %v5886
  %v5888 = vrot.slane %v5016, %v5887
  %5890 = vrot.lane.b32.xlu0 %v5888, 8
  %v5891 = vpop.permute.xlu0 %5890
  %v5893 = vmul.f32 %v3713, %v5891
  %v5894 = vmul.f32 %v3714, %v5891
  %v5895 = vmul.f32 %v3716, %v5891
  %v5896 = vmul.f32 %v3717, %v5891
  %v5897 = vlaneseq
  %v5898 = vshrl.u32 %v5897, 7
  %v5899 = vsub.s32 5, %v5898
  %v5900 = vrot.slane %v5016, %v5899
  %5902 = vrot.lane.b32.xlu0 %v5900, 16
  %v5903 = vpop.permute.xlu0 %5902
  %v5905 = vmul.f32 %v3713, %v5903
  %v5906 = vmul.f32 %v3714, %v5903
  %v5907 = vmul.f32 %v3716, %v5903
  %v5908 = vmul.f32 %v3717, %v5903
  %v5909 = vlaneseq
  %v5910 = vshrl.u32 %v5909, 7
  %v5911 = vsub.s32 6, %v5910
  %v5912 = vrot.slane %v5016, %v5911
  %5914 = vrot.lane.b32.xlu0 %v5912, 24
  %v5915 = vpop.permute.xlu0 %5914
  %v5917 = vmul.f32 %v3713, %v5915
  %v5918 = vmul.f32 %v3714, %v5915
  %v5919 = vmul.f32 %v3716, %v5915
  %v5920 = vmul.f32 %v3717, %v5915
  %5925 = vrot.lane.b32.xlu0 %v5863, 120
  %v5926 = vpop.permute.xlu0 %5925
  %5927 = vrot.lane.b32.xlu0 %v5864, 120
  %v5928 = vpop.permute.xlu0 %5927
  %5929 = vrot.lane.b32.xlu0 %v5865, 120
  %v5930 = vpop.permute.xlu0 %5929
  %5931 = vrot.lane.b32.xlu0 %v5866, 120
  %v5932 = vpop.permute.xlu0 %5931
  %v5933 = vsel %vm539, %v5926, %v5928
  %v5934 = vsel %vm539, %v5930, %v5932
  %v5939 = vadd.f32 %v5851, %v5933
  %v5940 = vadd.f32 %v5852, %v5928
  %v5941 = vadd.f32 %v5853, %v5934
  %v5942 = vadd.f32 %v5854, %v5932
  %5945 = vrot.lane.b32.xlu0 %v5883, 120
  %v5946 = vpop.permute.xlu0 %5945
  %5947 = vrot.lane.b32.xlu0 %v5884, 120
  %v5948 = vpop.permute.xlu0 %5947
  %v5951 = vadd.f32 %v5875, %v5946
  %v5952 = vadd.f32 %v5876, %v5946
  %v5953 = vadd.f32 %v5877, %v5948
  %v5954 = vadd.f32 %v5878, %v5948
  %5959 = vrot.lane.b32.xlu0 %v5905, 120
  %v5960 = vpop.permute.xlu0 %5959
  %5961 = vrot.lane.b32.xlu0 %v5906, 120
  %v5962 = vpop.permute.xlu0 %5961
  %5963 = vrot.lane.b32.xlu0 %v5907, 120
  %v5964 = vpop.permute.xlu0 %5963
  %5965 = vrot.lane.b32.xlu0 %v5908, 120
  %v5966 = vpop.permute.xlu0 %5965
  %v5967 = vsel %vm539, %v5960, %v5962
  %v5968 = vsel %vm539, %v5964, %v5966
  %v5973 = vadd.f32 %v5893, %v5967
  %v5974 = vadd.f32 %v5894, %v5962
  %v5975 = vadd.f32 %v5895, %v5968
  %v5976 = vadd.f32 %v5896, %v5966
  %5981 = vrot.lane.b32.xlu0 %v5951, 112
  %v5982 = vpop.permute.xlu0 %5981
  %5983 = vrot.lane.b32.xlu0 %v5952, 112
  %v5984 = vpop.permute.xlu0 %5983
  %5985 = vrot.lane.b32.xlu0 %v5953, 112
  %v5986 = vpop.permute.xlu0 %5985
  %5987 = vrot.lane.b32.xlu0 %v5954, 112
  %v5988 = vpop.permute.xlu0 %5987
  %v5989 = vsel %vm207, %v5982, %v5984
  %v5990 = vsel %vm207, %v5986, %v5988
  %v5995 = vadd.f32 %v5939, %v5989
  %v5996 = vadd.f32 %v5940, %v5984
  %v5997 = vadd.f32 %v5941, %v5990
  %v5998 = vadd.f32 %v5942, %v5988
  %6003 = vrot.lane.b32.xlu0 %v5917, 112
  %v6004 = vpop.permute.xlu0 %6003
  %6005 = vrot.lane.b32.xlu0 %v5918, 112
  %v6006 = vpop.permute.xlu0 %6005
  %6007 = vrot.lane.b32.xlu0 %v5919, 112
  %v6008 = vpop.permute.xlu0 %6007
  %6009 = vrot.lane.b32.xlu0 %v5920, 112
  %v6010 = vpop.permute.xlu0 %6009
  %v6011 = vsel %vm207, %v6004, %v6006
  %v6012 = vsel %vm207, %v6008, %v6010
  %v6017 = vadd.f32 %v5973, %v6011
  %v6018 = vadd.f32 %v5974, %v6006
  %v6019 = vadd.f32 %v5975, %v6012
  %v6020 = vadd.f32 %v5976, %v6010
  %6025 = vrot.lane.b32.xlu0 %v6017, 96
  %v6026 = vpop.permute.xlu0 %6025
  %6027 = vrot.lane.b32.xlu0 %v6018, 96
  %v6028 = vpop.permute.xlu0 %6027
  %6029 = vrot.lane.b32.xlu0 %v6019, 96
  %v6030 = vpop.permute.xlu0 %6029
  %6031 = vrot.lane.b32.xlu0 %v6020, 96
  %v6032 = vpop.permute.xlu0 %6031
  %v6033 = vsel %vm618, %v6026, %v6028
  %v6034 = vsel %vm618, %v6030, %v6032
  %v6039 = vadd.f32 %v5995, %v6026
  %v6040 = vadd.f32 %v5996, %v6033
  %v6041 = vadd.f32 %v5997, %v6030
  %v6042 = vadd.f32 %v5998, %v6034
  %v6043 = vlaneseq
  %v6044 = vshrl.u32 %v6043, 7
  %v6045 = vsub.s32 0, %v6044
  %v6046 = vrot.slane %v5017, %v6045
  %6048 = vrot.lane.b32.xlu0 %v6046, 104
  %v6049 = vpop.permute.xlu0 %6048
  %v6051 = vmul.f32 %v3712, %v6049
  %v6052 = vmul.f32 %v3713, %v6049
  %v6053 = vmul.f32 %v3715, %v6049
  %v6054 = vmul.f32 %v3716, %v6049
  %v6055 = vmul.f32 %v3718, %v6049
  %v6056 = vmul.f32 %v3719, %v6049
  %v6057 = vlaneseq
  %v6058 = vshrl.u32 %v6057, 7
  %v6059 = vsub.s32 1, %v6058
  %v6060 = vrot.slane %v5017, %v6059
  %6062 = vrot.lane.b32.xlu0 %v6060, 112
  %v6063 = vpop.permute.xlu0 %6062
  %v6065 = vmul.f32 %v3712, %v6063
  %v6066 = vmul.f32 %v3713, %v6063
  %v6067 = vmul.f32 %v3715, %v6063
  %v6068 = vmul.f32 %v3716, %v6063
  %v6069 = vmul.f32 %v3718, %v6063
  %v6070 = vmul.f32 %v3719, %v6063
  %v6071 = vlaneseq
  %v6072 = vshrl.u32 %v6071, 7
  %v6073 = vsub.s32 2, %v6072
  %v6074 = vrot.slane %v5017, %v6073
  %6076 = vrot.lane.b32.xlu0 %v6074, 120
  %v6077 = vpop.permute.xlu0 %6076
  %v6079 = vmul.f32 %v3712, %v6077
  %v6080 = vmul.f32 %v3713, %v6077
  %v6081 = vmul.f32 %v3715, %v6077
  %v6082 = vmul.f32 %v3716, %v6077
  %v6083 = vmul.f32 %v3718, %v6077
  %v6084 = vmul.f32 %v3719, %v6077
  %v6085 = vlaneseq
  %v6086 = vshrl.u32 %v6085, 7
  %v6087 = vsub.s32 3, %v6086
  %v6088 = vrot.slane %v5017, %v6087
  %v6089 = vmul.f32 %v3713, %v6088
  %v6090 = vmul.f32 %v3716, %v6088
  %v6091 = vmul.f32 %v3719, %v6088
  %v6092 = vlaneseq
  %v6093 = vshrl.u32 %v6092, 7
  %v6094 = vsub.s32 4, %v6093
  %v6095 = vrot.slane %v5017, %v6094
  %6097 = vrot.lane.b32.xlu0 %v6095, 8
  %v6098 = vpop.permute.xlu0 %6097
  %v6100 = vmul.f32 %v3713, %v6098
  %v6101 = vmul.f32 %v3714, %v6098
  %v6102 = vmul.f32 %v3716, %v6098
  %v6103 = vmul.f32 %v3717, %v6098
  %v6104 = vmul.f32 %v3719, %v6098
  %v6105 = vmul.f32 %v3720, %v6098
  %v6106 = vlaneseq
  %v6107 = vshrl.u32 %v6106, 7
  %v6108 = vsub.s32 5, %v6107
  %v6109 = vrot.slane %v5017, %v6108
  %6111 = vrot.lane.b32.xlu0 %v6109, 16
  %v6112 = vpop.permute.xlu0 %6111
  %v6114 = vmul.f32 %v3713, %v6112
  %v6115 = vmul.f32 %v3714, %v6112
  %v6116 = vmul.f32 %v3716, %v6112
  %v6117 = vmul.f32 %v3717, %v6112
  %v6118 = vmul.f32 %v3719, %v6112
  %v6119 = vmul.f32 %v3720, %v6112
  %v6120 = vlaneseq
  %v6121 = vshrl.u32 %v6120, 7
  %v6122 = vsub.s32 6, %v6121
  %v6123 = vrot.slane %v5017, %v6122
  %6125 = vrot.lane.b32.xlu0 %v6123, 24
  %v6126 = vpop.permute.xlu0 %6125
  %v6128 = vmul.f32 %v3713, %v6126
  %v6129 = vmul.f32 %v3714, %v6126
  %v6130 = vmul.f32 %v3716, %v6126
  %v6131 = vmul.f32 %v3717, %v6126
  %v6132 = vmul.f32 %v3719, %v6126
  %v6133 = vmul.f32 %v3720, %v6126
  %6140 = vrot.lane.b32.xlu0 %v6065, 120
  %v6141 = vpop.permute.xlu0 %6140
  %6142 = vrot.lane.b32.xlu0 %v6066, 120
  %v6143 = vpop.permute.xlu0 %6142
  %6144 = vrot.lane.b32.xlu0 %v6067, 120
  %v6145 = vpop.permute.xlu0 %6144
  %6146 = vrot.lane.b32.xlu0 %v6068, 120
  %v6147 = vpop.permute.xlu0 %6146
  %6148 = vrot.lane.b32.xlu0 %v6069, 120
  %v6149 = vpop.permute.xlu0 %6148
  %6150 = vrot.lane.b32.xlu0 %v6070, 120
  %v6151 = vpop.permute.xlu0 %6150
  %v6152 = vsel %vm539, %v6141, %v6143
  %v6153 = vsel %vm539, %v6145, %v6147
  %v6154 = vsel %vm539, %v6149, %v6151
  %v6161 = vadd.f32 %v6051, %v6152
  %v6162 = vadd.f32 %v6052, %v6143
  %v6163 = vadd.f32 %v6053, %v6153
  %v6164 = vadd.f32 %v6054, %v6147
  %v6165 = vadd.f32 %v6055, %v6154
  %v6166 = vadd.f32 %v6056, %v6151
  %6170 = vrot.lane.b32.xlu0 %v6089, 120
  %v6171 = vpop.permute.xlu0 %6170
  %6172 = vrot.lane.b32.xlu0 %v6090, 120
  %v6173 = vpop.permute.xlu0 %6172
  %6174 = vrot.lane.b32.xlu0 %v6091, 120
  %v6175 = vpop.permute.xlu0 %6174
  %v6179 = vadd.f32 %v6079, %v6171
  %v6180 = vadd.f32 %v6080, %v6171
  %v6181 = vadd.f32 %v6081, %v6173
  %v6182 = vadd.f32 %v6082, %v6173
  %v6183 = vadd.f32 %v6083, %v6175
  %v6184 = vadd.f32 %v6084, %v6175
  %6191 = vrot.lane.b32.xlu0 %v6114, 120
  %v6192 = vpop.permute.xlu0 %6191
  %6193 = vrot.lane.b32.xlu0 %v6115, 120
  %v6194 = vpop.permute.xlu0 %6193
  %6195 = vrot.lane.b32.xlu0 %v6116, 120
  %v6196 = vpop.permute.xlu0 %6195
  %6197 = vrot.lane.b32.xlu0 %v6117, 120
  %v6198 = vpop.permute.xlu0 %6197
  %6199 = vrot.lane.b32.xlu0 %v6118, 120
  %v6200 = vpop.permute.xlu0 %6199
  %6201 = vrot.lane.b32.xlu0 %v6119, 120
  %v6202 = vpop.permute.xlu0 %6201
  %v6203 = vsel %vm539, %v6192, %v6194
  %v6204 = vsel %vm539, %v6196, %v6198
  %v6205 = vsel %vm539, %v6200, %v6202
  %v6212 = vadd.f32 %v6100, %v6203
  %v6213 = vadd.f32 %v6101, %v6194
  %v6214 = vadd.f32 %v6102, %v6204
  %v6215 = vadd.f32 %v6103, %v6198
  %v6216 = vadd.f32 %v6104, %v6205
  %v6217 = vadd.f32 %v6105, %v6202
  %6224 = vrot.lane.b32.xlu0 %v6179, 112
  %v6225 = vpop.permute.xlu0 %6224
  %6226 = vrot.lane.b32.xlu0 %v6180, 112
  %v6227 = vpop.permute.xlu0 %6226
  %6228 = vrot.lane.b32.xlu0 %v6181, 112
  %v6229 = vpop.permute.xlu0 %6228
  %6230 = vrot.lane.b32.xlu0 %v6182, 112
  %v6231 = vpop.permute.xlu0 %6230
  %6232 = vrot.lane.b32.xlu0 %v6183, 112
  %v6233 = vpop.permute.xlu0 %6232
  %6234 = vrot.lane.b32.xlu0 %v6184, 112
  %v6235 = vpop.permute.xlu0 %6234
  %v6236 = vsel %vm207, %v6225, %v6227
  %v6237 = vsel %vm207, %v6229, %v6231
  %v6238 = vsel %vm207, %v6233, %v6235
  %v6245 = vadd.f32 %v6161, %v6236
  %v6246 = vadd.f32 %v6162, %v6227
  %v6247 = vadd.f32 %v6163, %v6237
  %v6248 = vadd.f32 %v6164, %v6231
  %v6249 = vadd.f32 %v6165, %v6238
  %v6250 = vadd.f32 %v6166, %v6235
  %6257 = vrot.lane.b32.xlu0 %v6128, 112
  %v6258 = vpop.permute.xlu0 %6257
  %6259 = vrot.lane.b32.xlu0 %v6129, 112
  %v6260 = vpop.permute.xlu0 %6259
  %6261 = vrot.lane.b32.xlu0 %v6130, 112
  %v6262 = vpop.permute.xlu0 %6261
  %6263 = vrot.lane.b32.xlu0 %v6131, 112
  %v6264 = vpop.permute.xlu0 %6263
  %6265 = vrot.lane.b32.xlu0 %v6132, 112
  %v6266 = vpop.permute.xlu0 %6265
  %6267 = vrot.lane.b32.xlu0 %v6133, 112
  %v6268 = vpop.permute.xlu0 %6267
  %v6269 = vsel %vm207, %v6258, %v6260
  %v6270 = vsel %vm207, %v6262, %v6264
  %v6271 = vsel %vm207, %v6266, %v6268
  %v6278 = vadd.f32 %v6212, %v6269
  %v6279 = vadd.f32 %v6213, %v6260
  %v6280 = vadd.f32 %v6214, %v6270
  %v6281 = vadd.f32 %v6215, %v6264
  %v6282 = vadd.f32 %v6216, %v6271
  %v6283 = vadd.f32 %v6217, %v6268
  %6290 = vrot.lane.b32.xlu0 %v6278, 96
  %v6291 = vpop.permute.xlu0 %6290
  %6292 = vrot.lane.b32.xlu0 %v6279, 96
  %v6293 = vpop.permute.xlu0 %6292
  %6294 = vrot.lane.b32.xlu0 %v6280, 96
  %v6295 = vpop.permute.xlu0 %6294
  %6296 = vrot.lane.b32.xlu0 %v6281, 96
  %v6297 = vpop.permute.xlu0 %6296
  %6298 = vrot.lane.b32.xlu0 %v6282, 96
  %v6299 = vpop.permute.xlu0 %6298
  %6300 = vrot.lane.b32.xlu0 %v6283, 96
  %v6301 = vpop.permute.xlu0 %6300
  %v6302 = vsel %vm618, %v6291, %v6293
  %v6303 = vsel %vm618, %v6295, %v6297
  %v6304 = vsel %vm618, %v6299, %v6301
  %v6311 = vadd.f32 %v6245, %v6291
  %v6312 = vadd.f32 %v6246, %v6302
  %v6313 = vadd.f32 %v6247, %v6295
  %v6314 = vadd.f32 %v6248, %v6303
  %v6315 = vadd.f32 %v6249, %v6299
  %v6316 = vadd.f32 %v6250, %v6304
  %v6317 = vlaneseq
  %v6318 = vshrl.u32 %v6317, 7
  %v6319 = vsub.s32 0, %v6318
  %v6320 = vrot.slane %v5018, %v6319
  %6322 = vrot.lane.b32.xlu0 %v6320, 104
  %v6323 = vpop.permute.xlu0 %6322
  %v6325 = vmul.f32 %v3712, %v6323
  %v6326 = vmul.f32 %v3713, %v6323
  %v6327 = vmul.f32 %v3715, %v6323
  %v6328 = vmul.f32 %v3716, %v6323
  %v6329 = vmul.f32 %v3718, %v6323
  %v6330 = vmul.f32 %v3719, %v6323
  %v6331 = vlaneseq
  %v6332 = vshrl.u32 %v6331, 7
  %v6333 = vsub.s32 1, %v6332
  %v6334 = vrot.slane %v5018, %v6333
  %6336 = vrot.lane.b32.xlu0 %v6334, 112
  %v6337 = vpop.permute.xlu0 %6336
  %v6339 = vmul.f32 %v3712, %v6337
  %v6340 = vmul.f32 %v3713, %v6337
  %v6341 = vmul.f32 %v3715, %v6337
  %v6342 = vmul.f32 %v3716, %v6337
  %v6343 = vmul.f32 %v3718, %v6337
  %v6344 = vmul.f32 %v3719, %v6337
  %v6345 = vlaneseq
  %v6346 = vshrl.u32 %v6345, 7
  %v6347 = vsub.s32 2, %v6346
  %v6348 = vrot.slane %v5018, %v6347
  %6350 = vrot.lane.b32.xlu0 %v6348, 120
  %v6351 = vpop.permute.xlu0 %6350
  %v6353 = vmul.f32 %v3712, %v6351
  %v6354 = vmul.f32 %v3713, %v6351
  %v6355 = vmul.f32 %v3715, %v6351
  %v6356 = vmul.f32 %v3716, %v6351
  %v6357 = vmul.f32 %v3718, %v6351
  %v6358 = vmul.f32 %v3719, %v6351
  %v6359 = vlaneseq
  %v6360 = vshrl.u32 %v6359, 7
  %v6361 = vsub.s32 3, %v6360
  %v6362 = vrot.slane %v5018, %v6361
  %v6363 = vmul.f32 %v3713, %v6362
  %v6364 = vmul.f32 %v3716, %v6362
  %v6365 = vmul.f32 %v3719, %v6362
  %v6366 = vlaneseq
  %v6367 = vshrl.u32 %v6366, 7
  %v6368 = vsub.s32 4, %v6367
  %v6369 = vrot.slane %v5018, %v6368
  %6371 = vrot.lane.b32.xlu0 %v6369, 8
  %v6372 = vpop.permute.xlu0 %6371
  %v6374 = vmul.f32 %v3713, %v6372
  %v6375 = vmul.f32 %v3714, %v6372
  %v6376 = vmul.f32 %v3716, %v6372
  %v6377 = vmul.f32 %v3717, %v6372
  %v6378 = vmul.f32 %v3719, %v6372
  %v6379 = vmul.f32 %v3720, %v6372
  %v6380 = vlaneseq
  %v6381 = vshrl.u32 %v6380, 7
  %v6382 = vsub.s32 5, %v6381
  %v6383 = vrot.slane %v5018, %v6382
  %6385 = vrot.lane.b32.xlu0 %v6383, 16
  %v6386 = vpop.permute.xlu0 %6385
  %v6388 = vmul.f32 %v3713, %v6386
  %v6389 = vmul.f32 %v3714, %v6386
  %v6390 = vmul.f32 %v3716, %v6386
  %v6391 = vmul.f32 %v3717, %v6386
  %v6392 = vmul.f32 %v3719, %v6386
  %v6393 = vmul.f32 %v3720, %v6386
  %v6394 = vlaneseq
  %v6395 = vshrl.u32 %v6394, 7
  %v6396 = vsub.s32 6, %v6395
  %v6397 = vrot.slane %v5018, %v6396
  %6399 = vrot.lane.b32.xlu0 %v6397, 24
  %v6400 = vpop.permute.xlu0 %6399
  %v6402 = vmul.f32 %v3713, %v6400
  %v6403 = vmul.f32 %v3714, %v6400
  %v6404 = vmul.f32 %v3716, %v6400
  %v6405 = vmul.f32 %v3717, %v6400
  %v6406 = vmul.f32 %v3719, %v6400
  %v6407 = vmul.f32 %v3720, %v6400
  %6414 = vrot.lane.b32.xlu0 %v6339, 120
  %v6415 = vpop.permute.xlu0 %6414
  %6416 = vrot.lane.b32.xlu0 %v6340, 120
  %v6417 = vpop.permute.xlu0 %6416
  %6418 = vrot.lane.b32.xlu0 %v6341, 120
  %v6419 = vpop.permute.xlu0 %6418
  %6420 = vrot.lane.b32.xlu0 %v6342, 120
  %v6421 = vpop.permute.xlu0 %6420
  %6422 = vrot.lane.b32.xlu0 %v6343, 120
  %v6423 = vpop.permute.xlu0 %6422
  %6424 = vrot.lane.b32.xlu0 %v6344, 120
  %v6425 = vpop.permute.xlu0 %6424
  %v6426 = vsel %vm539, %v6415, %v6417
  %v6427 = vsel %vm539, %v6419, %v6421
  %v6428 = vsel %vm539, %v6423, %v6425
  %v6435 = vadd.f32 %v6325, %v6426
  %v6436 = vadd.f32 %v6326, %v6417
  %v6437 = vadd.f32 %v6327, %v6427
  %v6438 = vadd.f32 %v6328, %v6421
  %v6439 = vadd.f32 %v6329, %v6428
  %v6440 = vadd.f32 %v6330, %v6425
  %6444 = vrot.lane.b32.xlu0 %v6363, 120
  %v6445 = vpop.permute.xlu0 %6444
  %6446 = vrot.lane.b32.xlu0 %v6364, 120
  %v6447 = vpop.permute.xlu0 %6446
  %6448 = vrot.lane.b32.xlu0 %v6365, 120
  %v6449 = vpop.permute.xlu0 %6448
  %v6453 = vadd.f32 %v6353, %v6445
  %v6454 = vadd.f32 %v6354, %v6445
  %v6455 = vadd.f32 %v6355, %v6447
  %v6456 = vadd.f32 %v6356, %v6447
  %v6457 = vadd.f32 %v6357, %v6449
  %v6458 = vadd.f32 %v6358, %v6449
  %6465 = vrot.lane.b32.xlu0 %v6388, 120
  %v6466 = vpop.permute.xlu0 %6465
  %6467 = vrot.lane.b32.xlu0 %v6389, 120
  %v6468 = vpop.permute.xlu0 %6467
  %6469 = vrot.lane.b32.xlu0 %v6390, 120
  %v6470 = vpop.permute.xlu0 %6469
  %6471 = vrot.lane.b32.xlu0 %v6391, 120
  %v6472 = vpop.permute.xlu0 %6471
  %6473 = vrot.lane.b32.xlu0 %v6392, 120
  %v6474 = vpop.permute.xlu0 %6473
  %6475 = vrot.lane.b32.xlu0 %v6393, 120
  %v6476 = vpop.permute.xlu0 %6475
  %v6477 = vsel %vm539, %v6466, %v6468
  %v6478 = vsel %vm539, %v6470, %v6472
  %v6479 = vsel %vm539, %v6474, %v6476
  %v6486 = vadd.f32 %v6374, %v6477
  %v6487 = vadd.f32 %v6375, %v6468
  %v6488 = vadd.f32 %v6376, %v6478
  %v6489 = vadd.f32 %v6377, %v6472
  %v6490 = vadd.f32 %v6378, %v6479
  %v6491 = vadd.f32 %v6379, %v6476
  %6498 = vrot.lane.b32.xlu0 %v6453, 112
  %v6499 = vpop.permute.xlu0 %6498
  %6500 = vrot.lane.b32.xlu0 %v6454, 112
  %v6501 = vpop.permute.xlu0 %6500
  %6502 = vrot.lane.b32.xlu0 %v6455, 112
  %v6503 = vpop.permute.xlu0 %6502
  %6504 = vrot.lane.b32.xlu0 %v6456, 112
  %v6505 = vpop.permute.xlu0 %6504
  %6506 = vrot.lane.b32.xlu0 %v6457, 112
  %v6507 = vpop.permute.xlu0 %6506
  %6508 = vrot.lane.b32.xlu0 %v6458, 112
  %v6509 = vpop.permute.xlu0 %6508
  %v6510 = vsel %vm207, %v6499, %v6501
  %v6511 = vsel %vm207, %v6503, %v6505
  %v6512 = vsel %vm207, %v6507, %v6509
  %v6519 = vadd.f32 %v6435, %v6510
  %v6520 = vadd.f32 %v6436, %v6501
  %v6521 = vadd.f32 %v6437, %v6511
  %v6522 = vadd.f32 %v6438, %v6505
  %v6523 = vadd.f32 %v6439, %v6512
  %v6524 = vadd.f32 %v6440, %v6509
  %6531 = vrot.lane.b32.xlu0 %v6402, 112
  %v6532 = vpop.permute.xlu0 %6531
  %6533 = vrot.lane.b32.xlu0 %v6403, 112
  %v6534 = vpop.permute.xlu0 %6533
  %6535 = vrot.lane.b32.xlu0 %v6404, 112
  %v6536 = vpop.permute.xlu0 %6535
  %6537 = vrot.lane.b32.xlu0 %v6405, 112
  %v6538 = vpop.permute.xlu0 %6537
  %6539 = vrot.lane.b32.xlu0 %v6406, 112
  %v6540 = vpop.permute.xlu0 %6539
  %6541 = vrot.lane.b32.xlu0 %v6407, 112
  %v6542 = vpop.permute.xlu0 %6541
  %v6543 = vsel %vm207, %v6532, %v6534
  %v6544 = vsel %vm207, %v6536, %v6538
  %v6545 = vsel %vm207, %v6540, %v6542
  %v6552 = vadd.f32 %v6486, %v6543
  %v6553 = vadd.f32 %v6487, %v6534
  %v6554 = vadd.f32 %v6488, %v6544
  %v6555 = vadd.f32 %v6489, %v6538
  %v6556 = vadd.f32 %v6490, %v6545
  %v6557 = vadd.f32 %v6491, %v6542
  %6564 = vrot.lane.b32.xlu0 %v6552, 96
  %v6565 = vpop.permute.xlu0 %6564
  %6566 = vrot.lane.b32.xlu0 %v6553, 96
  %v6567 = vpop.permute.xlu0 %6566
  %6568 = vrot.lane.b32.xlu0 %v6554, 96
  %v6569 = vpop.permute.xlu0 %6568
  %6570 = vrot.lane.b32.xlu0 %v6555, 96
  %v6571 = vpop.permute.xlu0 %6570
  %6572 = vrot.lane.b32.xlu0 %v6556, 96
  %v6573 = vpop.permute.xlu0 %6572
  %6574 = vrot.lane.b32.xlu0 %v6557, 96
  %v6575 = vpop.permute.xlu0 %6574
  %v6576 = vsel %vm618, %v6565, %v6567
  %v6577 = vsel %vm618, %v6569, %v6571
  %v6578 = vsel %vm618, %v6573, %v6575
  %v6585 = vadd.f32 %v6519, %v6565
  %v6586 = vadd.f32 %v6520, %v6576
  %v6587 = vadd.f32 %v6521, %v6569
  %v6588 = vadd.f32 %v6522, %v6577
  %v6589 = vadd.f32 %v6523, %v6573
  %v6590 = vadd.f32 %v6524, %v6578
  %v6591 = vlaneseq
  %v6592 = vshrl.u32 %v6591, 7
  %v6593 = vsub.s32 0, %v6592
  %v6594 = vrot.slane %v5019, %v6593
  %6596 = vrot.lane.b32.xlu0 %v6594, 104
  %v6597 = vpop.permute.xlu0 %6596
  %v6599 = vmul.f32 %v3712, %v6597
  %v6600 = vmul.f32 %v3713, %v6597
  %v6601 = vmul.f32 %v3715, %v6597
  %v6602 = vmul.f32 %v3716, %v6597
  %v6603 = vmul.f32 %v3718, %v6597
  %v6604 = vmul.f32 %v3719, %v6597
  %v6605 = vlaneseq
  %v6606 = vshrl.u32 %v6605, 7
  %v6607 = vsub.s32 1, %v6606
  %v6608 = vrot.slane %v5019, %v6607
  %6610 = vrot.lane.b32.xlu0 %v6608, 112
  %v6611 = vpop.permute.xlu0 %6610
  %v6613 = vmul.f32 %v3712, %v6611
  %v6614 = vmul.f32 %v3713, %v6611
  %v6615 = vmul.f32 %v3715, %v6611
  %v6616 = vmul.f32 %v3716, %v6611
  %v6617 = vmul.f32 %v3718, %v6611
  %v6618 = vmul.f32 %v3719, %v6611
  %v6619 = vlaneseq
  %v6620 = vshrl.u32 %v6619, 7
  %v6621 = vsub.s32 2, %v6620
  %v6622 = vrot.slane %v5019, %v6621
  %6624 = vrot.lane.b32.xlu0 %v6622, 120
  %v6625 = vpop.permute.xlu0 %6624
  %v6627 = vmul.f32 %v3712, %v6625
  %v6628 = vmul.f32 %v3713, %v6625
  %v6629 = vmul.f32 %v3715, %v6625
  %v6630 = vmul.f32 %v3716, %v6625
  %v6631 = vmul.f32 %v3718, %v6625
  %v6632 = vmul.f32 %v3719, %v6625
  %v6633 = vlaneseq
  %v6634 = vshrl.u32 %v6633, 7
  %v6635 = vsub.s32 3, %v6634
  %v6636 = vrot.slane %v5019, %v6635
  %v6637 = vmul.f32 %v3713, %v6636
  %v6638 = vmul.f32 %v3716, %v6636
  %v6639 = vmul.f32 %v3719, %v6636
  %v6640 = vlaneseq
  %v6641 = vshrl.u32 %v6640, 7
  %v6642 = vsub.s32 4, %v6641
  %v6643 = vrot.slane %v5019, %v6642
  %6645 = vrot.lane.b32.xlu0 %v6643, 8
  %v6646 = vpop.permute.xlu0 %6645
  %v6648 = vmul.f32 %v3713, %v6646
  %v6649 = vmul.f32 %v3714, %v6646
  %v6650 = vmul.f32 %v3716, %v6646
  %v6651 = vmul.f32 %v3717, %v6646
  %v6652 = vmul.f32 %v3719, %v6646
  %v6653 = vmul.f32 %v3720, %v6646
  %v6654 = vlaneseq
  %v6655 = vshrl.u32 %v6654, 7
  %v6656 = vsub.s32 5, %v6655
  %v6657 = vrot.slane %v5019, %v6656
  %6659 = vrot.lane.b32.xlu0 %v6657, 16
  %v6660 = vpop.permute.xlu0 %6659
  %v6662 = vmul.f32 %v3713, %v6660
  %v6663 = vmul.f32 %v3714, %v6660
  %v6664 = vmul.f32 %v3716, %v6660
  %v6665 = vmul.f32 %v3717, %v6660
  %v6666 = vmul.f32 %v3719, %v6660
  %v6667 = vmul.f32 %v3720, %v6660
  %v6668 = vlaneseq
  %v6669 = vshrl.u32 %v6668, 7
  %v6670 = vsub.s32 6, %v6669
  %v6671 = vrot.slane %v5019, %v6670
  %6673 = vrot.lane.b32.xlu0 %v6671, 24
  %v6674 = vpop.permute.xlu0 %6673
  %v6676 = vmul.f32 %v3713, %v6674
  %v6677 = vmul.f32 %v3714, %v6674
  %v6678 = vmul.f32 %v3716, %v6674
  %v6679 = vmul.f32 %v3717, %v6674
  %v6680 = vmul.f32 %v3719, %v6674
  %v6681 = vmul.f32 %v3720, %v6674
  %6688 = vrot.lane.b32.xlu0 %v6613, 120
  %v6689 = vpop.permute.xlu0 %6688
  %6690 = vrot.lane.b32.xlu0 %v6614, 120
  %v6691 = vpop.permute.xlu0 %6690
  %6692 = vrot.lane.b32.xlu0 %v6615, 120
  %v6693 = vpop.permute.xlu0 %6692
  %6694 = vrot.lane.b32.xlu0 %v6616, 120
  %v6695 = vpop.permute.xlu0 %6694
  %6696 = vrot.lane.b32.xlu0 %v6617, 120
  %v6697 = vpop.permute.xlu0 %6696
  %6698 = vrot.lane.b32.xlu0 %v6618, 120
  %v6699 = vpop.permute.xlu0 %6698
  %v6700 = vsel %vm539, %v6689, %v6691
  %v6701 = vsel %vm539, %v6693, %v6695
  %v6702 = vsel %vm539, %v6697, %v6699
  %v6709 = vadd.f32 %v6599, %v6700
  %v6710 = vadd.f32 %v6600, %v6691
  %v6711 = vadd.f32 %v6601, %v6701
  %v6712 = vadd.f32 %v6602, %v6695
  %v6713 = vadd.f32 %v6603, %v6702
  %v6714 = vadd.f32 %v6604, %v6699
  %6718 = vrot.lane.b32.xlu0 %v6637, 120
  %v6719 = vpop.permute.xlu0 %6718
  %6720 = vrot.lane.b32.xlu0 %v6638, 120
  %v6721 = vpop.permute.xlu0 %6720
  %6722 = vrot.lane.b32.xlu0 %v6639, 120
  %v6723 = vpop.permute.xlu0 %6722
  %v6727 = vadd.f32 %v6627, %v6719
  %v6728 = vadd.f32 %v6628, %v6719
  %v6729 = vadd.f32 %v6629, %v6721
  %v6730 = vadd.f32 %v6630, %v6721
  %v6731 = vadd.f32 %v6631, %v6723
  %v6732 = vadd.f32 %v6632, %v6723
  %6739 = vrot.lane.b32.xlu0 %v6662, 120
  %v6740 = vpop.permute.xlu0 %6739
  %6741 = vrot.lane.b32.xlu0 %v6663, 120
  %v6742 = vpop.permute.xlu0 %6741
  %6743 = vrot.lane.b32.xlu0 %v6664, 120
  %v6744 = vpop.permute.xlu0 %6743
  %6745 = vrot.lane.b32.xlu0 %v6665, 120
  %v6746 = vpop.permute.xlu0 %6745
  %6747 = vrot.lane.b32.xlu0 %v6666, 120
  %v6748 = vpop.permute.xlu0 %6747
  %6749 = vrot.lane.b32.xlu0 %v6667, 120
  %v6750 = vpop.permute.xlu0 %6749
  %v6751 = vsel %vm539, %v6740, %v6742
  %v6752 = vsel %vm539, %v6744, %v6746
  %v6753 = vsel %vm539, %v6748, %v6750
  %v6760 = vadd.f32 %v6648, %v6751
  %v6761 = vadd.f32 %v6649, %v6742
  %v6762 = vadd.f32 %v6650, %v6752
  %v6763 = vadd.f32 %v6651, %v6746
  %v6764 = vadd.f32 %v6652, %v6753
  %v6765 = vadd.f32 %v6653, %v6750
  %6772 = vrot.lane.b32.xlu0 %v6727, 112
  %v6773 = vpop.permute.xlu0 %6772
  %6774 = vrot.lane.b32.xlu0 %v6728, 112
  %v6775 = vpop.permute.xlu0 %6774
  %6776 = vrot.lane.b32.xlu0 %v6729, 112
  %v6777 = vpop.permute.xlu0 %6776
  %6778 = vrot.lane.b32.xlu0 %v6730, 112
  %v6779 = vpop.permute.xlu0 %6778
  %6780 = vrot.lane.b32.xlu0 %v6731, 112
  %v6781 = vpop.permute.xlu0 %6780
  %6782 = vrot.lane.b32.xlu0 %v6732, 112
  %v6783 = vpop.permute.xlu0 %6782
  %v6784 = vsel %vm207, %v6773, %v6775
  %v6785 = vsel %vm207, %v6777, %v6779
  %v6786 = vsel %vm207, %v6781, %v6783
  %v6793 = vadd.f32 %v6709, %v6784
  %v6794 = vadd.f32 %v6710, %v6775
  %v6795 = vadd.f32 %v6711, %v6785
  %v6796 = vadd.f32 %v6712, %v6779
  %v6797 = vadd.f32 %v6713, %v6786
  %v6798 = vadd.f32 %v6714, %v6783
  %6805 = vrot.lane.b32.xlu0 %v6676, 112
  %v6806 = vpop.permute.xlu0 %6805
  %6807 = vrot.lane.b32.xlu0 %v6677, 112
  %v6808 = vpop.permute.xlu0 %6807
  %6809 = vrot.lane.b32.xlu0 %v6678, 112
  %v6810 = vpop.permute.xlu0 %6809
  %6811 = vrot.lane.b32.xlu0 %v6679, 112
  %v6812 = vpop.permute.xlu0 %6811
  %6813 = vrot.lane.b32.xlu0 %v6680, 112
  %v6814 = vpop.permute.xlu0 %6813
  %6815 = vrot.lane.b32.xlu0 %v6681, 112
  %v6816 = vpop.permute.xlu0 %6815
  %v6817 = vsel %vm207, %v6806, %v6808
  %v6818 = vsel %vm207, %v6810, %v6812
  %v6819 = vsel %vm207, %v6814, %v6816
  %v6826 = vadd.f32 %v6760, %v6817
  %v6827 = vadd.f32 %v6761, %v6808
  %v6828 = vadd.f32 %v6762, %v6818
  %v6829 = vadd.f32 %v6763, %v6812
  %v6830 = vadd.f32 %v6764, %v6819
  %v6831 = vadd.f32 %v6765, %v6816
  %6838 = vrot.lane.b32.xlu0 %v6826, 96
  %v6839 = vpop.permute.xlu0 %6838
  %6840 = vrot.lane.b32.xlu0 %v6827, 96
  %v6841 = vpop.permute.xlu0 %6840
  %6842 = vrot.lane.b32.xlu0 %v6828, 96
  %v6843 = vpop.permute.xlu0 %6842
  %6844 = vrot.lane.b32.xlu0 %v6829, 96
  %v6845 = vpop.permute.xlu0 %6844
  %6846 = vrot.lane.b32.xlu0 %v6830, 96
  %v6847 = vpop.permute.xlu0 %6846
  %6848 = vrot.lane.b32.xlu0 %v6831, 96
  %v6849 = vpop.permute.xlu0 %6848
  %v6850 = vsel %vm618, %v6839, %v6841
  %v6851 = vsel %vm618, %v6843, %v6845
  %v6852 = vsel %vm618, %v6847, %v6849
  %v6859 = vadd.f32 %v6793, %v6839
  %v6860 = vadd.f32 %v6794, %v6850
  %v6861 = vadd.f32 %v6795, %v6843
  %v6862 = vadd.f32 %v6796, %v6851
  %v6863 = vadd.f32 %v6797, %v6847
  %v6864 = vadd.f32 %v6798, %v6852
  %v6871 = vrot.slane %v5563, 1
  %v6872 = vrot.slane %v5565, 1
  %v6873 = vsel %vm377, %v6871, %v6872
  %v6874 = vrot.slane %v5564, 1
  %v6875 = vrot.slane %v5566, 1
  %v6876 = vsel %vm377, %v6874, %v6875
  %v6877 = vrot.slane %v5567, 1
  %v6878 = vsel %vm377, %v6872, %v6877
  %v6879 = vrot.slane %v5568, 1
  %v6880 = vsel %vm377, %v6875, %v6879
  %v6887 = vadd.f32 %v5289, %v6873
  %v6888 = vadd.f32 %v5290, %v6876
  %v6889 = vadd.f32 %v5291, %v6878
  %v6890 = vadd.f32 %v5292, %v6880
  %v6891 = vadd.f32 %v5293, %v6877
  %v6892 = vadd.f32 %v5294, %v6879
  %v6897 = vrot.slane %v6039, 1
  %v6898 = vrot.slane %v6040, 1
  %v6899 = vrot.slane %v6041, 1
  %v6900 = vsel %vm377, %v6897, %v6899
  %v6901 = vrot.slane %v6042, 1
  %v6902 = vsel %vm377, %v6898, %v6901
  %v6909 = vadd.f32 %v5837, %v6897
  %v6910 = vadd.f32 %v5838, %v6898
  %v6911 = vadd.f32 %v5839, %v6900
  %v6912 = vadd.f32 %v5840, %v6902
  %v6913 = vadd.f32 %v5841, %v6899
  %v6914 = vadd.f32 %v5842, %v6901
  %v6921 = vrot.slane %v6585, 1
  %v6922 = vrot.slane %v6587, 1
  %v6923 = vsel %vm377, %v6921, %v6922
  %v6924 = vrot.slane %v6586, 1
  %v6925 = vrot.slane %v6588, 1
  %v6926 = vsel %vm377, %v6924, %v6925
  %v6927 = vrot.slane %v6589, 1
  %v6928 = vsel %vm377, %v6922, %v6927
  %v6929 = vrot.slane %v6590, 1
  %v6930 = vsel %vm377, %v6925, %v6929
  %v6937 = vadd.f32 %v6311, %v6923
  %v6938 = vadd.f32 %v6312, %v6926
  %v6939 = vadd.f32 %v6313, %v6928
  %v6940 = vadd.f32 %v6314, %v6930
  %v6941 = vadd.f32 %v6315, %v6927
  %v6942 = vadd.f32 %v6316, %v6929
  %v6949 = vrot.slane %v6909, 2
  %v6950 = vrot.slane %v6911, 2
  %v6951 = vsel %vm402, %v6949, %v6950
  %v6952 = vrot.slane %v6910, 2
  %v6953 = vrot.slane %v6912, 2
  %v6954 = vsel %vm402, %v6952, %v6953
  %v6955 = vrot.slane %v6913, 2
  %v6956 = vsel %vm402, %v6950, %v6955
  %v6957 = vrot.slane %v6914, 2
  %v6958 = vsel %vm402, %v6953, %v6957
  %v6965 = vadd.f32 %v6887, %v6951
  %v6966 = vadd.f32 %v6888, %v6954
  %v6967 = vadd.f32 %v6889, %v6956
  %v6968 = vadd.f32 %v6890, %v6958
  %v6969 = vadd.f32 %v6891, %v6955
  %v6970 = vadd.f32 %v6892, %v6957
  %v6977 = vrot.slane %v6859, 2
  %v6978 = vrot.slane %v6861, 2
  %v6979 = vsel %vm402, %v6977, %v6978
  %v6980 = vrot.slane %v6860, 2
  %v6981 = vrot.slane %v6862, 2
  %v6982 = vsel %vm402, %v6980, %v6981
  %v6983 = vrot.slane %v6863, 2
  %v6984 = vsel %vm402, %v6978, %v6983
  %v6985 = vrot.slane %v6864, 2
  %v6986 = vsel %vm402, %v6981, %v6985
  %v6993 = vadd.f32 %v6937, %v6979
  %v6994 = vadd.f32 %v6938, %v6982
  %v6995 = vadd.f32 %v6939, %v6984
  %v6996 = vadd.f32 %v6940, %v6986
  %v6997 = vadd.f32 %v6941, %v6983
  %v6998 = vadd.f32 %v6942, %v6985
  %v7005 = vrot.slane %v6993, 4
  %v7006 = vrot.slane %v6994, 4
  %v7007 = vrot.slane %v6995, 4
  %v7008 = vsel %vm1364, %v7005, %v7007
  %v7009 = vrot.slane %v6996, 4
  %v7010 = vsel %vm1364, %v7006, %v7009
  %v7011 = vrot.slane %v6997, 4
  %v7012 = vsel %vm1364, %v7007, %v7011
  %v7013 = vrot.slane %v6998, 4
  %v7014 = vsel %vm1364, %v7009, %v7013
  %v7021 = vadd.f32 %v6965, %v7005
  %v7022 = vadd.f32 %v6966, %v7006
  %v7023 = vadd.f32 %v6967, %v7008
  %v7024 = vadd.f32 %v6968, %v7010
  %v7025 = vadd.f32 %v6969, %v7012
  %v7026 = vadd.f32 %v6970, %v7014
  %v7027 = vlaneseq
  %v7028 = vshrl.u32 %v7027, 7
  %v7029 = vsub.s32 0, %v7028
  %v7030 = vrot.slane %v5020, %v7029
  %7032 = vrot.lane.b32.xlu0 %v7030, 104
  %v7033 = vpop.permute.xlu0 %7032
  %v7035 = vadd.f32 %v7021, %v7033
  %v7036 = vadd.f32 %v7022, %v7033
  %v7037 = vadd.f32 %v7023, %v7033
  %v7038 = vadd.f32 %v7024, %v7033
  %v7039 = vadd.f32 %v7025, %v7033
  %v7040 = vadd.f32 %v7026, %v7033
  %v7041 = vmax.f32 %v7035, 0.0
  %v7042 = vmax.f32 %v7036, 0.0
  %v7043 = vmax.f32 %v7037, 0.0
  %v7044 = vmax.f32 %v7038, 0.0
  %v7045 = vmax.f32 %v7039, 0.0
  %v7046 = vmax.f32 %v7040, 0.0
  %v7047 = vmin.f32 %v7041, 6.0
  %v7048 = vmin.f32 %v7042, 6.0
  %v7049 = vmin.f32 %v7043, 6.0
  %v7050 = vmin.f32 %v7044, 6.0
  %v7051 = vmin.f32 %v7045, 6.0
  %v7052 = vmin.f32 %v7046, 6.0
  %v7059 = vrot.slane %v4049, 7
  %v7060 = vrot.slane %v4051, 7
  %v7061 = vsel %vm3460, %v7059, %v7060
  %v7062 = vrot.slane %v4050, 7
  %v7063 = vrot.slane %v4052, 7
  %v7064 = vsel %vm3460, %v7062, %v7063
  %v7065 = vrot.slane %v4053, 7
  %v7066 = vsel %vm3460, %v7060, %v7065
  %v7067 = vrot.slane %v4054, 7
  %v7068 = vsel %vm3460, %v7063, %v7067
  %7069 = vrot.lane.b32.xlu0 %v7061, 8
  %v7070 = vpop.permute.xlu0 %7069
  %7071 = vrot.lane.b32.xlu0 %v7064, 8
  %v7072 = vpop.permute.xlu0 %7071
  %7073 = vrot.lane.b32.xlu0 %v7066, 8
  %v7074 = vpop.permute.xlu0 %7073
  %7075 = vrot.lane.b32.xlu0 %v7068, 8
  %v7076 = vpop.permute.xlu0 %7075
  %v7077 = vsel %vm3479, %v7070, %v7072
  %v7078 = vsel %vm3479, %v7074, %v7076
  %v7087 = vrot.slane %v5007, 6
  %v7088 = vrot.slane %v5009, 6
  %v7089 = vsel %vm3490, %v7087, %v7088
  %v7090 = vrot.slane %v5008, 6
  %v7091 = vrot.slane %v5010, 6
  %v7092 = vsel %vm3490, %v7090, %v7091
  %v7093 = vrot.slane %v5011, 6
  %v7094 = vsel %vm3490, %v7088, %v7093
  %v7095 = vrot.slane %v5012, 6
  %v7096 = vsel %vm3490, %v7091, %v7095
  %7097 = vrot.lane.b32.xlu0 %v7089, 16
  %v7098 = vpop.permute.xlu0 %7097
  %7099 = vrot.lane.b32.xlu0 %v7092, 16
  %v7100 = vpop.permute.xlu0 %7099
  %7101 = vrot.lane.b32.xlu0 %v7094, 16
  %v7102 = vpop.permute.xlu0 %7101
  %7103 = vrot.lane.b32.xlu0 %v7096, 16
  %v7104 = vpop.permute.xlu0 %7103
  %v7105 = vsel %vm3509, %v7098, %v7100
  %v7106 = vsel %vm3509, %v7102, %v7104
  %v7115 = vrot.slane %v7047, 5
  %v7116 = vrot.slane %v7049, 5
  %v7117 = vsel %vm3520, %v7115, %v7116
  %v7118 = vrot.slane %v7048, 5
  %v7119 = vrot.slane %v7050, 5
  %v7120 = vsel %vm3520, %v7118, %v7119
  %v7121 = vrot.slane %v7051, 5
  %v7122 = vsel %vm3520, %v7116, %v7121
  %v7123 = vrot.slane %v7052, 5
  %v7124 = vsel %vm3520, %v7119, %v7123
  %7125 = vrot.lane.b32.xlu0 %v7117, 24
  %v7126 = vpop.permute.xlu0 %7125
  %7127 = vrot.lane.b32.xlu0 %v7120, 24
  %v7128 = vpop.permute.xlu0 %7127
  %7129 = vrot.lane.b32.xlu0 %v7122, 24
  %v7130 = vpop.permute.xlu0 %7129
  %7131 = vrot.lane.b32.xlu0 %v7124, 24
  %v7132 = vpop.permute.xlu0 %7131
  %v7133 = vsel %vm3539, %v7126, %v7128
  %v7134 = vsel %vm3539, %v7130, %v7132
  %7137 = vmatprep.subr.mxu0 0.0
  %7138 = vmatpush1.msra.mxu0 %v20
  %7139 = vmatprep.subr.mxu0 0.0
  %7140 = vmatpush1.msra.mxu0 %v21
  %7141 = vmatprep.subr.mxu0 0.0
  %7142 = vmatpush1.msra.mxu0 %v22
  %7143 = vmatprep.subr.mxu0 0.0
  %7144 = vmatpush1.msra.mxu0 %v23
  %7145 = vmatprep.subr.mxu0 0.0
  %7146 = vmatpush1.msra.mxu0 %v24
  %7147 = vmatprep.subr.mxu0 0.0
  %7148 = vmatpush1.msra.mxu0 %v25
  %7149 = vmatprep.subr.mxu0 0.0
  %7150 = vmatpush1.msra.mxu0 %v26
  %7151 = vmatprep.subr.mxu0 0.0
  %7152 = vmatpush1.msra.mxu0 %v27
  %7153 = vmatprep.subr.mxu0 0.0
  %7154 = vmatpush1.msra.mxu0 %v28
  %7155 = vmatprep.subr.mxu0 0.0
  %7156 = vmatpush1.msra.mxu0 %v29
  %7157 = vmatprep.subr.mxu0 0.0
  %7158 = vmatpush1.msra.mxu0 %v30
  %7159 = vmatprep.subr.mxu0 0.0
  %7160 = vmatpush1.msra.mxu0 %v31
  %7161 = vmatprep.subr.mxu0 0.0
  %7162 = vmatpush1.msra.mxu0 %v32
  %7163 = vmatprep.subr.mxu0 0.0
  %7164 = vmatpush1.msra.mxu0 %v33
  %7165 = vmatprep.subr.mxu0 0.0
  %7166 = vmatpush1.msra.mxu0 %v34
  %7167 = vmatprep.subr.mxu0 0.0
  %7168 = vmatpush1.msra.mxu0 %v35
  %7169 = vmatprep.subr.mxu0 0.0
  %7170 = vmatpush1.msra.mxu0 %v36
  %7171 = vmatprep.subr.mxu0 0.0
  %7172 = vmatpush1.msra.mxu0 %v37
  %7173 = vmatprep.subr.mxu0 0.0
  %7174 = vmatpush1.msra.mxu0 %v38
  %7175 = vmatprep.subr.mxu0 0.0
  %7176 = vmatpush1.msra.mxu0 %v39
  %7177 = vmatprep.subr.mxu0 0.0
  %7178 = vmatpush1.msra.mxu0 %v40
  %7179 = vmatprep.subr.mxu0 0.0
  %7180 = vmatpush1.msra.mxu0 %v41
  %7181 = vmatprep.subr.mxu0 0.0
  %7182 = vmatpush1.msra.mxu0 %v42
  %7183 = vmatprep.subr.mxu0 0.0
  %7184 = vmatpush1.msra.mxu0 %v43
  %7185 = vmatprep.subr.mxu0 0.0
  %7186 = vmatpush1.msra.mxu0 %v44
  %7187 = vmatprep.subr.mxu0 0.0
  %7188 = vmatpush1.msra.mxu0 %v45
  %7189 = vmatprep.subr.mxu0 0.0
  %7190 = vmatpush1.msra.mxu0 %v46
  %7191 = vmatprep.subr.mxu0 0.0
  %7192 = vmatpush1.msra.mxu0 %v47
  %7193 = vmatprep.subr.mxu0 0.0
  %7194 = vmatpush1.msra.mxu0 %v48
  %7195 = vmatprep.subr.mxu0 0.0
  %7196 = vmatpush1.msra.mxu0 %v49
  %7197 = vmatprep.subr.mxu0 0.0
  %7198 = vmatpush1.msra.mxu0 %v50
  %7199 = vmatprep.subr.mxu0 0.0
  %7200 = vmatpush1.msra.mxu0 %v51
  %7201 = vmatprep.mubr.f32.mxu0 %v7077
  %7202 = vmatmul.mubr.f32.gmra.mrb[0].mxu0 %v3737
  %v7203 = vpop.f32.mrb[0].mxu0
  %v7204 = vadd.f32 %v3548, %v7203
  %v7205 = vpop.f32.mrb[0].mxu0
  %7206 = vmatprep.mubr.f32.mxu0 %v7078
  %7207 = vmatmul.mubr.f32.gmra.mrb[0].mxu0 %v3738
  %v7208 = vpop.f32.mrb[0].mxu0
  %v7209 = vadd.f32 %v3548, %v7208
  %v7210 = vpop.f32.mrb[0].mxu0
  %7211 = vdwg.mxu0
  %7212 = vmatprep.subr.mxu0 0.0
  %7213 = vmatpush1.msra.mxu0 %v52
  %7214 = vmatprep.subr.mxu0 0.0
  %7215 = vmatpush1.msra.mxu0 %v53
  %7216 = vmatprep.subr.mxu0 0.0
  %7217 = vmatpush1.msra.mxu0 %v54
  %7218 = vmatprep.subr.mxu0 0.0
  %7219 = vmatpush1.msra.mxu0 %v55
  %7220 = vmatprep.subr.mxu0 0.0
  %7221 = vmatpush1.msra.mxu0 %v56
  %7222 = vmatprep.subr.mxu0 0.0
  %7223 = vmatpush1.msra.mxu0 %v57
  %7224 = vmatprep.subr.mxu0 0.0
  %7225 = vmatpush1.msra.mxu0 %v58
  %7226 = vmatprep.subr.mxu0 0.0
  %7227 = vmatpush1.msra.mxu0 %v59
  %7228 = vmatprep.subr.mxu0 0.0
  %7229 = vmatpush1.msra.mxu0 %v60
  %7230 = vmatprep.subr.mxu0 0.0
  %7231 = vmatpush1.msra.mxu0 %v61
  %7232 = vmatprep.subr.mxu0 0.0
  %7233 = vmatpush1.msra.mxu0 %v62
  %7234 = vmatprep.subr.mxu0 0.0
  %7235 = vmatpush1.msra.mxu0 %v63
  %7236 = vmatprep.subr.mxu0 0.0
  %7237 = vmatpush1.msra.mxu0 %v64
  %7238 = vmatprep.subr.mxu0 0.0
  %7239 = vmatpush1.msra.mxu0 %v65
  %7240 = vmatprep.subr.mxu0 0.0
  %7241 = vmatpush1.msra.mxu0 %v66
  %7242 = vmatprep.subr.mxu0 0.0
  %7243 = vmatpush1.msra.mxu0 %v67
  %7244 = vmatprep.subr.mxu0 0.0
  %7245 = vmatpush1.msra.mxu0 %v68
  %7246 = vmatprep.subr.mxu0 0.0
  %7247 = vmatpush1.msra.mxu0 %v69
  %7248 = vmatprep.subr.mxu0 0.0
  %7249 = vmatpush1.msra.mxu0 %v70
  %7250 = vmatprep.subr.mxu0 0.0
  %7251 = vmatpush1.msra.mxu0 %v71
  %7252 = vmatprep.subr.mxu0 0.0
  %7253 = vmatpush1.msra.mxu0 %v72
  %7254 = vmatprep.subr.mxu0 0.0
  %7255 = vmatpush1.msra.mxu0 %v73
  %7256 = vmatprep.subr.mxu0 0.0
  %7257 = vmatpush1.msra.mxu0 %v74
  %7258 = vmatprep.subr.mxu0 0.0
  %7259 = vmatpush1.msra.mxu0 %v75
  %7260 = vmatprep.subr.mxu0 0.0
  %7261 = vmatpush1.msra.mxu0 %v76
  %7262 = vmatprep.subr.mxu0 0.0
  %7263 = vmatpush1.msra.mxu0 %v77
  %7264 = vmatprep.subr.mxu0 0.0
  %7265 = vmatpush1.msra.mxu0 %v78
  %7266 = vmatprep.subr.mxu0 0.0
  %7267 = vmatpush1.msra.mxu0 %v79
  %7268 = vmatprep.subr.mxu0 0.0
  %7269 = vmatpush1.msra.mxu0 %v80
  %7270 = vmatprep.subr.mxu0 0.0
  %7271 = vmatpush1.msra.mxu0 %v81
  %7272 = vmatprep.subr.mxu0 0.0
  %7273 = vmatpush1.msra.mxu0 %v82
  %7274 = vmatprep.subr.mxu0 0.0
  %7275 = vmatpush1.msra.mxu0 %v83
  %7276 = vmatprep.mubr.f32.mxu0 %v7133
  %7277 = vmatmul.mubr.f32.gmra.mrb[0].mxu0 %v7105
  %v7278 = vpop.f32.mrb[0].mxu0
  %v7279 = vadd.f32 %v7204, %v7278
  %v7280 = vpop.f32.mrb[0].mxu0
  %7281 = vmatprep.mubr.f32.mxu0 %v7134
  %7282 = vmatmul.mubr.f32.gmra.mrb[0].mxu0 %v7106
  %v7283 = vpop.f32.mrb[0].mxu0
  %v7284 = vadd.f32 %v7209, %v7283
  %v7285 = vpop.f32.mrb[0].mxu0
  %7286 = vdwg.mxu0
  %v7287 = vmax.f32 %v7279, 0.0
  %v7288 = vmax.f32 %v7284, 0.0
  %s7289 = scalar_lea.vmem %s5, 16
  %7290 = vst [vmem:[%s7289] sm:$0xff] %v7287
  %7291 = vst [vmem:[%s7289 + $0x8] sm:$0xff] %v7288
  // Predicated region
  $region22: #{fwd.1} parent=0 // pred_check
    _
  $region23: #{fwd.1} parent=0 // pred_check_branch
    %7293 = sbr.rel (0) target = $region25
  $region24: #{fwd.1} parent=0 // pred_region
    _
  $region25: #{fwd.1} parent=0 // pred_fallthru
    _
  // Predicated region
  $region26: #{fwd.1} parent=0 // pred_check
    _
  $region27: #{fwd.1} parent=0 // pred_check_branch
    %7295 = sbr.rel (0) target = $region29
  $region28: #{fwd.1} parent=0 // pred_region
    _
  $region29: #{fwd.1} parent=0 // pred_fallthru
    _

</llo_original>
